<compile_context>
chip_gen: v7x
topology: tpu7x:2x2x1
jax: 0.10.0
libtpu: 0.0.40
codegen_flags: <defaults>
</compile_context>

<pallas_src>
import functools

import jax
import jax.numpy as jnp
from jax import lax
from jax.experimental import pallas as pl
from jax.experimental.pallas import tpu as pltpu


def _round_up(x, m):
    return ((x + m - 1) // m) * m


# ------------------------------ Pallas kernel -------------------------------

def _bottleneck_kernel(x_ref, mask_ref, w1_ref, b1_ref, w2_ref, b2_ref,
                       w3_ref, b3_ref, o_ref, y1p_ref, *,
                       H, Wp, lead, rows_per_chunk):
    """Whole bottleneck block for one image, fused in VMEM.

    Flat spatial layout: row r = i*Wp + pj; valid image pixels at pj in [1, W].
      x_ref   : (H*Wp, Cp)   bf16  width/channel-padded input
      mask_ref: (H*Wp, 1)    f32   1.0 at valid columns, 0.0 at pad columns
      w1_ref  : (Cp, Cm)     bf16  conv1 weight (BN1 scale folded)
      b1_ref  : (1, Cm)      f32   BN1 bias
      w2_ref  : (9, Cm, Cm)  bf16  conv2 taps, tap index = di*3 + dj (BN2 folded)
      b2_ref  : (1, Cm)      f32   BN2 bias
      w3_ref  : (Cm, Co)     bf16  conv3 weight (BN3 folded)
      b3_ref  : (1, Co)      f32   BN3 bias
      o_ref   : (H*Wp, Co)   f32   output (same flat layout as x)
      y1p_ref : (ROWS, Cm)   f32   staging buffer; conv-padded pixel (pi, pjj)
                                   lives at flat row  lead + pi*Wp + pjj
    """
    Cm = w2_ref.shape[-1]
    HWp = H * Wp

    # ---- conv1 (1x1) + bn1 + relu over the whole (width-padded) image ----
    y1 = jnp.dot(x_ref[...], w1_ref[...], preferred_element_type=jnp.float32)
    y1 = jnp.maximum(y1 + b1_ref[...], 0.0)
    # conv2's zero-padding columns: the 1x1 conv + bias makes them nonzero,
    # so kill them with the per-row mask before staging.
    y1 = y1 * mask_ref[...]

    # ---- stage y1 into the flat halo buffer ----
    # Top / bottom zero halo rows: two small strips, rewritten every step
    # (cheap, and correct even when each core has its own scratch instance).
    zrow = jnp.zeros((Wp, Cm), jnp.float32)
    y1p_ref[pl.ds(lead, Wp), :] = zrow
    y1p_ref[pl.ds(lead + (H + 1) * Wp, Wp), :] = zrow
    # Interior: one contiguous, sublane-aligned store (start = lead + Wp).
    y1p_ref[pl.ds(lead + Wp, HWp), :] = y1

    # ---- conv2 (3x3, pad=1) + bn2 + relu, then conv3 (1x1) + bn3 +
    #      residual + relu, streamed over chunks of image rows ----
    crows = rows_per_chunk * Wp
    n_chunks = H // rows_per_chunk
    # TODO(synk): switch to lax.fori_loop over chunks for very large H.
    for c in range(n_chunks):
        base = c * crows
        acc = jnp.zeros((crows, Cm), jnp.float32)
        for di in range(3):
            for dj in range(3):
                # Output row r reads conv-padded pixel (i+di, pj-1+dj), which
                # lives at staging row  lead + r + di*Wp + (dj-1)  -> a single
                # contiguous flat slice per tap (no window copies).
                start = lead + base + di * Wp + dj - 1
                tap = y1p_ref[pl.ds(start, crows), :]
                acc += jnp.dot(tap.astype(jnp.bfloat16), w2_ref[di * 3 + dj],
                               preferred_element_type=jnp.float32)
        y2 = jnp.maximum(acc + b2_ref[...], 0.0).astype(jnp.bfloat16)
        y3 = jnp.dot(y2, w3_ref[...], preferred_element_type=jnp.float32)
        # Residual: re-read x only here (keeps it out of the live set above).
        y3 = y3 + b3_ref[...] + x_ref[pl.ds(base, crows), :].astype(jnp.float32)
        o_ref[pl.ds(base, crows), :] = jnp.maximum(y3, 0.0).astype(o_ref.dtype)


# ------------------------------- glue (JAX) ---------------------------------

def fold_bn(gamma, beta, mean, var, eps=1e-5):
    scale = gamma / jnp.sqrt(var + eps)
    bias = beta - mean * scale
    return scale, bias


def bottleneck_forward(x_nchw, p, stride=1):
    """Pallas implementation of Bottleneck.forward (inference BN, downsample=None)."""
    assert stride == 1, "downsample=None => residual requires stride == 1"

    x = jnp.transpose(x_nchw, (0, 2, 3, 1))                   # NCHW -> NHWC
    N, H, W, Cin = x.shape
    Cmid = p["conv1_w"].shape[0]
    Cout = p["conv3_w"].shape[0]
    assert Cin == Cout, "downsample=None => inplanes must equal planes * expansion"

    # Lane-dense channel padding (multiples of 128).
    Cp = _round_up(Cin, 128)
    Cm = _round_up(Cmid, 128)
    Co = _round_up(Cout, 128)
    assert Cp == Co  # residual add

    # Width-padded flat spatial layout: column 0 = conv2's left zero pad,
    # columns [1, W] = data, columns [W+1, Wp) = right pad / alignment.
    Wp = _round_up(W + 2, 8)
    lead = 8                                       # aligned lead-in for the halo buffer
    HWp = H * Wp
    buf_rows = _round_up(lead + (H + 2) * Wp + 1, 8)

    # Image rows processed per chunk in the conv2/conv3 stream (keep M ~<= 256).
    rc = 1
    for d in range(1, H + 1):
        if H % d == 0 and d * Wp <= 256:
            rc = d

    s1, b1 = fold_bn(p["bn1_g"], p["bn1_b"], p["bn1_m"], p["bn1_v"])
    s2, b2 = fold_bn(p["bn2_g"], p["bn2_b"], p["bn2_m"], p["bn2_v"])
    s3, b3 = fold_bn(p["bn3_g"], p["bn3_b"], p["bn3_m"], p["bn3_v"])

    # conv1: (Cmid, Cin, 1, 1) -> (Cin, Cmid), BN1 scale folded, padded, bf16.
    w1 = jnp.transpose(p["conv1_w"][:, :, 0, 0], (1, 0)) * s1[None, :]
    w1 = jnp.pad(w1, ((0, Cp - Cin), (0, Cm - Cmid))).astype(jnp.bfloat16)
    b1p = jnp.pad(b1, (0, Cm - Cmid)).reshape(1, Cm).astype(jnp.float32)

    # conv2: (Cmid, Cmid, 3, 3) -> (9, Cmid_in, Cmid_out), tap index = di*3 + dj.
    w2 = jnp.transpose(p["conv2_w"], (2, 3, 1, 0)) * s2[None, None, None, :]
    w2 = w2.reshape(9, Cmid, Cmid)
    w2 = jnp.pad(w2, ((0, 0), (0, Cm - Cmid), (0, Cm - Cmid))).astype(jnp.bfloat16)
    b2p = jnp.pad(b2, (0, Cm - Cmid)).reshape(1, Cm).astype(jnp.float32)

    # conv3: (Cout, Cmid, 1, 1) -> (Cmid, Cout).
    w3 = jnp.transpose(p["conv3_w"][:, :, 0, 0], (1, 0)) * s3[None, :]
    w3 = jnp.pad(w3, ((0, Cm - Cmid), (0, Co - Cout))).astype(jnp.bfloat16)
    b3p = jnp.pad(b3, (0, Co - Cout)).reshape(1, Co).astype(jnp.float32)

    # Activations: width + channel padded, flattened, bf16 (halves HBM read;
    # MXU inputs are bf16 anyway, residual picks up ~1e-3 relative rounding).
    xp = jnp.pad(x, ((0, 0), (0, 0), (1, Wp - W - 1), (0, Cp - Cin)))
    xp = xp.reshape(N, HWp, Cp).astype(jnp.bfloat16)

    # Per-row validity mask for conv2's zero-pad columns (grid-invariant input).
    col = jnp.arange(Wp)
    colmask = jnp.tile((col >= 1) & (col <= W), H).astype(jnp.float32)
    colmask = colmask.reshape(HWp, 1)

    kernel = functools.partial(_bottleneck_kernel, H=H, Wp=Wp, lead=lead,
                               rows_per_chunk=rc)

    flops = 2 * N * HWp * (Cp * Cm + 9 * Cm * Cm + Cm * Co)
    bytes_accessed = (N * HWp * (Cp * 2 + Co * 4) + HWp * 4
                      + (Cp * Cm + 9 * Cm * Cm + Cm * Co) * 2
                      + (2 * Cm + Co) * 4)

    out = pl.pallas_call(
        kernel,
        out_shape=jax.ShapeDtypeStruct((N, HWp, Co), jnp.float32),
        grid=(N,),
        in_specs=[
            pl.BlockSpec((None, HWp, Cp), lambda n: (n, 0, 0)),   # activations
            pl.BlockSpec((HWp, 1), lambda n: (0, 0)),             # column mask
            pl.BlockSpec((Cp, Cm), lambda n: (0, 0)),             # conv1 weight
            pl.BlockSpec((1, Cm), lambda n: (0, 0)),              # bn1 bias
            pl.BlockSpec((9, Cm, Cm), lambda n: (0, 0, 0)),       # conv2 taps
            pl.BlockSpec((1, Cm), lambda n: (0, 0)),              # bn2 bias
            pl.BlockSpec((Cm, Co), lambda n: (0, 0)),             # conv3 weight
            pl.BlockSpec((1, Co), lambda n: (0, 0)),              # bn3 bias
        ],
        out_specs=pl.BlockSpec((None, HWp, Co), lambda n: (n, 0, 0)),
        scratch_shapes=[pltpu.VMEM((buf_rows, Cm), jnp.float32)],
        compiler_params=pltpu.CompilerParams(
            dimension_semantics=("parallel",),
            vmem_limit_bytes=64 * 1024 * 1024,
        ),
        cost_estimate=pl.CostEstimate(flops=flops, transcendentals=0,
                                      bytes_accessed=bytes_accessed),
    )(xp, colmask, w1, b1p, w2, b2p, w3, b3p)

    out = out.reshape(N, H, Wp, Co)[:, :, 1:W + 1, :Cout]     # drop pad cols/chans
    return jnp.transpose(out, (0, 3, 1, 2))                   # NHWC -> NCHW


# --------------------------- pure-JAX reference -----------------------------

def _conv(x, w, stride, pad):
    return lax.conv_general_dilated(
        x, w, window_strides=(stride, stride), padding=[(pad, pad), (pad, pad)],
        dimension_numbers=("NCHW", "OIHW", "NCHW"))


def _bn(x, g, b, m, v, eps=1e-5):
    g, b, m, v = (a[None, :, None, None] for a in (g, b, m, v))
    return g * (x - m) / jnp.sqrt(v + eps) + b


def bottleneck_reference(x, p, stride=1):
    out = jax.nn.relu(_bn(_conv(x, p["conv1_w"], 1, 0),
                          p["bn1_g"], p["bn1_b"], p["bn1_m"], p["bn1_v"]))
    out = jax.nn.relu(_bn(_conv(out, p["conv2_w"], stride, 1),
                          p["bn2_g"], p["bn2_b"], p["bn2_m"], p["bn2_v"]))
    out = _bn(_conv(out, p["conv3_w"], 1, 0),
              p["bn3_g"], p["bn3_b"], p["bn3_m"], p["bn3_v"])
    return jax.nn.relu(out + x)


# --------------------------------- main --------------------------------------

if __name__ == "__main__":
    expansion = 4
    planes = 4
    inplanes = planes * expansion      # downsample=None -> residual shapes must match
    stride = 1
    N, H, W = 2, 16, 16

    key = jax.random.PRNGKey(0)
    ks = jax.random.split(key, 16)

    def normal(k, shape, scale=0.1):
        return scale * jax.random.normal(k, shape, dtype=jnp.float32)

    params = {
        # PyTorch conv weight layout: (Cout, Cin, kH, kW)
        "conv1_w": normal(ks[0], (planes, inplanes, 1, 1)),
        "conv2_w": normal(ks[1], (planes, planes, 3, 3)),
        "conv3_w": normal(ks[2], (planes * expansion, planes, 1, 1)),
        "bn1_g": 1.0 + normal(ks[3], (planes,)),
        "bn1_b": normal(ks[4], (planes,)),
        "bn1_m": normal(ks[5], (planes,)),
        "bn1_v": 0.5 + jax.random.uniform(ks[6], (planes,), dtype=jnp.float32),
        "bn2_g": 1.0 + normal(ks[7], (planes,)),
        "bn2_b": normal(ks[8], (planes,)),
        "bn2_m": normal(ks[9], (planes,)),
        "bn2_v": 0.5 + jax.random.uniform(ks[10], (planes,), dtype=jnp.float32),
        "bn3_g": 1.0 + normal(ks[11], (planes * expansion,)),
        "bn3_b": normal(ks[12], (planes * expansion,)),
        "bn3_m": normal(ks[13], (planes * expansion,)),
        "bn3_v": 0.5 + jax.random.uniform(ks[14], (planes * expansion,), dtype=jnp.float32),
    }

    x = jax.random.normal(ks[15], (N, inplanes, H, W), dtype=jnp.float32)

    out = jax.block_until_ready(bottleneck_forward(x, params, stride=stride))
    ref = jax.block_until_ready(bottleneck_reference(x, params, stride=stride))

    assert out.shape == ref.shape == (N, planes * expansion, H, W)
    # bf16 weights + bf16 activation I/O (residual in bf16) -> loosened tolerance.
    err = float(jnp.max(jnp.abs(out - ref)))
    assert jnp.allclose(out, ref, rtol=3e-2, atol=3e-2), err

    print("KERNEL_OK")
</pallas_src>

<mosaic_0001>
module attributes {stable_mosaic.version = 11 : i64} {
  func.func @_bottleneck_kernel(%arg0: i32, %arg1: memref<1x384x128xbf16, #tpu.memory_space<vmem>>, %arg2: memref<384x1xf32, #tpu.memory_space<vmem>>, %arg3: memref<128x128xbf16, #tpu.memory_space<vmem>>, %arg4: memref<1x128xf32, #tpu.memory_space<vmem>>, %arg5: memref<9x128x128xbf16, #tpu.memory_space<vmem>>, %arg6: memref<1x128xf32, #tpu.memory_space<vmem>>, %arg7: memref<128x128xbf16, #tpu.memory_space<vmem>>, %arg8: memref<1x128xf32, #tpu.memory_space<vmem>>, %arg9: memref<1x384x128xf32, #tpu.memory_space<vmem>>, %arg10: memref<448x128xf32, #tpu.memory_space<vmem>>) attributes {dimension_semantics = [#tpu.dimension_semantics<parallel>], iteration_bounds = array<i64: 2>, scalar_prefetch = 0 : i64, scratch_operands = 1 : i64, tpu.core_type = #tpu.core_type<tc>, window_params = [{transform_indices = @transform_0, window_bounds = array<i64: 1, 384, 128>}, {pipeline_mode = #tpu.pipeline_mode<synchronous>, transform_indices = @transform_1, window_bounds = array<i64: 384, 1>}, {pipeline_mode = #tpu.pipeline_mode<synchronous>, transform_indices = @transform_2, window_bounds = array<i64: 128, 128>}, {pipeline_mode = #tpu.pipeline_mode<synchronous>, transform_indices = @transform_3, window_bounds = array<i64: 1, 128>}, {pipeline_mode = #tpu.pipeline_mode<synchronous>, transform_indices = @transform_4, window_bounds = array<i64: 9, 128, 128>}, {pipeline_mode = #tpu.pipeline_mode<synchronous>, transform_indices = @transform_5, window_bounds = array<i64: 1, 128>}, {pipeline_mode = #tpu.pipeline_mode<synchronous>, transform_indices = @transform_6, window_bounds = array<i64: 128, 128>}, {pipeline_mode = #tpu.pipeline_mode<synchronous>, transform_indices = @transform_7, window_bounds = array<i64: 1, 128>}, {transform_indices = @transform_8, window_bounds = array<i64: 1, 384, 128>}]} {
    %c0 = arith.constant 0 : index
    %c0_0 = arith.constant 0 : index
    %c0_1 = arith.constant 0 : index
    %0 = vector.load %arg1[%c0, %c0_0, %c0_1] : memref<1x384x128xbf16, #tpu.memory_space<vmem>>, vector<1x384x128xbf16>
    %1 = vector.shape_cast %0 : vector<1x384x128xbf16> to vector<384x128xbf16>
    %c0_2 = arith.constant 0 : index
    %c0_3 = arith.constant 0 : index
    %2 = vector.load %arg3[%c0_2, %c0_3] : memref<128x128xbf16, #tpu.memory_space<vmem>>, vector<128x128xbf16>
    %cst = arith.constant dense<0.000000e+00> : vector<384x128xf32>
    %3 = tpu.matmul %1, %2, %cst {dimension_numbers = #tpu.dot_dimension_numbers<[1], [0], [0], [1], [0, 0, 1, 1], [], []>} : vector<384x128xbf16>, vector<128x128xbf16>, vector<384x128xf32> -> vector<384x128xf32>
    %c0_4 = arith.constant 0 : index
    %c0_5 = arith.constant 0 : index
    %4 = vector.load %arg4[%c0_4, %c0_5] : memref<1x128xf32, #tpu.memory_space<vmem>>, vector<1x128xf32>
    %5 = vector.broadcast %4 : vector<1x128xf32> to vector<384x128xf32>
    %6 = arith.addf %3, %5 : vector<384x128xf32>
    %cst_6 = arith.constant 0.000000e+00 : f32
    %7 = vector.broadcast %cst_6 : f32 to vector<384x128xf32>
    %8 = arith.maximumf %6, %7 : vector<384x128xf32>
    %c0_7 = arith.constant 0 : index
    %c0_8 = arith.constant 0 : index
    %9 = vector.load %arg2[%c0_7, %c0_8] : memref<384x1xf32, #tpu.memory_space<vmem>>, vector<384x1xf32>
    %10 = vector.broadcast %9 : vector<384x1xf32> to vector<384x128xf32>
    %11 = arith.mulf %8, %10 : vector<384x128xf32>
    %cst_9 = arith.constant 0.000000e+00 : f32
    %12 = vector.broadcast %cst_9 : f32 to vector<24x128xf32>
    %c8 = arith.constant 8 : index
    %c0_10 = arith.constant 0 : index
    %13 = vector.load %arg10[%c8, %c0_10] : memref<448x128xf32, #tpu.memory_space<vmem>>, vector<24x128xf32>
    tpu.vector_store %arg10[%c8, %c0_10], %12 {strides = array<i32>} : memref<448x128xf32, #tpu.memory_space<vmem>>, vector<24x128xf32>,
    %c416 = arith.constant 416 : index
    %c0_11 = arith.constant 0 : index
    %14 = vector.load %arg10[%c416, %c0_11] : memref<448x128xf32, #tpu.memory_space<vmem>>, vector<24x128xf32>
    tpu.vector_store %arg10[%c416, %c0_11], %12 {strides = array<i32>} : memref<448x128xf32, #tpu.memory_space<vmem>>, vector<24x128xf32>,
    %c32 = arith.constant 32 : index
    %c0_12 = arith.constant 0 : index
    %15 = vector.load %arg10[%c32, %c0_12] : memref<448x128xf32, #tpu.memory_space<vmem>>, vector<384x128xf32>
    tpu.vector_store %arg10[%c32, %c0_12], %11 {strides = array<i32>} : memref<448x128xf32, #tpu.memory_space<vmem>>, vector<384x128xf32>,
    %cst_13 = arith.constant 0.000000e+00 : f32
    %16 = vector.broadcast %cst_13 : f32 to vector<192x128xf32>
    %c7 = arith.constant 7 : index
    %c0_14 = arith.constant 0 : index
    %17 = vector.load %arg10[%c7, %c0_14] : memref<448x128xf32, #tpu.memory_space<vmem>>, vector<192x128xf32>
    %18 = arith.truncf %17 : vector<192x128xf32> to vector<192x128xbf16>
    %c0_15 = arith.constant 0 : index
    %c0_16 = arith.constant 0 : index
    %c0_17 = arith.constant 0 : index
    %19 = vector.load %arg5[%c0_15, %c0_16, %c0_17] : memref<9x128x128xbf16, #tpu.memory_space<vmem>>, vector<1x128x128xbf16>
    %20 = vector.shape_cast %19 : vector<1x128x128xbf16> to vector<128x128xbf16>
    %cst_18 = arith.constant dense<0.000000e+00> : vector<192x128xf32>
    %21 = tpu.matmul %18, %20, %cst_18 {dimension_numbers = #tpu.dot_dimension_numbers<[1], [0], [0], [1], [0, 0, 1, 1], [], []>} : vector<192x128xbf16>, vector<128x128xbf16>, vector<192x128xf32> -> vector<192x128xf32>
    %22 = arith.addf %16, %21 : vector<192x128xf32>
    %c8_19 = arith.constant 8 : index
    %c0_20 = arith.constant 0 : index
    %23 = vector.load %arg10[%c8_19, %c0_20] : memref<448x128xf32, #tpu.memory_space<vmem>>, vector<192x128xf32>
    %24 = arith.truncf %23 : vector<192x128xf32> to vector<192x128xbf16>
    %c1 = arith.constant 1 : index
    %c0_21 = arith.constant 0 : index
    %c0_22 = arith.constant 0 : index
    %25 = vector.load %arg5[%c1, %c0_21, %c0_22] : memref<9x128x128xbf16, #tpu.memory_space<vmem>>, vector<1x128x128xbf16>
    %26 = vector.shape_cast %25 : vector<1x128x128xbf16> to vector<128x128xbf16>
    %cst_23 = arith.constant dense<0.000000e+00> : vector<192x128xf32>
    %27 = tpu.matmul %24, %26, %cst_23 {dimension_numbers = #tpu.dot_dimension_numbers<[1], [0], [0], [1], [0, 0, 1, 1], [], []>} : vector<192x128xbf16>, vector<128x128xbf16>, vector<192x128xf32> -> vector<192x128xf32>
    %28 = arith.addf %22, %27 : vector<192x128xf32>
    %c9 = arith.constant 9 : index
    %c0_24 = arith.constant 0 : index
    %29 = vector.load %arg10[%c9, %c0_24] : memref<448x128xf32, #tpu.memory_space<vmem>>, vector<192x128xf32>
    %30 = arith.truncf %29 : vector<192x128xf32> to vector<192x128xbf16>
    %c2 = arith.constant 2 : index
    %c0_25 = arith.constant 0 : index
    %c0_26 = arith.constant 0 : index
    %31 = vector.load %arg5[%c2, %c0_25, %c0_26] : memref<9x128x128xbf16, #tpu.memory_space<vmem>>, vector<1x128x128xbf16>
    %32 = vector.shape_cast %31 : vector<1x128x128xbf16> to vector<128x128xbf16>
    %cst_27 = arith.constant dense<0.000000e+00> : vector<192x128xf32>
    %33 = tpu.matmul %30, %32, %cst_27 {dimension_numbers = #tpu.dot_dimension_numbers<[1], [0], [0], [1], [0, 0, 1, 1], [], []>} : vector<192x128xbf16>, vector<128x128xbf16>, vector<192x128xf32> -> vector<192x128xf32>
    %34 = arith.addf %28, %33 : vector<192x128xf32>
    %c31 = arith.constant 31 : index
    %c0_28 = arith.constant 0 : index
    %35 = vector.load %arg10[%c31, %c0_28] : memref<448x128xf32, #tpu.memory_space<vmem>>, vector<192x128xf32>
    %36 = arith.truncf %35 : vector<192x128xf32> to vector<192x128xbf16>
    %c3 = arith.constant 3 : index
    %c0_29 = arith.constant 0 : index
    %c0_30 = arith.constant 0 : index
    %37 = vector.load %arg5[%c3, %c0_29, %c0_30] : memref<9x128x128xbf16, #tpu.memory_space<vmem>>, vector<1x128x128xbf16>
    %38 = vector.shape_cast %37 : vector<1x128x128xbf16> to vector<128x128xbf16>
    %cst_31 = arith.constant dense<0.000000e+00> : vector<192x128xf32>
    %39 = tpu.matmul %36, %38, %cst_31 {dimension_numbers = #tpu.dot_dimension_numbers<[1], [0], [0], [1], [0, 0, 1, 1], [], []>} : vector<192x128xbf16>, vector<128x128xbf16>, vector<192x128xf32> -> vector<192x128xf32>
    %40 = arith.addf %34, %39 : vector<192x128xf32>
    %c32_32 = arith.constant 32 : index
    %c0_33 = arith.constant 0 : index
    %41 = vector.load %arg10[%c32_32, %c0_33] : memref<448x128xf32, #tpu.memory_space<vmem>>, vector<192x128xf32>
    %42 = arith.truncf %41 : vector<192x128xf32> to vector<192x128xbf16>
    %c4 = arith.constant 4 : index
    %c0_34 = arith.constant 0 : index
    %c0_35 = arith.constant 0 : index
    %43 = vector.load %arg5[%c4, %c0_34, %c0_35] : memref<9x128x128xbf16, #tpu.memory_space<vmem>>, vector<1x128x128xbf16>
    %44 = vector.shape_cast %43 : vector<1x128x128xbf16> to vector<128x128xbf16>
    %cst_36 = arith.constant dense<0.000000e+00> : vector<192x128xf32>
    %45 = tpu.matmul %42, %44, %cst_36 {dimension_numbers = #tpu.dot_dimension_numbers<[1], [0], [0], [1], [0, 0, 1, 1], [], []>} : vector<192x128xbf16>, vector<128x128xbf16>, vector<192x128xf32> -> vector<192x128xf32>
    %46 = arith.addf %40, %45 : vector<192x128xf32>
    %c33 = arith.constant 33 : index
    %c0_37 = arith.constant 0 : index
    %47 = vector.load %arg10[%c33, %c0_37] : memref<448x128xf32, #tpu.memory_space<vmem>>, vector<192x128xf32>
    %48 = arith.truncf %47 : vector<192x128xf32> to vector<192x128xbf16>
    %c5 = arith.constant 5 : index
    %c0_38 = arith.constant 0 : index
    %c0_39 = arith.constant 0 : index
    %49 = vector.load %arg5[%c5, %c0_38, %c0_39] : memref<9x128x128xbf16, #tpu.memory_space<vmem>>, vector<1x128x128xbf16>
    %50 = vector.shape_cast %49 : vector<1x128x128xbf16> to vector<128x128xbf16>
    %cst_40 = arith.constant dense<0.000000e+00> : vector<192x128xf32>
    %51 = tpu.matmul %48, %50, %cst_40 {dimension_numbers = #tpu.dot_dimension_numbers<[1], [0], [0], [1], [0, 0, 1, 1], [], []>} : vector<192x128xbf16>, vector<128x128xbf16>, vector<192x128xf32> -> vector<192x128xf32>
    %52 = arith.addf %46, %51 : vector<192x128xf32>
    %c55 = arith.constant 55 : index
    %c0_41 = arith.constant 0 : index
    %53 = vector.load %arg10[%c55, %c0_41] : memref<448x128xf32, #tpu.memory_space<vmem>>, vector<192x128xf32>
    %54 = arith.truncf %53 : vector<192x128xf32> to vector<192x128xbf16>
    %c6 = arith.constant 6 : index
    %c0_42 = arith.constant 0 : index
    %c0_43 = arith.constant 0 : index
    %55 = vector.load %arg5[%c6, %c0_42, %c0_43] : memref<9x128x128xbf16, #tpu.memory_space<vmem>>, vector<1x128x128xbf16>
    %56 = vector.shape_cast %55 : vector<1x128x128xbf16> to vector<128x128xbf16>
    %cst_44 = arith.constant dense<0.000000e+00> : vector<192x128xf32>
    %57 = tpu.matmul %54, %56, %cst_44 {dimension_numbers = #tpu.dot_dimension_numbers<[1], [0], [0], [1], [0, 0, 1, 1], [], []>} : vector<192x128xbf16>, vector<128x128xbf16>, vector<192x128xf32> -> vector<192x128xf32>
    %58 = arith.addf %52, %57 : vector<192x128xf32>
    %c56 = arith.constant 56 : index
    %c0_45 = arith.constant 0 : index
    %59 = vector.load %arg10[%c56, %c0_45] : memref<448x128xf32, #tpu.memory_space<vmem>>, vector<192x128xf32>
    %60 = arith.truncf %59 : vector<192x128xf32> to vector<192x128xbf16>
    %c7_46 = arith.constant 7 : index
    %c0_47 = arith.constant 0 : index
    %c0_48 = arith.constant 0 : index
    %61 = vector.load %arg5[%c7_46, %c0_47, %c0_48] : memref<9x128x128xbf16, #tpu.memory_space<vmem>>, vector<1x128x128xbf16>
    %62 = vector.shape_cast %61 : vector<1x128x128xbf16> to vector<128x128xbf16>
    %cst_49 = arith.constant dense<0.000000e+00> : vector<192x128xf32>
    %63 = tpu.matmul %60, %62, %cst_49 {dimension_numbers = #tpu.dot_dimension_numbers<[1], [0], [0], [1], [0, 0, 1, 1], [], []>} : vector<192x128xbf16>, vector<128x128xbf16>, vector<192x128xf32> -> vector<192x128xf32>
    %64 = arith.addf %58, %63 : vector<192x128xf32>
    %c57 = arith.constant 57 : index
    %c0_50 = arith.constant 0 : index
    %65 = vector.load %arg10[%c57, %c0_50] : memref<448x128xf32, #tpu.memory_space<vmem>>, vector<192x128xf32>
    %66 = arith.truncf %65 : vector<192x128xf32> to vector<192x128xbf16>
    %c8_51 = arith.constant 8 : index
    %c0_52 = arith.constant 0 : index
    %c0_53 = arith.constant 0 : index
    %67 = vector.load %arg5[%c8_51, %c0_52, %c0_53] : memref<9x128x128xbf16, #tpu.memory_space<vmem>>, vector<1x128x128xbf16>
    %68 = vector.shape_cast %67 : vector<1x128x128xbf16> to vector<128x128xbf16>
    %cst_54 = arith.constant dense<0.000000e+00> : vector<192x128xf32>
    %69 = tpu.matmul %66, %68, %cst_54 {dimension_numbers = #tpu.dot_dimension_numbers<[1], [0], [0], [1], [0, 0, 1, 1], [], []>} : vector<192x128xbf16>, vector<128x128xbf16>, vector<192x128xf32> -> vector<192x128xf32>
    %70 = arith.addf %64, %69 : vector<192x128xf32>
    %c0_55 = arith.constant 0 : index
    %c0_56 = arith.constant 0 : index
    %71 = vector.load %arg6[%c0_55, %c0_56] : memref<1x128xf32, #tpu.memory_space<vmem>>, vector<1x128xf32>
    %72 = vector.broadcast %71 : vector<1x128xf32> to vector<192x128xf32>
    %73 = arith.addf %70, %72 : vector<192x128xf32>
    %cst_57 = arith.constant 0.000000e+00 : f32
    %74 = vector.broadcast %cst_57 : f32 to vector<192x128xf32>
    %75 = arith.maximumf %73, %74 : vector<192x128xf32>
    %76 = arith.truncf %75 : vector<192x128xf32> to vector<192x128xbf16>
    %c0_58 = arith.constant 0 : index
    %c0_59 = arith.constant 0 : index
    %77 = vector.load %arg7[%c0_58, %c0_59] : memref<128x128xbf16, #tpu.memory_space<vmem>>, vector<128x128xbf16>
    %cst_60 = arith.constant dense<0.000000e+00> : vector<192x128xf32>
    %78 = tpu.matmul %76, %77, %cst_60 {dimension_numbers = #tpu.dot_dimension_numbers<[1], [0], [0], [1], [0, 0, 1, 1], [], []>} : vector<192x128xbf16>, vector<128x128xbf16>, vector<192x128xf32> -> vector<192x128xf32>
    %c0_61 = arith.constant 0 : index
    %c0_62 = arith.constant 0 : index
    %79 = vector.load %arg8[%c0_61, %c0_62] : memref<1x128xf32, #tpu.memory_space<vmem>>, vector<1x128xf32>
    %80 = vector.broadcast %79 : vector<1x128xf32> to vector<192x128xf32>
    %81 = arith.addf %78, %80 : vector<192x128xf32>
    %c0_63 = arith.constant 0 : index
    %c0_64 = arith.constant 0 : index
    %c0_65 = arith.constant 0 : index
    %82 = vector.load %arg1[%c0_63, %c0_64, %c0_65] : memref<1x384x128xbf16, #tpu.memory_space<vmem>>, vector<1x192x128xbf16>
    %83 = vector.shape_cast %82 : vector<1x192x128xbf16> to vector<192x128xbf16>
    %84 = arith.extf %83 : vector<192x128xbf16> to vector<192x128xf32>
    %85 = arith.addf %81, %84 : vector<192x128xf32>
    %cst_66 = arith.constant 0.000000e+00 : f32
    %86 = vector.broadcast %cst_66 : f32 to vector<192x128xf32>
    %87 = arith.maximumf %85, %86 : vector<192x128xf32>
    %c0_67 = arith.constant 0 : index
    %c0_68 = arith.constant 0 : index
    %c0_69 = arith.constant 0 : index
    %88 = vector.load %arg9[%c0_67, %c0_68, %c0_69] : memref<1x384x128xf32, #tpu.memory_space<vmem>>, vector<1x192x128xf32>
    %89 = vector.shape_cast %88 : vector<1x192x128xf32> to vector<192x128xf32>
    %90 = vector.shape_cast %87 : vector<192x128xf32> to vector<1x192x128xf32>
    tpu.vector_store %arg9[%c0_67, %c0_68, %c0_69], %90 {strides = array<i32>} : memref<1x384x128xf32, #tpu.memory_space<vmem>>, vector<1x192x128xf32>,
    %cst_70 = arith.constant 0.000000e+00 : f32
    %91 = vector.broadcast %cst_70 : f32 to vector<192x128xf32>
    %c199 = arith.constant 199 : index
    %c0_71 = arith.constant 0 : index
    %92 = vector.load %arg10[%c199, %c0_71] : memref<448x128xf32, #tpu.memory_space<vmem>>, vector<192x128xf32>
    %93 = arith.truncf %92 : vector<192x128xf32> to vector<192x128xbf16>
    %c0_72 = arith.constant 0 : index
    %c0_73 = arith.constant 0 : index
    %c0_74 = arith.constant 0 : index
    %94 = vector.load %arg5[%c0_72, %c0_73, %c0_74] : memref<9x128x128xbf16, #tpu.memory_space<vmem>>, vector<1x128x128xbf16>
    %95 = vector.shape_cast %94 : vector<1x128x128xbf16> to vector<128x128xbf16>
    %cst_75 = arith.constant dense<0.000000e+00> : vector<192x128xf32>
    %96 = tpu.matmul %93, %95, %cst_75 {dimension_numbers = #tpu.dot_dimension_numbers<[1], [0], [0], [1], [0, 0, 1, 1], [], []>} : vector<192x128xbf16>, vector<128x128xbf16>, vector<192x128xf32> -> vector<192x128xf32>
    %97 = arith.addf %91, %96 : vector<192x128xf32>
    %c200 = arith.constant 200 : index
    %c0_76 = arith.constant 0 : index
    %98 = vector.load %arg10[%c200, %c0_76] : memref<448x128xf32, #tpu.memory_space<vmem>>, vector<192x128xf32>
    %99 = arith.truncf %98 : vector<192x128xf32> to vector<192x128xbf16>
    %c1_77 = arith.constant 1 : index
    %c0_78 = arith.constant 0 : index
    %c0_79 = arith.constant 0 : index
    %100 = vector.load %arg5[%c1_77, %c0_78, %c0_79] : memref<9x128x128xbf16, #tpu.memory_space<vmem>>, vector<1x128x128xbf16>
    %101 = vector.shape_cast %100 : vector<1x128x128xbf16> to vector<128x128xbf16>
    %cst_80 = arith.constant dense<0.000000e+00> : vector<192x128xf32>
    %102 = tpu.matmul %99, %101, %cst_80 {dimension_numbers = #tpu.dot_dimension_numbers<[1], [0], [0], [1], [0, 0, 1, 1], [], []>} : vector<192x128xbf16>, vector<128x128xbf16>, vector<192x128xf32> -> vector<192x128xf32>
    %103 = arith.addf %97, %102 : vector<192x128xf32>
    %c201 = arith.constant 201 : index
    %c0_81 = arith.constant 0 : index
    %104 = vector.load %arg10[%c201, %c0_81] : memref<448x128xf32, #tpu.memory_space<vmem>>, vector<192x128xf32>
    %105 = arith.truncf %104 : vector<192x128xf32> to vector<192x128xbf16>
    %c2_82 = arith.constant 2 : index
    %c0_83 = arith.constant 0 : index
    %c0_84 = arith.constant 0 : index
    %106 = vector.load %arg5[%c2_82, %c0_83, %c0_84] : memref<9x128x128xbf16, #tpu.memory_space<vmem>>, vector<1x128x128xbf16>
    %107 = vector.shape_cast %106 : vector<1x128x128xbf16> to vector<128x128xbf16>
    %cst_85 = arith.constant dense<0.000000e+00> : vector<192x128xf32>
    %108 = tpu.matmul %105, %107, %cst_85 {dimension_numbers = #tpu.dot_dimension_numbers<[1], [0], [0], [1], [0, 0, 1, 1], [], []>} : vector<192x128xbf16>, vector<128x128xbf16>, vector<192x128xf32> -> vector<192x128xf32>
    %109 = arith.addf %103, %108 : vector<192x128xf32>
    %c223 = arith.constant 223 : index
    %c0_86 = arith.constant 0 : index
    %110 = vector.load %arg10[%c223, %c0_86] : memref<448x128xf32, #tpu.memory_space<vmem>>, vector<192x128xf32>
    %111 = arith.truncf %110 : vector<192x128xf32> to vector<192x128xbf16>
    %c3_87 = arith.constant 3 : index
    %c0_88 = arith.constant 0 : index
    %c0_89 = arith.constant 0 : index
    %112 = vector.load %arg5[%c3_87, %c0_88, %c0_89] : memref<9x128x128xbf16, #tpu.memory_space<vmem>>, vector<1x128x128xbf16>
    %113 = vector.shape_cast %112 : vector<1x128x128xbf16> to vector<128x128xbf16>
    %cst_90 = arith.constant dense<0.000000e+00> : vector<192x128xf32>
    %114 = tpu.matmul %111, %113, %cst_90 {dimension_numbers = #tpu.dot_dimension_numbers<[1], [0], [0], [1], [0, 0, 1, 1], [], []>} : vector<192x128xbf16>, vector<128x128xbf16>, vector<192x128xf32> -> vector<192x128xf32>
    %115 = arith.addf %109, %114 : vector<192x128xf32>
    %c224 = arith.constant 224 : index
    %c0_91 = arith.constant 0 : index
    %116 = vector.load %arg10[%c224, %c0_91] : memref<448x128xf32, #tpu.memory_space<vmem>>, vector<192x128xf32>
    %117 = arith.truncf %116 : vector<192x128xf32> to vector<192x128xbf16>
    %c4_92 = arith.constant 4 : index
    %c0_93 = arith.constant 0 : index
    %c0_94 = arith.constant 0 : index
    %118 = vector.load %arg5[%c4_92, %c0_93, %c0_94] : memref<9x128x128xbf16, #tpu.memory_space<vmem>>, vector<1x128x128xbf16>
    %119 = vector.shape_cast %118 : vector<1x128x128xbf16> to vector<128x128xbf16>
    %cst_95 = arith.constant dense<0.000000e+00> : vector<192x128xf32>
    %120 = tpu.matmul %117, %119, %cst_95 {dimension_numbers = #tpu.dot_dimension_numbers<[1], [0], [0], [1], [0, 0, 1, 1], [], []>} : vector<192x128xbf16>, vector<128x128xbf16>, vector<192x128xf32> -> vector<192x128xf32>
    %121 = arith.addf %115, %120 : vector<192x128xf32>
    %c225 = arith.constant 225 : index
    %c0_96 = arith.constant 0 : index
    %122 = vector.load %arg10[%c225, %c0_96] : memref<448x128xf32, #tpu.memory_space<vmem>>, vector<192x128xf32>
    %123 = arith.truncf %122 : vector<192x128xf32> to vector<192x128xbf16>
    %c5_97 = arith.constant 5 : index
    %c0_98 = arith.constant 0 : index
    %c0_99 = arith.constant 0 : index
    %124 = vector.load %arg5[%c5_97, %c0_98, %c0_99] : memref<9x128x128xbf16, #tpu.memory_space<vmem>>, vector<1x128x128xbf16>
    %125 = vector.shape_cast %124 : vector<1x128x128xbf16> to vector<128x128xbf16>
    %cst_100 = arith.constant dense<0.000000e+00> : vector<192x128xf32>
    %126 = tpu.matmul %123, %125, %cst_100 {dimension_numbers = #tpu.dot_dimension_numbers<[1], [0], [0], [1], [0, 0, 1, 1], [], []>} : vector<192x128xbf16>, vector<128x128xbf16>, vector<192x128xf32> -> vector<192x128xf32>
    %127 = arith.addf %121, %126 : vector<192x128xf32>
    %c247 = arith.constant 247 : index
    %c0_101 = arith.constant 0 : index
    %128 = vector.load %arg10[%c247, %c0_101] : memref<448x128xf32, #tpu.memory_space<vmem>>, vector<192x128xf32>
    %129 = arith.truncf %128 : vector<192x128xf32> to vector<192x128xbf16>
    %c6_102 = arith.constant 6 : index
    %c0_103 = arith.constant 0 : index
    %c0_104 = arith.constant 0 : index
    %130 = vector.load %arg5[%c6_102, %c0_103, %c0_104] : memref<9x128x128xbf16, #tpu.memory_space<vmem>>, vector<1x128x128xbf16>
    %131 = vector.shape_cast %130 : vector<1x128x128xbf16> to vector<128x128xbf16>
    %cst_105 = arith.constant dense<0.000000e+00> : vector<192x128xf32>
    %132 = tpu.matmul %129, %131, %cst_105 {dimension_numbers = #tpu.dot_dimension_numbers<[1], [0], [0], [1], [0, 0, 1, 1], [], []>} : vector<192x128xbf16>, vector<128x128xbf16>, vector<192x128xf32> -> vector<192x128xf32>
    %133 = arith.addf %127, %132 : vector<192x128xf32>
    %c248 = arith.constant 248 : index
    %c0_106 = arith.constant 0 : index
    %134 = vector.load %arg10[%c248, %c0_106] : memref<448x128xf32, #tpu.memory_space<vmem>>, vector<192x128xf32>
    %135 = arith.truncf %134 : vector<192x128xf32> to vector<192x128xbf16>
    %c7_107 = arith.constant 7 : index
    %c0_108 = arith.constant 0 : index
    %c0_109 = arith.constant 0 : index
    %136 = vector.load %arg5[%c7_107, %c0_108, %c0_109] : memref<9x128x128xbf16, #tpu.memory_space<vmem>>, vector<1x128x128xbf16>
    %137 = vector.shape_cast %136 : vector<1x128x128xbf16> to vector<128x128xbf16>
    %cst_110 = arith.constant dense<0.000000e+00> : vector<192x128xf32>
    %138 = tpu.matmul %135, %137, %cst_110 {dimension_numbers = #tpu.dot_dimension_numbers<[1], [0], [0], [1], [0, 0, 1, 1], [], []>} : vector<192x128xbf16>, vector<128x128xbf16>, vector<192x128xf32> -> vector<192x128xf32>
    %139 = arith.addf %133, %138 : vector<192x128xf32>
    %c249 = arith.constant 249 : index
    %c0_111 = arith.constant 0 : index
    %140 = vector.load %arg10[%c249, %c0_111] : memref<448x128xf32, #tpu.memory_space<vmem>>, vector<192x128xf32>
    %141 = arith.truncf %140 : vector<192x128xf32> to vector<192x128xbf16>
    %c8_112 = arith.constant 8 : index
    %c0_113 = arith.constant 0 : index
    %c0_114 = arith.constant 0 : index
    %142 = vector.load %arg5[%c8_112, %c0_113, %c0_114] : memref<9x128x128xbf16, #tpu.memory_space<vmem>>, vector<1x128x128xbf16>
    %143 = vector.shape_cast %142 : vector<1x128x128xbf16> to vector<128x128xbf16>
    %cst_115 = arith.constant dense<0.000000e+00> : vector<192x128xf32>
    %144 = tpu.matmul %141, %143, %cst_115 {dimension_numbers = #tpu.dot_dimension_numbers<[1], [0], [0], [1], [0, 0, 1, 1], [], []>} : vector<192x128xbf16>, vector<128x128xbf16>, vector<192x128xf32> -> vector<192x128xf32>
    %145 = arith.addf %139, %144 : vector<192x128xf32>
    %c0_116 = arith.constant 0 : index
    %c0_117 = arith.constant 0 : index
    %146 = vector.load %arg6[%c0_116, %c0_117] : memref<1x128xf32, #tpu.memory_space<vmem>>, vector<1x128xf32>
    %147 = vector.broadcast %146 : vector<1x128xf32> to vector<192x128xf32>
    %148 = arith.addf %145, %147 : vector<192x128xf32>
    %cst_118 = arith.constant 0.000000e+00 : f32
    %149 = vector.broadcast %cst_118 : f32 to vector<192x128xf32>
    %150 = arith.maximumf %148, %149 : vector<192x128xf32>
    %151 = arith.truncf %150 : vector<192x128xf32> to vector<192x128xbf16>
    %c0_119 = arith.constant 0 : index
    %c0_120 = arith.constant 0 : index
    %152 = vector.load %arg7[%c0_119, %c0_120] : memref<128x128xbf16, #tpu.memory_space<vmem>>, vector<128x128xbf16>
    %cst_121 = arith.constant dense<0.000000e+00> : vector<192x128xf32>
    %153 = tpu.matmul %151, %152, %cst_121 {dimension_numbers = #tpu.dot_dimension_numbers<[1], [0], [0], [1], [0, 0, 1, 1], [], []>} : vector<192x128xbf16>, vector<128x128xbf16>, vector<192x128xf32> -> vector<192x128xf32>
    %c0_122 = arith.constant 0 : index
    %c0_123 = arith.constant 0 : index
    %154 = vector.load %arg8[%c0_122, %c0_123] : memref<1x128xf32, #tpu.memory_space<vmem>>, vector<1x128xf32>
    %155 = vector.broadcast %154 : vector<1x128xf32> to vector<192x128xf32>
    %156 = arith.addf %153, %155 : vector<192x128xf32>
    %c0_124 = arith.constant 0 : index
    %c192 = arith.constant 192 : index
    %c0_125 = arith.constant 0 : index
    %157 = vector.load %arg1[%c0_124, %c192, %c0_125] : memref<1x384x128xbf16, #tpu.memory_space<vmem>>, vector<1x192x128xbf16>
    %158 = vector.shape_cast %157 : vector<1x192x128xbf16> to vector<192x128xbf16>
    %159 = arith.extf %158 : vector<192x128xbf16> to vector<192x128xf32>
    %160 = arith.addf %156, %159 : vector<192x128xf32>
    %cst_126 = arith.constant 0.000000e+00 : f32
    %161 = vector.broadcast %cst_126 : f32 to vector<192x128xf32>
    %162 = arith.maximumf %160, %161 : vector<192x128xf32>
    %c0_127 = arith.constant 0 : index
    %c192_128 = arith.constant 192 : index
    %c0_129 = arith.constant 0 : index
    %163 = vector.load %arg9[%c0_127, %c192_128, %c0_129] : memref<1x384x128xf32, #tpu.memory_space<vmem>>, vector<1x192x128xf32>
    %164 = vector.shape_cast %163 : vector<1x192x128xf32> to vector<192x128xf32>
    %165 = vector.shape_cast %162 : vector<192x128xf32> to vector<1x192x128xf32>
    tpu.vector_store %arg9[%c0_127, %c192_128, %c0_129], %165 {strides = array<i32>} : memref<1x384x128xf32, #tpu.memory_space<vmem>>, vector<1x192x128xf32>,
    return
  }
  func.func @transform_0(%arg0: i32) -> (i32, i32, i32) {
    %c0_i32 = arith.constant 0 : i32
    %c0_i32_0 = arith.constant 0 : i32
    %c0_i32_1 = arith.constant 0 : i32
    return %arg0, %c0_i32, %c0_i32_0 : i32, i32, i32
  }
  func.func @transform_1(%arg0: i32) -> (i32, i32) {
    %c0_i32 = arith.constant 0 : i32
    %c0_i32_0 = arith.constant 0 : i32
    %c0_i32_1 = arith.constant 0 : i32
    return %c0_i32, %c0_i32_0 : i32, i32
  }
  func.func @transform_2(%arg0: i32) -> (i32, i32) {
    %c0_i32 = arith.constant 0 : i32
    %c0_i32_0 = arith.constant 0 : i32
    %c0_i32_1 = arith.constant 0 : i32
    return %c0_i32, %c0_i32_0 : i32, i32
  }
  func.func @transform_3(%arg0: i32) -> (i32, i32) {
    %c0_i32 = arith.constant 0 : i32
    %c0_i32_0 = arith.constant 0 : i32
    %c0_i32_1 = arith.constant 0 : i32
    return %c0_i32, %c0_i32_0 : i32, i32
  }
  func.func @transform_4(%arg0: i32) -> (i32, i32, i32) {
    %c0_i32 = arith.constant 0 : i32
    %c0_i32_0 = arith.constant 0 : i32
    %c0_i32_1 = arith.constant 0 : i32
    %c0_i32_2 = arith.constant 0 : i32
    return %c0_i32, %c0_i32_0, %c0_i32_1 : i32, i32, i32
  }
  func.func @transform_5(%arg0: i32) -> (i32, i32) {
    %c0_i32 = arith.constant 0 : i32
    %c0_i32_0 = arith.constant 0 : i32
    %c0_i32_1 = arith.constant 0 : i32
    return %c0_i32, %c0_i32_0 : i32, i32
  }
  func.func @transform_6(%arg0: i32) -> (i32, i32) {
    %c0_i32 = arith.constant 0 : i32
    %c0_i32_0 = arith.constant 0 : i32
    %c0_i32_1 = arith.constant 0 : i32
    return %c0_i32, %c0_i32_0 : i32, i32
  }
  func.func @transform_7(%arg0: i32) -> (i32, i32) {
    %c0_i32 = arith.constant 0 : i32
    %c0_i32_0 = arith.constant 0 : i32
    %c0_i32_1 = arith.constant 0 : i32
    return %c0_i32, %c0_i32_0 : i32, i32
  }
  func.func @transform_8(%arg0: i32) -> (i32, i32, i32) {
    %c0_i32 = arith.constant 0 : i32
    %c0_i32_0 = arith.constant 0 : i32
    %c0_i32_1 = arith.constant 0 : i32
    return %arg0, %c0_i32, %c0_i32_0 : i32, i32, i32
  }
}

</mosaic_0001>

<llo_original>
// kernel: tpu_custom_call.1
$region0: #{tpu_custom_call.1}
  #allocation0 [shape = 'u32[]', space=smem, size = 0x4, offset = 0x4, fixed_abs, tag = 'smem constant byte address 0x4 - core index']
  #allocation1 [shape = 'u32[144,128]{1,0:T(1,128)}', space=vmem, size = 0x12000, scoped, tag = 'internal scratch']
  #allocation2 [shape = 'f32[448,128]{1,0:T(8,128)}', space=vmem, size = 0x38000, scoped, tag = 'scratch operand']
  %s0 = inlined_call_operand.hbm [shape: bf16[2,384,128], index: 0, kind: input, shape index: {}]
  %s1 = inlined_call_operand.hbm [shape: f32[384,1], index: 1, kind: input, shape index: {}]
  %s2 = inlined_call_operand.hbm [shape: bf16[128,128], index: 2, kind: input, shape index: {}]
  %s3 = inlined_call_operand.hbm [shape: f32[1,128], index: 3, kind: input, shape index: {}]
  %s4 = inlined_call_operand.hbm [shape: bf16[9,128,128], index: 4, kind: input, shape index: {}]
  %s5 = inlined_call_operand.hbm [shape: f32[1,128], index: 5, kind: input, shape index: {}]
  %s6 = inlined_call_operand.hbm [shape: bf16[128,128], index: 6, kind: input, shape index: {}]
  %s7 = inlined_call_operand.hbm [shape: f32[1,128], index: 7, kind: input, shape index: {}]
  %s8 = inlined_call_operand.hbm [shape: f32[2,384,128], index: 8, kind: output, shape index: {}]
  %s9 = sld [smem:[#allocation0]]
  $region97: #{tpu_custom_call.1} parent=0
    _
  %s11 = ssub.s32 1, %s9
  %s12 = scalar_select 0, %s11, %s9
  $region1: #{tpu_custom_call.1} parent=0
    #allocation3 [shape = 'u8[196608]{0}', space=vmem, size = 0x30000, scoped, tag = 'input window, operand 0']
    #allocation4 [shape = 's32[2]{0}', space=sflag, size = 0x8, scoped, tag = 'scoped memory for tpu_custom_call.1']
    #allocation5 [shape = 's32[2]{0}', space=sflag, size = 0x8, scoped, tag = 'scoped memory for tpu_custom_call.1']
    #allocation6 [shape = 'u8[196608]{0}', space=vmem, size = 0x30000, scoped, tag = 'input window, operand 1, single buffered']
    #allocation7 [shape = 's32[1]{0}', space=sflag, size = 0x4, scoped, tag = 'scoped memory for tpu_custom_call.1']
    #allocation8 [shape = 'u8[32768]{0}', space=vmem, size = 0x8000, scoped, tag = 'input window, operand 2, single buffered']
    #allocation9 [shape = 'u8[512]{0}', space=vmem, size = 0x400, scoped, tag = 'input window, operand 3, single buffered']
    #allocation10 [shape = 's32[1]{0}', space=sflag, size = 0x4, scoped, tag = 'scoped memory for tpu_custom_call.1']
    #allocation11 [shape = 'u8[294912]{0}', space=vmem, size = 0x48000, scoped, tag = 'input window, operand 4, single buffered']
    #allocation12 [shape = 'u8[512]{0}', space=vmem, size = 0x400, scoped, tag = 'input window, operand 5, single buffered']
    #allocation13 [shape = 's32[1]{0}', space=sflag, size = 0x4, scoped, tag = 'scoped memory for tpu_custom_call.1']
    #allocation14 [shape = 'u8[32768]{0}', space=vmem, size = 0x8000, scoped, tag = 'input window, operand 6, single buffered']
    #allocation15 [shape = 'u8[512]{0}', space=vmem, size = 0x400, scoped, tag = 'input window, operand 7, single buffered']
    #allocation16 [shape = 's32[1]{0}', space=sflag, size = 0x4, scoped, tag = 'scoped memory for tpu_custom_call.1']
    #allocation17 [shape = 'u8[393216]{0}', space=vmem, size = 0x60000, scoped, tag = 'output window, operand 0']
    %13 = vsyncpa [#allocation4], 0
    %s14 = scalar_lea.sflag [#allocation4], 1
    %15 = vsyncpa %s14, 0
    %16 = vsyncpa [#allocation7], 0
    %17 = vsyncpa [#allocation10], 0
    %18 = vsyncpa [#allocation13], 0
    %19 = vsyncpa [#allocation16], 0
    %20 = vsyncpa [#allocation5], 0
    %s21 = scalar_lea.sflag [#allocation5], 1
    %22 = vsyncpa %s21, 0
    loop: start=0, step=1, limit=4
    $region2: #{tpu_custom_call.1} parent=1 // loop_pre_header
      _
    $region3: #{tpu_custom_call.1} parent=1 // loop_header
      %s24 = sphi 0, %s28
      %p25 = scmp.ge.s32.totalorder %s24, 4
      %s34 = sphi 0, %s36
      %s37 = sphi 0, %s34
      %s38 = sphi 0, %s37
      %s54 = sphi 0, %s38
      %s58 = sphi 0, %s58
      %s60 = sphi 0, %s58
      %s61 = sphi 0, %s60
      %s75 = sphi 0, %s61
      %s79 = sphi 0, %s79
      %s81 = sphi 0, %s79
      %s82 = sphi 0, %s81
      %s96 = sphi 0, %s82
      %s100 = sphi 0, %s100
      %s102 = sphi 0, %s100
      %s103 = sphi 0, %s102
      %s117 = sphi 0, %s103
      %s121 = sphi 0, %s121
      %s123 = sphi 0, %s121
      %s124 = sphi 0, %s123
      %s138 = sphi 0, %s124
      %s142 = sphi 0, %s142
      %s144 = sphi 0, %s142
      %s145 = sphi 0, %s144
      %s159 = sphi 0, %s145
      %s163 = sphi 0, %s163
      %s165 = sphi 0, %s163
      %s166 = sphi 0, %s165
      %s180 = sphi 0, %s166
      %s184 = sphi 0, %s184
      %s186 = sphi 0, %s184
      %s187 = sphi 0, %s186
      %s201 = sphi 0, %s187
      %s207 = sphi 0, %s209
      %s210 = sphi 0, %s207
      %s211 = sphi 0, %s210
      %s227 = sphi 0, %s211
    $region4: #{tpu_custom_call.1} parent=1 // loop_header_branch
      %27 = sbr.rel (%p25) target = $region8
    $region5: #{tpu_custom_call.1} parent=1 // loop_body
      %s29 = ssub.s32 %s24, 1
      %s30 = ssub.s32 %s24, 2
      %s31 = sadd.s32 %s24, 1
      %s32 = ssub.s32 %s24, %s31
      %p33 = scmp.eq.s32.totalorder %s32, 0
      %s35 = sadd.s32 %s34, 1
      %s36 = scalar_select %p33, %s34, %s35
      %p39 = pneg %p33
      %p40 = scmp.eq.s32.totalorder %s24, 1
      %p41 = por %p39, %p40
      %p42 = scmp.ne.s32.totalorder %s34, %s37
      %p43 = scmp.eq.s32.totalorder %s24, 0
      %p44 = por %p42, %p43
      %p45 = scmp.ne.s32.totalorder %s34, %s37
      %p46 = scmp.eq.s32.totalorder %s29, 1
      %p47 = por %p45, %p46
      %p48 = scmp.ne.s32.totalorder %s37, %s38
      %p49 = scmp.eq.s32.totalorder %s29, 0
      %p50 = por %p48, %p49
      %p51 = scmp.ne.s32.totalorder %s37, %s38
      %p52 = scmp.eq.s32.totalorder %s30, 1
      %p53 = por %p51, %p52
      %p55 = scmp.ne.s32.totalorder %s38, %s54
      %p56 = scmp.eq.s32.totalorder %s30, 0
      %p57 = por %p55, %p56
      %s59 = sadd.s32 %s58, 1
      %p62 = scmp.eq.s32.totalorder %s24, 1
      %p63 = scmp.ne.s32.totalorder %s58, %s60
      %p64 = scmp.eq.s32.totalorder %s24, 0
      %p65 = por %p63, %p64
      %p66 = scmp.ne.s32.totalorder %s58, %s60
      %p67 = scmp.eq.s32.totalorder %s29, 1
      %p68 = por %p66, %p67
      %p69 = scmp.ne.s32.totalorder %s60, %s61
      %p70 = scmp.eq.s32.totalorder %s29, 0
      %p71 = por %p69, %p70
      %p72 = scmp.ne.s32.totalorder %s60, %s61
      %p73 = scmp.eq.s32.totalorder %s30, 1
      %p74 = por %p72, %p73
      %p76 = scmp.ne.s32.totalorder %s61, %s75
      %p77 = scmp.eq.s32.totalorder %s30, 0
      %p78 = por %p76, %p77
      %s80 = sadd.s32 %s79, 1
      %p83 = scmp.eq.s32.totalorder %s24, 1
      %p84 = scmp.ne.s32.totalorder %s79, %s81
      %p85 = scmp.eq.s32.totalorder %s24, 0
      %p86 = por %p84, %p85
      %p87 = scmp.ne.s32.totalorder %s79, %s81
      %p88 = scmp.eq.s32.totalorder %s29, 1
      %p89 = por %p87, %p88
      %p90 = scmp.ne.s32.totalorder %s81, %s82
      %p91 = scmp.eq.s32.totalorder %s29, 0
      %p92 = por %p90, %p91
      %p93 = scmp.ne.s32.totalorder %s81, %s82
      %p94 = scmp.eq.s32.totalorder %s30, 1
      %p95 = por %p93, %p94
      %p97 = scmp.ne.s32.totalorder %s82, %s96
      %p98 = scmp.eq.s32.totalorder %s30, 0
      %p99 = por %p97, %p98
      %s101 = sadd.s32 %s100, 1
      %p104 = scmp.eq.s32.totalorder %s24, 1
      %p105 = scmp.ne.s32.totalorder %s100, %s102
      %p106 = scmp.eq.s32.totalorder %s24, 0
      %p107 = por %p105, %p106
      %p108 = scmp.ne.s32.totalorder %s100, %s102
      %p109 = scmp.eq.s32.totalorder %s29, 1
      %p110 = por %p108, %p109
      %p111 = scmp.ne.s32.totalorder %s102, %s103
      %p112 = scmp.eq.s32.totalorder %s29, 0
      %p113 = por %p111, %p112
      %p114 = scmp.ne.s32.totalorder %s102, %s103
      %p115 = scmp.eq.s32.totalorder %s30, 1
      %p116 = por %p114, %p115
      %p118 = scmp.ne.s32.totalorder %s103, %s117
      %p119 = scmp.eq.s32.totalorder %s30, 0
      %p120 = por %p118, %p119
      %s122 = sadd.s32 %s121, 1
      %p125 = scmp.eq.s32.totalorder %s24, 1
      %p126 = scmp.ne.s32.totalorder %s121, %s123
      %p127 = scmp.eq.s32.totalorder %s24, 0
      %p128 = por %p126, %p127
      %p129 = scmp.ne.s32.totalorder %s121, %s123
      %p130 = scmp.eq.s32.totalorder %s29, 1
      %p131 = por %p129, %p130
      %p132 = scmp.ne.s32.totalorder %s123, %s124
      %p133 = scmp.eq.s32.totalorder %s29, 0
      %p134 = por %p132, %p133
      %p135 = scmp.ne.s32.totalorder %s123, %s124
      %p136 = scmp.eq.s32.totalorder %s30, 1
      %p137 = por %p135, %p136
      %p139 = scmp.ne.s32.totalorder %s124, %s138
      %p140 = scmp.eq.s32.totalorder %s30, 0
      %p141 = por %p139, %p140
      %s143 = sadd.s32 %s142, 1
      %p146 = scmp.eq.s32.totalorder %s24, 1
      %p147 = scmp.ne.s32.totalorder %s142, %s144
      %p148 = scmp.eq.s32.totalorder %s24, 0
      %p149 = por %p147, %p148
      %p150 = scmp.ne.s32.totalorder %s142, %s144
      %p151 = scmp.eq.s32.totalorder %s29, 1
      %p152 = por %p150, %p151
      %p153 = scmp.ne.s32.totalorder %s144, %s145
      %p154 = scmp.eq.s32.totalorder %s29, 0
      %p155 = por %p153, %p154
      %p156 = scmp.ne.s32.totalorder %s144, %s145
      %p157 = scmp.eq.s32.totalorder %s30, 1
      %p158 = por %p156, %p157
      %p160 = scmp.ne.s32.totalorder %s145, %s159
      %p161 = scmp.eq.s32.totalorder %s30, 0
      %p162 = por %p160, %p161
      %s164 = sadd.s32 %s163, 1
      %p167 = scmp.eq.s32.totalorder %s24, 1
      %p168 = scmp.ne.s32.totalorder %s163, %s165
      %p169 = scmp.eq.s32.totalorder %s24, 0
      %p170 = por %p168, %p169
      %p171 = scmp.ne.s32.totalorder %s163, %s165
      %p172 = scmp.eq.s32.totalorder %s29, 1
      %p173 = por %p171, %p172
      %p174 = scmp.ne.s32.totalorder %s165, %s166
      %p175 = scmp.eq.s32.totalorder %s29, 0
      %p176 = por %p174, %p175
      %p177 = scmp.ne.s32.totalorder %s165, %s166
      %p178 = scmp.eq.s32.totalorder %s30, 1
      %p179 = por %p177, %p178
      %p181 = scmp.ne.s32.totalorder %s166, %s180
      %p182 = scmp.eq.s32.totalorder %s30, 0
      %p183 = por %p181, %p182
      %s185 = sadd.s32 %s184, 1
      %p188 = scmp.eq.s32.totalorder %s24, 1
      %p189 = scmp.ne.s32.totalorder %s184, %s186
      %p190 = scmp.eq.s32.totalorder %s24, 0
      %p191 = por %p189, %p190
      %p192 = scmp.ne.s32.totalorder %s184, %s186
      %p193 = scmp.eq.s32.totalorder %s29, 1
      %p194 = por %p192, %p193
      %p195 = scmp.ne.s32.totalorder %s186, %s187
      %p196 = scmp.eq.s32.totalorder %s29, 0
      %p197 = por %p195, %p196
      %p198 = scmp.ne.s32.totalorder %s186, %s187
      %p199 = scmp.eq.s32.totalorder %s30, 1
      %p200 = por %p198, %p199
      %p202 = scmp.ne.s32.totalorder %s187, %s201
      %p203 = scmp.eq.s32.totalorder %s30, 0
      %p204 = por %p202, %p203
      %s205 = ssub.s32 %s24, %s31
      %p206 = scmp.eq.s32.totalorder %s205, 0
      %s208 = sadd.s32 %s207, 1
      %s209 = scalar_select %p206, %s207, %s208
      %p212 = pneg %p206
      %p213 = scmp.eq.s32.totalorder %s24, 1
      %p214 = por %p212, %p213
      %p215 = scmp.ne.s32.totalorder %s207, %s210
      %p216 = scmp.eq.s32.totalorder %s24, 0
      %p217 = por %p215, %p216
      %p218 = scmp.ne.s32.totalorder %s207, %s210
      %p219 = scmp.eq.s32.totalorder %s29, 1
      %p220 = por %p218, %p219
      %p221 = scmp.ne.s32.totalorder %s210, %s211
      %p222 = scmp.eq.s32.totalorder %s29, 0
      %p223 = por %p221, %p222
      %p224 = scmp.ne.s32.totalorder %s210, %s211
      %p225 = scmp.eq.s32.totalorder %s30, 1
      %p226 = por %p224, %p225
      %p228 = scmp.ne.s32.totalorder %s211, %s227
      %p229 = scmp.eq.s32.totalorder %s30, 0
      %p230 = por %p228, %p229
      %p231 = scmp.le.s32.totalorder 1, %s24
      %p232 = scmp.lt.s32.totalorder %s24, 3
      %p233 = pnand %p231, %p232
      %p234 = pneg %p233
      // Predicated region
      $region9: #{tpu_custom_call.1} parent=5 // pred_check
        _
      $region10: #{tpu_custom_call.1} parent=5 // pred_check_branch
        %236 = sbr.rel (%p233) target = $region12
      $region11: #{tpu_custom_call.1} parent=5 // pred_region
        %s237 = ssub.s32 %s24, 1
        // Predicated region
        $region13: #{tpu_custom_call.1} parent=11 // pred_check
          %p238 = pneg %p71
        $region14: #{tpu_custom_call.1} parent=11 // pred_check_branch
          %240 = sbr.rel (%p238) target = $region16
        $region15: #{tpu_custom_call.1} parent=11 // pred_region
          %s242 = ssub.s32 6144, 6144
          %243 = vsyncadd [#allocation7], %s242
          %s244 = sshll.u32 [#allocation6], 4
          %s245 = int_to_ptr.vmem [resolvable:$true] %s244
          %250 = dma.hbm_to_vmem [thread:$0]  %s1, 6144, %s245, [#allocation7], 128, 128, 8
        $region16: #{tpu_custom_call.1} parent=11 // pred_fallthru
          _
        // Predicated region
        $region17: #{tpu_custom_call.1} parent=11 // pred_check
          %p251 = pneg %p92
        $region18: #{tpu_custom_call.1} parent=11 // pred_check_branch
          %253 = sbr.rel (%p251) target = $region20
        $region19: #{tpu_custom_call.1} parent=11 // pred_region
          %s255 = ssub.s32 1024, 1024
          %256 = vsyncadd [#allocation7], %s255
          %s257 = sshll.u32 [#allocation8], 4
          %s258 = int_to_ptr.vmem [resolvable:$true] %s257
          %263 = dma.hbm_to_vmem [thread:$0]  %s2, 1024, %s258, [#allocation7], 64, 64, 4
        $region20: #{tpu_custom_call.1} parent=11 // pred_fallthru
          _
        // Predicated region
        $region21: #{tpu_custom_call.1} parent=11 // pred_check
          %p264 = pneg %p113
        $region22: #{tpu_custom_call.1} parent=11 // pred_check_branch
          %266 = sbr.rel (%p264) target = $region24
        $region23: #{tpu_custom_call.1} parent=11 // pred_region
          %s268 = ssub.s32 16, 16
          %269 = vsyncadd [#allocation10], %s268
          %s271 = sshll.u32 [#allocation9], 4
          %s272 = int_to_ptr.vmem [resolvable:$true] %s271
          %274 = dma.hbm_to_vmem [thread:$0]  %s3, 16, %s272, [#allocation10]
        $region24: #{tpu_custom_call.1} parent=11 // pred_fallthru
          _
        // Predicated region
        $region25: #{tpu_custom_call.1} parent=11 // pred_check
          %p275 = pneg %p134
        $region26: #{tpu_custom_call.1} parent=11 // pred_check_branch
          %277 = sbr.rel (%p275) target = $region28
        $region27: #{tpu_custom_call.1} parent=11 // pred_region
          %s279 = ssub.s32 9216, 9216
          %280 = vsyncadd [#allocation10], %s279
          %s281 = sshll.u32 [#allocation11], 4
          %s282 = int_to_ptr.vmem [resolvable:$true] %s281
          %287 = dma.hbm_to_vmem [thread:$0]  %s4, 9216, %s282, [#allocation10], 64, 64, 4
        $region28: #{tpu_custom_call.1} parent=11 // pred_fallthru
          _
        // Predicated region
        $region29: #{tpu_custom_call.1} parent=11 // pred_check
          %p288 = pneg %p155
        $region30: #{tpu_custom_call.1} parent=11 // pred_check_branch
          %290 = sbr.rel (%p288) target = $region32
        $region31: #{tpu_custom_call.1} parent=11 // pred_region
          %s292 = ssub.s32 16, 16
          %293 = vsyncadd [#allocation13], %s292
          %s295 = sshll.u32 [#allocation12], 4
          %s296 = int_to_ptr.vmem [resolvable:$true] %s295
          %298 = dma.hbm_to_vmem [thread:$0]  %s5, 16, %s296, [#allocation13]
        $region32: #{tpu_custom_call.1} parent=11 // pred_fallthru
          _
        // Predicated region
        $region33: #{tpu_custom_call.1} parent=11 // pred_check
          %p299 = pneg %p176
        $region34: #{tpu_custom_call.1} parent=11 // pred_check_branch
          %301 = sbr.rel (%p299) target = $region36
        $region35: #{tpu_custom_call.1} parent=11 // pred_region
          %s303 = ssub.s32 1024, 1024
          %304 = vsyncadd [#allocation13], %s303
          %s305 = sshll.u32 [#allocation14], 4
          %s306 = int_to_ptr.vmem [resolvable:$true] %s305
          %311 = dma.hbm_to_vmem [thread:$0]  %s6, 1024, %s306, [#allocation13], 64, 64, 4
        $region36: #{tpu_custom_call.1} parent=11 // pred_fallthru
          _
        // Predicated region
        $region37: #{tpu_custom_call.1} parent=11 // pred_check
          %p312 = pneg %p197
        $region38: #{tpu_custom_call.1} parent=11 // pred_check_branch
          %314 = sbr.rel (%p312) target = $region40
        $region39: #{tpu_custom_call.1} parent=11 // pred_region
          %s316 = ssub.s32 16, 16
          %317 = vsyncadd [#allocation16], %s316
          %s319 = sshll.u32 [#allocation15], 4
          %s320 = int_to_ptr.vmem [resolvable:$true] %s319
          %322 = dma.hbm_to_vmem [thread:$0]  %s7, 16, %s320, [#allocation16]
        $region40: #{tpu_custom_call.1} parent=11 // pred_fallthru
          _
      $region12: #{tpu_custom_call.1} parent=5 // pred_fallthru
        _
      %p323 = scmp.lt.s32.totalorder %s24, 2
      // Predicated region
      $region41: #{tpu_custom_call.1} parent=5 // pred_check
        %p324 = pneg %p323
      $region42: #{tpu_custom_call.1} parent=5 // pred_check_branch
        %326 = sbr.rel (%p324) target = $region44
      $region43: #{tpu_custom_call.1} parent=5 // pred_region
        // Predicated region
        $region45: #{tpu_custom_call.1} parent=43 // pred_check
          %p327 = pneg %p44
        $region46: #{tpu_custom_call.1} parent=43 // pred_check_branch
          %329 = sbr.rel (%p327) target = $region48
        $region47: #{tpu_custom_call.1} parent=43 // pred_region
          %s330 = sand.u32 %s34, 1
          %s331 = scalar_lea.sflag [#allocation4], %s330
          %s332 = sand.u32 %s34, 1
          %s333 = smul.addr %s332, 192
          %s334 = scalar_lea.vmem [#allocation3], %s333
          %s336 = ssub.s32 3072, 3072
          %337 = vsyncadd %s331, %s336
          %s338 = smul.addr %s24, 48
          %s339 = smul.addr %s338, 64
          %s340 = scalar_lea.hbm %s0, %s339
          %s341 = sshll.u32 %s334, 4
          %s342 = int_to_ptr.vmem [resolvable:$true] %s341
          %347 = dma.hbm_to_vmem [thread:$0]  %s340, 3072, %s342, %s331, 64, 64, 4
        $region48: #{tpu_custom_call.1} parent=43 // pred_fallthru
          _
      $region44: #{tpu_custom_call.1} parent=5 // pred_fallthru
        _
      %p348 = scmp.le.s32.totalorder 1, %s24
      %p349 = scmp.lt.s32.totalorder %s24, 3
      %p350 = pnand %p348, %p349
      %p351 = pneg %p350
      // Predicated region
      $region49: #{tpu_custom_call.1} parent=5 // pred_check
        _
      $region50: #{tpu_custom_call.1} parent=5 // pred_check_branch
        %353 = sbr.rel (%p350) target = $region52
      $region51: #{tpu_custom_call.1} parent=5 // pred_region
        %s354 = ssub.s32 %s24, 1
        %s355 = sand.u32 %s37, 1
        %s356 = scalar_lea.sflag [#allocation4], %s355
        %s357 = sand.u32 %s37, 1
        %s358 = smul.addr %s357, 192
        %s359 = scalar_lea.vmem [#allocation3], %s358
        // Predicated region
        $region53: #{tpu_custom_call.1} parent=51 // pred_check
          %p360 = pneg %p50
        $region54: #{tpu_custom_call.1} parent=51 // pred_check_branch
          %362 = sbr.rel (%p360) target = $region56
        $region55: #{tpu_custom_call.1} parent=51 // pred_region
          %363 = dma.done %s356, 3072
        $region56: #{tpu_custom_call.1} parent=51 // pred_fallthru
          _
        // Predicated region
        $region57: #{tpu_custom_call.1} parent=51 // pred_check
          %p364 = pneg %p71
        $region58: #{tpu_custom_call.1} parent=51 // pred_check_branch
          %366 = sbr.rel (%p364) target = $region60
        $region59: #{tpu_custom_call.1} parent=51 // pred_region
          %367 = dma.done [#allocation7], 6144
        $region60: #{tpu_custom_call.1} parent=51 // pred_fallthru
          _
        // Predicated region
        $region61: #{tpu_custom_call.1} parent=51 // pred_check
          %p368 = pneg %p92
        $region62: #{tpu_custom_call.1} parent=51 // pred_check_branch
          %370 = sbr.rel (%p368) target = $region64
        $region63: #{tpu_custom_call.1} parent=51 // pred_region
          %371 = dma.done [#allocation7], 1024
        $region64: #{tpu_custom_call.1} parent=51 // pred_fallthru
          _
        // Predicated region
        $region65: #{tpu_custom_call.1} parent=51 // pred_check
          %p372 = pneg %p113
        $region66: #{tpu_custom_call.1} parent=51 // pred_check_branch
          %374 = sbr.rel (%p372) target = $region68
        $region67: #{tpu_custom_call.1} parent=51 // pred_region
          %375 = dma.done [#allocation10], 16
        $region68: #{tpu_custom_call.1} parent=51 // pred_fallthru
          _
        // Predicated region
        $region69: #{tpu_custom_call.1} parent=51 // pred_check
          %p376 = pneg %p134
        $region70: #{tpu_custom_call.1} parent=51 // pred_check_branch
          %378 = sbr.rel (%p376) target = $region72
        $region71: #{tpu_custom_call.1} parent=51 // pred_region
          %379 = dma.done [#allocation10], 9216
        $region72: #{tpu_custom_call.1} parent=51 // pred_fallthru
          _
        // Predicated region
        $region73: #{tpu_custom_call.1} parent=51 // pred_check
          %p380 = pneg %p155
        $region74: #{tpu_custom_call.1} parent=51 // pred_check_branch
          %382 = sbr.rel (%p380) target = $region76
        $region75: #{tpu_custom_call.1} parent=51 // pred_region
          %383 = dma.done [#allocation13], 16
        $region76: #{tpu_custom_call.1} parent=51 // pred_fallthru
          _
        // Predicated region
        $region77: #{tpu_custom_call.1} parent=51 // pred_check
          %p384 = pneg %p176
        $region78: #{tpu_custom_call.1} parent=51 // pred_check_branch
          %386 = sbr.rel (%p384) target = $region80
        $region79: #{tpu_custom_call.1} parent=51 // pred_region
          %387 = dma.done [#allocation13], 1024
        $region80: #{tpu_custom_call.1} parent=51 // pred_fallthru
          _
        // Predicated region
        $region81: #{tpu_custom_call.1} parent=51 // pred_check
          %p388 = pneg %p197
        $region82: #{tpu_custom_call.1} parent=51 // pred_check_branch
          %390 = sbr.rel (%p388) target = $region84
        $region83: #{tpu_custom_call.1} parent=51 // pred_region
          %391 = dma.done [#allocation16], 16
        $region84: #{tpu_custom_call.1} parent=51 // pred_fallthru
          _
        %s392 = sand.u32 %s37, 1
        %s393 = scalar_lea.sflag [#allocation4], %s392
        %s394 = sand.u32 %s37, 1
        %s395 = smul.addr %s394, 192
        %s396 = scalar_lea.vmem [#allocation3], %s395
        %p397 = pneg %p50
        %p398 = pneg %p47
        %p399 = pneg %p71
        %p400 = pneg %p68
        %p401 = pneg %p92
        %p402 = pneg %p89
        %p403 = pneg %p113
        %p404 = pneg %p110
        %p405 = pneg %p134
        %p406 = pneg %p131
        %p407 = pneg %p155
        %p408 = pneg %p152
        %p409 = pneg %p176
        %p410 = pneg %p173
        %p411 = pneg %p197
        %p412 = pneg %p194
        %p413 = pneg %p223
        %p414 = pneg %p220
        %s415 = sand.u32 %s210, 1
        %s416 = scalar_lea.sflag [#allocation5], %s415
        %s417 = sand.u32 %s210, 1
        %s418 = smul.addr %s417, 384
        %s419 = scalar_lea.vmem [#allocation17], %s418
        %v421 = vld [vmem:[%s359] sm:$0xf]
        %v422 = vld [vmem:[%s359 + $0x4] sm:$0xf]
        %v423 = vld [vmem:[%s359 + $0x8] sm:$0xf]
        %v424 = vld [vmem:[%s359 + $0xc] sm:$0xf]
        %v425 = vld [vmem:[%s359 + $0x10] sm:$0xf]
        %v426 = vld [vmem:[%s359 + $0x14] sm:$0xf]
        %v427 = vld [vmem:[%s359 + $0x18] sm:$0xf]
        %v428 = vld [vmem:[%s359 + $0x1c] sm:$0xf]
        %v429 = vld [vmem:[%s359 + $0x20] sm:$0xf]
        %v430 = vld [vmem:[%s359 + $0x24] sm:$0xf]
        %v431 = vld [vmem:[%s359 + $0x28] sm:$0xf]
        %v432 = vld [vmem:[%s359 + $0x2c] sm:$0xf]
        %v433 = vld [vmem:[%s359 + $0x30] sm:$0xf]
        %v434 = vld [vmem:[%s359 + $0x34] sm:$0xf]
        %v435 = vld [vmem:[%s359 + $0x38] sm:$0xf]
        %v436 = vld [vmem:[%s359 + $0x3c] sm:$0xf]
        %v437 = vld [vmem:[%s359 + $0x40] sm:$0xf]
        %v438 = vld [vmem:[%s359 + $0x44] sm:$0xf]
        %v439 = vld [vmem:[%s359 + $0x48] sm:$0xf]
        %v440 = vld [vmem:[%s359 + $0x4c] sm:$0xf]
        %v441 = vld [vmem:[%s359 + $0x50] sm:$0xf]
        %v442 = vld [vmem:[%s359 + $0x54] sm:$0xf]
        %v443 = vld [vmem:[%s359 + $0x58] sm:$0xf]
        %v444 = vld [vmem:[%s359 + $0x5c] sm:$0xf]
        %v445 = vld [vmem:[%s359 + $0x60] sm:$0xf]
        %v446 = vld [vmem:[%s359 + $0x64] sm:$0xf]
        %v447 = vld [vmem:[%s359 + $0x68] sm:$0xf]
        %v448 = vld [vmem:[%s359 + $0x6c] sm:$0xf]
        %v449 = vld [vmem:[%s359 + $0x70] sm:$0xf]
        %v450 = vld [vmem:[%s359 + $0x74] sm:$0xf]
        %v451 = vld [vmem:[%s359 + $0x78] sm:$0xf]
        %v452 = vld [vmem:[%s359 + $0x7c] sm:$0xf]
        %v453 = vld [vmem:[%s359 + $0x80] sm:$0xf]
        %v454 = vld [vmem:[%s359 + $0x84] sm:$0xf]
        %v455 = vld [vmem:[%s359 + $0x88] sm:$0xf]
        %v456 = vld [vmem:[%s359 + $0x8c] sm:$0xf]
        %v457 = vld [vmem:[%s359 + $0x90] sm:$0xf]
        %v458 = vld [vmem:[%s359 + $0x94] sm:$0xf]
        %v459 = vld [vmem:[%s359 + $0x98] sm:$0xf]
        %v460 = vld [vmem:[%s359 + $0x9c] sm:$0xf]
        %v461 = vld [vmem:[%s359 + $0xa0] sm:$0xf]
        %v462 = vld [vmem:[%s359 + $0xa4] sm:$0xf]
        %v463 = vld [vmem:[%s359 + $0xa8] sm:$0xf]
        %v464 = vld [vmem:[%s359 + $0xac] sm:$0xf]
        %v465 = vld [vmem:[%s359 + $0xb0] sm:$0xf]
        %v466 = vld [vmem:[%s359 + $0xb4] sm:$0xf]
        %v467 = vld [vmem:[%s359 + $0xb8] sm:$0xf]
        %v468 = vld [vmem:[%s359 + $0xbc] sm:$0xf]
        %v469 = vld [vmem:[#allocation8] sm:$0xf]
        %v470 = vld [vmem:[#allocation8 + $0x4] sm:$0xf]
        %v471 = vld [vmem:[#allocation8 + $0x8] sm:$0xf]
        %v472 = vld [vmem:[#allocation8 + $0xc] sm:$0xf]
        %v473 = vld [vmem:[#allocation8 + $0x10] sm:$0xf]
        %v474 = vld [vmem:[#allocation8 + $0x14] sm:$0xf]
        %v475 = vld [vmem:[#allocation8 + $0x18] sm:$0xf]
        %v476 = vld [vmem:[#allocation8 + $0x1c] sm:$0xf]
        %v477 = vld [vmem:[#allocation8 + $0x20] sm:$0xf]
        %v478 = vld [vmem:[#allocation8 + $0x24] sm:$0xf]
        %v479 = vld [vmem:[#allocation8 + $0x28] sm:$0xf]
        %v480 = vld [vmem:[#allocation8 + $0x2c] sm:$0xf]
        %v481 = vld [vmem:[#allocation8 + $0x30] sm:$0xf]
        %v482 = vld [vmem:[#allocation8 + $0x34] sm:$0xf]
        %v483 = vld [vmem:[#allocation8 + $0x38] sm:$0xf]
        %v484 = vld [vmem:[#allocation8 + $0x3c] sm:$0xf]
        %v485 = vld [vmem:[#allocation9] sm:$0x1]
        %v487 = vlaneseq
        %v488 = vshrl.u32 %v487, 7
        %v489 = vsub.s32 0, %v488
        %v490 = vrot.slane %v485, %v489
        %v540 = vunpack.c.l.b16 %v421
        %v541 = vunpack.c.l.b16 %v422
        %v542 = vunpack.c.l.b16 %v423
        %v543 = vunpack.c.l.b16 %v424
        %v544 = vunpack.c.l.b16 %v425
        %v545 = vunpack.c.l.b16 %v426
        %v546 = vunpack.c.l.b16 %v427
        %v547 = vunpack.c.l.b16 %v428
        %v548 = vunpack.c.l.b16 %v429
        %v549 = vunpack.c.l.b16 %v430
        %v550 = vunpack.c.l.b16 %v431
        %v551 = vunpack.c.l.b16 %v432
        %v552 = vunpack.c.l.b16 %v433
        %v553 = vunpack.c.l.b16 %v434
        %v554 = vunpack.c.l.b16 %v435
        %v555 = vunpack.c.l.b16 %v436
        %v556 = vunpack.c.l.b16 %v437
        %v557 = vunpack.c.l.b16 %v438
        %v558 = vunpack.c.l.b16 %v439
        %v559 = vunpack.c.l.b16 %v440
        %v560 = vunpack.c.l.b16 %v441
        %v561 = vunpack.c.l.b16 %v442
        %v562 = vunpack.c.l.b16 %v443
        %v563 = vunpack.c.l.b16 %v444
        %v564 = vunpack.c.l.b16 %v445
        %v565 = vunpack.c.l.b16 %v446
        %v566 = vunpack.c.l.b16 %v447
        %v567 = vunpack.c.l.b16 %v448
        %v568 = vunpack.c.l.b16 %v449
        %v569 = vunpack.c.l.b16 %v450
        %v570 = vunpack.c.l.b16 %v451
        %v571 = vunpack.c.l.b16 %v452
        %v572 = vunpack.c.l.b16 %v453
        %v573 = vunpack.c.l.b16 %v454
        %v574 = vunpack.c.l.b16 %v455
        %v575 = vunpack.c.l.b16 %v456
        %v576 = vunpack.c.l.b16 %v457
        %v577 = vunpack.c.l.b16 %v458
        %v578 = vunpack.c.l.b16 %v459
        %v579 = vunpack.c.l.b16 %v460
        %v580 = vunpack.c.l.b16 %v461
        %v581 = vunpack.c.l.b16 %v462
        %v582 = vunpack.c.l.b16 %v463
        %v583 = vunpack.c.l.b16 %v464
        %v584 = vunpack.c.l.b16 %v465
        %v585 = vunpack.c.l.b16 %v466
        %v586 = vunpack.c.l.b16 %v467
        %v587 = vunpack.c.l.b16 %v468
        %v588 = vpack.c.b16 %v541, %v540
        %v589 = vpack.c.b16 %v543, %v542
        %v590 = vpack.c.b16 %v545, %v544
        %v591 = vpack.c.b16 %v547, %v546
        %v592 = vpack.c.b16 %v549, %v548
        %v593 = vpack.c.b16 %v551, %v550
        %v594 = vpack.c.b16 %v553, %v552
        %v595 = vpack.c.b16 %v555, %v554
        %v596 = vpack.c.b16 %v557, %v556
        %v597 = vpack.c.b16 %v559, %v558
        %v598 = vpack.c.b16 %v561, %v560
        %v599 = vpack.c.b16 %v563, %v562
        %v600 = vpack.c.b16 %v565, %v564
        %v601 = vpack.c.b16 %v567, %v566
        %v602 = vpack.c.b16 %v569, %v568
        %v603 = vpack.c.b16 %v571, %v570
        %v604 = vpack.c.b16 %v573, %v572
        %v605 = vpack.c.b16 %v575, %v574
        %v606 = vpack.c.b16 %v577, %v576
        %v607 = vpack.c.b16 %v579, %v578
        %v608 = vpack.c.b16 %v581, %v580
        %v609 = vpack.c.b16 %v583, %v582
        %v610 = vpack.c.b16 %v585, %v584
        %v611 = vpack.c.b16 %v587, %v586
        %v652 = vunpack.c.l.b16 %v469
        %v653 = vunpack.c.l.b16 %v470
        %v654 = vunpack.c.l.b16 %v471
        %v655 = vunpack.c.l.b16 %v472
        %v656 = vunpack.c.l.b16 %v473
        %v657 = vunpack.c.l.b16 %v474
        %v658 = vunpack.c.l.b16 %v475
        %v659 = vunpack.c.l.b16 %v476
        %v660 = vunpack.c.l.b16 %v477
        %v661 = vunpack.c.l.b16 %v478
        %v662 = vunpack.c.l.b16 %v479
        %v663 = vunpack.c.l.b16 %v480
        %v664 = vunpack.c.l.b16 %v481
        %v665 = vunpack.c.l.b16 %v482
        %v666 = vunpack.c.l.b16 %v483
        %v667 = vunpack.c.l.b16 %v484
        %v668 = vpack.c.b16 %v653, %v652
        %v669 = vpack.c.b16 %v655, %v654
        %v670 = vpack.c.b16 %v657, %v656
        %v671 = vpack.c.b16 %v659, %v658
        %v672 = vpack.c.b16 %v661, %v660
        %v673 = vpack.c.b16 %v663, %v662
        %v674 = vpack.c.b16 %v665, %v664
        %v675 = vpack.c.b16 %v667, %v666
        %684 = vmatprep.subr.bf16.mxu0 0
        %685 = vmatpush1.bf16.msra.mxu0 %v668
        %686 = vmatprep.subr.bf16.mxu0 0
        %687 = vmatpush1.bf16.msra.mxu0 %v669
        %688 = vmatprep.subr.bf16.mxu0 0
        %689 = vmatpush1.bf16.msra.mxu0 %v670
        %690 = vmatprep.subr.bf16.mxu0 0
        %691 = vmatpush1.bf16.msra.mxu0 %v671
        %692 = vmatprep.subr.bf16.mxu0 0
        %693 = vmatpush1.bf16.msra.mxu0 %v672
        %694 = vmatprep.subr.bf16.mxu0 0
        %695 = vmatpush1.bf16.msra.mxu0 %v673
        %696 = vmatprep.subr.bf16.mxu0 0
        %697 = vmatpush1.bf16.msra.mxu0 %v674
        %698 = vmatprep.subr.bf16.mxu0 0
        %699 = vmatpush1.bf16.msra.mxu0 %v675
        %700 = vmatprep.subr.bf16.mxu0 0
        %701 = vmatpush1.bf16.msra.mxu0 0
        %702 = vmatprep.subr.bf16.mxu0 0
        %703 = vmatpush1.bf16.msra.mxu0 0
        %704 = vmatprep.subr.bf16.mxu0 0
        %705 = vmatpush1.bf16.msra.mxu0 0
        %706 = vmatprep.subr.bf16.mxu0 0
        %707 = vmatpush1.bf16.msra.mxu0 0
        %708 = vmatprep.subr.bf16.mxu0 0
        %709 = vmatpush1.bf16.msra.mxu0 0
        %710 = vmatprep.subr.bf16.mxu0 0
        %711 = vmatpush1.bf16.msra.mxu0 0
        %712 = vmatprep.subr.bf16.mxu0 0
        %713 = vmatpush1.bf16.msra.mxu0 0
        %714 = vmatprep.subr.bf16.mxu0 0
        %715 = vmatpush1.bf16.msra.mxu0 0
        %716 = vmatprep.mubr.bf16.mxu0 0
        %717 = vmatmul.mubr.bf16.gmra.mrb[0].mxu0 %v588
        %v718 = vpop.f32.mrb[0].mxu0
        %v719 = vadd.f32 %v490, %v718
        %v720 = vpop.f32.mrb[0].mxu0
        %v721 = vpop.f32.mrb[0].mxu0
        %v722 = vadd.f32 %v490, %v721
        %v723 = vpop.f32.mrb[0].mxu0
        %724 = vmatprep.mubr.bf16.mxu0 0
        %725 = vmatmul.mubr.bf16.gmra.mrb[0].mxu0 %v589
        %v726 = vpop.f32.mrb[0].mxu0
        %v727 = vadd.f32 %v490, %v726
        %v728 = vpop.f32.mrb[0].mxu0
        %v729 = vpop.f32.mrb[0].mxu0
        %v730 = vadd.f32 %v490, %v729
        %v731 = vpop.f32.mrb[0].mxu0
        %732 = vmatprep.mubr.bf16.mxu0 0
        %733 = vmatmul.mubr.bf16.gmra.mrb[0].mxu0 %v590
        %v734 = vpop.f32.mrb[0].mxu0
        %v735 = vadd.f32 %v490, %v734
        %v736 = vpop.f32.mrb[0].mxu0
        %v737 = vpop.f32.mrb[0].mxu0
        %v738 = vadd.f32 %v490, %v737
        %v739 = vpop.f32.mrb[0].mxu0
        %740 = vmatprep.mubr.bf16.mxu0 0
        %741 = vmatmul.mubr.bf16.gmra.mrb[0].mxu0 %v591
        %v742 = vpop.f32.mrb[0].mxu0
        %v743 = vadd.f32 %v490, %v742
        %v744 = vpop.f32.mrb[0].mxu0
        %v745 = vpop.f32.mrb[0].mxu0
        %v746 = vadd.f32 %v490, %v745
        %v747 = vpop.f32.mrb[0].mxu0
        %748 = vmatprep.mubr.bf16.mxu0 0
        %749 = vmatmul.mubr.bf16.gmra.mrb[0].mxu0 %v592
        %v750 = vpop.f32.mrb[0].mxu0
        %v751 = vadd.f32 %v490, %v750
        %v752 = vpop.f32.mrb[0].mxu0
        %v753 = vpop.f32.mrb[0].mxu0
        %v754 = vadd.f32 %v490, %v753
        %v755 = vpop.f32.mrb[0].mxu0
        %756 = vmatprep.mubr.bf16.mxu0 0
        %757 = vmatmul.mubr.bf16.gmra.mrb[0].mxu0 %v593
        %v758 = vpop.f32.mrb[0].mxu0
        %v759 = vadd.f32 %v490, %v758
        %v760 = vpop.f32.mrb[0].mxu0
        %v761 = vpop.f32.mrb[0].mxu0
        %v762 = vadd.f32 %v490, %v761
        %v763 = vpop.f32.mrb[0].mxu0
        %764 = vmatprep.mubr.bf16.mxu0 0
        %765 = vmatmul.mubr.bf16.gmra.mrb[0].mxu0 %v594
        %v766 = vpop.f32.mrb[0].mxu0
        %v767 = vadd.f32 %v490, %v766
        %v768 = vpop.f32.mrb[0].mxu0
        %v769 = vpop.f32.mrb[0].mxu0
        %v770 = vadd.f32 %v490, %v769
        %v771 = vpop.f32.mrb[0].mxu0
        %772 = vmatprep.mubr.bf16.mxu0 0
        %773 = vmatmul.mubr.bf16.gmra.mrb[0].mxu0 %v595
        %v774 = vpop.f32.mrb[0].mxu0
        %v775 = vadd.f32 %v490, %v774
        %v776 = vpop.f32.mrb[0].mxu0
        %v777 = vpop.f32.mrb[0].mxu0
        %v778 = vadd.f32 %v490, %v777
        %v779 = vpop.f32.mrb[0].mxu0
        %780 = vmatprep.mubr.bf16.mxu0 0
        %781 = vmatmul.mubr.bf16.gmra.mrb[0].mxu0 %v596
        %v782 = vpop.f32.mrb[0].mxu0
        %v783 = vadd.f32 %v490, %v782
        %v784 = vpop.f32.mrb[0].mxu0
        %v785 = vpop.f32.mrb[0].mxu0
        %v786 = vadd.f32 %v490, %v785
        %v787 = vpop.f32.mrb[0].mxu0
        %788 = vmatprep.mubr.bf16.mxu0 0
        %789 = vmatmul.mubr.bf16.gmra.mrb[0].mxu0 %v597
        %v790 = vpop.f32.mrb[0].mxu0
        %v791 = vadd.f32 %v490, %v790
        %v792 = vpop.f32.mrb[0].mxu0
        %v793 = vpop.f32.mrb[0].mxu0
        %v794 = vadd.f32 %v490, %v793
        %v795 = vpop.f32.mrb[0].mxu0
        %796 = vmatprep.mubr.bf16.mxu0 0
        %797 = vmatmul.mubr.bf16.gmra.mrb[0].mxu0 %v598
        %v798 = vpop.f32.mrb[0].mxu0
        %v799 = vadd.f32 %v490, %v798
        %v800 = vpop.f32.mrb[0].mxu0
        %v801 = vpop.f32.mrb[0].mxu0
        %v802 = vadd.f32 %v490, %v801
        %v803 = vpop.f32.mrb[0].mxu0
        %804 = vmatprep.mubr.bf16.mxu0 0
        %805 = vmatmul.mubr.bf16.gmra.mrb[0].mxu0 %v599
        %v806 = vpop.f32.mrb[0].mxu0
        %v807 = vadd.f32 %v490, %v806
        %v808 = vpop.f32.mrb[0].mxu0
        %v809 = vpop.f32.mrb[0].mxu0
        %v810 = vadd.f32 %v490, %v809
        %v811 = vpop.f32.mrb[0].mxu0
        %812 = vmatprep.mubr.bf16.mxu0 0
        %813 = vmatmul.mubr.bf16.gmra.mrb[0].mxu0 %v600
        %v814 = vpop.f32.mrb[0].mxu0
        %v815 = vadd.f32 %v490, %v814
        %v816 = vpop.f32.mrb[0].mxu0
        %v817 = vpop.f32.mrb[0].mxu0
        %v818 = vadd.f32 %v490, %v817
        %v819 = vpop.f32.mrb[0].mxu0
        %820 = vmatprep.mubr.bf16.mxu0 0
        %821 = vmatmul.mubr.bf16.gmra.mrb[0].mxu0 %v601
        %v822 = vpop.f32.mrb[0].mxu0
        %v823 = vadd.f32 %v490, %v822
        %v824 = vpop.f32.mrb[0].mxu0
        %v825 = vpop.f32.mrb[0].mxu0
        %v826 = vadd.f32 %v490, %v825
        %v827 = vpop.f32.mrb[0].mxu0
        %828 = vmatprep.mubr.bf16.mxu0 0
        %829 = vmatmul.mubr.bf16.gmra.mrb[0].mxu0 %v602
        %v830 = vpop.f32.mrb[0].mxu0
        %v831 = vadd.f32 %v490, %v830
        %v832 = vpop.f32.mrb[0].mxu0
        %v833 = vpop.f32.mrb[0].mxu0
        %v834 = vadd.f32 %v490, %v833
        %v835 = vpop.f32.mrb[0].mxu0
        %836 = vmatprep.mubr.bf16.mxu0 0
        %837 = vmatmul.mubr.bf16.gmra.mrb[0].mxu0 %v603
        %v838 = vpop.f32.mrb[0].mxu0
        %v839 = vadd.f32 %v490, %v838
        %v840 = vpop.f32.mrb[0].mxu0
        %v841 = vpop.f32.mrb[0].mxu0
        %v842 = vadd.f32 %v490, %v841
        %v843 = vpop.f32.mrb[0].mxu0
        %844 = vmatprep.mubr.bf16.mxu0 0
        %845 = vmatmul.mubr.bf16.gmra.mrb[0].mxu0 %v604
        %v846 = vpop.f32.mrb[0].mxu0
        %v847 = vadd.f32 %v490, %v846
        %v848 = vpop.f32.mrb[0].mxu0
        %v849 = vpop.f32.mrb[0].mxu0
        %v850 = vadd.f32 %v490, %v849
        %v851 = vpop.f32.mrb[0].mxu0
        %852 = vmatprep.mubr.bf16.mxu0 0
        %853 = vmatmul.mubr.bf16.gmra.mrb[0].mxu0 %v605
        %v854 = vpop.f32.mrb[0].mxu0
        %v855 = vadd.f32 %v490, %v854
        %v856 = vpop.f32.mrb[0].mxu0
        %v857 = vpop.f32.mrb[0].mxu0
        %v858 = vadd.f32 %v490, %v857
        %v859 = vpop.f32.mrb[0].mxu0
        %860 = vmatprep.mubr.bf16.mxu0 0
        %861 = vmatmul.mubr.bf16.gmra.mrb[0].mxu0 %v606
        %v862 = vpop.f32.mrb[0].mxu0
        %v863 = vadd.f32 %v490, %v862
        %v864 = vpop.f32.mrb[0].mxu0
        %v865 = vpop.f32.mrb[0].mxu0
        %v866 = vadd.f32 %v490, %v865
        %v867 = vpop.f32.mrb[0].mxu0
        %868 = vmatprep.mubr.bf16.mxu0 0
        %869 = vmatmul.mubr.bf16.gmra.mrb[0].mxu0 %v607
        %v870 = vpop.f32.mrb[0].mxu0
        %v871 = vadd.f32 %v490, %v870
        %v872 = vpop.f32.mrb[0].mxu0
        %v873 = vpop.f32.mrb[0].mxu0
        %v874 = vadd.f32 %v490, %v873
        %v875 = vpop.f32.mrb[0].mxu0
        %876 = vmatprep.mubr.bf16.mxu0 0
        %877 = vmatmul.mubr.bf16.gmra.mrb[0].mxu0 %v608
        %v878 = vpop.f32.mrb[0].mxu0
        %v879 = vadd.f32 %v490, %v878
        %v880 = vpop.f32.mrb[0].mxu0
        %v881 = vpop.f32.mrb[0].mxu0
        %v882 = vadd.f32 %v490, %v881
        %v883 = vpop.f32.mrb[0].mxu0
        %884 = vmatprep.mubr.bf16.mxu0 0
        %885 = vmatmul.mubr.bf16.gmra.mrb[0].mxu0 %v609
        %v886 = vpop.f32.mrb[0].mxu0
        %v887 = vadd.f32 %v490, %v886
        %v888 = vpop.f32.mrb[0].mxu0
        %v889 = vpop.f32.mrb[0].mxu0
        %v890 = vadd.f32 %v490, %v889
        %v891 = vpop.f32.mrb[0].mxu0
        %892 = vmatprep.mubr.bf16.mxu0 0
        %893 = vmatmul.mubr.bf16.gmra.mrb[0].mxu0 %v610
        %v894 = vpop.f32.mrb[0].mxu0
        %v895 = vadd.f32 %v490, %v894
        %v896 = vpop.f32.mrb[0].mxu0
        %v897 = vpop.f32.mrb[0].mxu0
        %v898 = vadd.f32 %v490, %v897
        %v899 = vpop.f32.mrb[0].mxu0
        %900 = vmatprep.mubr.bf16.mxu0 0
        %901 = vmatmul.mubr.bf16.gmra.mrb[0].mxu0 %v611
        %v902 = vpop.f32.mrb[0].mxu0
        %v903 = vadd.f32 %v490, %v902
        %v904 = vpop.f32.mrb[0].mxu0
        %v905 = vpop.f32.mrb[0].mxu0
        %v906 = vadd.f32 %v490, %v905
        %v907 = vpop.f32.mrb[0].mxu0
        %908 = vdwg.mxu0
        %v909 = vmax.f32 %v719, 0.0
        %v910 = vmax.f32 %v722, 0.0
        %v911 = vmax.f32 %v727, 0.0
        %v912 = vmax.f32 %v730, 0.0
        %v913 = vmax.f32 %v735, 0.0
        %v914 = vmax.f32 %v738, 0.0
        %v915 = vmax.f32 %v743, 0.0
        %v916 = vmax.f32 %v746, 0.0
        %v917 = vmax.f32 %v751, 0.0
        %v918 = vmax.f32 %v754, 0.0
        %v919 = vmax.f32 %v759, 0.0
        %v920 = vmax.f32 %v762, 0.0
        %v921 = vmax.f32 %v767, 0.0
        %v922 = vmax.f32 %v770, 0.0
        %v923 = vmax.f32 %v775, 0.0
        %v924 = vmax.f32 %v778, 0.0
        %v925 = vmax.f32 %v783, 0.0
        %v926 = vmax.f32 %v786, 0.0
        %v927 = vmax.f32 %v791, 0.0
        %v928 = vmax.f32 %v794, 0.0
        %v929 = vmax.f32 %v799, 0.0
        %v930 = vmax.f32 %v802, 0.0
        %v931 = vmax.f32 %v807, 0.0
        %v932 = vmax.f32 %v810, 0.0
        %v933 = vmax.f32 %v815, 0.0
        %v934 = vmax.f32 %v818, 0.0
        %v935 = vmax.f32 %v823, 0.0
        %v936 = vmax.f32 %v826, 0.0
        %v937 = vmax.f32 %v831, 0.0
        %v938 = vmax.f32 %v834, 0.0
        %v939 = vmax.f32 %v839, 0.0
        %v940 = vmax.f32 %v842, 0.0
        %v941 = vmax.f32 %v847, 0.0
        %v942 = vmax.f32 %v850, 0.0
        %v943 = vmax.f32 %v855, 0.0
        %v944 = vmax.f32 %v858, 0.0
        %v945 = vmax.f32 %v863, 0.0
        %v946 = vmax.f32 %v866, 0.0
        %v947 = vmax.f32 %v871, 0.0
        %v948 = vmax.f32 %v874, 0.0
        %v949 = vmax.f32 %v879, 0.0
        %v950 = vmax.f32 %v882, 0.0
        %v951 = vmax.f32 %v887, 0.0
        %v952 = vmax.f32 %v890, 0.0
        %v953 = vmax.f32 %v895, 0.0
        %v954 = vmax.f32 %v898, 0.0
        %v955 = vmax.f32 %v903, 0.0
        %v956 = vmax.f32 %v906, 0.0
        %v957 = vld [vmem:[#allocation6] sm:$0xff]
        %v958 = vld [vmem:[#allocation6 + $0x8] sm:$0xff]
        %v959 = vld [vmem:[#allocation6 + $0x10] sm:$0xff]
        %v960 = vld [vmem:[#allocation6 + $0x18] sm:$0xff]
        %v961 = vld [vmem:[#allocation6 + $0x20] sm:$0xff]
        %v962 = vld [vmem:[#allocation6 + $0x28] sm:$0xff]
        %v963 = vld [vmem:[#allocation6 + $0x30] sm:$0xff]
        %v964 = vld [vmem:[#allocation6 + $0x38] sm:$0xff]
        %v965 = vld [vmem:[#allocation6 + $0x40] sm:$0xff]
        %v966 = vld [vmem:[#allocation6 + $0x48] sm:$0xff]
        %v967 = vld [vmem:[#allocation6 + $0x50] sm:$0xff]
        %v968 = vld [vmem:[#allocation6 + $0x58] sm:$0xff]
        %v969 = vld [vmem:[#allocation6 + $0x60] sm:$0xff]
        %v970 = vld [vmem:[#allocation6 + $0x68] sm:$0xff]
        %v971 = vld [vmem:[#allocation6 + $0x70] sm:$0xff]
        %v972 = vld [vmem:[#allocation6 + $0x78] sm:$0xff]
        %v973 = vld [vmem:[#allocation6 + $0x80] sm:$0xff]
        %v974 = vld [vmem:[#allocation6 + $0x88] sm:$0xff]
        %v975 = vld [vmem:[#allocation6 + $0x90] sm:$0xff]
        %v976 = vld [vmem:[#allocation6 + $0x98] sm:$0xff]
        %v977 = vld [vmem:[#allocation6 + $0xa0] sm:$0xff]
        %v978 = vld [vmem:[#allocation6 + $0xa8] sm:$0xff]
        %v979 = vld [vmem:[#allocation6 + $0xb0] sm:$0xff]
        %v980 = vld [vmem:[#allocation6 + $0xb8] sm:$0xff]
        %v981 = vld [vmem:[#allocation6 + $0xc0] sm:$0xff]
        %v982 = vld [vmem:[#allocation6 + $0xc8] sm:$0xff]
        %v983 = vld [vmem:[#allocation6 + $0xd0] sm:$0xff]
        %v984 = vld [vmem:[#allocation6 + $0xd8] sm:$0xff]
        %v985 = vld [vmem:[#allocation6 + $0xe0] sm:$0xff]
        %v986 = vld [vmem:[#allocation6 + $0xe8] sm:$0xff]
        %v987 = vld [vmem:[#allocation6 + $0xf0] sm:$0xff]
        %v988 = vld [vmem:[#allocation6 + $0xf8] sm:$0xff]
        %v989 = vld [vmem:[#allocation6 + $0x100] sm:$0xff]
        %v990 = vld [vmem:[#allocation6 + $0x108] sm:$0xff]
        %v991 = vld [vmem:[#allocation6 + $0x110] sm:$0xff]
        %v992 = vld [vmem:[#allocation6 + $0x118] sm:$0xff]
        %v993 = vld [vmem:[#allocation6 + $0x120] sm:$0xff]
        %v994 = vld [vmem:[#allocation6 + $0x128] sm:$0xff]
        %v995 = vld [vmem:[#allocation6 + $0x130] sm:$0xff]
        %v996 = vld [vmem:[#allocation6 + $0x138] sm:$0xff]
        %v997 = vld [vmem:[#allocation6 + $0x140] sm:$0xff]
        %v998 = vld [vmem:[#allocation6 + $0x148] sm:$0xff]
        %v999 = vld [vmem:[#allocation6 + $0x150] sm:$0xff]
        %v1000 = vld [vmem:[#allocation6 + $0x158] sm:$0xff]
        %v1001 = vld [vmem:[#allocation6 + $0x160] sm:$0xff]
        %v1002 = vld [vmem:[#allocation6 + $0x168] sm:$0xff]
        %v1003 = vld [vmem:[#allocation6 + $0x170] sm:$0xff]
        %v1004 = vld [vmem:[#allocation6 + $0x178] sm:$0xff]
        %1006 = vset.pattern.permute.xlu0 0
        %1007 = vperm.xlu0 %1006, %v957
        %v1008 = vpop.permute.xlu0 %1007
        %1011 = vset.pattern.permute.xlu0 0
        %1012 = vperm.xlu0 %1011, %v958
        %v1013 = vpop.permute.xlu0 %1012
        %1016 = vset.pattern.permute.xlu0 0
        %1017 = vperm.xlu0 %1016, %v959
        %v1018 = vpop.permute.xlu0 %1017
        %1021 = vset.pattern.permute.xlu0 0
        %1022 = vperm.xlu0 %1021, %v960
        %v1023 = vpop.permute.xlu0 %1022
        %1026 = vset.pattern.permute.xlu0 0
        %1027 = vperm.xlu0 %1026, %v961
        %v1028 = vpop.permute.xlu0 %1027
        %1031 = vset.pattern.permute.xlu0 0
        %1032 = vperm.xlu0 %1031, %v962
        %v1033 = vpop.permute.xlu0 %1032
        %1036 = vset.pattern.permute.xlu0 0
        %1037 = vperm.xlu0 %1036, %v963
        %v1038 = vpop.permute.xlu0 %1037
        %1041 = vset.pattern.permute.xlu0 0
        %1042 = vperm.xlu0 %1041, %v964
        %v1043 = vpop.permute.xlu0 %1042
        %1046 = vset.pattern.permute.xlu0 0
        %1047 = vperm.xlu0 %1046, %v965
        %v1048 = vpop.permute.xlu0 %1047
        %1051 = vset.pattern.permute.xlu0 0
        %1052 = vperm.xlu0 %1051, %v966
        %v1053 = vpop.permute.xlu0 %1052
        %1056 = vset.pattern.permute.xlu0 0
        %1057 = vperm.xlu0 %1056, %v967
        %v1058 = vpop.permute.xlu0 %1057
        %1061 = vset.pattern.permute.xlu0 0
        %1062 = vperm.xlu0 %1061, %v968
        %v1063 = vpop.permute.xlu0 %1062
        %1066 = vset.pattern.permute.xlu0 0
        %1067 = vperm.xlu0 %1066, %v969
        %v1068 = vpop.permute.xlu0 %1067
        %1071 = vset.pattern.permute.xlu0 0
        %1072 = vperm.xlu0 %1071, %v970
        %v1073 = vpop.permute.xlu0 %1072
        %1076 = vset.pattern.permute.xlu0 0
        %1077 = vperm.xlu0 %1076, %v971
        %v1078 = vpop.permute.xlu0 %1077
        %1081 = vset.pattern.permute.xlu0 0
        %1082 = vperm.xlu0 %1081, %v972
        %v1083 = vpop.permute.xlu0 %1082
        %1086 = vset.pattern.permute.xlu0 0
        %1087 = vperm.xlu0 %1086, %v973
        %v1088 = vpop.permute.xlu0 %1087
        %1091 = vset.pattern.permute.xlu0 0
        %1092 = vperm.xlu0 %1091, %v974
        %v1093 = vpop.permute.xlu0 %1092
        %1096 = vset.pattern.permute.xlu0 0
        %1097 = vperm.xlu0 %1096, %v975
        %v1098 = vpop.permute.xlu0 %1097
        %1101 = vset.pattern.permute.xlu0 0
        %1102 = vperm.xlu0 %1101, %v976
        %v1103 = vpop.permute.xlu0 %1102
        %1106 = vset.pattern.permute.xlu0 0
        %1107 = vperm.xlu0 %1106, %v977
        %v1108 = vpop.permute.xlu0 %1107
        %1111 = vset.pattern.permute.xlu0 0
        %1112 = vperm.xlu0 %1111, %v978
        %v1113 = vpop.permute.xlu0 %1112
        %1116 = vset.pattern.permute.xlu0 0
        %1117 = vperm.xlu0 %1116, %v979
        %v1118 = vpop.permute.xlu0 %1117
        %1121 = vset.pattern.permute.xlu0 0
        %1122 = vperm.xlu0 %1121, %v980
        %v1123 = vpop.permute.xlu0 %1122
        %1126 = vset.pattern.permute.xlu0 0
        %1127 = vperm.xlu0 %1126, %v981
        %v1128 = vpop.permute.xlu0 %1127
        %1131 = vset.pattern.permute.xlu0 0
        %1132 = vperm.xlu0 %1131, %v982
        %v1133 = vpop.permute.xlu0 %1132
        %1136 = vset.pattern.permute.xlu0 0
        %1137 = vperm.xlu0 %1136, %v983
        %v1138 = vpop.permute.xlu0 %1137
        %1141 = vset.pattern.permute.xlu0 0
        %1142 = vperm.xlu0 %1141, %v984
        %v1143 = vpop.permute.xlu0 %1142
        %1146 = vset.pattern.permute.xlu0 0
        %1147 = vperm.xlu0 %1146, %v985
        %v1148 = vpop.permute.xlu0 %1147
        %1151 = vset.pattern.permute.xlu0 0
        %1152 = vperm.xlu0 %1151, %v986
        %v1153 = vpop.permute.xlu0 %1152
        %1156 = vset.pattern.permute.xlu0 0
        %1157 = vperm.xlu0 %1156, %v987
        %v1158 = vpop.permute.xlu0 %1157
        %1161 = vset.pattern.permute.xlu0 0
        %1162 = vperm.xlu0 %1161, %v988
        %v1163 = vpop.permute.xlu0 %1162
        %1166 = vset.pattern.permute.xlu0 0
        %1167 = vperm.xlu0 %1166, %v989
        %v1168 = vpop.permute.xlu0 %1167
        %1171 = vset.pattern.permute.xlu0 0
        %1172 = vperm.xlu0 %1171, %v990
        %v1173 = vpop.permute.xlu0 %1172
        %1176 = vset.pattern.permute.xlu0 0
        %1177 = vperm.xlu0 %1176, %v991
        %v1178 = vpop.permute.xlu0 %1177
        %1181 = vset.pattern.permute.xlu0 0
        %1182 = vperm.xlu0 %1181, %v992
        %v1183 = vpop.permute.xlu0 %1182
        %1186 = vset.pattern.permute.xlu0 0
        %1187 = vperm.xlu0 %1186, %v993
        %v1188 = vpop.permute.xlu0 %1187
        %1191 = vset.pattern.permute.xlu0 0
        %1192 = vperm.xlu0 %1191, %v994
        %v1193 = vpop.permute.xlu0 %1192
        %1196 = vset.pattern.permute.xlu0 0
        %1197 = vperm.xlu0 %1196, %v995
        %v1198 = vpop.permute.xlu0 %1197
        %1201 = vset.pattern.permute.xlu0 0
        %1202 = vperm.xlu0 %1201, %v996
        %v1203 = vpop.permute.xlu0 %1202
        %1206 = vset.pattern.permute.xlu0 0
        %1207 = vperm.xlu0 %1206, %v997
        %v1208 = vpop.permute.xlu0 %1207
        %1211 = vset.pattern.permute.xlu0 0
        %1212 = vperm.xlu0 %1211, %v998
        %v1213 = vpop.permute.xlu0 %1212
        %1216 = vset.pattern.permute.xlu0 0
        %1217 = vperm.xlu0 %1216, %v999
        %v1218 = vpop.permute.xlu0 %1217
        %1221 = vset.pattern.permute.xlu0 0
        %1222 = vperm.xlu0 %1221, %v1000
        %v1223 = vpop.permute.xlu0 %1222
        %1226 = vset.pattern.permute.xlu0 0
        %1227 = vperm.xlu0 %1226, %v1001
        %v1228 = vpop.permute.xlu0 %1227
        %1231 = vset.pattern.permute.xlu0 0
        %1232 = vperm.xlu0 %1231, %v1002
        %v1233 = vpop.permute.xlu0 %1232
        %1236 = vset.pattern.permute.xlu0 0
        %1237 = vperm.xlu0 %1236, %v1003
        %v1238 = vpop.permute.xlu0 %1237
        %1241 = vset.pattern.permute.xlu0 0
        %1242 = vperm.xlu0 %1241, %v1004
        %v1243 = vpop.permute.xlu0 %1242
        %v1245 = vmul.f32 %v909, %v1008
        %v1246 = vmul.f32 %v910, %v1013
        %v1247 = vmul.f32 %v911, %v1018
        %v1248 = vmul.f32 %v912, %v1023
        %v1249 = vmul.f32 %v913, %v1028
        %v1250 = vmul.f32 %v914, %v1033
        %v1251 = vmul.f32 %v915, %v1038
        %v1252 = vmul.f32 %v916, %v1043
        %v1253 = vmul.f32 %v917, %v1048
        %v1254 = vmul.f32 %v918, %v1053
        %v1255 = vmul.f32 %v919, %v1058
        %v1256 = vmul.f32 %v920, %v1063
        %v1257 = vmul.f32 %v921, %v1068
        %v1258 = vmul.f32 %v922, %v1073
        %v1259 = vmul.f32 %v923, %v1078
        %v1260 = vmul.f32 %v924, %v1083
        %v1261 = vmul.f32 %v925, %v1088
        %v1262 = vmul.f32 %v926, %v1093
        %v1263 = vmul.f32 %v927, %v1098
        %v1264 = vmul.f32 %v928, %v1103
        %v1265 = vmul.f32 %v929, %v1108
        %v1266 = vmul.f32 %v930, %v1113
        %v1267 = vmul.f32 %v931, %v1118
        %v1268 = vmul.f32 %v932, %v1123
        %v1269 = vmul.f32 %v933, %v1128
        %v1270 = vmul.f32 %v934, %v1133
        %v1271 = vmul.f32 %v935, %v1138
        %v1272 = vmul.f32 %v936, %v1143
        %v1273 = vmul.f32 %v937, %v1148
        %v1274 = vmul.f32 %v938, %v1153
        %v1275 = vmul.f32 %v939, %v1158
        %v1276 = vmul.f32 %v940, %v1163
        %v1277 = vmul.f32 %v941, %v1168
        %v1278 = vmul.f32 %v942, %v1173
        %v1279 = vmul.f32 %v943, %v1178
        %v1280 = vmul.f32 %v944, %v1183
        %v1281 = vmul.f32 %v945, %v1188
        %v1282 = vmul.f32 %v946, %v1193
        %v1283 = vmul.f32 %v947, %v1198
        %v1284 = vmul.f32 %v948, %v1203
        %v1285 = vmul.f32 %v949, %v1208
        %v1286 = vmul.f32 %v950, %v1213
        %v1287 = vmul.f32 %v951, %v1218
        %v1288 = vmul.f32 %v952, %v1223
        %v1289 = vmul.f32 %v953, %v1228
        %v1290 = vmul.f32 %v954, %v1233
        %v1291 = vmul.f32 %v955, %v1238
        %v1292 = vmul.f32 %v956, %v1243
        %1293 = vst [vmem:[#allocation2 + $0x8] sm:$0xff] 0.0
        %1294 = vst [vmem:[#allocation2 + $0x10] sm:$0xff] 0.0
        %1295 = vst [vmem:[#allocation2 + $0x18] sm:$0xff] 0.0
        %1296 = vst [vmem:[#allocation2 + $0x1a0] sm:$0xff] 0.0
        %1297 = vst [vmem:[#allocation2 + $0x1a8] sm:$0xff] 0.0
        %1298 = vst [vmem:[#allocation2 + $0x1b0] sm:$0xff] 0.0
        %1299 = vst [vmem:[#allocation2 + $0x20] sm:$0xff] %v1245
        %1300 = vst [vmem:[#allocation2 + $0x28] sm:$0xff] %v1246
        %1301 = vst [vmem:[#allocation2 + $0x30] sm:$0xff] %v1247
        %1302 = vst [vmem:[#allocation2 + $0x38] sm:$0xff] %v1248
        %1303 = vst [vmem:[#allocation2 + $0x40] sm:$0xff] %v1249
        %1304 = vst [vmem:[#allocation2 + $0x48] sm:$0xff] %v1250
        %1305 = vst [vmem:[#allocation2 + $0x50] sm:$0xff] %v1251
        %1306 = vst [vmem:[#allocation2 + $0x58] sm:$0xff] %v1252
        %1307 = vst [vmem:[#allocation2 + $0x60] sm:$0xff] %v1253
        %1308 = vst [vmem:[#allocation2 + $0x68] sm:$0xff] %v1254
        %1309 = vst [vmem:[#allocation2 + $0x70] sm:$0xff] %v1255
        %1310 = vst [vmem:[#allocation2 + $0x78] sm:$0xff] %v1256
        %1311 = vst [vmem:[#allocation2 + $0x80] sm:$0xff] %v1257
        %1312 = vst [vmem:[#allocation2 + $0x88] sm:$0xff] %v1258
        %1313 = vst [vmem:[#allocation2 + $0x90] sm:$0xff] %v1259
        %1314 = vst [vmem:[#allocation2 + $0x98] sm:$0xff] %v1260
        %1315 = vst [vmem:[#allocation2 + $0xa0] sm:$0xff] %v1261
        %1316 = vst [vmem:[#allocation2 + $0xa8] sm:$0xff] %v1262
        %1317 = vst [vmem:[#allocation2 + $0xb0] sm:$0xff] %v1263
        %1318 = vst [vmem:[#allocation2 + $0xb8] sm:$0xff] %v1264
        %1319 = vst [vmem:[#allocation2 + $0xc0] sm:$0xff] %v1265
        %1320 = vst [vmem:[#allocation2 + $0xc8] sm:$0xff] %v1266
        %1321 = vst [vmem:[#allocation2 + $0xd0] sm:$0xff] %v1267
        %1322 = vst [vmem:[#allocation2 + $0xd8] sm:$0xff] %v1268
        %1323 = vst [vmem:[#allocation2 + $0xe0] sm:$0xff] %v1269
        %1324 = vst [vmem:[#allocation2 + $0xe8] sm:$0xff] %v1270
        %1325 = vst [vmem:[#allocation2 + $0xf0] sm:$0xff] %v1271
        %1326 = vst [vmem:[#allocation2 + $0xf8] sm:$0xff] %v1272
        %1327 = vst [vmem:[#allocation2 + $0x100] sm:$0xff] %v1273
        %1328 = vst [vmem:[#allocation2 + $0x108] sm:$0xff] %v1274
        %1329 = vst [vmem:[#allocation2 + $0x110] sm:$0xff] %v1275
        %1330 = vst [vmem:[#allocation2 + $0x118] sm:$0xff] %v1276
        %1331 = vst [vmem:[#allocation2 + $0x120] sm:$0xff] %v1277
        %1332 = vst [vmem:[#allocation2 + $0x128] sm:$0xff] %v1278
        %1333 = vst [vmem:[#allocation2 + $0x130] sm:$0xff] %v1279
        %1334 = vst [vmem:[#allocation2 + $0x138] sm:$0xff] %v1280
        %1335 = vst [vmem:[#allocation2 + $0x140] sm:$0xff] %v1281
        %1336 = vst [vmem:[#allocation2 + $0x148] sm:$0xff] %v1282
        %1337 = vst [vmem:[#allocation2 + $0x150] sm:$0xff] %v1283
        %1338 = vst [vmem:[#allocation2 + $0x158] sm:$0xff] %v1284
        %1339 = vst [vmem:[#allocation2 + $0x160] sm:$0xff] %v1285
        %1340 = vst [vmem:[#allocation2 + $0x168] sm:$0xff] %v1286
        %1341 = vst [vmem:[#allocation2 + $0x170] sm:$0xff] %v1287
        %1342 = vst [vmem:[#allocation2 + $0x178] sm:$0xff] %v1288
        %1343 = vst [vmem:[#allocation2 + $0x180] sm:$0xff] %v1289
        %1344 = vst [vmem:[#allocation2 + $0x188] sm:$0xff] %v1290
        %1345 = vst [vmem:[#allocation2 + $0x190] sm:$0xff] %v1291
        %1346 = vst [vmem:[#allocation2 + $0x198] sm:$0xff] %v1292
        %v1347 = vld [vmem:[#allocation2 + $0x7] sm:$0xff]
        %v1348 = vld [vmem:[#allocation2 + $0xf] sm:$0xff]
        %v1349 = vld [vmem:[#allocation2 + $0x17] sm:$0xff]
        %v1350 = vld [vmem:[#allocation2 + $0x1f] sm:$0xff]
        %v1351 = vld [vmem:[#allocation2 + $0x27] sm:$0xff]
        %v1352 = vld [vmem:[#allocation2 + $0x2f] sm:$0xff]
        %v1353 = vld [vmem:[#allocation2 + $0x37] sm:$0xff]
        %v1354 = vld [vmem:[#allocation2 + $0x3f] sm:$0xff]
        %v1355 = vld [vmem:[#allocation2 + $0x47] sm:$0xff]
        %v1356 = vld [vmem:[#allocation2 + $0x4f] sm:$0xff]
        %v1357 = vld [vmem:[#allocation2 + $0x57] sm:$0xff]
        %v1358 = vld [vmem:[#allocation2 + $0x5f] sm:$0xff]
        %v1359 = vld [vmem:[#allocation2 + $0x67] sm:$0xff]
        %v1360 = vld [vmem:[#allocation2 + $0x6f] sm:$0xff]
        %v1361 = vld [vmem:[#allocation2 + $0x77] sm:$0xff]
        %v1362 = vld [vmem:[#allocation2 + $0x7f] sm:$0xff]
        %v1363 = vld [vmem:[#allocation2 + $0x87] sm:$0xff]
        %v1364 = vld [vmem:[#allocation2 + $0x8f] sm:$0xff]
        %v1365 = vld [vmem:[#allocation2 + $0x97] sm:$0xff]
        %v1366 = vld [vmem:[#allocation2 + $0x9f] sm:$0xff]
        %v1367 = vld [vmem:[#allocation2 + $0xa7] sm:$0xff]
        %v1368 = vld [vmem:[#allocation2 + $0xaf] sm:$0xff]
        %v1369 = vld [vmem:[#allocation2 + $0xb7] sm:$0xff]
        %v1370 = vld [vmem:[#allocation2 + $0xbf] sm:$0xff]
        %v1371 = vpack.c.bf16 %v1348, %v1347
        %v1372 = vpack.c.bf16 %v1350, %v1349
        %v1373 = vpack.c.bf16 %v1352, %v1351
        %v1374 = vpack.c.bf16 %v1354, %v1353
        %v1375 = vpack.c.bf16 %v1356, %v1355
        %v1376 = vpack.c.bf16 %v1358, %v1357
        %v1377 = vpack.c.bf16 %v1360, %v1359
        %v1378 = vpack.c.bf16 %v1362, %v1361
        %v1379 = vpack.c.bf16 %v1364, %v1363
        %v1380 = vpack.c.bf16 %v1366, %v1365
        %v1381 = vpack.c.bf16 %v1368, %v1367
        %v1382 = vpack.c.bf16 %v1370, %v1369
        %v1383 = vld [vmem:[#allocation11] sm:$0xf]
        %v1384 = vld [vmem:[#allocation11 + $0x4] sm:$0xf]
        %v1385 = vld [vmem:[#allocation11 + $0x8] sm:$0xf]
        %v1386 = vld [vmem:[#allocation11 + $0xc] sm:$0xf]
        %v1387 = vld [vmem:[#allocation11 + $0x10] sm:$0xf]
        %v1388 = vld [vmem:[#allocation11 + $0x14] sm:$0xf]
        %v1389 = vld [vmem:[#allocation11 + $0x18] sm:$0xf]
        %v1390 = vld [vmem:[#allocation11 + $0x1c] sm:$0xf]
        %v1391 = vld [vmem:[#allocation11 + $0x20] sm:$0xf]
        %v1392 = vld [vmem:[#allocation11 + $0x24] sm:$0xf]
        %v1393 = vld [vmem:[#allocation11 + $0x28] sm:$0xf]
        %v1394 = vld [vmem:[#allocation11 + $0x2c] sm:$0xf]
        %v1395 = vld [vmem:[#allocation11 + $0x30] sm:$0xf]
        %v1396 = vld [vmem:[#allocation11 + $0x34] sm:$0xf]
        %v1397 = vld [vmem:[#allocation11 + $0x38] sm:$0xf]
        %v1398 = vld [vmem:[#allocation11 + $0x3c] sm:$0xf]
        %v1399 = vld [vmem:[#allocation2 + $0x8] sm:$0xff]
        %v1400 = vld [vmem:[#allocation2 + $0x10] sm:$0xff]
        %v1401 = vld [vmem:[#allocation2 + $0x18] sm:$0xff]
        %v1402 = vld [vmem:[#allocation2 + $0x20] sm:$0xff]
        %v1403 = vld [vmem:[#allocation2 + $0x28] sm:$0xff]
        %v1404 = vld [vmem:[#allocation2 + $0x30] sm:$0xff]
        %v1405 = vld [vmem:[#allocation2 + $0x38] sm:$0xff]
        %v1406 = vld [vmem:[#allocation2 + $0x40] sm:$0xff]
        %v1407 = vld [vmem:[#allocation2 + $0x48] sm:$0xff]
        %v1408 = vld [vmem:[#allocation2 + $0x50] sm:$0xff]
        %v1409 = vld [vmem:[#allocation2 + $0x58] sm:$0xff]
        %v1410 = vld [vmem:[#allocation2 + $0x60] sm:$0xff]
        %v1411 = vld [vmem:[#allocation2 + $0x68] sm:$0xff]
        %v1412 = vld [vmem:[#allocation2 + $0x70] sm:$0xff]
        %v1413 = vld [vmem:[#allocation2 + $0x78] sm:$0xff]
        %v1414 = vld [vmem:[#allocation2 + $0x80] sm:$0xff]
        %v1415 = vld [vmem:[#allocation2 + $0x88] sm:$0xff]
        %v1416 = vld [vmem:[#allocation2 + $0x90] sm:$0xff]
        %v1417 = vld [vmem:[#allocation2 + $0x98] sm:$0xff]
        %v1418 = vld [vmem:[#allocation2 + $0xa0] sm:$0xff]
        %v1419 = vld [vmem:[#allocation2 + $0xa8] sm:$0xff]
        %v1420 = vld [vmem:[#allocation2 + $0xb0] sm:$0xff]
        %v1421 = vld [vmem:[#allocation2 + $0xb8] sm:$0xff]
        %v1422 = vld [vmem:[#allocation2 + $0xc0] sm:$0xff]
        %v1423 = vpack.c.bf16 %v1400, %v1399
        %v1424 = vpack.c.bf16 %v1402, %v1401
        %v1425 = vpack.c.bf16 %v1404, %v1403
        %v1426 = vpack.c.bf16 %v1406, %v1405
        %v1427 = vpack.c.bf16 %v1408, %v1407
        %v1428 = vpack.c.bf16 %v1410, %v1409
        %v1429 = vpack.c.bf16 %v1412, %v1411
        %v1430 = vpack.c.bf16 %v1414, %v1413
        %v1431 = vpack.c.bf16 %v1416, %v1415
        %v1432 = vpack.c.bf16 %v1418, %v1417
        %v1433 = vpack.c.bf16 %v1420, %v1419
        %v1434 = vpack.c.bf16 %v1422, %v1421
        %s1435 = scalar_lea.vmem [#allocation11], 64
        %v1436 = vld [vmem:[%s1435] sm:$0xf]
        %v1437 = vld [vmem:[%s1435 + $0x4] sm:$0xf]
        %v1438 = vld [vmem:[%s1435 + $0x8] sm:$0xf]
        %v1439 = vld [vmem:[%s1435 + $0xc] sm:$0xf]
        %v1440 = vld [vmem:[%s1435 + $0x10] sm:$0xf]
        %v1441 = vld [vmem:[%s1435 + $0x14] sm:$0xf]
        %v1442 = vld [vmem:[%s1435 + $0x18] sm:$0xf]
        %v1443 = vld [vmem:[%s1435 + $0x1c] sm:$0xf]
        %v1444 = vld [vmem:[%s1435 + $0x20] sm:$0xf]
        %v1445 = vld [vmem:[%s1435 + $0x24] sm:$0xf]
        %v1446 = vld [vmem:[%s1435 + $0x28] sm:$0xf]
        %v1447 = vld [vmem:[%s1435 + $0x2c] sm:$0xf]
        %v1448 = vld [vmem:[%s1435 + $0x30] sm:$0xf]
        %v1449 = vld [vmem:[%s1435 + $0x34] sm:$0xf]
        %v1450 = vld [vmem:[%s1435 + $0x38] sm:$0xf]
        %v1451 = vld [vmem:[%s1435 + $0x3c] sm:$0xf]
        %v1468 = vunpack.c.l.b16 %v1436
        %v1469 = vunpack.c.l.b16 %v1437
        %v1470 = vunpack.c.l.b16 %v1438
        %v1471 = vunpack.c.l.b16 %v1439
        %v1472 = vunpack.c.l.b16 %v1440
        %v1473 = vunpack.c.l.b16 %v1441
        %v1474 = vunpack.c.l.b16 %v1442
        %v1475 = vunpack.c.l.b16 %v1443
        %v1476 = vunpack.c.l.b16 %v1444
        %v1477 = vunpack.c.l.b16 %v1445
        %v1478 = vunpack.c.l.b16 %v1446
        %v1479 = vunpack.c.l.b16 %v1447
        %v1480 = vunpack.c.l.b16 %v1448
        %v1481 = vunpack.c.l.b16 %v1449
        %v1482 = vunpack.c.l.b16 %v1450
        %v1483 = vunpack.c.l.b16 %v1451
        %v1484 = vpack.c.b16 %v1469, %v1468
        %v1485 = vpack.c.b16 %v1471, %v1470
        %v1486 = vpack.c.b16 %v1473, %v1472
        %v1487 = vpack.c.b16 %v1475, %v1474
        %v1488 = vpack.c.b16 %v1477, %v1476
        %v1489 = vpack.c.b16 %v1479, %v1478
        %v1490 = vpack.c.b16 %v1481, %v1480
        %v1491 = vpack.c.b16 %v1483, %v1482
        %1500 = vmatprep.subr.bf16.mxu0 0
        %1501 = vmatpush1.bf16.msra.mxu0 %v1484
        %1502 = vmatprep.subr.bf16.mxu0 0
        %1503 = vmatpush1.bf16.msra.mxu0 %v1485
        %1504 = vmatprep.subr.bf16.mxu0 0
        %1505 = vmatpush1.bf16.msra.mxu0 %v1486
        %1506 = vmatprep.subr.bf16.mxu0 0
        %1507 = vmatpush1.bf16.msra.mxu0 %v1487
        %1508 = vmatprep.subr.bf16.mxu0 0
        %1509 = vmatpush1.bf16.msra.mxu0 %v1488
        %1510 = vmatprep.subr.bf16.mxu0 0
        %1511 = vmatpush1.bf16.msra.mxu0 %v1489
        %1512 = vmatprep.subr.bf16.mxu0 0
        %1513 = vmatpush1.bf16.msra.mxu0 %v1490
        %1514 = vmatprep.subr.bf16.mxu0 0
        %1515 = vmatpush1.bf16.msra.mxu0 %v1491
        %1516 = vmatprep.subr.bf16.mxu0 0
        %1517 = vmatpush1.bf16.msra.mxu0 0
        %1518 = vmatprep.subr.bf16.mxu0 0
        %1519 = vmatpush1.bf16.msra.mxu0 0
        %1520 = vmatprep.subr.bf16.mxu0 0
        %1521 = vmatpush1.bf16.msra.mxu0 0
        %1522 = vmatprep.subr.bf16.mxu0 0
        %1523 = vmatpush1.bf16.msra.mxu0 0
        %1524 = vmatprep.subr.bf16.mxu0 0
        %1525 = vmatpush1.bf16.msra.mxu0 0
        %1526 = vmatprep.subr.bf16.mxu0 0
        %1527 = vmatpush1.bf16.msra.mxu0 0
        %1528 = vmatprep.subr.bf16.mxu0 0
        %1529 = vmatpush1.bf16.msra.mxu0 0
        %1530 = vmatprep.subr.bf16.mxu0 0
        %1531 = vmatpush1.bf16.msra.mxu0 0
        %1532 = vmatprep.mubr.bf16.mxu0 0
        %1533 = vmatmul.mubr.bf16.gmra.mrb[0].mxu0 %v1423
        %v1534 = vpop.f32.mrb[0].mxu0
        %v1535 = vadd.f32 0.0, %v1534
        %v1536 = vpop.f32.mrb[0].mxu0
        %v1537 = vpop.f32.mrb[0].mxu0
        %v1538 = vadd.f32 0.0, %v1537
        %v1539 = vpop.f32.mrb[0].mxu0
        %1540 = vmatprep.mubr.bf16.mxu0 0
        %1541 = vmatmul.mubr.bf16.gmra.mrb[0].mxu0 %v1424
        %v1542 = vpop.f32.mrb[0].mxu0
        %v1543 = vadd.f32 0.0, %v1542
        %v1544 = vpop.f32.mrb[0].mxu0
        %v1545 = vpop.f32.mrb[0].mxu0
        %v1546 = vadd.f32 0.0, %v1545
        %v1547 = vpop.f32.mrb[0].mxu0
        %1548 = vmatprep.mubr.bf16.mxu0 0
        %1549 = vmatmul.mubr.bf16.gmra.mrb[0].mxu0 %v1425
        %v1550 = vpop.f32.mrb[0].mxu0
        %v1551 = vadd.f32 0.0, %v1550
        %v1552 = vpop.f32.mrb[0].mxu0
        %v1553 = vpop.f32.mrb[0].mxu0
        %v1554 = vadd.f32 0.0, %v1553
        %v1555 = vpop.f32.mrb[0].mxu0
        %1556 = vmatprep.mubr.bf16.mxu0 0
        %1557 = vmatmul.mubr.bf16.gmra.mrb[0].mxu0 %v1426
        %v1558 = vpop.f32.mrb[0].mxu0
        %v1559 = vadd.f32 0.0, %v1558
        %v1560 = vpop.f32.mrb[0].mxu0
        %v1561 = vpop.f32.mrb[0].mxu0
        %v1562 = vadd.f32 0.0, %v1561
        %v1563 = vpop.f32.mrb[0].mxu0
        %1564 = vmatprep.mubr.bf16.mxu0 0
        %1565 = vmatmul.mubr.bf16.gmra.mrb[0].mxu0 %v1427
        %v1566 = vpop.f32.mrb[0].mxu0
        %v1567 = vadd.f32 0.0, %v1566
        %v1568 = vpop.f32.mrb[0].mxu0
        %v1569 = vpop.f32.mrb[0].mxu0
        %v1570 = vadd.f32 0.0, %v1569
        %v1571 = vpop.f32.mrb[0].mxu0
        %1572 = vmatprep.mubr.bf16.mxu0 0
        %1573 = vmatmul.mubr.bf16.gmra.mrb[0].mxu0 %v1428
        %v1574 = vpop.f32.mrb[0].mxu0
        %v1575 = vadd.f32 0.0, %v1574
        %v1576 = vpop.f32.mrb[0].mxu0
        %v1577 = vpop.f32.mrb[0].mxu0
        %v1578 = vadd.f32 0.0, %v1577
        %v1579 = vpop.f32.mrb[0].mxu0
        %1580 = vmatprep.mubr.bf16.mxu0 0
        %1581 = vmatmul.mubr.bf16.gmra.mrb[0].mxu0 %v1429
        %v1582 = vpop.f32.mrb[0].mxu0
        %v1583 = vadd.f32 0.0, %v1582
        %v1584 = vpop.f32.mrb[0].mxu0
        %v1585 = vpop.f32.mrb[0].mxu0
        %v1586 = vadd.f32 0.0, %v1585
        %v1587 = vpop.f32.mrb[0].mxu0
        %1588 = vmatprep.mubr.bf16.mxu0 0
        %1589 = vmatmul.mubr.bf16.gmra.mrb[0].mxu0 %v1430
        %v1590 = vpop.f32.mrb[0].mxu0
        %v1591 = vadd.f32 0.0, %v1590
        %v1592 = vpop.f32.mrb[0].mxu0
        %v1593 = vpop.f32.mrb[0].mxu0
        %v1594 = vadd.f32 0.0, %v1593
        %v1595 = vpop.f32.mrb[0].mxu0
        %1596 = vmatprep.mubr.bf16.mxu0 0
        %1597 = vmatmul.mubr.bf16.gmra.mrb[0].mxu0 %v1431
        %v1598 = vpop.f32.mrb[0].mxu0
        %v1599 = vadd.f32 0.0, %v1598
        %v1600 = vpop.f32.mrb[0].mxu0
        %v1601 = vpop.f32.mrb[0].mxu0
        %v1602 = vadd.f32 0.0, %v1601
        %v1603 = vpop.f32.mrb[0].mxu0
        %1604 = vmatprep.mubr.bf16.mxu0 0
        %1605 = vmatmul.mubr.bf16.gmra.mrb[0].mxu0 %v1432
        %v1606 = vpop.f32.mrb[0].mxu0
        %v1607 = vadd.f32 0.0, %v1606
        %v1608 = vpop.f32.mrb[0].mxu0
        %v1609 = vpop.f32.mrb[0].mxu0
        %v1610 = vadd.f32 0.0, %v1609
        %v1611 = vpop.f32.mrb[0].mxu0
        %1612 = vmatprep.mubr.bf16.mxu0 0
        %1613 = vmatmul.mubr.bf16.gmra.mrb[0].mxu0 %v1433
        %v1614 = vpop.f32.mrb[0].mxu0
        %v1615 = vadd.f32 0.0, %v1614
        %v1616 = vpop.f32.mrb[0].mxu0
        %v1617 = vpop.f32.mrb[0].mxu0
        %v1618 = vadd.f32 0.0, %v1617
        %v1619 = vpop.f32.mrb[0].mxu0
        %1620 = vmatprep.mubr.bf16.mxu0 0
        %1621 = vmatmul.mubr.bf16.gmra.mrb[0].mxu0 %v1434
        %v1622 = vpop.f32.mrb[0].mxu0
        %v1623 = vadd.f32 0.0, %v1622
        %v1624 = vpop.f32.mrb[0].mxu0
        %v1625 = vpop.f32.mrb[0].mxu0
        %v1626 = vadd.f32 0.0, %v1625
        %v1627 = vpop.f32.mrb[0].mxu0
        %1628 = vdwg.mxu0
        %v1645 = vunpack.c.l.b16 %v1383
        %v1646 = vunpack.c.l.b16 %v1384
        %v1647 = vunpack.c.l.b16 %v1385
        %v1648 = vunpack.c.l.b16 %v1386
        %v1649 = vunpack.c.l.b16 %v1387
        %v1650 = vunpack.c.l.b16 %v1388
        %v1651 = vunpack.c.l.b16 %v1389
        %v1652 = vunpack.c.l.b16 %v1390
        %v1653 = vunpack.c.l.b16 %v1391
        %v1654 = vunpack.c.l.b16 %v1392
        %v1655 = vunpack.c.l.b16 %v1393
        %v1656 = vunpack.c.l.b16 %v1394
        %v1657 = vunpack.c.l.b16 %v1395
        %v1658 = vunpack.c.l.b16 %v1396
        %v1659 = vunpack.c.l.b16 %v1397
        %v1660 = vunpack.c.l.b16 %v1398
        %v1661 = vpack.c.b16 %v1646, %v1645
        %v1662 = vpack.c.b16 %v1648, %v1647
        %v1663 = vpack.c.b16 %v1650, %v1649
        %v1664 = vpack.c.b16 %v1652, %v1651
        %v1665 = vpack.c.b16 %v1654, %v1653
        %v1666 = vpack.c.b16 %v1656, %v1655
        %v1667 = vpack.c.b16 %v1658, %v1657
        %v1668 = vpack.c.b16 %v1660, %v1659
        %1677 = vmatprep.subr.bf16.mxu0 0
        %1678 = vmatpush1.bf16.msra.mxu0 %v1661
        %1679 = vmatprep.subr.bf16.mxu0 0
        %1680 = vmatpush1.bf16.msra.mxu0 %v1662
        %1681 = vmatprep.subr.bf16.mxu0 0
        %1682 = vmatpush1.bf16.msra.mxu0 %v1663
        %1683 = vmatprep.subr.bf16.mxu0 0
        %1684 = vmatpush1.bf16.msra.mxu0 %v1664
        %1685 = vmatprep.subr.bf16.mxu0 0
        %1686 = vmatpush1.bf16.msra.mxu0 %v1665
        %1687 = vmatprep.subr.bf16.mxu0 0
        %1688 = vmatpush1.bf16.msra.mxu0 %v1666
        %1689 = vmatprep.subr.bf16.mxu0 0
        %1690 = vmatpush1.bf16.msra.mxu0 %v1667
        %1691 = vmatprep.subr.bf16.mxu0 0
        %1692 = vmatpush1.bf16.msra.mxu0 %v1668
        %1693 = vmatprep.subr.bf16.mxu0 0
        %1694 = vmatpush1.bf16.msra.mxu0 0
        %1695 = vmatprep.subr.bf16.mxu0 0
        %1696 = vmatpush1.bf16.msra.mxu0 0
        %1697 = vmatprep.subr.bf16.mxu0 0
        %1698 = vmatpush1.bf16.msra.mxu0 0
        %1699 = vmatprep.subr.bf16.mxu0 0
        %1700 = vmatpush1.bf16.msra.mxu0 0
        %1701 = vmatprep.subr.bf16.mxu0 0
        %1702 = vmatpush1.bf16.msra.mxu0 0
        %1703 = vmatprep.subr.bf16.mxu0 0
        %1704 = vmatpush1.bf16.msra.mxu0 0
        %1705 = vmatprep.subr.bf16.mxu0 0
        %1706 = vmatpush1.bf16.msra.mxu0 0
        %1707 = vmatprep.subr.bf16.mxu0 0
        %1708 = vmatpush1.bf16.msra.mxu0 0
        %1709 = vmatprep.mubr.bf16.mxu0 0
        %1710 = vmatmul.mubr.bf16.gmra.mrb[0].mxu0 %v1371
        %v1711 = vpop.f32.mrb[0].mxu0
        %v1712 = vadd.f32 %v1535, %v1711
        %v1713 = vpop.f32.mrb[0].mxu0
        %v1714 = vpop.f32.mrb[0].mxu0
        %v1715 = vadd.f32 %v1538, %v1714
        %v1716 = vpop.f32.mrb[0].mxu0
        %1717 = vmatprep.mubr.bf16.mxu0 0
        %1718 = vmatmul.mubr.bf16.gmra.mrb[0].mxu0 %v1372
        %v1719 = vpop.f32.mrb[0].mxu0
        %v1720 = vadd.f32 %v1543, %v1719
        %v1721 = vpop.f32.mrb[0].mxu0
        %v1722 = vpop.f32.mrb[0].mxu0
        %v1723 = vadd.f32 %v1546, %v1722
        %v1724 = vpop.f32.mrb[0].mxu0
        %1725 = vmatprep.mubr.bf16.mxu0 0
        %1726 = vmatmul.mubr.bf16.gmra.mrb[0].mxu0 %v1373
        %v1727 = vpop.f32.mrb[0].mxu0
        %v1728 = vadd.f32 %v1551, %v1727
        %v1729 = vpop.f32.mrb[0].mxu0
        %v1730 = vpop.f32.mrb[0].mxu0
        %v1731 = vadd.f32 %v1554, %v1730
        %v1732 = vpop.f32.mrb[0].mxu0
        %1733 = vmatprep.mubr.bf16.mxu0 0
        %1734 = vmatmul.mubr.bf16.gmra.mrb[0].mxu0 %v1374
        %v1735 = vpop.f32.mrb[0].mxu0
        %v1736 = vadd.f32 %v1559, %v1735
        %v1737 = vpop.f32.mrb[0].mxu0
        %v1738 = vpop.f32.mrb[0].mxu0
        %v1739 = vadd.f32 %v1562, %v1738
        %v1740 = vpop.f32.mrb[0].mxu0
        %1741 = vmatprep.mubr.bf16.mxu0 0
        %1742 = vmatmul.mubr.bf16.gmra.mrb[0].mxu0 %v1375
        %v1743 = vpop.f32.mrb[0].mxu0
        %v1744 = vadd.f32 %v1567, %v1743
        %v1745 = vpop.f32.mrb[0].mxu0
        %v1746 = vpop.f32.mrb[0].mxu0
        %v1747 = vadd.f32 %v1570, %v1746
        %v1748 = vpop.f32.mrb[0].mxu0
        %1749 = vmatprep.mubr.bf16.mxu0 0
        %1750 = vmatmul.mubr.bf16.gmra.mrb[0].mxu0 %v1376
        %v1751 = vpop.f32.mrb[0].mxu0
        %v1752 = vadd.f32 %v1575, %v1751
        %v1753 = vpop.f32.mrb[0].mxu0
        %v1754 = vpop.f32.mrb[0].mxu0
        %v1755 = vadd.f32 %v1578, %v1754
        %v1756 = vpop.f32.mrb[0].mxu0
        %1757 = vmatprep.mubr.bf16.mxu0 0
        %1758 = vmatmul.mubr.bf16.gmra.mrb[0].mxu0 %v1377
        %v1759 = vpop.f32.mrb[0].mxu0
        %v1760 = vadd.f32 %v1583, %v1759
        %v1761 = vpop.f32.mrb[0].mxu0
        %v1762 = vpop.f32.mrb[0].mxu0
        %v1763 = vadd.f32 %v1586, %v1762
        %v1764 = vpop.f32.mrb[0].mxu0
        %1765 = vmatprep.mubr.bf16.mxu0 0
        %1766 = vmatmul.mubr.bf16.gmra.mrb[0].mxu0 %v1378
        %v1767 = vpop.f32.mrb[0].mxu0
        %v1768 = vadd.f32 %v1591, %v1767
        %v1769 = vpop.f32.mrb[0].mxu0
        %v1770 = vpop.f32.mrb[0].mxu0
        %v1771 = vadd.f32 %v1594, %v1770
        %v1772 = vpop.f32.mrb[0].mxu0
        %1773 = vmatprep.mubr.bf16.mxu0 0
        %1774 = vmatmul.mubr.bf16.gmra.mrb[0].mxu0 %v1379
        %v1775 = vpop.f32.mrb[0].mxu0
        %v1776 = vadd.f32 %v1599, %v1775
        %v1777 = vpop.f32.mrb[0].mxu0
        %v1778 = vpop.f32.mrb[0].mxu0
        %v1779 = vadd.f32 %v1602, %v1778
        %v1780 = vpop.f32.mrb[0].mxu0
        %1781 = vmatprep.mubr.bf16.mxu0 0
        %1782 = vmatmul.mubr.bf16.gmra.mrb[0].mxu0 %v1380
        %v1783 = vpop.f32.mrb[0].mxu0
        %v1784 = vadd.f32 %v1607, %v1783
        %v1785 = vpop.f32.mrb[0].mxu0
        %v1786 = vpop.f32.mrb[0].mxu0
        %v1787 = vadd.f32 %v1610, %v1786
        %v1788 = vpop.f32.mrb[0].mxu0
        %1789 = vmatprep.mubr.bf16.mxu0 0
        %1790 = vmatmul.mubr.bf16.gmra.mrb[0].mxu0 %v1381
        %v1791 = vpop.f32.mrb[0].mxu0
        %v1792 = vadd.f32 %v1615, %v1791
        %v1793 = vpop.f32.mrb[0].mxu0
        %v1794 = vpop.f32.mrb[0].mxu0
        %v1795 = vadd.f32 %v1618, %v1794
        %v1796 = vpop.f32.mrb[0].mxu0
        %1797 = vmatprep.mubr.bf16.mxu0 0
        %1798 = vmatmul.mubr.bf16.gmra.mrb[0].mxu0 %v1382
        %v1799 = vpop.f32.mrb[0].mxu0
        %v1800 = vadd.f32 %v1623, %v1799
        %v1801 = vpop.f32.mrb[0].mxu0
        %v1802 = vpop.f32.mrb[0].mxu0
        %v1803 = vadd.f32 %v1626, %v1802
        %v1804 = vpop.f32.mrb[0].mxu0
        %1805 = vdwg.mxu0
        %v1806 = vld [vmem:[#allocation2 + $0x9] sm:$0xff]
        %v1807 = vld [vmem:[#allocation2 + $0x11] sm:$0xff]
        %v1808 = vld [vmem:[#allocation2 + $0x19] sm:$0xff]
        %v1809 = vld [vmem:[#allocation2 + $0x21] sm:$0xff]
        %v1810 = vld [vmem:[#allocation2 + $0x29] sm:$0xff]
        %v1811 = vld [vmem:[#allocation2 + $0x31] sm:$0xff]
        %v1812 = vld [vmem:[#allocation2 + $0x39] sm:$0xff]
        %v1813 = vld [vmem:[#allocation2 + $0x41] sm:$0xff]
        %v1814 = vld [vmem:[#allocation2 + $0x49] sm:$0xff]
        %v1815 = vld [vmem:[#allocation2 + $0x51] sm:$0xff]
        %v1816 = vld [vmem:[#allocation2 + $0x59] sm:$0xff]
        %v1817 = vld [vmem:[#allocation2 + $0x61] sm:$0xff]
        %v1818 = vld [vmem:[#allocation2 + $0x69] sm:$0xff]
        %v1819 = vld [vmem:[#allocation2 + $0x71] sm:$0xff]
        %v1820 = vld [vmem:[#allocation2 + $0x79] sm:$0xff]
        %v1821 = vld [vmem:[#allocation2 + $0x81] sm:$0xff]
        %v1822 = vld [vmem:[#allocation2 + $0x89] sm:$0xff]
        %v1823 = vld [vmem:[#allocation2 + $0x91] sm:$0xff]
        %v1824 = vld [vmem:[#allocation2 + $0x99] sm:$0xff]
        %v1825 = vld [vmem:[#allocation2 + $0xa1] sm:$0xff]
        %v1826 = vld [vmem:[#allocation2 + $0xa9] sm:$0xff]
        %v1827 = vld [vmem:[#allocation2 + $0xb1] sm:$0xff]
        %v1828 = vld [vmem:[#allocation2 + $0xb9] sm:$0xff]
        %v1829 = vld [vmem:[#allocation2 + $0xc1] sm:$0xff]
        %v1830 = vpack.c.bf16 %v1807, %v1806
        %v1831 = vpack.c.bf16 %v1809, %v1808
        %v1832 = vpack.c.bf16 %v1811, %v1810
        %v1833 = vpack.c.bf16 %v1813, %v1812
        %v1834 = vpack.c.bf16 %v1815, %v1814
        %v1835 = vpack.c.bf16 %v1817, %v1816
        %v1836 = vpack.c.bf16 %v1819, %v1818
        %v1837 = vpack.c.bf16 %v1821, %v1820
        %v1838 = vpack.c.bf16 %v1823, %v1822
        %v1839 = vpack.c.bf16 %v1825, %v1824
        %v1840 = vpack.c.bf16 %v1827, %v1826
        %v1841 = vpack.c.bf16 %v1829, %v1828
        %s1842 = scalar_lea.vmem [#allocation11], 128
        %v1843 = vld [vmem:[%s1842] sm:$0xf]
        %v1844 = vld [vmem:[%s1842 + $0x4] sm:$0xf]
        %v1845 = vld [vmem:[%s1842 + $0x8] sm:$0xf]
        %v1846 = vld [vmem:[%s1842 + $0xc] sm:$0xf]
        %v1847 = vld [vmem:[%s1842 + $0x10] sm:$0xf]
        %v1848 = vld [vmem:[%s1842 + $0x14] sm:$0xf]
        %v1849 = vld [vmem:[%s1842 + $0x18] sm:$0xf]
        %v1850 = vld [vmem:[%s1842 + $0x1c] sm:$0xf]
        %v1851 = vld [vmem:[%s1842 + $0x20] sm:$0xf]
        %v1852 = vld [vmem:[%s1842 + $0x24] sm:$0xf]
        %v1853 = vld [vmem:[%s1842 + $0x28] sm:$0xf]
        %v1854 = vld [vmem:[%s1842 + $0x2c] sm:$0xf]
        %v1855 = vld [vmem:[%s1842 + $0x30] sm:$0xf]
        %v1856 = vld [vmem:[%s1842 + $0x34] sm:$0xf]
        %v1857 = vld [vmem:[%s1842 + $0x38] sm:$0xf]
        %v1858 = vld [vmem:[%s1842 + $0x3c] sm:$0xf]
        %v1875 = vunpack.c.l.b16 %v1843
        %v1876 = vunpack.c.l.b16 %v1844
        %v1877 = vunpack.c.l.b16 %v1845
        %v1878 = vunpack.c.l.b16 %v1846
        %v1879 = vunpack.c.l.b16 %v1847
        %v1880 = vunpack.c.l.b16 %v1848
        %v1881 = vunpack.c.l.b16 %v1849
        %v1882 = vunpack.c.l.b16 %v1850
        %v1883 = vunpack.c.l.b16 %v1851
        %v1884 = vunpack.c.l.b16 %v1852
        %v1885 = vunpack.c.l.b16 %v1853
        %v1886 = vunpack.c.l.b16 %v1854
        %v1887 = vunpack.c.l.b16 %v1855
        %v1888 = vunpack.c.l.b16 %v1856
        %v1889 = vunpack.c.l.b16 %v1857
        %v1890 = vunpack.c.l.b16 %v1858
        %v1891 = vpack.c.b16 %v1876, %v1875
        %v1892 = vpack.c.b16 %v1878, %v1877
        %v1893 = vpack.c.b16 %v1880, %v1879
        %v1894 = vpack.c.b16 %v1882, %v1881
        %v1895 = vpack.c.b16 %v1884, %v1883
        %v1896 = vpack.c.b16 %v1886, %v1885
        %v1897 = vpack.c.b16 %v1888, %v1887
        %v1898 = vpack.c.b16 %v1890, %v1889
        %1907 = vmatprep.subr.bf16.mxu0 0
        %1908 = vmatpush1.bf16.msra.mxu0 %v1891
        %1909 = vmatprep.subr.bf16.mxu0 0
        %1910 = vmatpush1.bf16.msra.mxu0 %v1892
        %1911 = vmatprep.subr.bf16.mxu0 0
        %1912 = vmatpush1.bf16.msra.mxu0 %v1893
        %1913 = vmatprep.subr.bf16.mxu0 0
        %1914 = vmatpush1.bf16.msra.mxu0 %v1894
        %1915 = vmatprep.subr.bf16.mxu0 0
        %1916 = vmatpush1.bf16.msra.mxu0 %v1895
        %1917 = vmatprep.subr.bf16.mxu0 0
        %1918 = vmatpush1.bf16.msra.mxu0 %v1896
        %1919 = vmatprep.subr.bf16.mxu0 0
        %1920 = vmatpush1.bf16.msra.mxu0 %v1897
        %1921 = vmatprep.subr.bf16.mxu0 0
        %1922 = vmatpush1.bf16.msra.mxu0 %v1898
        %1923 = vmatprep.subr.bf16.mxu0 0
        %1924 = vmatpush1.bf16.msra.mxu0 0
        %1925 = vmatprep.subr.bf16.mxu0 0
        %1926 = vmatpush1.bf16.msra.mxu0 0
        %1927 = vmatprep.subr.bf16.mxu0 0
        %1928 = vmatpush1.bf16.msra.mxu0 0
        %1929 = vmatprep.subr.bf16.mxu0 0
        %1930 = vmatpush1.bf16.msra.mxu0 0
        %1931 = vmatprep.subr.bf16.mxu0 0
        %1932 = vmatpush1.bf16.msra.mxu0 0
        %1933 = vmatprep.subr.bf16.mxu0 0
        %1934 = vmatpush1.bf16.msra.mxu0 0
        %1935 = vmatprep.subr.bf16.mxu0 0
        %1936 = vmatpush1.bf16.msra.mxu0 0
        %1937 = vmatprep.subr.bf16.mxu0 0
        %1938 = vmatpush1.bf16.msra.mxu0 0
        %1939 = vmatprep.mubr.bf16.mxu0 0
        %1940 = vmatmul.mubr.bf16.gmra.mrb[0].mxu0 %v1830
        %v1941 = vpop.f32.mrb[0].mxu0
        %v1942 = vadd.f32 0.0, %v1941
        %v1943 = vpop.f32.mrb[0].mxu0
        %v1944 = vpop.f32.mrb[0].mxu0
        %v1945 = vadd.f32 0.0, %v1944
        %v1946 = vpop.f32.mrb[0].mxu0
        %1947 = vmatprep.mubr.bf16.mxu0 0
        %1948 = vmatmul.mubr.bf16.gmra.mrb[0].mxu0 %v1831
        %v1949 = vpop.f32.mrb[0].mxu0
        %v1950 = vadd.f32 0.0, %v1949
        %v1951 = vpop.f32.mrb[0].mxu0
        %v1952 = vpop.f32.mrb[0].mxu0
        %v1953 = vadd.f32 0.0, %v1952
        %v1954 = vpop.f32.mrb[0].mxu0
        %1955 = vmatprep.mubr.bf16.mxu0 0
        %1956 = vmatmul.mubr.bf16.gmra.mrb[0].mxu0 %v1832
        %v1957 = vpop.f32.mrb[0].mxu0
        %v1958 = vadd.f32 0.0, %v1957
        %v1959 = vpop.f32.mrb[0].mxu0
        %v1960 = vpop.f32.mrb[0].mxu0
        %v1961 = vadd.f32 0.0, %v1960
        %v1962 = vpop.f32.mrb[0].mxu0
        %1963 = vmatprep.mubr.bf16.mxu0 0
        %1964 = vmatmul.mubr.bf16.gmra.mrb[0].mxu0 %v1833
        %v1965 = vpop.f32.mrb[0].mxu0
        %v1966 = vadd.f32 0.0, %v1965
        %v1967 = vpop.f32.mrb[0].mxu0
        %v1968 = vpop.f32.mrb[0].mxu0
        %v1969 = vadd.f32 0.0, %v1968
        %v1970 = vpop.f32.mrb[0].mxu0
        %1971 = vmatprep.mubr.bf16.mxu0 0
        %1972 = vmatmul.mubr.bf16.gmra.mrb[0].mxu0 %v1834
        %v1973 = vpop.f32.mrb[0].mxu0
        %v1974 = vadd.f32 0.0, %v1973
        %v1975 = vpop.f32.mrb[0].mxu0
        %v1976 = vpop.f32.mrb[0].mxu0
        %v1977 = vadd.f32 0.0, %v1976
        %v1978 = vpop.f32.mrb[0].mxu0
        %1979 = vmatprep.mubr.bf16.mxu0 0
        %1980 = vmatmul.mubr.bf16.gmra.mrb[0].mxu0 %v1835
        %v1981 = vpop.f32.mrb[0].mxu0
        %v1982 = vadd.f32 0.0, %v1981
        %v1983 = vpop.f32.mrb[0].mxu0
        %v1984 = vpop.f32.mrb[0].mxu0
        %v1985 = vadd.f32 0.0, %v1984
        %v1986 = vpop.f32.mrb[0].mxu0
        %1987 = vmatprep.mubr.bf16.mxu0 0
        %1988 = vmatmul.mubr.bf16.gmra.mrb[0].mxu0 %v1836
        %v1989 = vpop.f32.mrb[0].mxu0
        %v1990 = vadd.f32 0.0, %v1989
        %v1991 = vpop.f32.mrb[0].mxu0
        %v1992 = vpop.f32.mrb[0].mxu0
        %v1993 = vadd.f32 0.0, %v1992
        %v1994 = vpop.f32.mrb[0].mxu0
        %1995 = vmatprep.mubr.bf16.mxu0 0
        %1996 = vmatmul.mubr.bf16.gmra.mrb[0].mxu0 %v1837
        %v1997 = vpop.f32.mrb[0].mxu0
        %v1998 = vadd.f32 0.0, %v1997
        %v1999 = vpop.f32.mrb[0].mxu0
        %v2000 = vpop.f32.mrb[0].mxu0
        %v2001 = vadd.f32 0.0, %v2000
        %v2002 = vpop.f32.mrb[0].mxu0
        %2003 = vmatprep.mubr.bf16.mxu0 0
        %2004 = vmatmul.mubr.bf16.gmra.mrb[0].mxu0 %v1838
        %v2005 = vpop.f32.mrb[0].mxu0
        %v2006 = vadd.f32 0.0, %v2005
        %v2007 = vpop.f32.mrb[0].mxu0
        %v2008 = vpop.f32.mrb[0].mxu0
        %v2009 = vadd.f32 0.0, %v2008
        %v2010 = vpop.f32.mrb[0].mxu0
        %2011 = vmatprep.mubr.bf16.mxu0 0
        %2012 = vmatmul.mubr.bf16.gmra.mrb[0].mxu0 %v1839
        %v2013 = vpop.f32.mrb[0].mxu0
        %v2014 = vadd.f32 0.0, %v2013
        %v2015 = vpop.f32.mrb[0].mxu0
        %v2016 = vpop.f32.mrb[0].mxu0
        %v2017 = vadd.f32 0.0, %v2016
        %v2018 = vpop.f32.mrb[0].mxu0
        %2019 = vmatprep.mubr.bf16.mxu0 0
        %2020 = vmatmul.mubr.bf16.gmra.mrb[0].mxu0 %v1840
        %v2021 = vpop.f32.mrb[0].mxu0
        %v2022 = vadd.f32 0.0, %v2021
        %v2023 = vpop.f32.mrb[0].mxu0
        %v2024 = vpop.f32.mrb[0].mxu0
        %v2025 = vadd.f32 0.0, %v2024
        %v2026 = vpop.f32.mrb[0].mxu0
        %2027 = vmatprep.mubr.bf16.mxu0 0
        %2028 = vmatmul.mubr.bf16.gmra.mrb[0].mxu0 %v1841
        %v2029 = vpop.f32.mrb[0].mxu0
        %v2030 = vadd.f32 0.0, %v2029
        %v2031 = vpop.f32.mrb[0].mxu0
        %v2032 = vpop.f32.mrb[0].mxu0
        %v2033 = vadd.f32 0.0, %v2032
        %v2034 = vpop.f32.mrb[0].mxu0
        %2035 = vdwg.mxu0
        %v2036 = vadd.f32 %v1712, %v1942
        %v2037 = vadd.f32 %v1715, %v1945
        %v2038 = vadd.f32 %v1720, %v1950
        %v2039 = vadd.f32 %v1723, %v1953
        %v2040 = vadd.f32 %v1728, %v1958
        %v2041 = vadd.f32 %v1731, %v1961
        %v2042 = vadd.f32 %v1736, %v1966
        %v2043 = vadd.f32 %v1739, %v1969
        %v2044 = vadd.f32 %v1744, %v1974
        %v2045 = vadd.f32 %v1747, %v1977
        %v2046 = vadd.f32 %v1752, %v1982
        %v2047 = vadd.f32 %v1755, %v1985
        %v2048 = vadd.f32 %v1760, %v1990
        %v2049 = vadd.f32 %v1763, %v1993
        %v2050 = vadd.f32 %v1768, %v1998
        %v2051 = vadd.f32 %v1771, %v2001
        %v2052 = vadd.f32 %v1776, %v2006
        %v2053 = vadd.f32 %v1779, %v2009
        %v2054 = vadd.f32 %v1784, %v2014
        %v2055 = vadd.f32 %v1787, %v2017
        %v2056 = vadd.f32 %v1792, %v2022
        %v2057 = vadd.f32 %v1795, %v2025
        %v2058 = vadd.f32 %v1800, %v2030
        %v2059 = vadd.f32 %v1803, %v2033
        %v2060 = vld [vmem:[#allocation2 + $0x1f] sm:$0xff]
        %v2061 = vld [vmem:[#allocation2 + $0x27] sm:$0xff]
        %v2062 = vld [vmem:[#allocation2 + $0x2f] sm:$0xff]
        %v2063 = vld [vmem:[#allocation2 + $0x37] sm:$0xff]
        %v2064 = vld [vmem:[#allocation2 + $0x3f] sm:$0xff]
        %v2065 = vld [vmem:[#allocation2 + $0x47] sm:$0xff]
        %v2066 = vld [vmem:[#allocation2 + $0x4f] sm:$0xff]
        %v2067 = vld [vmem:[#allocation2 + $0x57] sm:$0xff]
        %v2068 = vld [vmem:[#allocation2 + $0x5f] sm:$0xff]
        %v2069 = vld [vmem:[#allocation2 + $0x67] sm:$0xff]
        %v2070 = vld [vmem:[#allocation2 + $0x6f] sm:$0xff]
        %v2071 = vld [vmem:[#allocation2 + $0x77] sm:$0xff]
        %v2072 = vld [vmem:[#allocation2 + $0x7f] sm:$0xff]
        %v2073 = vld [vmem:[#allocation2 + $0x87] sm:$0xff]
        %v2074 = vld [vmem:[#allocation2 + $0x8f] sm:$0xff]
        %v2075 = vld [vmem:[#allocation2 + $0x97] sm:$0xff]
        %v2076 = vld [vmem:[#allocation2 + $0x9f] sm:$0xff]
        %v2077 = vld [vmem:[#allocation2 + $0xa7] sm:$0xff]
        %v2078 = vld [vmem:[#allocation2 + $0xaf] sm:$0xff]
        %v2079 = vld [vmem:[#allocation2 + $0xb7] sm:$0xff]
        %v2080 = vld [vmem:[#allocation2 + $0xbf] sm:$0xff]
        %v2081 = vld [vmem:[#allocation2 + $0xc7] sm:$0xff]
        %v2082 = vld [vmem:[#allocation2 + $0xcf] sm:$0xff]
        %v2083 = vld [vmem:[#allocation2 + $0xd7] sm:$0xff]
        %v2084 = vpack.c.bf16 %v2061, %v2060
        %v2085 = vpack.c.bf16 %v2063, %v2062
        %v2086 = vpack.c.bf16 %v2065, %v2064
        %v2087 = vpack.c.bf16 %v2067, %v2066
        %v2088 = vpack.c.bf16 %v2069, %v2068
        %v2089 = vpack.c.bf16 %v2071, %v2070
        %v2090 = vpack.c.bf16 %v2073, %v2072
        %v2091 = vpack.c.bf16 %v2075, %v2074
        %v2092 = vpack.c.bf16 %v2077, %v2076
        %v2093 = vpack.c.bf16 %v2079, %v2078
        %v2094 = vpack.c.bf16 %v2081, %v2080
        %v2095 = vpack.c.bf16 %v2083, %v2082
        %s2096 = scalar_lea.vmem [#allocation11], 192
        %v2097 = vld [vmem:[%s2096] sm:$0xf]
        %v2098 = vld [vmem:[%s2096 + $0x4] sm:$0xf]
        %v2099 = vld [vmem:[%s2096 + $0x8] sm:$0xf]
        %v2100 = vld [vmem:[%s2096 + $0xc] sm:$0xf]
        %v2101 = vld [vmem:[%s2096 + $0x10] sm:$0xf]
        %v2102 = vld [vmem:[%s2096 + $0x14] sm:$0xf]
        %v2103 = vld [vmem:[%s2096 + $0x18] sm:$0xf]
        %v2104 = vld [vmem:[%s2096 + $0x1c] sm:$0xf]
        %v2105 = vld [vmem:[%s2096 + $0x20] sm:$0xf]
        %v2106 = vld [vmem:[%s2096 + $0x24] sm:$0xf]
        %v2107 = vld [vmem:[%s2096 + $0x28] sm:$0xf]
        %v2108 = vld [vmem:[%s2096 + $0x2c] sm:$0xf]
        %v2109 = vld [vmem:[%s2096 + $0x30] sm:$0xf]
        %v2110 = vld [vmem:[%s2096 + $0x34] sm:$0xf]
        %v2111 = vld [vmem:[%s2096 + $0x38] sm:$0xf]
        %v2112 = vld [vmem:[%s2096 + $0x3c] sm:$0xf]
        %v2129 = vunpack.c.l.b16 %v2097
        %v2130 = vunpack.c.l.b16 %v2098
        %v2131 = vunpack.c.l.b16 %v2099
        %v2132 = vunpack.c.l.b16 %v2100
        %v2133 = vunpack.c.l.b16 %v2101
        %v2134 = vunpack.c.l.b16 %v2102
        %v2135 = vunpack.c.l.b16 %v2103
        %v2136 = vunpack.c.l.b16 %v2104
        %v2137 = vunpack.c.l.b16 %v2105
        %v2138 = vunpack.c.l.b16 %v2106
        %v2139 = vunpack.c.l.b16 %v2107
        %v2140 = vunpack.c.l.b16 %v2108
        %v2141 = vunpack.c.l.b16 %v2109
        %v2142 = vunpack.c.l.b16 %v2110
        %v2143 = vunpack.c.l.b16 %v2111
        %v2144 = vunpack.c.l.b16 %v2112
        %v2145 = vpack.c.b16 %v2130, %v2129
        %v2146 = vpack.c.b16 %v2132, %v2131
        %v2147 = vpack.c.b16 %v2134, %v2133
        %v2148 = vpack.c.b16 %v2136, %v2135
        %v2149 = vpack.c.b16 %v2138, %v2137
        %v2150 = vpack.c.b16 %v2140, %v2139
        %v2151 = vpack.c.b16 %v2142, %v2141
        %v2152 = vpack.c.b16 %v2144, %v2143
        %2161 = vmatprep.subr.bf16.mxu0 0
        %2162 = vmatpush1.bf16.msra.mxu0 %v2145
        %2163 = vmatprep.subr.bf16.mxu0 0
        %2164 = vmatpush1.bf16.msra.mxu0 %v2146
        %2165 = vmatprep.subr.bf16.mxu0 0
        %2166 = vmatpush1.bf16.msra.mxu0 %v2147
        %2167 = vmatprep.subr.bf16.mxu0 0
        %2168 = vmatpush1.bf16.msra.mxu0 %v2148
        %2169 = vmatprep.subr.bf16.mxu0 0
        %2170 = vmatpush1.bf16.msra.mxu0 %v2149
        %2171 = vmatprep.subr.bf16.mxu0 0
        %2172 = vmatpush1.bf16.msra.mxu0 %v2150
        %2173 = vmatprep.subr.bf16.mxu0 0
        %2174 = vmatpush1.bf16.msra.mxu0 %v2151
        %2175 = vmatprep.subr.bf16.mxu0 0
        %2176 = vmatpush1.bf16.msra.mxu0 %v2152
        %2177 = vmatprep.subr.bf16.mxu0 0
        %2178 = vmatpush1.bf16.msra.mxu0 0
        %2179 = vmatprep.subr.bf16.mxu0 0
        %2180 = vmatpush1.bf16.msra.mxu0 0
        %2181 = vmatprep.subr.bf16.mxu0 0
        %2182 = vmatpush1.bf16.msra.mxu0 0
        %2183 = vmatprep.subr.bf16.mxu0 0
        %2184 = vmatpush1.bf16.msra.mxu0 0
        %2185 = vmatprep.subr.bf16.mxu0 0
        %2186 = vmatpush1.bf16.msra.mxu0 0
        %2187 = vmatprep.subr.bf16.mxu0 0
        %2188 = vmatpush1.bf16.msra.mxu0 0
        %2189 = vmatprep.subr.bf16.mxu0 0
        %2190 = vmatpush1.bf16.msra.mxu0 0
        %2191 = vmatprep.subr.bf16.mxu0 0
        %2192 = vmatpush1.bf16.msra.mxu0 0
        %2193 = vmatprep.mubr.bf16.mxu0 0
        %2194 = vmatmul.mubr.bf16.gmra.mrb[0].mxu0 %v2084
        %v2195 = vpop.f32.mrb[0].mxu0
        %v2196 = vadd.f32 0.0, %v2195
        %v2197 = vpop.f32.mrb[0].mxu0
        %v2198 = vpop.f32.mrb[0].mxu0
        %v2199 = vadd.f32 0.0, %v2198
        %v2200 = vpop.f32.mrb[0].mxu0
        %2201 = vmatprep.mubr.bf16.mxu0 0
        %2202 = vmatmul.mubr.bf16.gmra.mrb[0].mxu0 %v2085
        %v2203 = vpop.f32.mrb[0].mxu0
        %v2204 = vadd.f32 0.0, %v2203
        %v2205 = vpop.f32.mrb[0].mxu0
        %v2206 = vpop.f32.mrb[0].mxu0
        %v2207 = vadd.f32 0.0, %v2206
        %v2208 = vpop.f32.mrb[0].mxu0
        %2209 = vmatprep.mubr.bf16.mxu0 0
        %2210 = vmatmul.mubr.bf16.gmra.mrb[0].mxu0 %v2086
        %v2211 = vpop.f32.mrb[0].mxu0
        %v2212 = vadd.f32 0.0, %v2211
        %v2213 = vpop.f32.mrb[0].mxu0
        %v2214 = vpop.f32.mrb[0].mxu0
        %v2215 = vadd.f32 0.0, %v2214
        %v2216 = vpop.f32.mrb[0].mxu0
        %2217 = vmatprep.mubr.bf16.mxu0 0
        %2218 = vmatmul.mubr.bf16.gmra.mrb[0].mxu0 %v2087
        %v2219 = vpop.f32.mrb[0].mxu0
        %v2220 = vadd.f32 0.0, %v2219
        %v2221 = vpop.f32.mrb[0].mxu0
        %v2222 = vpop.f32.mrb[0].mxu0
        %v2223 = vadd.f32 0.0, %v2222
        %v2224 = vpop.f32.mrb[0].mxu0
        %2225 = vmatprep.mubr.bf16.mxu0 0
        %2226 = vmatmul.mubr.bf16.gmra.mrb[0].mxu0 %v2088
        %v2227 = vpop.f32.mrb[0].mxu0
        %v2228 = vadd.f32 0.0, %v2227
        %v2229 = vpop.f32.mrb[0].mxu0
        %v2230 = vpop.f32.mrb[0].mxu0
        %v2231 = vadd.f32 0.0, %v2230
        %v2232 = vpop.f32.mrb[0].mxu0
        %2233 = vmatprep.mubr.bf16.mxu0 0
        %2234 = vmatmul.mubr.bf16.gmra.mrb[0].mxu0 %v2089
        %v2235 = vpop.f32.mrb[0].mxu0
        %v2236 = vadd.f32 0.0, %v2235
        %v2237 = vpop.f32.mrb[0].mxu0
        %v2238 = vpop.f32.mrb[0].mxu0
        %v2239 = vadd.f32 0.0, %v2238
        %v2240 = vpop.f32.mrb[0].mxu0
        %2241 = vmatprep.mubr.bf16.mxu0 0
        %2242 = vmatmul.mubr.bf16.gmra.mrb[0].mxu0 %v2090
        %v2243 = vpop.f32.mrb[0].mxu0
        %v2244 = vadd.f32 0.0, %v2243
        %v2245 = vpop.f32.mrb[0].mxu0
        %v2246 = vpop.f32.mrb[0].mxu0
        %v2247 = vadd.f32 0.0, %v2246
        %v2248 = vpop.f32.mrb[0].mxu0
        %2249 = vmatprep.mubr.bf16.mxu0 0
        %2250 = vmatmul.mubr.bf16.gmra.mrb[0].mxu0 %v2091
        %v2251 = vpop.f32.mrb[0].mxu0
        %v2252 = vadd.f32 0.0, %v2251
        %v2253 = vpop.f32.mrb[0].mxu0
        %v2254 = vpop.f32.mrb[0].mxu0
        %v2255 = vadd.f32 0.0, %v2254
        %v2256 = vpop.f32.mrb[0].mxu0
        %2257 = vmatprep.mubr.bf16.mxu0 0
        %2258 = vmatmul.mubr.bf16.gmra.mrb[0].mxu0 %v2092
        %v2259 = vpop.f32.mrb[0].mxu0
        %v2260 = vadd.f32 0.0, %v2259
        %v2261 = vpop.f32.mrb[0].mxu0
        %v2262 = vpop.f32.mrb[0].mxu0
        %v2263 = vadd.f32 0.0, %v2262
        %v2264 = vpop.f32.mrb[0].mxu0
        %2265 = vmatprep.mubr.bf16.mxu0 0
        %2266 = vmatmul.mubr.bf16.gmra.mrb[0].mxu0 %v2093
        %v2267 = vpop.f32.mrb[0].mxu0
        %v2268 = vadd.f32 0.0, %v2267
        %v2269 = vpop.f32.mrb[0].mxu0
        %v2270 = vpop.f32.mrb[0].mxu0
        %v2271 = vadd.f32 0.0, %v2270
        %v2272 = vpop.f32.mrb[0].mxu0
        %2273 = vmatprep.mubr.bf16.mxu0 0
        %2274 = vmatmul.mubr.bf16.gmra.mrb[0].mxu0 %v2094
        %v2275 = vpop.f32.mrb[0].mxu0
        %v2276 = vadd.f32 0.0, %v2275
        %v2277 = vpop.f32.mrb[0].mxu0
        %v2278 = vpop.f32.mrb[0].mxu0
        %v2279 = vadd.f32 0.0, %v2278
        %v2280 = vpop.f32.mrb[0].mxu0
        %2281 = vmatprep.mubr.bf16.mxu0 0
        %2282 = vmatmul.mubr.bf16.gmra.mrb[0].mxu0 %v2095
        %v2283 = vpop.f32.mrb[0].mxu0
        %v2284 = vadd.f32 0.0, %v2283
        %v2285 = vpop.f32.mrb[0].mxu0
        %v2286 = vpop.f32.mrb[0].mxu0
        %v2287 = vadd.f32 0.0, %v2286
        %v2288 = vpop.f32.mrb[0].mxu0
        %2289 = vdwg.mxu0
        %v2290 = vadd.f32 %v2036, %v2196
        %v2291 = vadd.f32 %v2037, %v2199
        %v2292 = vadd.f32 %v2038, %v2204
        %v2293 = vadd.f32 %v2039, %v2207
        %v2294 = vadd.f32 %v2040, %v2212
        %v2295 = vadd.f32 %v2041, %v2215
        %v2296 = vadd.f32 %v2042, %v2220
        %v2297 = vadd.f32 %v2043, %v2223
        %v2298 = vadd.f32 %v2044, %v2228
        %v2299 = vadd.f32 %v2045, %v2231
        %v2300 = vadd.f32 %v2046, %v2236
        %v2301 = vadd.f32 %v2047, %v2239
        %v2302 = vadd.f32 %v2048, %v2244
        %v2303 = vadd.f32 %v2049, %v2247
        %v2304 = vadd.f32 %v2050, %v2252
        %v2305 = vadd.f32 %v2051, %v2255
        %v2306 = vadd.f32 %v2052, %v2260
        %v2307 = vadd.f32 %v2053, %v2263
        %v2308 = vadd.f32 %v2054, %v2268
        %v2309 = vadd.f32 %v2055, %v2271
        %v2310 = vadd.f32 %v2056, %v2276
        %v2311 = vadd.f32 %v2057, %v2279
        %v2312 = vadd.f32 %v2058, %v2284
        %v2313 = vadd.f32 %v2059, %v2287
        %v2314 = vld [vmem:[#allocation2 + $0x20] sm:$0xff]
        %v2315 = vld [vmem:[#allocation2 + $0x28] sm:$0xff]
        %v2316 = vld [vmem:[#allocation2 + $0x30] sm:$0xff]
        %v2317 = vld [vmem:[#allocation2 + $0x38] sm:$0xff]
        %v2318 = vld [vmem:[#allocation2 + $0x40] sm:$0xff]
        %v2319 = vld [vmem:[#allocation2 + $0x48] sm:$0xff]
        %v2320 = vld [vmem:[#allocation2 + $0x50] sm:$0xff]
        %v2321 = vld [vmem:[#allocation2 + $0x58] sm:$0xff]
        %v2322 = vld [vmem:[#allocation2 + $0x60] sm:$0xff]
        %v2323 = vld [vmem:[#allocation2 + $0x68] sm:$0xff]
        %v2324 = vld [vmem:[#allocation2 + $0x70] sm:$0xff]
        %v2325 = vld [vmem:[#allocation2 + $0x78] sm:$0xff]
        %v2326 = vld [vmem:[#allocation2 + $0x80] sm:$0xff]
        %v2327 = vld [vmem:[#allocation2 + $0x88] sm:$0xff]
        %v2328 = vld [vmem:[#allocation2 + $0x90] sm:$0xff]
        %v2329 = vld [vmem:[#allocation2 + $0x98] sm:$0xff]
        %v2330 = vld [vmem:[#allocation2 + $0xa0] sm:$0xff]
        %v2331 = vld [vmem:[#allocation2 + $0xa8] sm:$0xff]
        %v2332 = vld [vmem:[#allocation2 + $0xb0] sm:$0xff]
        %v2333 = vld [vmem:[#allocation2 + $0xb8] sm:$0xff]
        %v2334 = vld [vmem:[#allocation2 + $0xc0] sm:$0xff]
        %v2335 = vld [vmem:[#allocation2 + $0xc8] sm:$0xff]
        %v2336 = vld [vmem:[#allocation2 + $0xd0] sm:$0xff]
        %v2337 = vld [vmem:[#allocation2 + $0xd8] sm:$0xff]
        %v2338 = vpack.c.bf16 %v2315, %v2314
        %v2339 = vpack.c.bf16 %v2317, %v2316
        %v2340 = vpack.c.bf16 %v2319, %v2318
        %v2341 = vpack.c.bf16 %v2321, %v2320
        %v2342 = vpack.c.bf16 %v2323, %v2322
        %v2343 = vpack.c.bf16 %v2325, %v2324
        %v2344 = vpack.c.bf16 %v2327, %v2326
        %v2345 = vpack.c.bf16 %v2329, %v2328
        %v2346 = vpack.c.bf16 %v2331, %v2330
        %v2347 = vpack.c.bf16 %v2333, %v2332
        %v2348 = vpack.c.bf16 %v2335, %v2334
        %v2349 = vpack.c.bf16 %v2337, %v2336
        %s2350 = scalar_lea.vmem [#allocation11], 256
        %v2351 = vld [vmem:[%s2350] sm:$0xf]
        %v2352 = vld [vmem:[%s2350 + $0x4] sm:$0xf]
        %v2353 = vld [vmem:[%s2350 + $0x8] sm:$0xf]
        %v2354 = vld [vmem:[%s2350 + $0xc] sm:$0xf]
        %v2355 = vld [vmem:[%s2350 + $0x10] sm:$0xf]
        %v2356 = vld [vmem:[%s2350 + $0x14] sm:$0xf]
        %v2357 = vld [vmem:[%s2350 + $0x18] sm:$0xf]
        %v2358 = vld [vmem:[%s2350 + $0x1c] sm:$0xf]
        %v2359 = vld [vmem:[%s2350 + $0x20] sm:$0xf]
        %v2360 = vld [vmem:[%s2350 + $0x24] sm:$0xf]
        %v2361 = vld [vmem:[%s2350 + $0x28] sm:$0xf]
        %v2362 = vld [vmem:[%s2350 + $0x2c] sm:$0xf]
        %v2363 = vld [vmem:[%s2350 + $0x30] sm:$0xf]
        %v2364 = vld [vmem:[%s2350 + $0x34] sm:$0xf]
        %v2365 = vld [vmem:[%s2350 + $0x38] sm:$0xf]
        %v2366 = vld [vmem:[%s2350 + $0x3c] sm:$0xf]
        %v2383 = vunpack.c.l.b16 %v2351
        %v2384 = vunpack.c.l.b16 %v2352
        %v2385 = vunpack.c.l.b16 %v2353
        %v2386 = vunpack.c.l.b16 %v2354
        %v2387 = vunpack.c.l.b16 %v2355
        %v2388 = vunpack.c.l.b16 %v2356
        %v2389 = vunpack.c.l.b16 %v2357
        %v2390 = vunpack.c.l.b16 %v2358
        %v2391 = vunpack.c.l.b16 %v2359
        %v2392 = vunpack.c.l.b16 %v2360
        %v2393 = vunpack.c.l.b16 %v2361
        %v2394 = vunpack.c.l.b16 %v2362
        %v2395 = vunpack.c.l.b16 %v2363
        %v2396 = vunpack.c.l.b16 %v2364
        %v2397 = vunpack.c.l.b16 %v2365
        %v2398 = vunpack.c.l.b16 %v2366
        %v2399 = vpack.c.b16 %v2384, %v2383
        %v2400 = vpack.c.b16 %v2386, %v2385
        %v2401 = vpack.c.b16 %v2388, %v2387
        %v2402 = vpack.c.b16 %v2390, %v2389
        %v2403 = vpack.c.b16 %v2392, %v2391
        %v2404 = vpack.c.b16 %v2394, %v2393
        %v2405 = vpack.c.b16 %v2396, %v2395
        %v2406 = vpack.c.b16 %v2398, %v2397
        %2415 = vmatprep.subr.bf16.mxu0 0
        %2416 = vmatpush1.bf16.msra.mxu0 %v2399
        %2417 = vmatprep.subr.bf16.mxu0 0
        %2418 = vmatpush1.bf16.msra.mxu0 %v2400
        %2419 = vmatprep.subr.bf16.mxu0 0
        %2420 = vmatpush1.bf16.msra.mxu0 %v2401
        %2421 = vmatprep.subr.bf16.mxu0 0
        %2422 = vmatpush1.bf16.msra.mxu0 %v2402
        %2423 = vmatprep.subr.bf16.mxu0 0
        %2424 = vmatpush1.bf16.msra.mxu0 %v2403
        %2425 = vmatprep.subr.bf16.mxu0 0
        %2426 = vmatpush1.bf16.msra.mxu0 %v2404
        %2427 = vmatprep.subr.bf16.mxu0 0
        %2428 = vmatpush1.bf16.msra.mxu0 %v2405
        %2429 = vmatprep.subr.bf16.mxu0 0
        %2430 = vmatpush1.bf16.msra.mxu0 %v2406
        %2431 = vmatprep.subr.bf16.mxu0 0
        %2432 = vmatpush1.bf16.msra.mxu0 0
        %2433 = vmatprep.subr.bf16.mxu0 0
        %2434 = vmatpush1.bf16.msra.mxu0 0
        %2435 = vmatprep.subr.bf16.mxu0 0
        %2436 = vmatpush1.bf16.msra.mxu0 0
        %2437 = vmatprep.subr.bf16.mxu0 0
        %2438 = vmatpush1.bf16.msra.mxu0 0
        %2439 = vmatprep.subr.bf16.mxu0 0
        %2440 = vmatpush1.bf16.msra.mxu0 0
        %2441 = vmatprep.subr.bf16.mxu0 0
        %2442 = vmatpush1.bf16.msra.mxu0 0
        %2443 = vmatprep.subr.bf16.mxu0 0
        %2444 = vmatpush1.bf16.msra.mxu0 0
        %2445 = vmatprep.subr.bf16.mxu0 0
        %2446 = vmatpush1.bf16.msra.mxu0 0
        %2447 = vmatprep.mubr.bf16.mxu0 0
        %2448 = vmatmul.mubr.bf16.gmra.mrb[0].mxu0 %v2338
        %v2449 = vpop.f32.mrb[0].mxu0
        %v2450 = vadd.f32 0.0, %v2449
        %v2451 = vpop.f32.mrb[0].mxu0
        %v2452 = vpop.f32.mrb[0].mxu0
        %v2453 = vadd.f32 0.0, %v2452
        %v2454 = vpop.f32.mrb[0].mxu0
        %2455 = vmatprep.mubr.bf16.mxu0 0
        %2456 = vmatmul.mubr.bf16.gmra.mrb[0].mxu0 %v2339
        %v2457 = vpop.f32.mrb[0].mxu0
        %v2458 = vadd.f32 0.0, %v2457
        %v2459 = vpop.f32.mrb[0].mxu0
        %v2460 = vpop.f32.mrb[0].mxu0
        %v2461 = vadd.f32 0.0, %v2460
        %v2462 = vpop.f32.mrb[0].mxu0
        %2463 = vmatprep.mubr.bf16.mxu0 0
        %2464 = vmatmul.mubr.bf16.gmra.mrb[0].mxu0 %v2340
        %v2465 = vpop.f32.mrb[0].mxu0
        %v2466 = vadd.f32 0.0, %v2465
        %v2467 = vpop.f32.mrb[0].mxu0
        %v2468 = vpop.f32.mrb[0].mxu0
        %v2469 = vadd.f32 0.0, %v2468
        %v2470 = vpop.f32.mrb[0].mxu0
        %2471 = vmatprep.mubr.bf16.mxu0 0
        %2472 = vmatmul.mubr.bf16.gmra.mrb[0].mxu0 %v2341
        %v2473 = vpop.f32.mrb[0].mxu0
        %v2474 = vadd.f32 0.0, %v2473
        %v2475 = vpop.f32.mrb[0].mxu0
        %v2476 = vpop.f32.mrb[0].mxu0
        %v2477 = vadd.f32 0.0, %v2476
        %v2478 = vpop.f32.mrb[0].mxu0
        %2479 = vmatprep.mubr.bf16.mxu0 0
        %2480 = vmatmul.mubr.bf16.gmra.mrb[0].mxu0 %v2342
        %v2481 = vpop.f32.mrb[0].mxu0
        %v2482 = vadd.f32 0.0, %v2481
        %v2483 = vpop.f32.mrb[0].mxu0
        %v2484 = vpop.f32.mrb[0].mxu0
        %v2485 = vadd.f32 0.0, %v2484
        %v2486 = vpop.f32.mrb[0].mxu0
        %2487 = vmatprep.mubr.bf16.mxu0 0
        %2488 = vmatmul.mubr.bf16.gmra.mrb[0].mxu0 %v2343
        %v2489 = vpop.f32.mrb[0].mxu0
        %v2490 = vadd.f32 0.0, %v2489
        %v2491 = vpop.f32.mrb[0].mxu0
        %v2492 = vpop.f32.mrb[0].mxu0
        %v2493 = vadd.f32 0.0, %v2492
        %v2494 = vpop.f32.mrb[0].mxu0
        %2495 = vmatprep.mubr.bf16.mxu0 0
        %2496 = vmatmul.mubr.bf16.gmra.mrb[0].mxu0 %v2344
        %v2497 = vpop.f32.mrb[0].mxu0
        %v2498 = vadd.f32 0.0, %v2497
        %v2499 = vpop.f32.mrb[0].mxu0
        %v2500 = vpop.f32.mrb[0].mxu0
        %v2501 = vadd.f32 0.0, %v2500
        %v2502 = vpop.f32.mrb[0].mxu0
        %2503 = vmatprep.mubr.bf16.mxu0 0
        %2504 = vmatmul.mubr.bf16.gmra.mrb[0].mxu0 %v2345
        %v2505 = vpop.f32.mrb[0].mxu0
        %v2506 = vadd.f32 0.0, %v2505
        %v2507 = vpop.f32.mrb[0].mxu0
        %v2508 = vpop.f32.mrb[0].mxu0
        %v2509 = vadd.f32 0.0, %v2508
        %v2510 = vpop.f32.mrb[0].mxu0
        %2511 = vmatprep.mubr.bf16.mxu0 0
        %2512 = vmatmul.mubr.bf16.gmra.mrb[0].mxu0 %v2346
        %v2513 = vpop.f32.mrb[0].mxu0
        %v2514 = vadd.f32 0.0, %v2513
        %v2515 = vpop.f32.mrb[0].mxu0
        %v2516 = vpop.f32.mrb[0].mxu0
        %v2517 = vadd.f32 0.0, %v2516
        %v2518 = vpop.f32.mrb[0].mxu0
        %2519 = vmatprep.mubr.bf16.mxu0 0
        %2520 = vmatmul.mubr.bf16.gmra.mrb[0].mxu0 %v2347
        %v2521 = vpop.f32.mrb[0].mxu0
        %v2522 = vadd.f32 0.0, %v2521
        %v2523 = vpop.f32.mrb[0].mxu0
        %v2524 = vpop.f32.mrb[0].mxu0
        %v2525 = vadd.f32 0.0, %v2524
        %v2526 = vpop.f32.mrb[0].mxu0
        %2527 = vmatprep.mubr.bf16.mxu0 0
        %2528 = vmatmul.mubr.bf16.gmra.mrb[0].mxu0 %v2348
        %v2529 = vpop.f32.mrb[0].mxu0
        %v2530 = vadd.f32 0.0, %v2529
        %v2531 = vpop.f32.mrb[0].mxu0
        %v2532 = vpop.f32.mrb[0].mxu0
        %v2533 = vadd.f32 0.0, %v2532
        %v2534 = vpop.f32.mrb[0].mxu0
        %2535 = vmatprep.mubr.bf16.mxu0 0
        %2536 = vmatmul.mubr.bf16.gmra.mrb[0].mxu0 %v2349
        %v2537 = vpop.f32.mrb[0].mxu0
        %v2538 = vadd.f32 0.0, %v2537
        %v2539 = vpop.f32.mrb[0].mxu0
        %v2540 = vpop.f32.mrb[0].mxu0
        %v2541 = vadd.f32 0.0, %v2540
        %v2542 = vpop.f32.mrb[0].mxu0
        %2543 = vdwg.mxu0
        %v2544 = vadd.f32 %v2290, %v2450
        %v2545 = vadd.f32 %v2291, %v2453
        %v2546 = vadd.f32 %v2292, %v2458
        %v2547 = vadd.f32 %v2293, %v2461
        %v2548 = vadd.f32 %v2294, %v2466
        %v2549 = vadd.f32 %v2295, %v2469
        %v2550 = vadd.f32 %v2296, %v2474
        %v2551 = vadd.f32 %v2297, %v2477
        %v2552 = vadd.f32 %v2298, %v2482
        %v2553 = vadd.f32 %v2299, %v2485
        %v2554 = vadd.f32 %v2300, %v2490
        %v2555 = vadd.f32 %v2301, %v2493
        %v2556 = vadd.f32 %v2302, %v2498
        %v2557 = vadd.f32 %v2303, %v2501
        %v2558 = vadd.f32 %v2304, %v2506
        %v2559 = vadd.f32 %v2305, %v2509
        %v2560 = vadd.f32 %v2306, %v2514
        %v2561 = vadd.f32 %v2307, %v2517
        %v2562 = vadd.f32 %v2308, %v2522
        %v2563 = vadd.f32 %v2309, %v2525
        %v2564 = vadd.f32 %v2310, %v2530
        %v2565 = vadd.f32 %v2311, %v2533
        %v2566 = vadd.f32 %v2312, %v2538
        %v2567 = vadd.f32 %v2313, %v2541
        %v2568 = vld [vmem:[#allocation2 + $0x21] sm:$0xff]
        %v2569 = vld [vmem:[#allocation2 + $0x29] sm:$0xff]
        %v2570 = vld [vmem:[#allocation2 + $0x31] sm:$0xff]
        %v2571 = vld [vmem:[#allocation2 + $0x39] sm:$0xff]
        %v2572 = vld [vmem:[#allocation2 + $0x41] sm:$0xff]
        %v2573 = vld [vmem:[#allocation2 + $0x49] sm:$0xff]
        %v2574 = vld [vmem:[#allocation2 + $0x51] sm:$0xff]
        %v2575 = vld [vmem:[#allocation2 + $0x59] sm:$0xff]
        %v2576 = vld [vmem:[#allocation2 + $0x61] sm:$0xff]
        %v2577 = vld [vmem:[#allocation2 + $0x69] sm:$0xff]
        %v2578 = vld [vmem:[#allocation2 + $0x71] sm:$0xff]
        %v2579 = vld [vmem:[#allocation2 + $0x79] sm:$0xff]
        %v2580 = vld [vmem:[#allocation2 + $0x81] sm:$0xff]
        %v2581 = vld [vmem:[#allocation2 + $0x89] sm:$0xff]
        %v2582 = vld [vmem:[#allocation2 + $0x91] sm:$0xff]
        %v2583 = vld [vmem:[#allocation2 + $0x99] sm:$0xff]
        %v2584 = vld [vmem:[#allocation2 + $0xa1] sm:$0xff]
        %v2585 = vld [vmem:[#allocation2 + $0xa9] sm:$0xff]
        %v2586 = vld [vmem:[#allocation2 + $0xb1] sm:$0xff]
        %v2587 = vld [vmem:[#allocation2 + $0xb9] sm:$0xff]
        %v2588 = vld [vmem:[#allocation2 + $0xc1] sm:$0xff]
        %v2589 = vld [vmem:[#allocation2 + $0xc9] sm:$0xff]
        %v2590 = vld [vmem:[#allocation2 + $0xd1] sm:$0xff]
        %v2591 = vld [vmem:[#allocation2 + $0xd9] sm:$0xff]
        %v2592 = vpack.c.bf16 %v2569, %v2568
        %v2593 = vpack.c.bf16 %v2571, %v2570
        %v2594 = vpack.c.bf16 %v2573, %v2572
        %v2595 = vpack.c.bf16 %v2575, %v2574
        %v2596 = vpack.c.bf16 %v2577, %v2576
        %v2597 = vpack.c.bf16 %v2579, %v2578
        %v2598 = vpack.c.bf16 %v2581, %v2580
        %v2599 = vpack.c.bf16 %v2583, %v2582
        %v2600 = vpack.c.bf16 %v2585, %v2584
        %v2601 = vpack.c.bf16 %v2587, %v2586
        %v2602 = vpack.c.bf16 %v2589, %v2588
        %v2603 = vpack.c.bf16 %v2591, %v2590
        %s2604 = scalar_lea.vmem [#allocation11], 320
        %v2605 = vld [vmem:[%s2604] sm:$0xf]
        %v2606 = vld [vmem:[%s2604 + $0x4] sm:$0xf]
        %v2607 = vld [vmem:[%s2604 + $0x8] sm:$0xf]
        %v2608 = vld [vmem:[%s2604 + $0xc] sm:$0xf]
        %v2609 = vld [vmem:[%s2604 + $0x10] sm:$0xf]
        %v2610 = vld [vmem:[%s2604 + $0x14] sm:$0xf]
        %v2611 = vld [vmem:[%s2604 + $0x18] sm:$0xf]
        %v2612 = vld [vmem:[%s2604 + $0x1c] sm:$0xf]
        %v2613 = vld [vmem:[%s2604 + $0x20] sm:$0xf]
        %v2614 = vld [vmem:[%s2604 + $0x24] sm:$0xf]
        %v2615 = vld [vmem:[%s2604 + $0x28] sm:$0xf]
        %v2616 = vld [vmem:[%s2604 + $0x2c] sm:$0xf]
        %v2617 = vld [vmem:[%s2604 + $0x30] sm:$0xf]
        %v2618 = vld [vmem:[%s2604 + $0x34] sm:$0xf]
        %v2619 = vld [vmem:[%s2604 + $0x38] sm:$0xf]
        %v2620 = vld [vmem:[%s2604 + $0x3c] sm:$0xf]
        %v2637 = vunpack.c.l.b16 %v2605
        %v2638 = vunpack.c.l.b16 %v2606
        %v2639 = vunpack.c.l.b16 %v2607
        %v2640 = vunpack.c.l.b16 %v2608
        %v2641 = vunpack.c.l.b16 %v2609
        %v2642 = vunpack.c.l.b16 %v2610
        %v2643 = vunpack.c.l.b16 %v2611
        %v2644 = vunpack.c.l.b16 %v2612
        %v2645 = vunpack.c.l.b16 %v2613
        %v2646 = vunpack.c.l.b16 %v2614
        %v2647 = vunpack.c.l.b16 %v2615
        %v2648 = vunpack.c.l.b16 %v2616
        %v2649 = vunpack.c.l.b16 %v2617
        %v2650 = vunpack.c.l.b16 %v2618
        %v2651 = vunpack.c.l.b16 %v2619
        %v2652 = vunpack.c.l.b16 %v2620
        %v2653 = vpack.c.b16 %v2638, %v2637
        %v2654 = vpack.c.b16 %v2640, %v2639
        %v2655 = vpack.c.b16 %v2642, %v2641
        %v2656 = vpack.c.b16 %v2644, %v2643
        %v2657 = vpack.c.b16 %v2646, %v2645
        %v2658 = vpack.c.b16 %v2648, %v2647
        %v2659 = vpack.c.b16 %v2650, %v2649
        %v2660 = vpack.c.b16 %v2652, %v2651
        %2669 = vmatprep.subr.bf16.mxu0 0
        %2670 = vmatpush1.bf16.msra.mxu0 %v2653
        %2671 = vmatprep.subr.bf16.mxu0 0
        %2672 = vmatpush1.bf16.msra.mxu0 %v2654
        %2673 = vmatprep.subr.bf16.mxu0 0
        %2674 = vmatpush1.bf16.msra.mxu0 %v2655
        %2675 = vmatprep.subr.bf16.mxu0 0
        %2676 = vmatpush1.bf16.msra.mxu0 %v2656
        %2677 = vmatprep.subr.bf16.mxu0 0
        %2678 = vmatpush1.bf16.msra.mxu0 %v2657
        %2679 = vmatprep.subr.bf16.mxu0 0
        %2680 = vmatpush1.bf16.msra.mxu0 %v2658
        %2681 = vmatprep.subr.bf16.mxu0 0
        %2682 = vmatpush1.bf16.msra.mxu0 %v2659
        %2683 = vmatprep.subr.bf16.mxu0 0
        %2684 = vmatpush1.bf16.msra.mxu0 %v2660
        %2685 = vmatprep.subr.bf16.mxu0 0
        %2686 = vmatpush1.bf16.msra.mxu0 0
        %2687 = vmatprep.subr.bf16.mxu0 0
        %2688 = vmatpush1.bf16.msra.mxu0 0
        %2689 = vmatprep.subr.bf16.mxu0 0
        %2690 = vmatpush1.bf16.msra.mxu0 0
        %2691 = vmatprep.subr.bf16.mxu0 0
        %2692 = vmatpush1.bf16.msra.mxu0 0
        %2693 = vmatprep.subr.bf16.mxu0 0
        %2694 = vmatpush1.bf16.msra.mxu0 0
        %2695 = vmatprep.subr.bf16.mxu0 0
        %2696 = vmatpush1.bf16.msra.mxu0 0
        %2697 = vmatprep.subr.bf16.mxu0 0
        %2698 = vmatpush1.bf16.msra.mxu0 0
        %2699 = vmatprep.subr.bf16.mxu0 0
        %2700 = vmatpush1.bf16.msra.mxu0 0
        %2701 = vmatprep.mubr.bf16.mxu0 0
        %2702 = vmatmul.mubr.bf16.gmra.mrb[0].mxu0 %v2592
        %v2703 = vpop.f32.mrb[0].mxu0
        %v2704 = vadd.f32 0.0, %v2703
        %v2705 = vpop.f32.mrb[0].mxu0
        %v2706 = vpop.f32.mrb[0].mxu0
        %v2707 = vadd.f32 0.0, %v2706
        %v2708 = vpop.f32.mrb[0].mxu0
        %2709 = vmatprep.mubr.bf16.mxu0 0
        %2710 = vmatmul.mubr.bf16.gmra.mrb[0].mxu0 %v2593
        %v2711 = vpop.f32.mrb[0].mxu0
        %v2712 = vadd.f32 0.0, %v2711
        %v2713 = vpop.f32.mrb[0].mxu0
        %v2714 = vpop.f32.mrb[0].mxu0
        %v2715 = vadd.f32 0.0, %v2714
        %v2716 = vpop.f32.mrb[0].mxu0
        %2717 = vmatprep.mubr.bf16.mxu0 0
        %2718 = vmatmul.mubr.bf16.gmra.mrb[0].mxu0 %v2594
        %v2719 = vpop.f32.mrb[0].mxu0
        %v2720 = vadd.f32 0.0, %v2719
        %v2721 = vpop.f32.mrb[0].mxu0
        %v2722 = vpop.f32.mrb[0].mxu0
        %v2723 = vadd.f32 0.0, %v2722
        %v2724 = vpop.f32.mrb[0].mxu0
        %2725 = vmatprep.mubr.bf16.mxu0 0
        %2726 = vmatmul.mubr.bf16.gmra.mrb[0].mxu0 %v2595
        %v2727 = vpop.f32.mrb[0].mxu0
        %v2728 = vadd.f32 0.0, %v2727
        %v2729 = vpop.f32.mrb[0].mxu0
        %v2730 = vpop.f32.mrb[0].mxu0
        %v2731 = vadd.f32 0.0, %v2730
        %v2732 = vpop.f32.mrb[0].mxu0
        %2733 = vmatprep.mubr.bf16.mxu0 0
        %2734 = vmatmul.mubr.bf16.gmra.mrb[0].mxu0 %v2596
        %v2735 = vpop.f32.mrb[0].mxu0
        %v2736 = vadd.f32 0.0, %v2735
        %v2737 = vpop.f32.mrb[0].mxu0
        %v2738 = vpop.f32.mrb[0].mxu0
        %v2739 = vadd.f32 0.0, %v2738
        %v2740 = vpop.f32.mrb[0].mxu0
        %2741 = vmatprep.mubr.bf16.mxu0 0
        %2742 = vmatmul.mubr.bf16.gmra.mrb[0].mxu0 %v2597
        %v2743 = vpop.f32.mrb[0].mxu0
        %v2744 = vadd.f32 0.0, %v2743
        %v2745 = vpop.f32.mrb[0].mxu0
        %v2746 = vpop.f32.mrb[0].mxu0
        %v2747 = vadd.f32 0.0, %v2746
        %v2748 = vpop.f32.mrb[0].mxu0
        %2749 = vmatprep.mubr.bf16.mxu0 0
        %2750 = vmatmul.mubr.bf16.gmra.mrb[0].mxu0 %v2598
        %v2751 = vpop.f32.mrb[0].mxu0
        %v2752 = vadd.f32 0.0, %v2751
        %v2753 = vpop.f32.mrb[0].mxu0
        %v2754 = vpop.f32.mrb[0].mxu0
        %v2755 = vadd.f32 0.0, %v2754
        %v2756 = vpop.f32.mrb[0].mxu0
        %2757 = vmatprep.mubr.bf16.mxu0 0
        %2758 = vmatmul.mubr.bf16.gmra.mrb[0].mxu0 %v2599
        %v2759 = vpop.f32.mrb[0].mxu0
        %v2760 = vadd.f32 0.0, %v2759
        %v2761 = vpop.f32.mrb[0].mxu0
        %v2762 = vpop.f32.mrb[0].mxu0
        %v2763 = vadd.f32 0.0, %v2762
        %v2764 = vpop.f32.mrb[0].mxu0
        %2765 = vmatprep.mubr.bf16.mxu0 0
        %2766 = vmatmul.mubr.bf16.gmra.mrb[0].mxu0 %v2600
        %v2767 = vpop.f32.mrb[0].mxu0
        %v2768 = vadd.f32 0.0, %v2767
        %v2769 = vpop.f32.mrb[0].mxu0
        %v2770 = vpop.f32.mrb[0].mxu0
        %v2771 = vadd.f32 0.0, %v2770
        %v2772 = vpop.f32.mrb[0].mxu0
        %2773 = vmatprep.mubr.bf16.mxu0 0
        %2774 = vmatmul.mubr.bf16.gmra.mrb[0].mxu0 %v2601
        %v2775 = vpop.f32.mrb[0].mxu0
        %v2776 = vadd.f32 0.0, %v2775
        %v2777 = vpop.f32.mrb[0].mxu0
        %v2778 = vpop.f32.mrb[0].mxu0
        %v2779 = vadd.f32 0.0, %v2778
        %v2780 = vpop.f32.mrb[0].mxu0
        %2781 = vmatprep.mubr.bf16.mxu0 0
        %2782 = vmatmul.mubr.bf16.gmra.mrb[0].mxu0 %v2602
        %v2783 = vpop.f32.mrb[0].mxu0
        %v2784 = vadd.f32 0.0, %v2783
        %v2785 = vpop.f32.mrb[0].mxu0
        %v2786 = vpop.f32.mrb[0].mxu0
        %v2787 = vadd.f32 0.0, %v2786
        %v2788 = vpop.f32.mrb[0].mxu0
        %2789 = vmatprep.mubr.bf16.mxu0 0
        %2790 = vmatmul.mubr.bf16.gmra.mrb[0].mxu0 %v2603
        %v2791 = vpop.f32.mrb[0].mxu0
        %v2792 = vadd.f32 0.0, %v2791
        %v2793 = vpop.f32.mrb[0].mxu0
        %v2794 = vpop.f32.mrb[0].mxu0
        %v2795 = vadd.f32 0.0, %v2794
        %v2796 = vpop.f32.mrb[0].mxu0
        %2797 = vdwg.mxu0
        %v2798 = vadd.f32 %v2544, %v2704
        %v2799 = vadd.f32 %v2545, %v2707
        %v2800 = vadd.f32 %v2546, %v2712
        %v2801 = vadd.f32 %v2547, %v2715
        %v2802 = vadd.f32 %v2548, %v2720
        %v2803 = vadd.f32 %v2549, %v2723
        %v2804 = vadd.f32 %v2550, %v2728
        %v2805 = vadd.f32 %v2551, %v2731
        %v2806 = vadd.f32 %v2552, %v2736
        %v2807 = vadd.f32 %v2553, %v2739
        %v2808 = vadd.f32 %v2554, %v2744
        %v2809 = vadd.f32 %v2555, %v2747
        %v2810 = vadd.f32 %v2556, %v2752
        %v2811 = vadd.f32 %v2557, %v2755
        %v2812 = vadd.f32 %v2558, %v2760
        %v2813 = vadd.f32 %v2559, %v2763
        %v2814 = vadd.f32 %v2560, %v2768
        %v2815 = vadd.f32 %v2561, %v2771
        %v2816 = vadd.f32 %v2562, %v2776
        %v2817 = vadd.f32 %v2563, %v2779
        %v2818 = vadd.f32 %v2564, %v2784
        %v2819 = vadd.f32 %v2565, %v2787
        %v2820 = vadd.f32 %v2566, %v2792
        %v2821 = vadd.f32 %v2567, %v2795
        %v2822 = vld [vmem:[#allocation2 + $0x37] sm:$0xff]
        %v2823 = vld [vmem:[#allocation2 + $0x3f] sm:$0xff]
        %v2824 = vld [vmem:[#allocation2 + $0x47] sm:$0xff]
        %v2825 = vld [vmem:[#allocation2 + $0x4f] sm:$0xff]
        %v2826 = vld [vmem:[#allocation2 + $0x57] sm:$0xff]
        %v2827 = vld [vmem:[#allocation2 + $0x5f] sm:$0xff]
        %v2828 = vld [vmem:[#allocation2 + $0x67] sm:$0xff]
        %v2829 = vld [vmem:[#allocation2 + $0x6f] sm:$0xff]
        %v2830 = vld [vmem:[#allocation2 + $0x77] sm:$0xff]
        %v2831 = vld [vmem:[#allocation2 + $0x7f] sm:$0xff]
        %v2832 = vld [vmem:[#allocation2 + $0x87] sm:$0xff]
        %v2833 = vld [vmem:[#allocation2 + $0x8f] sm:$0xff]
        %v2834 = vld [vmem:[#allocation2 + $0x97] sm:$0xff]
        %v2835 = vld [vmem:[#allocation2 + $0x9f] sm:$0xff]
        %v2836 = vld [vmem:[#allocation2 + $0xa7] sm:$0xff]
        %v2837 = vld [vmem:[#allocation2 + $0xaf] sm:$0xff]
        %v2838 = vld [vmem:[#allocation2 + $0xb7] sm:$0xff]
        %v2839 = vld [vmem:[#allocation2 + $0xbf] sm:$0xff]
        %v2840 = vld [vmem:[#allocation2 + $0xc7] sm:$0xff]
        %v2841 = vld [vmem:[#allocation2 + $0xcf] sm:$0xff]
        %v2842 = vld [vmem:[#allocation2 + $0xd7] sm:$0xff]
        %v2843 = vld [vmem:[#allocation2 + $0xdf] sm:$0xff]
        %v2844 = vld [vmem:[#allocation2 + $0xe7] sm:$0xff]
        %v2845 = vld [vmem:[#allocation2 + $0xef] sm:$0xff]
        %v2846 = vpack.c.bf16 %v2823, %v2822
        %v2847 = vpack.c.bf16 %v2825, %v2824
        %v2848 = vpack.c.bf16 %v2827, %v2826
        %v2849 = vpack.c.bf16 %v2829, %v2828
        %v2850 = vpack.c.bf16 %v2831, %v2830
        %v2851 = vpack.c.bf16 %v2833, %v2832
        %v2852 = vpack.c.bf16 %v2835, %v2834
        %v2853 = vpack.c.bf16 %v2837, %v2836
        %v2854 = vpack.c.bf16 %v2839, %v2838
        %v2855 = vpack.c.bf16 %v2841, %v2840
        %v2856 = vpack.c.bf16 %v2843, %v2842
        %v2857 = vpack.c.bf16 %v2845, %v2844
        %s2858 = scalar_lea.vmem [#allocation11], 384
        %v2859 = vld [vmem:[%s2858] sm:$0xf]
        %v2860 = vld [vmem:[%s2858 + $0x4] sm:$0xf]
        %v2861 = vld [vmem:[%s2858 + $0x8] sm:$0xf]
        %v2862 = vld [vmem:[%s2858 + $0xc] sm:$0xf]
        %v2863 = vld [vmem:[%s2858 + $0x10] sm:$0xf]
        %v2864 = vld [vmem:[%s2858 + $0x14] sm:$0xf]
        %v2865 = vld [vmem:[%s2858 + $0x18] sm:$0xf]
        %v2866 = vld [vmem:[%s2858 + $0x1c] sm:$0xf]
        %v2867 = vld [vmem:[%s2858 + $0x20] sm:$0xf]
        %v2868 = vld [vmem:[%s2858 + $0x24] sm:$0xf]
        %v2869 = vld [vmem:[%s2858 + $0x28] sm:$0xf]
        %v2870 = vld [vmem:[%s2858 + $0x2c] sm:$0xf]
        %v2871 = vld [vmem:[%s2858 + $0x30] sm:$0xf]
        %v2872 = vld [vmem:[%s2858 + $0x34] sm:$0xf]
        %v2873 = vld [vmem:[%s2858 + $0x38] sm:$0xf]
        %v2874 = vld [vmem:[%s2858 + $0x3c] sm:$0xf]
        %v2891 = vunpack.c.l.b16 %v2859
        %v2892 = vunpack.c.l.b16 %v2860
        %v2893 = vunpack.c.l.b16 %v2861
        %v2894 = vunpack.c.l.b16 %v2862
        %v2895 = vunpack.c.l.b16 %v2863
        %v2896 = vunpack.c.l.b16 %v2864
        %v2897 = vunpack.c.l.b16 %v2865
        %v2898 = vunpack.c.l.b16 %v2866
        %v2899 = vunpack.c.l.b16 %v2867
        %v2900 = vunpack.c.l.b16 %v2868
        %v2901 = vunpack.c.l.b16 %v2869
        %v2902 = vunpack.c.l.b16 %v2870
        %v2903 = vunpack.c.l.b16 %v2871
        %v2904 = vunpack.c.l.b16 %v2872
        %v2905 = vunpack.c.l.b16 %v2873
        %v2906 = vunpack.c.l.b16 %v2874
        %v2907 = vpack.c.b16 %v2892, %v2891
        %v2908 = vpack.c.b16 %v2894, %v2893
        %v2909 = vpack.c.b16 %v2896, %v2895
        %v2910 = vpack.c.b16 %v2898, %v2897
        %v2911 = vpack.c.b16 %v2900, %v2899
        %v2912 = vpack.c.b16 %v2902, %v2901
        %v2913 = vpack.c.b16 %v2904, %v2903
        %v2914 = vpack.c.b16 %v2906, %v2905
        %2923 = vmatprep.subr.bf16.mxu0 0
        %2924 = vmatpush1.bf16.msra.mxu0 %v2907
        %2925 = vmatprep.subr.bf16.mxu0 0
        %2926 = vmatpush1.bf16.msra.mxu0 %v2908
        %2927 = vmatprep.subr.bf16.mxu0 0
        %2928 = vmatpush1.bf16.msra.mxu0 %v2909
        %2929 = vmatprep.subr.bf16.mxu0 0
        %2930 = vmatpush1.bf16.msra.mxu0 %v2910
        %2931 = vmatprep.subr.bf16.mxu0 0
        %2932 = vmatpush1.bf16.msra.mxu0 %v2911
        %2933 = vmatprep.subr.bf16.mxu0 0
        %2934 = vmatpush1.bf16.msra.mxu0 %v2912
        %2935 = vmatprep.subr.bf16.mxu0 0
        %2936 = vmatpush1.bf16.msra.mxu0 %v2913
        %2937 = vmatprep.subr.bf16.mxu0 0
        %2938 = vmatpush1.bf16.msra.mxu0 %v2914
        %2939 = vmatprep.subr.bf16.mxu0 0
        %2940 = vmatpush1.bf16.msra.mxu0 0
        %2941 = vmatprep.subr.bf16.mxu0 0
        %2942 = vmatpush1.bf16.msra.mxu0 0
        %2943 = vmatprep.subr.bf16.mxu0 0
        %2944 = vmatpush1.bf16.msra.mxu0 0
        %2945 = vmatprep.subr.bf16.mxu0 0
        %2946 = vmatpush1.bf16.msra.mxu0 0
        %2947 = vmatprep.subr.bf16.mxu0 0
        %2948 = vmatpush1.bf16.msra.mxu0 0
        %2949 = vmatprep.subr.bf16.mxu0 0
        %2950 = vmatpush1.bf16.msra.mxu0 0
        %2951 = vmatprep.subr.bf16.mxu0 0
        %2952 = vmatpush1.bf16.msra.mxu0 0
        %2953 = vmatprep.subr.bf16.mxu0 0
        %2954 = vmatpush1.bf16.msra.mxu0 0
        %2955 = vmatprep.mubr.bf16.mxu0 0
        %2956 = vmatmul.mubr.bf16.gmra.mrb[0].mxu0 %v2846
        %v2957 = vpop.f32.mrb[0].mxu0
        %v2958 = vadd.f32 0.0, %v2957
        %v2959 = vpop.f32.mrb[0].mxu0
        %v2960 = vpop.f32.mrb[0].mxu0
        %v2961 = vadd.f32 0.0, %v2960
        %v2962 = vpop.f32.mrb[0].mxu0
        %2963 = vmatprep.mubr.bf16.mxu0 0
        %2964 = vmatmul.mubr.bf16.gmra.mrb[0].mxu0 %v2847
        %v2965 = vpop.f32.mrb[0].mxu0
        %v2966 = vadd.f32 0.0, %v2965
        %v2967 = vpop.f32.mrb[0].mxu0
        %v2968 = vpop.f32.mrb[0].mxu0
        %v2969 = vadd.f32 0.0, %v2968
        %v2970 = vpop.f32.mrb[0].mxu0
        %2971 = vmatprep.mubr.bf16.mxu0 0
        %2972 = vmatmul.mubr.bf16.gmra.mrb[0].mxu0 %v2848
        %v2973 = vpop.f32.mrb[0].mxu0
        %v2974 = vadd.f32 0.0, %v2973
        %v2975 = vpop.f32.mrb[0].mxu0
        %v2976 = vpop.f32.mrb[0].mxu0
        %v2977 = vadd.f32 0.0, %v2976
        %v2978 = vpop.f32.mrb[0].mxu0
        %2979 = vmatprep.mubr.bf16.mxu0 0
        %2980 = vmatmul.mubr.bf16.gmra.mrb[0].mxu0 %v2849
        %v2981 = vpop.f32.mrb[0].mxu0
        %v2982 = vadd.f32 0.0, %v2981
        %v2983 = vpop.f32.mrb[0].mxu0
        %v2984 = vpop.f32.mrb[0].mxu0
        %v2985 = vadd.f32 0.0, %v2984
        %v2986 = vpop.f32.mrb[0].mxu0
        %2987 = vmatprep.mubr.bf16.mxu0 0
        %2988 = vmatmul.mubr.bf16.gmra.mrb[0].mxu0 %v2850
        %v2989 = vpop.f32.mrb[0].mxu0
        %v2990 = vadd.f32 0.0, %v2989
        %v2991 = vpop.f32.mrb[0].mxu0
        %v2992 = vpop.f32.mrb[0].mxu0
        %v2993 = vadd.f32 0.0, %v2992
        %v2994 = vpop.f32.mrb[0].mxu0
        %2995 = vmatprep.mubr.bf16.mxu0 0
        %2996 = vmatmul.mubr.bf16.gmra.mrb[0].mxu0 %v2851
        %v2997 = vpop.f32.mrb[0].mxu0
        %v2998 = vadd.f32 0.0, %v2997
        %v2999 = vpop.f32.mrb[0].mxu0
        %v3000 = vpop.f32.mrb[0].mxu0
        %v3001 = vadd.f32 0.0, %v3000
        %v3002 = vpop.f32.mrb[0].mxu0
        %3003 = vmatprep.mubr.bf16.mxu0 0
        %3004 = vmatmul.mubr.bf16.gmra.mrb[0].mxu0 %v2852
        %v3005 = vpop.f32.mrb[0].mxu0
        %v3006 = vadd.f32 0.0, %v3005
        %v3007 = vpop.f32.mrb[0].mxu0
        %v3008 = vpop.f32.mrb[0].mxu0
        %v3009 = vadd.f32 0.0, %v3008
        %v3010 = vpop.f32.mrb[0].mxu0
        %3011 = vmatprep.mubr.bf16.mxu0 0
        %3012 = vmatmul.mubr.bf16.gmra.mrb[0].mxu0 %v2853
        %v3013 = vpop.f32.mrb[0].mxu0
        %v3014 = vadd.f32 0.0, %v3013
        %v3015 = vpop.f32.mrb[0].mxu0
        %v3016 = vpop.f32.mrb[0].mxu0
        %v3017 = vadd.f32 0.0, %v3016
        %v3018 = vpop.f32.mrb[0].mxu0
        %3019 = vmatprep.mubr.bf16.mxu0 0
        %3020 = vmatmul.mubr.bf16.gmra.mrb[0].mxu0 %v2854
        %v3021 = vpop.f32.mrb[0].mxu0
        %v3022 = vadd.f32 0.0, %v3021
        %v3023 = vpop.f32.mrb[0].mxu0
        %v3024 = vpop.f32.mrb[0].mxu0
        %v3025 = vadd.f32 0.0, %v3024
        %v3026 = vpop.f32.mrb[0].mxu0
        %3027 = vmatprep.mubr.bf16.mxu0 0
        %3028 = vmatmul.mubr.bf16.gmra.mrb[0].mxu0 %v2855
        %v3029 = vpop.f32.mrb[0].mxu0
        %v3030 = vadd.f32 0.0, %v3029
        %v3031 = vpop.f32.mrb[0].mxu0
        %v3032 = vpop.f32.mrb[0].mxu0
        %v3033 = vadd.f32 0.0, %v3032
        %v3034 = vpop.f32.mrb[0].mxu0
        %3035 = vmatprep.mubr.bf16.mxu0 0
        %3036 = vmatmul.mubr.bf16.gmra.mrb[0].mxu0 %v2856
        %v3037 = vpop.f32.mrb[0].mxu0
        %v3038 = vadd.f32 0.0, %v3037
        %v3039 = vpop.f32.mrb[0].mxu0
        %v3040 = vpop.f32.mrb[0].mxu0
        %v3041 = vadd.f32 0.0, %v3040
        %v3042 = vpop.f32.mrb[0].mxu0
        %3043 = vmatprep.mubr.bf16.mxu0 0
        %3044 = vmatmul.mubr.bf16.gmra.mrb[0].mxu0 %v2857
        %v3045 = vpop.f32.mrb[0].mxu0
        %v3046 = vadd.f32 0.0, %v3045
        %v3047 = vpop.f32.mrb[0].mxu0
        %v3048 = vpop.f32.mrb[0].mxu0
        %v3049 = vadd.f32 0.0, %v3048
        %v3050 = vpop.f32.mrb[0].mxu0
        %3051 = vdwg.mxu0
        %v3052 = vadd.f32 %v2798, %v2958
        %v3053 = vadd.f32 %v2799, %v2961
        %v3054 = vadd.f32 %v2800, %v2966
        %v3055 = vadd.f32 %v2801, %v2969
        %v3056 = vadd.f32 %v2802, %v2974
        %v3057 = vadd.f32 %v2803, %v2977
        %v3058 = vadd.f32 %v2804, %v2982
        %v3059 = vadd.f32 %v2805, %v2985
        %v3060 = vadd.f32 %v2806, %v2990
        %v3061 = vadd.f32 %v2807, %v2993
        %v3062 = vadd.f32 %v2808, %v2998
        %v3063 = vadd.f32 %v2809, %v3001
        %v3064 = vadd.f32 %v2810, %v3006
        %v3065 = vadd.f32 %v2811, %v3009
        %v3066 = vadd.f32 %v2812, %v3014
        %v3067 = vadd.f32 %v2813, %v3017
        %v3068 = vadd.f32 %v2814, %v3022
        %v3069 = vadd.f32 %v2815, %v3025
        %v3070 = vadd.f32 %v2816, %v3030
        %v3071 = vadd.f32 %v2817, %v3033
        %v3072 = vadd.f32 %v2818, %v3038
        %v3073 = vadd.f32 %v2819, %v3041
        %v3074 = vadd.f32 %v2820, %v3046
        %v3075 = vadd.f32 %v2821, %v3049
        %v3076 = vld [vmem:[#allocation2 + $0x38] sm:$0xff]
        %v3077 = vld [vmem:[#allocation2 + $0x40] sm:$0xff]
        %v3078 = vld [vmem:[#allocation2 + $0x48] sm:$0xff]
        %v3079 = vld [vmem:[#allocation2 + $0x50] sm:$0xff]
        %v3080 = vld [vmem:[#allocation2 + $0x58] sm:$0xff]
        %v3081 = vld [vmem:[#allocation2 + $0x60] sm:$0xff]
        %v3082 = vld [vmem:[#allocation2 + $0x68] sm:$0xff]
        %v3083 = vld [vmem:[#allocation2 + $0x70] sm:$0xff]
        %v3084 = vld [vmem:[#allocation2 + $0x78] sm:$0xff]
        %v3085 = vld [vmem:[#allocation2 + $0x80] sm:$0xff]
        %v3086 = vld [vmem:[#allocation2 + $0x88] sm:$0xff]
        %v3087 = vld [vmem:[#allocation2 + $0x90] sm:$0xff]
        %v3088 = vld [vmem:[#allocation2 + $0x98] sm:$0xff]
        %v3089 = vld [vmem:[#allocation2 + $0xa0] sm:$0xff]
        %v3090 = vld [vmem:[#allocation2 + $0xa8] sm:$0xff]
        %v3091 = vld [vmem:[#allocation2 + $0xb0] sm:$0xff]
        %v3092 = vld [vmem:[#allocation2 + $0xb8] sm:$0xff]
        %v3093 = vld [vmem:[#allocation2 + $0xc0] sm:$0xff]
        %v3094 = vld [vmem:[#allocation2 + $0xc8] sm:$0xff]
        %v3095 = vld [vmem:[#allocation2 + $0xd0] sm:$0xff]
        %v3096 = vld [vmem:[#allocation2 + $0xd8] sm:$0xff]
        %v3097 = vld [vmem:[#allocation2 + $0xe0] sm:$0xff]
        %v3098 = vld [vmem:[#allocation2 + $0xe8] sm:$0xff]
        %v3099 = vld [vmem:[#allocation2 + $0xf0] sm:$0xff]
        %v3100 = vpack.c.bf16 %v3077, %v3076
        %v3101 = vpack.c.bf16 %v3079, %v3078
        %v3102 = vpack.c.bf16 %v3081, %v3080
        %v3103 = vpack.c.bf16 %v3083, %v3082
        %v3104 = vpack.c.bf16 %v3085, %v3084
        %v3105 = vpack.c.bf16 %v3087, %v3086
        %v3106 = vpack.c.bf16 %v3089, %v3088
        %v3107 = vpack.c.bf16 %v3091, %v3090
        %v3108 = vpack.c.bf16 %v3093, %v3092
        %v3109 = vpack.c.bf16 %v3095, %v3094
        %v3110 = vpack.c.bf16 %v3097, %v3096
        %v3111 = vpack.c.bf16 %v3099, %v3098
        %s3112 = scalar_lea.vmem [#allocation11], 448
        %v3113 = vld [vmem:[%s3112] sm:$0xf]
        %v3114 = vld [vmem:[%s3112 + $0x4] sm:$0xf]
        %v3115 = vld [vmem:[%s3112 + $0x8] sm:$0xf]
        %v3116 = vld [vmem:[%s3112 + $0xc] sm:$0xf]
        %v3117 = vld [vmem:[%s3112 + $0x10] sm:$0xf]
        %v3118 = vld [vmem:[%s3112 + $0x14] sm:$0xf]
        %v3119 = vld [vmem:[%s3112 + $0x18] sm:$0xf]
        %v3120 = vld [vmem:[%s3112 + $0x1c] sm:$0xf]
        %v3121 = vld [vmem:[%s3112 + $0x20] sm:$0xf]
        %v3122 = vld [vmem:[%s3112 + $0x24] sm:$0xf]
        %v3123 = vld [vmem:[%s3112 + $0x28] sm:$0xf]
        %v3124 = vld [vmem:[%s3112 + $0x2c] sm:$0xf]
        %v3125 = vld [vmem:[%s3112 + $0x30] sm:$0xf]
        %v3126 = vld [vmem:[%s3112 + $0x34] sm:$0xf]
        %v3127 = vld [vmem:[%s3112 + $0x38] sm:$0xf]
        %v3128 = vld [vmem:[%s3112 + $0x3c] sm:$0xf]
        %v3145 = vunpack.c.l.b16 %v3113
        %v3146 = vunpack.c.l.b16 %v3114
        %v3147 = vunpack.c.l.b16 %v3115
        %v3148 = vunpack.c.l.b16 %v3116
        %v3149 = vunpack.c.l.b16 %v3117
        %v3150 = vunpack.c.l.b16 %v3118
        %v3151 = vunpack.c.l.b16 %v3119
        %v3152 = vunpack.c.l.b16 %v3120
        %v3153 = vunpack.c.l.b16 %v3121
        %v3154 = vunpack.c.l.b16 %v3122
        %v3155 = vunpack.c.l.b16 %v3123
        %v3156 = vunpack.c.l.b16 %v3124
        %v3157 = vunpack.c.l.b16 %v3125
        %v3158 = vunpack.c.l.b16 %v3126
        %v3159 = vunpack.c.l.b16 %v3127
        %v3160 = vunpack.c.l.b16 %v3128
        %v3161 = vpack.c.b16 %v3146, %v3145
        %v3162 = vpack.c.b16 %v3148, %v3147
        %v3163 = vpack.c.b16 %v3150, %v3149
        %v3164 = vpack.c.b16 %v3152, %v3151
        %v3165 = vpack.c.b16 %v3154, %v3153
        %v3166 = vpack.c.b16 %v3156, %v3155
        %v3167 = vpack.c.b16 %v3158, %v3157
        %v3168 = vpack.c.b16 %v3160, %v3159
        %3177 = vmatprep.subr.bf16.mxu0 0
        %3178 = vmatpush1.bf16.msra.mxu0 %v3161
        %3179 = vmatprep.subr.bf16.mxu0 0
        %3180 = vmatpush1.bf16.msra.mxu0 %v3162
        %3181 = vmatprep.subr.bf16.mxu0 0
        %3182 = vmatpush1.bf16.msra.mxu0 %v3163
        %3183 = vmatprep.subr.bf16.mxu0 0
        %3184 = vmatpush1.bf16.msra.mxu0 %v3164
        %3185 = vmatprep.subr.bf16.mxu0 0
        %3186 = vmatpush1.bf16.msra.mxu0 %v3165
        %3187 = vmatprep.subr.bf16.mxu0 0
        %3188 = vmatpush1.bf16.msra.mxu0 %v3166
        %3189 = vmatprep.subr.bf16.mxu0 0
        %3190 = vmatpush1.bf16.msra.mxu0 %v3167
        %3191 = vmatprep.subr.bf16.mxu0 0
        %3192 = vmatpush1.bf16.msra.mxu0 %v3168
        %3193 = vmatprep.subr.bf16.mxu0 0
        %3194 = vmatpush1.bf16.msra.mxu0 0
        %3195 = vmatprep.subr.bf16.mxu0 0
        %3196 = vmatpush1.bf16.msra.mxu0 0
        %3197 = vmatprep.subr.bf16.mxu0 0
        %3198 = vmatpush1.bf16.msra.mxu0 0
        %3199 = vmatprep.subr.bf16.mxu0 0
        %3200 = vmatpush1.bf16.msra.mxu0 0
        %3201 = vmatprep.subr.bf16.mxu0 0
        %3202 = vmatpush1.bf16.msra.mxu0 0
        %3203 = vmatprep.subr.bf16.mxu0 0
        %3204 = vmatpush1.bf16.msra.mxu0 0
        %3205 = vmatprep.subr.bf16.mxu0 0
        %3206 = vmatpush1.bf16.msra.mxu0 0
        %3207 = vmatprep.subr.bf16.mxu0 0
        %3208 = vmatpush1.bf16.msra.mxu0 0
        %3209 = vmatprep.mubr.bf16.mxu0 0
        %3210 = vmatmul.mubr.bf16.gmra.mrb[0].mxu0 %v3100
        %v3211 = vpop.f32.mrb[0].mxu0
        %v3212 = vadd.f32 0.0, %v3211
        %v3213 = vpop.f32.mrb[0].mxu0
        %v3214 = vpop.f32.mrb[0].mxu0
        %v3215 = vadd.f32 0.0, %v3214
        %v3216 = vpop.f32.mrb[0].mxu0
        %3217 = vmatprep.mubr.bf16.mxu0 0
        %3218 = vmatmul.mubr.bf16.gmra.mrb[0].mxu0 %v3101
        %v3219 = vpop.f32.mrb[0].mxu0
        %v3220 = vadd.f32 0.0, %v3219
        %v3221 = vpop.f32.mrb[0].mxu0
        %v3222 = vpop.f32.mrb[0].mxu0
        %v3223 = vadd.f32 0.0, %v3222
        %v3224 = vpop.f32.mrb[0].mxu0
        %3225 = vmatprep.mubr.bf16.mxu0 0
        %3226 = vmatmul.mubr.bf16.gmra.mrb[0].mxu0 %v3102
        %v3227 = vpop.f32.mrb[0].mxu0
        %v3228 = vadd.f32 0.0, %v3227
        %v3229 = vpop.f32.mrb[0].mxu0
        %v3230 = vpop.f32.mrb[0].mxu0
        %v3231 = vadd.f32 0.0, %v3230
        %v3232 = vpop.f32.mrb[0].mxu0
        %3233 = vmatprep.mubr.bf16.mxu0 0
        %3234 = vmatmul.mubr.bf16.gmra.mrb[0].mxu0 %v3103
        %v3235 = vpop.f32.mrb[0].mxu0
        %v3236 = vadd.f32 0.0, %v3235
        %v3237 = vpop.f32.mrb[0].mxu0
        %v3238 = vpop.f32.mrb[0].mxu0
        %v3239 = vadd.f32 0.0, %v3238
        %v3240 = vpop.f32.mrb[0].mxu0
        %3241 = vmatprep.mubr.bf16.mxu0 0
        %3242 = vmatmul.mubr.bf16.gmra.mrb[0].mxu0 %v3104
        %v3243 = vpop.f32.mrb[0].mxu0
        %v3244 = vadd.f32 0.0, %v3243
        %v3245 = vpop.f32.mrb[0].mxu0
        %v3246 = vpop.f32.mrb[0].mxu0
        %v3247 = vadd.f32 0.0, %v3246
        %v3248 = vpop.f32.mrb[0].mxu0
        %3249 = vmatprep.mubr.bf16.mxu0 0
        %3250 = vmatmul.mubr.bf16.gmra.mrb[0].mxu0 %v3105
        %v3251 = vpop.f32.mrb[0].mxu0
        %v3252 = vadd.f32 0.0, %v3251
        %v3253 = vpop.f32.mrb[0].mxu0
        %v3254 = vpop.f32.mrb[0].mxu0
        %v3255 = vadd.f32 0.0, %v3254
        %v3256 = vpop.f32.mrb[0].mxu0
        %3257 = vmatprep.mubr.bf16.mxu0 0
        %3258 = vmatmul.mubr.bf16.gmra.mrb[0].mxu0 %v3106
        %v3259 = vpop.f32.mrb[0].mxu0
        %v3260 = vadd.f32 0.0, %v3259
        %v3261 = vpop.f32.mrb[0].mxu0
        %v3262 = vpop.f32.mrb[0].mxu0
        %v3263 = vadd.f32 0.0, %v3262
        %v3264 = vpop.f32.mrb[0].mxu0
        %3265 = vmatprep.mubr.bf16.mxu0 0
        %3266 = vmatmul.mubr.bf16.gmra.mrb[0].mxu0 %v3107
        %v3267 = vpop.f32.mrb[0].mxu0
        %v3268 = vadd.f32 0.0, %v3267
        %v3269 = vpop.f32.mrb[0].mxu0
        %v3270 = vpop.f32.mrb[0].mxu0
        %v3271 = vadd.f32 0.0, %v3270
        %v3272 = vpop.f32.mrb[0].mxu0
        %3273 = vmatprep.mubr.bf16.mxu0 0
        %3274 = vmatmul.mubr.bf16.gmra.mrb[0].mxu0 %v3108
        %v3275 = vpop.f32.mrb[0].mxu0
        %v3276 = vadd.f32 0.0, %v3275
        %v3277 = vpop.f32.mrb[0].mxu0
        %v3278 = vpop.f32.mrb[0].mxu0
        %v3279 = vadd.f32 0.0, %v3278
        %v3280 = vpop.f32.mrb[0].mxu0
        %3281 = vmatprep.mubr.bf16.mxu0 0
        %3282 = vmatmul.mubr.bf16.gmra.mrb[0].mxu0 %v3109
        %v3283 = vpop.f32.mrb[0].mxu0
        %v3284 = vadd.f32 0.0, %v3283
        %v3285 = vpop.f32.mrb[0].mxu0
        %v3286 = vpop.f32.mrb[0].mxu0
        %v3287 = vadd.f32 0.0, %v3286
        %v3288 = vpop.f32.mrb[0].mxu0
        %3289 = vmatprep.mubr.bf16.mxu0 0
        %3290 = vmatmul.mubr.bf16.gmra.mrb[0].mxu0 %v3110
        %v3291 = vpop.f32.mrb[0].mxu0
        %v3292 = vadd.f32 0.0, %v3291
        %v3293 = vpop.f32.mrb[0].mxu0
        %v3294 = vpop.f32.mrb[0].mxu0
        %v3295 = vadd.f32 0.0, %v3294
        %v3296 = vpop.f32.mrb[0].mxu0
        %3297 = vmatprep.mubr.bf16.mxu0 0
        %3298 = vmatmul.mubr.bf16.gmra.mrb[0].mxu0 %v3111
        %v3299 = vpop.f32.mrb[0].mxu0
        %v3300 = vadd.f32 0.0, %v3299
        %v3301 = vpop.f32.mrb[0].mxu0
        %v3302 = vpop.f32.mrb[0].mxu0
        %v3303 = vadd.f32 0.0, %v3302
        %v3304 = vpop.f32.mrb[0].mxu0
        %3305 = vdwg.mxu0
        %v3306 = vadd.f32 %v3052, %v3212
        %v3307 = vadd.f32 %v3053, %v3215
        %v3308 = vadd.f32 %v3054, %v3220
        %v3309 = vadd.f32 %v3055, %v3223
        %v3310 = vadd.f32 %v3056, %v3228
        %v3311 = vadd.f32 %v3057, %v3231
        %v3312 = vadd.f32 %v3058, %v3236
        %v3313 = vadd.f32 %v3059, %v3239
        %v3314 = vadd.f32 %v3060, %v3244
        %v3315 = vadd.f32 %v3061, %v3247
        %v3316 = vadd.f32 %v3062, %v3252
        %v3317 = vadd.f32 %v3063, %v3255
        %v3318 = vadd.f32 %v3064, %v3260
        %v3319 = vadd.f32 %v3065, %v3263
        %v3320 = vadd.f32 %v3066, %v3268
        %v3321 = vadd.f32 %v3067, %v3271
        %v3322 = vadd.f32 %v3068, %v3276
        %v3323 = vadd.f32 %v3069, %v3279
        %v3324 = vadd.f32 %v3070, %v3284
        %v3325 = vadd.f32 %v3071, %v3287
        %v3326 = vadd.f32 %v3072, %v3292
        %v3327 = vadd.f32 %v3073, %v3295
        %v3328 = vadd.f32 %v3074, %v3300
        %v3329 = vadd.f32 %v3075, %v3303
        %v3330 = vld [vmem:[#allocation2 + $0x39] sm:$0xff]
        %v3331 = vld [vmem:[#allocation2 + $0x41] sm:$0xff]
        %v3332 = vld [vmem:[#allocation2 + $0x49] sm:$0xff]
        %v3333 = vld [vmem:[#allocation2 + $0x51] sm:$0xff]
        %v3334 = vld [vmem:[#allocation2 + $0x59] sm:$0xff]
        %v3335 = vld [vmem:[#allocation2 + $0x61] sm:$0xff]
        %v3336 = vld [vmem:[#allocation2 + $0x69] sm:$0xff]
        %v3337 = vld [vmem:[#allocation2 + $0x71] sm:$0xff]
        %v3338 = vld [vmem:[#allocation2 + $0x79] sm:$0xff]
        %v3339 = vld [vmem:[#allocation2 + $0x81] sm:$0xff]
        %v3340 = vld [vmem:[#allocation2 + $0x89] sm:$0xff]
        %v3341 = vld [vmem:[#allocation2 + $0x91] sm:$0xff]
        %v3342 = vld [vmem:[#allocation2 + $0x99] sm:$0xff]
        %v3343 = vld [vmem:[#allocation2 + $0xa1] sm:$0xff]
        %v3344 = vld [vmem:[#allocation2 + $0xa9] sm:$0xff]
        %v3345 = vld [vmem:[#allocation2 + $0xb1] sm:$0xff]
        %v3346 = vld [vmem:[#allocation2 + $0xb9] sm:$0xff]
        %v3347 = vld [vmem:[#allocation2 + $0xc1] sm:$0xff]
        %v3348 = vld [vmem:[#allocation2 + $0xc9] sm:$0xff]
        %v3349 = vld [vmem:[#allocation2 + $0xd1] sm:$0xff]
        %v3350 = vld [vmem:[#allocation2 + $0xd9] sm:$0xff]
        %v3351 = vld [vmem:[#allocation2 + $0xe1] sm:$0xff]
        %v3352 = vld [vmem:[#allocation2 + $0xe9] sm:$0xff]
        %v3353 = vld [vmem:[#allocation2 + $0xf1] sm:$0xff]
        %v3354 = vpack.c.bf16 %v3331, %v3330
        %v3355 = vpack.c.bf16 %v3333, %v3332
        %v3356 = vpack.c.bf16 %v3335, %v3334
        %v3357 = vpack.c.bf16 %v3337, %v3336
        %v3358 = vpack.c.bf16 %v3339, %v3338
        %v3359 = vpack.c.bf16 %v3341, %v3340
        %v3360 = vpack.c.bf16 %v3343, %v3342
        %v3361 = vpack.c.bf16 %v3345, %v3344
        %v3362 = vpack.c.bf16 %v3347, %v3346
        %v3363 = vpack.c.bf16 %v3349, %v3348
        %v3364 = vpack.c.bf16 %v3351, %v3350
        %v3365 = vpack.c.bf16 %v3353, %v3352
        %s3366 = scalar_lea.vmem [#allocation11], 512
        %v3367 = vld [vmem:[%s3366] sm:$0xf]
        %v3368 = vld [vmem:[%s3366 + $0x4] sm:$0xf]
        %v3369 = vld [vmem:[%s3366 + $0x8] sm:$0xf]
        %v3370 = vld [vmem:[%s3366 + $0xc] sm:$0xf]
        %v3371 = vld [vmem:[%s3366 + $0x10] sm:$0xf]
        %v3372 = vld [vmem:[%s3366 + $0x14] sm:$0xf]
        %v3373 = vld [vmem:[%s3366 + $0x18] sm:$0xf]
        %v3374 = vld [vmem:[%s3366 + $0x1c] sm:$0xf]
        %v3375 = vld [vmem:[%s3366 + $0x20] sm:$0xf]
        %v3376 = vld [vmem:[%s3366 + $0x24] sm:$0xf]
        %v3377 = vld [vmem:[%s3366 + $0x28] sm:$0xf]
        %v3378 = vld [vmem:[%s3366 + $0x2c] sm:$0xf]
        %v3379 = vld [vmem:[%s3366 + $0x30] sm:$0xf]
        %v3380 = vld [vmem:[%s3366 + $0x34] sm:$0xf]
        %v3381 = vld [vmem:[%s3366 + $0x38] sm:$0xf]
        %v3382 = vld [vmem:[%s3366 + $0x3c] sm:$0xf]
        %v3399 = vunpack.c.l.b16 %v3367
        %v3400 = vunpack.c.l.b16 %v3368
        %v3401 = vunpack.c.l.b16 %v3369
        %v3402 = vunpack.c.l.b16 %v3370
        %v3403 = vunpack.c.l.b16 %v3371
        %v3404 = vunpack.c.l.b16 %v3372
        %v3405 = vunpack.c.l.b16 %v3373
        %v3406 = vunpack.c.l.b16 %v3374
        %v3407 = vunpack.c.l.b16 %v3375
        %v3408 = vunpack.c.l.b16 %v3376
        %v3409 = vunpack.c.l.b16 %v3377
        %v3410 = vunpack.c.l.b16 %v3378
        %v3411 = vunpack.c.l.b16 %v3379
        %v3412 = vunpack.c.l.b16 %v3380
        %v3413 = vunpack.c.l.b16 %v3381
        %v3414 = vunpack.c.l.b16 %v3382
        %v3415 = vpack.c.b16 %v3400, %v3399
        %v3416 = vpack.c.b16 %v3402, %v3401
        %v3417 = vpack.c.b16 %v3404, %v3403
        %v3418 = vpack.c.b16 %v3406, %v3405
        %v3419 = vpack.c.b16 %v3408, %v3407
        %v3420 = vpack.c.b16 %v3410, %v3409
        %v3421 = vpack.c.b16 %v3412, %v3411
        %v3422 = vpack.c.b16 %v3414, %v3413
        %3431 = vmatprep.subr.bf16.mxu0 0
        %3432 = vmatpush1.bf16.msra.mxu0 %v3415
        %3433 = vmatprep.subr.bf16.mxu0 0
        %3434 = vmatpush1.bf16.msra.mxu0 %v3416
        %3435 = vmatprep.subr.bf16.mxu0 0
        %3436 = vmatpush1.bf16.msra.mxu0 %v3417
        %3437 = vmatprep.subr.bf16.mxu0 0
        %3438 = vmatpush1.bf16.msra.mxu0 %v3418
        %3439 = vmatprep.subr.bf16.mxu0 0
        %3440 = vmatpush1.bf16.msra.mxu0 %v3419
        %3441 = vmatprep.subr.bf16.mxu0 0
        %3442 = vmatpush1.bf16.msra.mxu0 %v3420
        %3443 = vmatprep.subr.bf16.mxu0 0
        %3444 = vmatpush1.bf16.msra.mxu0 %v3421
        %3445 = vmatprep.subr.bf16.mxu0 0
        %3446 = vmatpush1.bf16.msra.mxu0 %v3422
        %3447 = vmatprep.subr.bf16.mxu0 0
        %3448 = vmatpush1.bf16.msra.mxu0 0
        %3449 = vmatprep.subr.bf16.mxu0 0
        %3450 = vmatpush1.bf16.msra.mxu0 0
        %3451 = vmatprep.subr.bf16.mxu0 0
        %3452 = vmatpush1.bf16.msra.mxu0 0
        %3453 = vmatprep.subr.bf16.mxu0 0
        %3454 = vmatpush1.bf16.msra.mxu0 0
        %3455 = vmatprep.subr.bf16.mxu0 0
        %3456 = vmatpush1.bf16.msra.mxu0 0
        %3457 = vmatprep.subr.bf16.mxu0 0
        %3458 = vmatpush1.bf16.msra.mxu0 0
        %3459 = vmatprep.subr.bf16.mxu0 0
        %3460 = vmatpush1.bf16.msra.mxu0 0
        %3461 = vmatprep.subr.bf16.mxu0 0
        %3462 = vmatpush1.bf16.msra.mxu0 0
        %3463 = vmatprep.mubr.bf16.mxu0 0
        %3464 = vmatmul.mubr.bf16.gmra.mrb[0].mxu0 %v3354
        %v3465 = vpop.f32.mrb[0].mxu0
        %v3466 = vadd.f32 0.0, %v3465
        %v3467 = vpop.f32.mrb[0].mxu0
        %v3468 = vpop.f32.mrb[0].mxu0
        %v3469 = vadd.f32 0.0, %v3468
        %v3470 = vpop.f32.mrb[0].mxu0
        %3471 = vmatprep.mubr.bf16.mxu0 0
        %3472 = vmatmul.mubr.bf16.gmra.mrb[0].mxu0 %v3355
        %v3473 = vpop.f32.mrb[0].mxu0
        %v3474 = vadd.f32 0.0, %v3473
        %v3475 = vpop.f32.mrb[0].mxu0
        %v3476 = vpop.f32.mrb[0].mxu0
        %v3477 = vadd.f32 0.0, %v3476
        %v3478 = vpop.f32.mrb[0].mxu0
        %3479 = vmatprep.mubr.bf16.mxu0 0
        %3480 = vmatmul.mubr.bf16.gmra.mrb[0].mxu0 %v3356
        %v3481 = vpop.f32.mrb[0].mxu0
        %v3482 = vadd.f32 0.0, %v3481
        %v3483 = vpop.f32.mrb[0].mxu0
        %v3484 = vpop.f32.mrb[0].mxu0
        %v3485 = vadd.f32 0.0, %v3484
        %v3486 = vpop.f32.mrb[0].mxu0
        %3487 = vmatprep.mubr.bf16.mxu0 0
        %3488 = vmatmul.mubr.bf16.gmra.mrb[0].mxu0 %v3357
        %v3489 = vpop.f32.mrb[0].mxu0
        %v3490 = vadd.f32 0.0, %v3489
        %v3491 = vpop.f32.mrb[0].mxu0
        %v3492 = vpop.f32.mrb[0].mxu0
        %v3493 = vadd.f32 0.0, %v3492
        %v3494 = vpop.f32.mrb[0].mxu0
        %3495 = vmatprep.mubr.bf16.mxu0 0
        %3496 = vmatmul.mubr.bf16.gmra.mrb[0].mxu0 %v3358
        %v3497 = vpop.f32.mrb[0].mxu0
        %v3498 = vadd.f32 0.0, %v3497
        %v3499 = vpop.f32.mrb[0].mxu0
        %v3500 = vpop.f32.mrb[0].mxu0
        %v3501 = vadd.f32 0.0, %v3500
        %v3502 = vpop.f32.mrb[0].mxu0
        %3503 = vmatprep.mubr.bf16.mxu0 0
        %3504 = vmatmul.mubr.bf16.gmra.mrb[0].mxu0 %v3359
        %v3505 = vpop.f32.mrb[0].mxu0
        %v3506 = vadd.f32 0.0, %v3505
        %v3507 = vpop.f32.mrb[0].mxu0
        %v3508 = vpop.f32.mrb[0].mxu0
        %v3509 = vadd.f32 0.0, %v3508
        %v3510 = vpop.f32.mrb[0].mxu0
        %3511 = vmatprep.mubr.bf16.mxu0 0
        %3512 = vmatmul.mubr.bf16.gmra.mrb[0].mxu0 %v3360
        %v3513 = vpop.f32.mrb[0].mxu0
        %v3514 = vadd.f32 0.0, %v3513
        %v3515 = vpop.f32.mrb[0].mxu0
        %v3516 = vpop.f32.mrb[0].mxu0
        %v3517 = vadd.f32 0.0, %v3516
        %v3518 = vpop.f32.mrb[0].mxu0
        %3519 = vmatprep.mubr.bf16.mxu0 0
        %3520 = vmatmul.mubr.bf16.gmra.mrb[0].mxu0 %v3361
        %v3521 = vpop.f32.mrb[0].mxu0
        %v3522 = vadd.f32 0.0, %v3521
        %v3523 = vpop.f32.mrb[0].mxu0
        %v3524 = vpop.f32.mrb[0].mxu0
        %v3525 = vadd.f32 0.0, %v3524
        %v3526 = vpop.f32.mrb[0].mxu0
        %3527 = vmatprep.mubr.bf16.mxu0 0
        %3528 = vmatmul.mubr.bf16.gmra.mrb[0].mxu0 %v3362
        %v3529 = vpop.f32.mrb[0].mxu0
        %v3530 = vadd.f32 0.0, %v3529
        %v3531 = vpop.f32.mrb[0].mxu0
        %v3532 = vpop.f32.mrb[0].mxu0
        %v3533 = vadd.f32 0.0, %v3532
        %v3534 = vpop.f32.mrb[0].mxu0
        %3535 = vmatprep.mubr.bf16.mxu0 0
        %3536 = vmatmul.mubr.bf16.gmra.mrb[0].mxu0 %v3363
        %v3537 = vpop.f32.mrb[0].mxu0
        %v3538 = vadd.f32 0.0, %v3537
        %v3539 = vpop.f32.mrb[0].mxu0
        %v3540 = vpop.f32.mrb[0].mxu0
        %v3541 = vadd.f32 0.0, %v3540
        %v3542 = vpop.f32.mrb[0].mxu0
        %3543 = vmatprep.mubr.bf16.mxu0 0
        %3544 = vmatmul.mubr.bf16.gmra.mrb[0].mxu0 %v3364
        %v3545 = vpop.f32.mrb[0].mxu0
        %v3546 = vadd.f32 0.0, %v3545
        %v3547 = vpop.f32.mrb[0].mxu0
        %v3548 = vpop.f32.mrb[0].mxu0
        %v3549 = vadd.f32 0.0, %v3548
        %v3550 = vpop.f32.mrb[0].mxu0
        %3551 = vmatprep.mubr.bf16.mxu0 0
        %3552 = vmatmul.mubr.bf16.gmra.mrb[0].mxu0 %v3365
        %v3553 = vpop.f32.mrb[0].mxu0
        %v3554 = vadd.f32 0.0, %v3553
        %v3555 = vpop.f32.mrb[0].mxu0
        %v3556 = vpop.f32.mrb[0].mxu0
        %v3557 = vadd.f32 0.0, %v3556
        %v3558 = vpop.f32.mrb[0].mxu0
        %3559 = vdwg.mxu0
        %v3560 = vadd.f32 %v3306, %v3466
        %v3561 = vadd.f32 %v3307, %v3469
        %v3562 = vadd.f32 %v3308, %v3474
        %v3563 = vadd.f32 %v3309, %v3477
        %v3564 = vadd.f32 %v3310, %v3482
        %v3565 = vadd.f32 %v3311, %v3485
        %v3566 = vadd.f32 %v3312, %v3490
        %v3567 = vadd.f32 %v3313, %v3493
        %v3568 = vadd.f32 %v3314, %v3498
        %v3569 = vadd.f32 %v3315, %v3501
        %v3570 = vadd.f32 %v3316, %v3506
        %v3571 = vadd.f32 %v3317, %v3509
        %v3572 = vadd.f32 %v3318, %v3514
        %v3573 = vadd.f32 %v3319, %v3517
        %v3574 = vadd.f32 %v3320, %v3522
        %v3575 = vadd.f32 %v3321, %v3525
        %v3576 = vadd.f32 %v3322, %v3530
        %v3577 = vadd.f32 %v3323, %v3533
        %v3578 = vadd.f32 %v3324, %v3538
        %v3579 = vadd.f32 %v3325, %v3541
        %v3580 = vadd.f32 %v3326, %v3546
        %v3581 = vadd.f32 %v3327, %v3549
        %v3582 = vadd.f32 %v3328, %v3554
        %v3583 = vadd.f32 %v3329, %v3557
        %v3584 = vld [vmem:[#allocation12] sm:$0x1]
        %v3586 = vlaneseq
        %v3587 = vshrl.u32 %v3586, 7
        %v3588 = vsub.s32 0, %v3587
        %v3589 = vrot.slane %v3584, %v3588
        %v3591 = vadd.f32 %v3560, %v3589
        %v3592 = vadd.f32 %v3561, %v3589
        %v3593 = vadd.f32 %v3562, %v3589
        %v3594 = vadd.f32 %v3563, %v3589
        %v3595 = vadd.f32 %v3564, %v3589
        %v3596 = vadd.f32 %v3565, %v3589
        %v3597 = vadd.f32 %v3566, %v3589
        %v3598 = vadd.f32 %v3567, %v3589
        %v3599 = vadd.f32 %v3568, %v3589
        %v3600 = vadd.f32 %v3569, %v3589
        %v3601 = vadd.f32 %v3570, %v3589
        %v3602 = vadd.f32 %v3571, %v3589
        %v3603 = vadd.f32 %v3572, %v3589
        %v3604 = vadd.f32 %v3573, %v3589
        %v3605 = vadd.f32 %v3574, %v3589
        %v3606 = vadd.f32 %v3575, %v3589
        %v3607 = vadd.f32 %v3576, %v3589
        %v3608 = vadd.f32 %v3577, %v3589
        %v3609 = vadd.f32 %v3578, %v3589
        %v3610 = vadd.f32 %v3579, %v3589
        %v3611 = vadd.f32 %v3580, %v3589
        %v3612 = vadd.f32 %v3581, %v3589
        %v3613 = vadd.f32 %v3582, %v3589
        %v3614 = vadd.f32 %v3583, %v3589
        %v3615 = vmax.f32 %v3591, 0.0
        %v3616 = vmax.f32 %v3592, 0.0
        %v3617 = vmax.f32 %v3593, 0.0
        %v3618 = vmax.f32 %v3594, 0.0
        %v3619 = vmax.f32 %v3595, 0.0
        %v3620 = vmax.f32 %v3596, 0.0
        %v3621 = vmax.f32 %v3597, 0.0
        %v3622 = vmax.f32 %v3598, 0.0
        %v3623 = vmax.f32 %v3599, 0.0
        %v3624 = vmax.f32 %v3600, 0.0
        %v3625 = vmax.f32 %v3601, 0.0
        %v3626 = vmax.f32 %v3602, 0.0
        %v3627 = vmax.f32 %v3603, 0.0
        %v3628 = vmax.f32 %v3604, 0.0
        %v3629 = vmax.f32 %v3605, 0.0
        %v3630 = vmax.f32 %v3606, 0.0
        %v3631 = vmax.f32 %v3607, 0.0
        %v3632 = vmax.f32 %v3608, 0.0
        %v3633 = vmax.f32 %v3609, 0.0
        %v3634 = vmax.f32 %v3610, 0.0
        %v3635 = vmax.f32 %v3611, 0.0
        %v3636 = vmax.f32 %v3612, 0.0
        %v3637 = vmax.f32 %v3613, 0.0
        %v3638 = vmax.f32 %v3614, 0.0
        %v3639 = vpack.c.bf16 %v3616, %v3615
        %v3640 = vpack.c.bf16 %v3618, %v3617
        %v3641 = vpack.c.bf16 %v3620, %v3619
        %v3642 = vpack.c.bf16 %v3622, %v3621
        %v3643 = vpack.c.bf16 %v3624, %v3623
        %v3644 = vpack.c.bf16 %v3626, %v3625
        %v3645 = vpack.c.bf16 %v3628, %v3627
        %v3646 = vpack.c.bf16 %v3630, %v3629
        %v3647 = vpack.c.bf16 %v3632, %v3631
        %v3648 = vpack.c.bf16 %v3634, %v3633
        %v3649 = vpack.c.bf16 %v3636, %v3635
        %v3650 = vpack.c.bf16 %v3638, %v3637
        %v3651 = vld [vmem:[#allocation14] sm:$0xf]
        %v3652 = vld [vmem:[#allocation14 + $0x4] sm:$0xf]
        %v3653 = vld [vmem:[#allocation14 + $0x8] sm:$0xf]
        %v3654 = vld [vmem:[#allocation14 + $0xc] sm:$0xf]
        %v3655 = vld [vmem:[#allocation14 + $0x10] sm:$0xf]
        %v3656 = vld [vmem:[#allocation14 + $0x14] sm:$0xf]
        %v3657 = vld [vmem:[#allocation14 + $0x18] sm:$0xf]
        %v3658 = vld [vmem:[#allocation14 + $0x1c] sm:$0xf]
        %v3659 = vld [vmem:[#allocation14 + $0x20] sm:$0xf]
        %v3660 = vld [vmem:[#allocation14 + $0x24] sm:$0xf]
        %v3661 = vld [vmem:[#allocation14 + $0x28] sm:$0xf]
        %v3662 = vld [vmem:[#allocation14 + $0x2c] sm:$0xf]
        %v3663 = vld [vmem:[#allocation14 + $0x30] sm:$0xf]
        %v3664 = vld [vmem:[#allocation14 + $0x34] sm:$0xf]
        %v3665 = vld [vmem:[#allocation14 + $0x38] sm:$0xf]
        %v3666 = vld [vmem:[#allocation14 + $0x3c] sm:$0xf]
        %v3667 = vld [vmem:[#allocation15] sm:$0x1]
        %v3669 = vlaneseq
        %v3670 = vshrl.u32 %v3669, 7
        %v3671 = vsub.s32 0, %v3670
        %v3672 = vrot.slane %v3667, %v3671
        %v3690 = vunpack.c.l.b16 %v3651
        %v3691 = vunpack.c.l.b16 %v3652
        %v3692 = vunpack.c.l.b16 %v3653
        %v3693 = vunpack.c.l.b16 %v3654
        %v3694 = vunpack.c.l.b16 %v3655
        %v3695 = vunpack.c.l.b16 %v3656
        %v3696 = vunpack.c.l.b16 %v3657
        %v3697 = vunpack.c.l.b16 %v3658
        %v3698 = vunpack.c.l.b16 %v3659
        %v3699 = vunpack.c.l.b16 %v3660
        %v3700 = vunpack.c.l.b16 %v3661
        %v3701 = vunpack.c.l.b16 %v3662
        %v3702 = vunpack.c.l.b16 %v3663
        %v3703 = vunpack.c.l.b16 %v3664
        %v3704 = vunpack.c.l.b16 %v3665
        %v3705 = vunpack.c.l.b16 %v3666
        %v3706 = vpack.c.b16 %v3691, %v3690
        %v3707 = vpack.c.b16 %v3693, %v3692
        %v3708 = vpack.c.b16 %v3695, %v3694
        %v3709 = vpack.c.b16 %v3697, %v3696
        %v3710 = vpack.c.b16 %v3699, %v3698
        %v3711 = vpack.c.b16 %v3701, %v3700
        %v3712 = vpack.c.b16 %v3703, %v3702
        %v3713 = vpack.c.b16 %v3705, %v3704
        %3722 = vmatprep.subr.bf16.mxu0 0
        %3723 = vmatpush1.bf16.msra.mxu0 %v3706
        %3724 = vmatprep.subr.bf16.mxu0 0
        %3725 = vmatpush1.bf16.msra.mxu0 %v3707
        %3726 = vmatprep.subr.bf16.mxu0 0
        %3727 = vmatpush1.bf16.msra.mxu0 %v3708
        %3728 = vmatprep.subr.bf16.mxu0 0
        %3729 = vmatpush1.bf16.msra.mxu0 %v3709
        %3730 = vmatprep.subr.bf16.mxu0 0
        %3731 = vmatpush1.bf16.msra.mxu0 %v3710
        %3732 = vmatprep.subr.bf16.mxu0 0
        %3733 = vmatpush1.bf16.msra.mxu0 %v3711
        %3734 = vmatprep.subr.bf16.mxu0 0
        %3735 = vmatpush1.bf16.msra.mxu0 %v3712
        %3736 = vmatprep.subr.bf16.mxu0 0
        %3737 = vmatpush1.bf16.msra.mxu0 %v3713
        %3738 = vmatprep.subr.bf16.mxu0 0
        %3739 = vmatpush1.bf16.msra.mxu0 0
        %3740 = vmatprep.subr.bf16.mxu0 0
        %3741 = vmatpush1.bf16.msra.mxu0 0
        %3742 = vmatprep.subr.bf16.mxu0 0
        %3743 = vmatpush1.bf16.msra.mxu0 0
        %3744 = vmatprep.subr.bf16.mxu0 0
        %3745 = vmatpush1.bf16.msra.mxu0 0
        %3746 = vmatprep.subr.bf16.mxu0 0
        %3747 = vmatpush1.bf16.msra.mxu0 0
        %3748 = vmatprep.subr.bf16.mxu0 0
        %3749 = vmatpush1.bf16.msra.mxu0 0
        %3750 = vmatprep.subr.bf16.mxu0 0
        %3751 = vmatpush1.bf16.msra.mxu0 0
        %3752 = vmatprep.subr.bf16.mxu0 0
        %3753 = vmatpush1.bf16.msra.mxu0 0
        %3754 = vmatprep.mubr.bf16.mxu0 0
        %3755 = vmatmul.mubr.bf16.gmra.mrb[0].mxu0 %v3639
        %v3756 = vpop.f32.mrb[0].mxu0
        %v3757 = vadd.f32 %v3672, %v3756
        %v3758 = vpop.f32.mrb[0].mxu0
        %v3759 = vpop.f32.mrb[0].mxu0
        %v3760 = vadd.f32 %v3672, %v3759
        %v3761 = vpop.f32.mrb[0].mxu0
        %3762 = vmatprep.mubr.bf16.mxu0 0
        %3763 = vmatmul.mubr.bf16.gmra.mrb[0].mxu0 %v3640
        %v3764 = vpop.f32.mrb[0].mxu0
        %v3765 = vadd.f32 %v3672, %v3764
        %v3766 = vpop.f32.mrb[0].mxu0
        %v3767 = vpop.f32.mrb[0].mxu0
        %v3768 = vadd.f32 %v3672, %v3767
        %v3769 = vpop.f32.mrb[0].mxu0
        %3770 = vmatprep.mubr.bf16.mxu0 0
        %3771 = vmatmul.mubr.bf16.gmra.mrb[0].mxu0 %v3641
        %v3772 = vpop.f32.mrb[0].mxu0
        %v3773 = vadd.f32 %v3672, %v3772
        %v3774 = vpop.f32.mrb[0].mxu0
        %v3775 = vpop.f32.mrb[0].mxu0
        %v3776 = vadd.f32 %v3672, %v3775
        %v3777 = vpop.f32.mrb[0].mxu0
        %3778 = vmatprep.mubr.bf16.mxu0 0
        %3779 = vmatmul.mubr.bf16.gmra.mrb[0].mxu0 %v3642
        %v3780 = vpop.f32.mrb[0].mxu0
        %v3781 = vadd.f32 %v3672, %v3780
        %v3782 = vpop.f32.mrb[0].mxu0
        %v3783 = vpop.f32.mrb[0].mxu0
        %v3784 = vadd.f32 %v3672, %v3783
        %v3785 = vpop.f32.mrb[0].mxu0
        %3786 = vmatprep.mubr.bf16.mxu0 0
        %3787 = vmatmul.mubr.bf16.gmra.mrb[0].mxu0 %v3643
        %v3788 = vpop.f32.mrb[0].mxu0
        %v3789 = vadd.f32 %v3672, %v3788
        %v3790 = vpop.f32.mrb[0].mxu0
        %v3791 = vpop.f32.mrb[0].mxu0
        %v3792 = vadd.f32 %v3672, %v3791
        %v3793 = vpop.f32.mrb[0].mxu0
        %3794 = vmatprep.mubr.bf16.mxu0 0
        %3795 = vmatmul.mubr.bf16.gmra.mrb[0].mxu0 %v3644
        %v3796 = vpop.f32.mrb[0].mxu0
        %v3797 = vadd.f32 %v3672, %v3796
        %v3798 = vpop.f32.mrb[0].mxu0
        %v3799 = vpop.f32.mrb[0].mxu0
        %v3800 = vadd.f32 %v3672, %v3799
        %v3801 = vpop.f32.mrb[0].mxu0
        %3802 = vmatprep.mubr.bf16.mxu0 0
        %3803 = vmatmul.mubr.bf16.gmra.mrb[0].mxu0 %v3645
        %v3804 = vpop.f32.mrb[0].mxu0
        %v3805 = vadd.f32 %v3672, %v3804
        %v3806 = vpop.f32.mrb[0].mxu0
        %v3807 = vpop.f32.mrb[0].mxu0
        %v3808 = vadd.f32 %v3672, %v3807
        %v3809 = vpop.f32.mrb[0].mxu0
        %3810 = vmatprep.mubr.bf16.mxu0 0
        %3811 = vmatmul.mubr.bf16.gmra.mrb[0].mxu0 %v3646
        %v3812 = vpop.f32.mrb[0].mxu0
        %v3813 = vadd.f32 %v3672, %v3812
        %v3814 = vpop.f32.mrb[0].mxu0
        %v3815 = vpop.f32.mrb[0].mxu0
        %v3816 = vadd.f32 %v3672, %v3815
        %v3817 = vpop.f32.mrb[0].mxu0
        %3818 = vmatprep.mubr.bf16.mxu0 0
        %3819 = vmatmul.mubr.bf16.gmra.mrb[0].mxu0 %v3647
        %v3820 = vpop.f32.mrb[0].mxu0
        %v3821 = vadd.f32 %v3672, %v3820
        %v3822 = vpop.f32.mrb[0].mxu0
        %v3823 = vpop.f32.mrb[0].mxu0
        %v3824 = vadd.f32 %v3672, %v3823
        %v3825 = vpop.f32.mrb[0].mxu0
        %3826 = vmatprep.mubr.bf16.mxu0 0
        %3827 = vmatmul.mubr.bf16.gmra.mrb[0].mxu0 %v3648
        %v3828 = vpop.f32.mrb[0].mxu0
        %v3829 = vadd.f32 %v3672, %v3828
        %v3830 = vpop.f32.mrb[0].mxu0
        %v3831 = vpop.f32.mrb[0].mxu0
        %v3832 = vadd.f32 %v3672, %v3831
        %v3833 = vpop.f32.mrb[0].mxu0
        %3834 = vmatprep.mubr.bf16.mxu0 0
        %3835 = vmatmul.mubr.bf16.gmra.mrb[0].mxu0 %v3649
        %v3836 = vpop.f32.mrb[0].mxu0
        %v3837 = vadd.f32 %v3672, %v3836
        %v3838 = vpop.f32.mrb[0].mxu0
        %v3839 = vpop.f32.mrb[0].mxu0
        %v3840 = vadd.f32 %v3672, %v3839
        %v3841 = vpop.f32.mrb[0].mxu0
        %3842 = vmatprep.mubr.bf16.mxu0 0
        %3843 = vmatmul.mubr.bf16.gmra.mrb[0].mxu0 %v3650
        %v3844 = vpop.f32.mrb[0].mxu0
        %v3845 = vadd.f32 %v3672, %v3844
        %v3846 = vpop.f32.mrb[0].mxu0
        %v3847 = vpop.f32.mrb[0].mxu0
        %v3848 = vadd.f32 %v3672, %v3847
        %v3849 = vpop.f32.mrb[0].mxu0
        %3850 = vdwg.mxu0
        %v3851 = vld [vmem:[%s359] sm:$0xf]
        %v3852 = vld [vmem:[%s359 + $0x4] sm:$0xf]
        %v3853 = vld [vmem:[%s359 + $0x8] sm:$0xf]
        %v3854 = vld [vmem:[%s359 + $0xc] sm:$0xf]
        %v3855 = vld [vmem:[%s359 + $0x10] sm:$0xf]
        %v3856 = vld [vmem:[%s359 + $0x14] sm:$0xf]
        %v3857 = vld [vmem:[%s359 + $0x18] sm:$0xf]
        %v3858 = vld [vmem:[%s359 + $0x1c] sm:$0xf]
        %v3859 = vld [vmem:[%s359 + $0x20] sm:$0xf]
        %v3860 = vld [vmem:[%s359 + $0x24] sm:$0xf]
        %v3861 = vld [vmem:[%s359 + $0x28] sm:$0xf]
        %v3862 = vld [vmem:[%s359 + $0x2c] sm:$0xf]
        %v3863 = vld [vmem:[%s359 + $0x30] sm:$0xf]
        %v3864 = vld [vmem:[%s359 + $0x34] sm:$0xf]
        %v3865 = vld [vmem:[%s359 + $0x38] sm:$0xf]
        %v3866 = vld [vmem:[%s359 + $0x3c] sm:$0xf]
        %v3867 = vld [vmem:[%s359 + $0x40] sm:$0xf]
        %v3868 = vld [vmem:[%s359 + $0x44] sm:$0xf]
        %v3869 = vld [vmem:[%s359 + $0x48] sm:$0xf]
        %v3870 = vld [vmem:[%s359 + $0x4c] sm:$0xf]
        %v3871 = vld [vmem:[%s359 + $0x50] sm:$0xf]
        %v3872 = vld [vmem:[%s359 + $0x54] sm:$0xf]
        %v3873 = vld [vmem:[%s359 + $0x58] sm:$0xf]
        %v3874 = vld [vmem:[%s359 + $0x5c] sm:$0xf]
        %v3875 = vunpack.c.l.bf16 %v3851
        %v3876 = vunpack.c.l.bf16 %v3852
        %v3877 = vunpack.c.l.bf16 %v3853
        %v3878 = vunpack.c.l.bf16 %v3854
        %v3879 = vunpack.c.l.bf16 %v3855
        %v3880 = vunpack.c.l.bf16 %v3856
        %v3881 = vunpack.c.l.bf16 %v3857
        %v3882 = vunpack.c.l.bf16 %v3858
        %v3883 = vunpack.c.l.bf16 %v3859
        %v3884 = vunpack.c.l.bf16 %v3860
        %v3885 = vunpack.c.l.bf16 %v3861
        %v3886 = vunpack.c.l.bf16 %v3862
        %v3887 = vunpack.c.l.bf16 %v3863
        %v3888 = vunpack.c.l.bf16 %v3864
        %v3889 = vunpack.c.l.bf16 %v3865
        %v3890 = vunpack.c.l.bf16 %v3866
        %v3891 = vunpack.c.l.bf16 %v3867
        %v3892 = vunpack.c.l.bf16 %v3868
        %v3893 = vunpack.c.l.bf16 %v3869
        %v3894 = vunpack.c.l.bf16 %v3870
        %v3895 = vunpack.c.l.bf16 %v3871
        %v3896 = vunpack.c.l.bf16 %v3872
        %v3897 = vunpack.c.l.bf16 %v3873
        %v3898 = vunpack.c.l.bf16 %v3874
        %v3899 = vadd.f32 %v3757, %v3875
        %v3900 = vadd.f32 %v3760, %v3876
        %v3901 = vadd.f32 %v3765, %v3877
        %v3902 = vadd.f32 %v3768, %v3878
        %v3903 = vadd.f32 %v3773, %v3879
        %v3904 = vadd.f32 %v3776, %v3880
        %v3905 = vadd.f32 %v3781, %v3881
        %v3906 = vadd.f32 %v3784, %v3882
        %v3907 = vadd.f32 %v3789, %v3883
        %v3908 = vadd.f32 %v3792, %v3884
        %v3909 = vadd.f32 %v3797, %v3885
        %v3910 = vadd.f32 %v3800, %v3886
        %v3911 = vadd.f32 %v3805, %v3887
        %v3912 = vadd.f32 %v3808, %v3888
        %v3913 = vadd.f32 %v3813, %v3889
        %v3914 = vadd.f32 %v3816, %v3890
        %v3915 = vadd.f32 %v3821, %v3891
        %v3916 = vadd.f32 %v3824, %v3892
        %v3917 = vadd.f32 %v3829, %v3893
        %v3918 = vadd.f32 %v3832, %v3894
        %v3919 = vadd.f32 %v3837, %v3895
        %v3920 = vadd.f32 %v3840, %v3896
        %v3921 = vadd.f32 %v3845, %v3897
        %v3922 = vadd.f32 %v3848, %v3898
        %v3923 = vmax.f32 %v3899, 0.0
        %v3924 = vmax.f32 %v3900, 0.0
        %v3925 = vmax.f32 %v3901, 0.0
        %v3926 = vmax.f32 %v3902, 0.0
        %v3927 = vmax.f32 %v3903, 0.0
        %v3928 = vmax.f32 %v3904, 0.0
        %v3929 = vmax.f32 %v3905, 0.0
        %v3930 = vmax.f32 %v3906, 0.0
        %v3931 = vmax.f32 %v3907, 0.0
        %v3932 = vmax.f32 %v3908, 0.0
        %v3933 = vmax.f32 %v3909, 0.0
        %v3934 = vmax.f32 %v3910, 0.0
        %v3935 = vmax.f32 %v3911, 0.0
        %v3936 = vmax.f32 %v3912, 0.0
        %v3937 = vmax.f32 %v3913, 0.0
        %v3938 = vmax.f32 %v3914, 0.0
        %v3939 = vmax.f32 %v3915, 0.0
        %v3940 = vmax.f32 %v3916, 0.0
        %v3941 = vmax.f32 %v3917, 0.0
        %v3942 = vmax.f32 %v3918, 0.0
        %v3943 = vmax.f32 %v3919, 0.0
        %v3944 = vmax.f32 %v3920, 0.0
        %v3945 = vmax.f32 %v3921, 0.0
        %v3946 = vmax.f32 %v3922, 0.0
        %3947 = vst [vmem:[%s419] sm:$0xff] %v3923
        %3948 = vst [vmem:[%s419 + $0x8] sm:$0xff] %v3924
        %3949 = vst [vmem:[%s419 + $0x10] sm:$0xff] %v3925
        %3950 = vst [vmem:[%s419 + $0x18] sm:$0xff] %v3926
        %3951 = vst [vmem:[%s419 + $0x20] sm:$0xff] %v3927
        %3952 = vst [vmem:[%s419 + $0x28] sm:$0xff] %v3928
        %3953 = vst [vmem:[%s419 + $0x30] sm:$0xff] %v3929
        %3954 = vst [vmem:[%s419 + $0x38] sm:$0xff] %v3930
        %3955 = vst [vmem:[%s419 + $0x40] sm:$0xff] %v3931
        %3956 = vst [vmem:[%s419 + $0x48] sm:$0xff] %v3932
        %3957 = vst [vmem:[%s419 + $0x50] sm:$0xff] %v3933
        %3958 = vst [vmem:[%s419 + $0x58] sm:$0xff] %v3934
        %3959 = vst [vmem:[%s419 + $0x60] sm:$0xff] %v3935
        %3960 = vst [vmem:[%s419 + $0x68] sm:$0xff] %v3936
        %3961 = vst [vmem:[%s419 + $0x70] sm:$0xff] %v3937
        %3962 = vst [vmem:[%s419 + $0x78] sm:$0xff] %v3938
        %3963 = vst [vmem:[%s419 + $0x80] sm:$0xff] %v3939
        %3964 = vst [vmem:[%s419 + $0x88] sm:$0xff] %v3940
        %3965 = vst [vmem:[%s419 + $0x90] sm:$0xff] %v3941
        %3966 = vst [vmem:[%s419 + $0x98] sm:$0xff] %v3942
        %3967 = vst [vmem:[%s419 + $0xa0] sm:$0xff] %v3943
        %3968 = vst [vmem:[%s419 + $0xa8] sm:$0xff] %v3944
        %3969 = vst [vmem:[%s419 + $0xb0] sm:$0xff] %v3945
        %3970 = vst [vmem:[%s419 + $0xb8] sm:$0xff] %v3946
        %v3971 = vld [vmem:[#allocation2 + $0xc7] sm:$0xff]
        %v3972 = vld [vmem:[#allocation2 + $0xcf] sm:$0xff]
        %v3973 = vld [vmem:[#allocation2 + $0xd7] sm:$0xff]
        %v3974 = vld [vmem:[#allocation2 + $0xdf] sm:$0xff]
        %v3975 = vld [vmem:[#allocation2 + $0xe7] sm:$0xff]
        %v3976 = vld [vmem:[#allocation2 + $0xef] sm:$0xff]
        %v3977 = vld [vmem:[#allocation2 + $0xf7] sm:$0xff]
        %v3978 = vld [vmem:[#allocation2 + $0xff] sm:$0xff]
        %v3979 = vld [vmem:[#allocation2 + $0x107] sm:$0xff]
        %v3980 = vld [vmem:[#allocation2 + $0x10f] sm:$0xff]
        %v3981 = vld [vmem:[#allocation2 + $0x117] sm:$0xff]
        %v3982 = vld [vmem:[#allocation2 + $0x11f] sm:$0xff]
        %v3983 = vld [vmem:[#allocation2 + $0x127] sm:$0xff]
        %v3984 = vld [vmem:[#allocation2 + $0x12f] sm:$0xff]
        %v3985 = vld [vmem:[#allocation2 + $0x137] sm:$0xff]
        %v3986 = vld [vmem:[#allocation2 + $0x13f] sm:$0xff]
        %v3987 = vld [vmem:[#allocation2 + $0x147] sm:$0xff]
        %v3988 = vld [vmem:[#allocation2 + $0x14f] sm:$0xff]
        %v3989 = vld [vmem:[#allocation2 + $0x157] sm:$0xff]
        %v3990 = vld [vmem:[#allocation2 + $0x15f] sm:$0xff]
        %v3991 = vld [vmem:[#allocation2 + $0x167] sm:$0xff]
        %v3992 = vld [vmem:[#allocation2 + $0x16f] sm:$0xff]
        %v3993 = vld [vmem:[#allocation2 + $0x177] sm:$0xff]
        %v3994 = vld [vmem:[#allocation2 + $0x17f] sm:$0xff]
        %v3995 = vpack.c.bf16 %v3972, %v3971
        %v3996 = vpack.c.bf16 %v3974, %v3973
        %v3997 = vpack.c.bf16 %v3976, %v3975
        %v3998 = vpack.c.bf16 %v3978, %v3977
        %v3999 = vpack.c.bf16 %v3980, %v3979
        %v4000 = vpack.c.bf16 %v3982, %v3981
        %v4001 = vpack.c.bf16 %v3984, %v3983
        %v4002 = vpack.c.bf16 %v3986, %v3985
        %v4003 = vpack.c.bf16 %v3988, %v3987
        %v4004 = vpack.c.bf16 %v3990, %v3989
        %v4005 = vpack.c.bf16 %v3992, %v3991
        %v4006 = vpack.c.bf16 %v3994, %v3993
        %v4007 = vld [vmem:[#allocation11] sm:$0xf]
        %v4008 = vld [vmem:[#allocation11 + $0x4] sm:$0xf]
        %v4009 = vld [vmem:[#allocation11 + $0x8] sm:$0xf]
        %v4010 = vld [vmem:[#allocation11 + $0xc] sm:$0xf]
        %v4011 = vld [vmem:[#allocation11 + $0x10] sm:$0xf]
        %v4012 = vld [vmem:[#allocation11 + $0x14] sm:$0xf]
        %v4013 = vld [vmem:[#allocation11 + $0x18] sm:$0xf]
        %v4014 = vld [vmem:[#allocation11 + $0x1c] sm:$0xf]
        %v4015 = vld [vmem:[#allocation11 + $0x20] sm:$0xf]
        %v4016 = vld [vmem:[#allocation11 + $0x24] sm:$0xf]
        %v4017 = vld [vmem:[#allocation11 + $0x28] sm:$0xf]
        %v4018 = vld [vmem:[#allocation11 + $0x2c] sm:$0xf]
        %v4019 = vld [vmem:[#allocation11 + $0x30] sm:$0xf]
        %v4020 = vld [vmem:[#allocation11 + $0x34] sm:$0xf]
        %v4021 = vld [vmem:[#allocation11 + $0x38] sm:$0xf]
        %v4022 = vld [vmem:[#allocation11 + $0x3c] sm:$0xf]
        %v4023 = vld [vmem:[#allocation2 + $0xc8] sm:$0xff]
        %v4024 = vld [vmem:[#allocation2 + $0xd0] sm:$0xff]
        %v4025 = vld [vmem:[#allocation2 + $0xd8] sm:$0xff]
        %v4026 = vld [vmem:[#allocation2 + $0xe0] sm:$0xff]
        %v4027 = vld [vmem:[#allocation2 + $0xe8] sm:$0xff]
        %v4028 = vld [vmem:[#allocation2 + $0xf0] sm:$0xff]
        %v4029 = vld [vmem:[#allocation2 + $0xf8] sm:$0xff]
        %v4030 = vld [vmem:[#allocation2 + $0x100] sm:$0xff]
        %v4031 = vld [vmem:[#allocation2 + $0x108] sm:$0xff]
        %v4032 = vld [vmem:[#allocation2 + $0x110] sm:$0xff]
        %v4033 = vld [vmem:[#allocation2 + $0x118] sm:$0xff]
        %v4034 = vld [vmem:[#allocation2 + $0x120] sm:$0xff]
        %v4035 = vld [vmem:[#allocation2 + $0x128] sm:$0xff]
        %v4036 = vld [vmem:[#allocation2 + $0x130] sm:$0xff]
        %v4037 = vld [vmem:[#allocation2 + $0x138] sm:$0xff]
        %v4038 = vld [vmem:[#allocation2 + $0x140] sm:$0xff]
        %v4039 = vld [vmem:[#allocation2 + $0x148] sm:$0xff]
        %v4040 = vld [vmem:[#allocation2 + $0x150] sm:$0xff]
        %v4041 = vld [vmem:[#allocation2 + $0x158] sm:$0xff]
        %v4042 = vld [vmem:[#allocation2 + $0x160] sm:$0xff]
        %v4043 = vld [vmem:[#allocation2 + $0x168] sm:$0xff]
        %v4044 = vld [vmem:[#allocation2 + $0x170] sm:$0xff]
        %v4045 = vld [vmem:[#allocation2 + $0x178] sm:$0xff]
        %v4046 = vld [vmem:[#allocation2 + $0x180] sm:$0xff]
        %v4047 = vpack.c.bf16 %v4024, %v4023
        %v4048 = vpack.c.bf16 %v4026, %v4025
        %v4049 = vpack.c.bf16 %v4028, %v4027
        %v4050 = vpack.c.bf16 %v4030, %v4029
        %v4051 = vpack.c.bf16 %v4032, %v4031
        %v4052 = vpack.c.bf16 %v4034, %v4033
        %v4053 = vpack.c.bf16 %v4036, %v4035
        %v4054 = vpack.c.bf16 %v4038, %v4037
        %v4055 = vpack.c.bf16 %v4040, %v4039
        %v4056 = vpack.c.bf16 %v4042, %v4041
        %v4057 = vpack.c.bf16 %v4044, %v4043
        %v4058 = vpack.c.bf16 %v4046, %v4045
        %v4059 = vld [vmem:[%s1435] sm:$0xf]
        %v4060 = vld [vmem:[%s1435 + $0x4] sm:$0xf]
        %v4061 = vld [vmem:[%s1435 + $0x8] sm:$0xf]
        %v4062 = vld [vmem:[%s1435 + $0xc] sm:$0xf]
        %v4063 = vld [vmem:[%s1435 + $0x10] sm:$0xf]
        %v4064 = vld [vmem:[%s1435 + $0x14] sm:$0xf]
        %v4065 = vld [vmem:[%s1435 + $0x18] sm:$0xf]
        %v4066 = vld [vmem:[%s1435 + $0x1c] sm:$0xf]
        %v4067 = vld [vmem:[%s1435 + $0x20] sm:$0xf]
        %v4068 = vld [vmem:[%s1435 + $0x24] sm:$0xf]
        %v4069 = vld [vmem:[%s1435 + $0x28] sm:$0xf]
        %v4070 = vld [vmem:[%s1435 + $0x2c] sm:$0xf]
        %v4071 = vld [vmem:[%s1435 + $0x30] sm:$0xf]
        %v4072 = vld [vmem:[%s1435 + $0x34] sm:$0xf]
        %v4073 = vld [vmem:[%s1435 + $0x38] sm:$0xf]
        %v4074 = vld [vmem:[%s1435 + $0x3c] sm:$0xf]
        %v4091 = vunpack.c.l.b16 %v4059
        %v4092 = vunpack.c.l.b16 %v4060
        %v4093 = vunpack.c.l.b16 %v4061
        %v4094 = vunpack.c.l.b16 %v4062
        %v4095 = vunpack.c.l.b16 %v4063
        %v4096 = vunpack.c.l.b16 %v4064
        %v4097 = vunpack.c.l.b16 %v4065
        %v4098 = vunpack.c.l.b16 %v4066
        %v4099 = vunpack.c.l.b16 %v4067
        %v4100 = vunpack.c.l.b16 %v4068
        %v4101 = vunpack.c.l.b16 %v4069
        %v4102 = vunpack.c.l.b16 %v4070
        %v4103 = vunpack.c.l.b16 %v4071
        %v4104 = vunpack.c.l.b16 %v4072
        %v4105 = vunpack.c.l.b16 %v4073
        %v4106 = vunpack.c.l.b16 %v4074
        %v4107 = vpack.c.b16 %v4092, %v4091
        %v4108 = vpack.c.b16 %v4094, %v4093
        %v4109 = vpack.c.b16 %v4096, %v4095
        %v4110 = vpack.c.b16 %v4098, %v4097
        %v4111 = vpack.c.b16 %v4100, %v4099
        %v4112 = vpack.c.b16 %v4102, %v4101
        %v4113 = vpack.c.b16 %v4104, %v4103
        %v4114 = vpack.c.b16 %v4106, %v4105
        %4123 = vmatprep.subr.bf16.mxu0 0
        %4124 = vmatpush1.bf16.msra.mxu0 %v4107
        %4125 = vmatprep.subr.bf16.mxu0 0
        %4126 = vmatpush1.bf16.msra.mxu0 %v4108
        %4127 = vmatprep.subr.bf16.mxu0 0
        %4128 = vmatpush1.bf16.msra.mxu0 %v4109
        %4129 = vmatprep.subr.bf16.mxu0 0
        %4130 = vmatpush1.bf16.msra.mxu0 %v4110
        %4131 = vmatprep.subr.bf16.mxu0 0
        %4132 = vmatpush1.bf16.msra.mxu0 %v4111
        %4133 = vmatprep.subr.bf16.mxu0 0
        %4134 = vmatpush1.bf16.msra.mxu0 %v4112
        %4135 = vmatprep.subr.bf16.mxu0 0
        %4136 = vmatpush1.bf16.msra.mxu0 %v4113
        %4137 = vmatprep.subr.bf16.mxu0 0
        %4138 = vmatpush1.bf16.msra.mxu0 %v4114
        %4139 = vmatprep.subr.bf16.mxu0 0
        %4140 = vmatpush1.bf16.msra.mxu0 0
        %4141 = vmatprep.subr.bf16.mxu0 0
        %4142 = vmatpush1.bf16.msra.mxu0 0
        %4143 = vmatprep.subr.bf16.mxu0 0
        %4144 = vmatpush1.bf16.msra.mxu0 0
        %4145 = vmatprep.subr.bf16.mxu0 0
        %4146 = vmatpush1.bf16.msra.mxu0 0
        %4147 = vmatprep.subr.bf16.mxu0 0
        %4148 = vmatpush1.bf16.msra.mxu0 0
        %4149 = vmatprep.subr.bf16.mxu0 0
        %4150 = vmatpush1.bf16.msra.mxu0 0
        %4151 = vmatprep.subr.bf16.mxu0 0
        %4152 = vmatpush1.bf16.msra.mxu0 0
        %4153 = vmatprep.subr.bf16.mxu0 0
        %4154 = vmatpush1.bf16.msra.mxu0 0
        %4155 = vmatprep.mubr.bf16.mxu0 0
        %4156 = vmatmul.mubr.bf16.gmra.mrb[0].mxu0 %v4047
        %v4157 = vpop.f32.mrb[0].mxu0
        %v4158 = vadd.f32 0.0, %v4157
        %v4159 = vpop.f32.mrb[0].mxu0
        %v4160 = vpop.f32.mrb[0].mxu0
        %v4161 = vadd.f32 0.0, %v4160
        %v4162 = vpop.f32.mrb[0].mxu0
        %4163 = vmatprep.mubr.bf16.mxu0 0
        %4164 = vmatmul.mubr.bf16.gmra.mrb[0].mxu0 %v4048
        %v4165 = vpop.f32.mrb[0].mxu0
        %v4166 = vadd.f32 0.0, %v4165
        %v4167 = vpop.f32.mrb[0].mxu0
        %v4168 = vpop.f32.mrb[0].mxu0
        %v4169 = vadd.f32 0.0, %v4168
        %v4170 = vpop.f32.mrb[0].mxu0
        %4171 = vmatprep.mubr.bf16.mxu0 0
        %4172 = vmatmul.mubr.bf16.gmra.mrb[0].mxu0 %v4049
        %v4173 = vpop.f32.mrb[0].mxu0
        %v4174 = vadd.f32 0.0, %v4173
        %v4175 = vpop.f32.mrb[0].mxu0
        %v4176 = vpop.f32.mrb[0].mxu0
        %v4177 = vadd.f32 0.0, %v4176
        %v4178 = vpop.f32.mrb[0].mxu0
        %4179 = vmatprep.mubr.bf16.mxu0 0
        %4180 = vmatmul.mubr.bf16.gmra.mrb[0].mxu0 %v4050
        %v4181 = vpop.f32.mrb[0].mxu0
        %v4182 = vadd.f32 0.0, %v4181
        %v4183 = vpop.f32.mrb[0].mxu0
        %v4184 = vpop.f32.mrb[0].mxu0
        %v4185 = vadd.f32 0.0, %v4184
        %v4186 = vpop.f32.mrb[0].mxu0
        %4187 = vmatprep.mubr.bf16.mxu0 0
        %4188 = vmatmul.mubr.bf16.gmra.mrb[0].mxu0 %v4051
        %v4189 = vpop.f32.mrb[0].mxu0
        %v4190 = vadd.f32 0.0, %v4189
        %v4191 = vpop.f32.mrb[0].mxu0
        %v4192 = vpop.f32.mrb[0].mxu0
        %v4193 = vadd.f32 0.0, %v4192
        %v4194 = vpop.f32.mrb[0].mxu0
        %4195 = vmatprep.mubr.bf16.mxu0 0
        %4196 = vmatmul.mubr.bf16.gmra.mrb[0].mxu0 %v4052
        %v4197 = vpop.f32.mrb[0].mxu0
        %v4198 = vadd.f32 0.0, %v4197
        %v4199 = vpop.f32.mrb[0].mxu0
        %v4200 = vpop.f32.mrb[0].mxu0
        %v4201 = vadd.f32 0.0, %v4200
        %v4202 = vpop.f32.mrb[0].mxu0
        %4203 = vmatprep.mubr.bf16.mxu0 0
        %4204 = vmatmul.mubr.bf16.gmra.mrb[0].mxu0 %v4053
        %v4205 = vpop.f32.mrb[0].mxu0
        %v4206 = vadd.f32 0.0, %v4205
        %v4207 = vpop.f32.mrb[0].mxu0
        %v4208 = vpop.f32.mrb[0].mxu0
        %v4209 = vadd.f32 0.0, %v4208
        %v4210 = vpop.f32.mrb[0].mxu0
        %4211 = vmatprep.mubr.bf16.mxu0 0
        %4212 = vmatmul.mubr.bf16.gmra.mrb[0].mxu0 %v4054
        %v4213 = vpop.f32.mrb[0].mxu0
        %v4214 = vadd.f32 0.0, %v4213
        %v4215 = vpop.f32.mrb[0].mxu0
        %v4216 = vpop.f32.mrb[0].mxu0
        %v4217 = vadd.f32 0.0, %v4216
        %v4218 = vpop.f32.mrb[0].mxu0
        %4219 = vmatprep.mubr.bf16.mxu0 0
        %4220 = vmatmul.mubr.bf16.gmra.mrb[0].mxu0 %v4055
        %v4221 = vpop.f32.mrb[0].mxu0
        %v4222 = vadd.f32 0.0, %v4221
        %v4223 = vpop.f32.mrb[0].mxu0
        %v4224 = vpop.f32.mrb[0].mxu0
        %v4225 = vadd.f32 0.0, %v4224
        %v4226 = vpop.f32.mrb[0].mxu0
        %4227 = vmatprep.mubr.bf16.mxu0 0
        %4228 = vmatmul.mubr.bf16.gmra.mrb[0].mxu0 %v4056
        %v4229 = vpop.f32.mrb[0].mxu0
        %v4230 = vadd.f32 0.0, %v4229
        %v4231 = vpop.f32.mrb[0].mxu0
        %v4232 = vpop.f32.mrb[0].mxu0
        %v4233 = vadd.f32 0.0, %v4232
        %v4234 = vpop.f32.mrb[0].mxu0
        %4235 = vmatprep.mubr.bf16.mxu0 0
        %4236 = vmatmul.mubr.bf16.gmra.mrb[0].mxu0 %v4057
        %v4237 = vpop.f32.mrb[0].mxu0
        %v4238 = vadd.f32 0.0, %v4237
        %v4239 = vpop.f32.mrb[0].mxu0
        %v4240 = vpop.f32.mrb[0].mxu0
        %v4241 = vadd.f32 0.0, %v4240
        %v4242 = vpop.f32.mrb[0].mxu0
        %4243 = vmatprep.mubr.bf16.mxu0 0
        %4244 = vmatmul.mubr.bf16.gmra.mrb[0].mxu0 %v4058
        %v4245 = vpop.f32.mrb[0].mxu0
        %v4246 = vadd.f32 0.0, %v4245
        %v4247 = vpop.f32.mrb[0].mxu0
        %v4248 = vpop.f32.mrb[0].mxu0
        %v4249 = vadd.f32 0.0, %v4248
        %v4250 = vpop.f32.mrb[0].mxu0
        %4251 = vdwg.mxu0
        %v4268 = vunpack.c.l.b16 %v4007
        %v4269 = vunpack.c.l.b16 %v4008
        %v4270 = vunpack.c.l.b16 %v4009
        %v4271 = vunpack.c.l.b16 %v4010
        %v4272 = vunpack.c.l.b16 %v4011
        %v4273 = vunpack.c.l.b16 %v4012
        %v4274 = vunpack.c.l.b16 %v4013
        %v4275 = vunpack.c.l.b16 %v4014
        %v4276 = vunpack.c.l.b16 %v4015
        %v4277 = vunpack.c.l.b16 %v4016
        %v4278 = vunpack.c.l.b16 %v4017
        %v4279 = vunpack.c.l.b16 %v4018
        %v4280 = vunpack.c.l.b16 %v4019
        %v4281 = vunpack.c.l.b16 %v4020
        %v4282 = vunpack.c.l.b16 %v4021
        %v4283 = vunpack.c.l.b16 %v4022
        %v4284 = vpack.c.b16 %v4269, %v4268
        %v4285 = vpack.c.b16 %v4271, %v4270
        %v4286 = vpack.c.b16 %v4273, %v4272
        %v4287 = vpack.c.b16 %v4275, %v4274
        %v4288 = vpack.c.b16 %v4277, %v4276
        %v4289 = vpack.c.b16 %v4279, %v4278
        %v4290 = vpack.c.b16 %v4281, %v4280
        %v4291 = vpack.c.b16 %v4283, %v4282
        %4300 = vmatprep.subr.bf16.mxu0 0
        %4301 = vmatpush1.bf16.msra.mxu0 %v4284
        %4302 = vmatprep.subr.bf16.mxu0 0
        %4303 = vmatpush1.bf16.msra.mxu0 %v4285
        %4304 = vmatprep.subr.bf16.mxu0 0
        %4305 = vmatpush1.bf16.msra.mxu0 %v4286
        %4306 = vmatprep.subr.bf16.mxu0 0
        %4307 = vmatpush1.bf16.msra.mxu0 %v4287
        %4308 = vmatprep.subr.bf16.mxu0 0
        %4309 = vmatpush1.bf16.msra.mxu0 %v4288
        %4310 = vmatprep.subr.bf16.mxu0 0
        %4311 = vmatpush1.bf16.msra.mxu0 %v4289
        %4312 = vmatprep.subr.bf16.mxu0 0
        %4313 = vmatpush1.bf16.msra.mxu0 %v4290
        %4314 = vmatprep.subr.bf16.mxu0 0
        %4315 = vmatpush1.bf16.msra.mxu0 %v4291
        %4316 = vmatprep.subr.bf16.mxu0 0
        %4317 = vmatpush1.bf16.msra.mxu0 0
        %4318 = vmatprep.subr.bf16.mxu0 0
        %4319 = vmatpush1.bf16.msra.mxu0 0
        %4320 = vmatprep.subr.bf16.mxu0 0
        %4321 = vmatpush1.bf16.msra.mxu0 0
        %4322 = vmatprep.subr.bf16.mxu0 0
        %4323 = vmatpush1.bf16.msra.mxu0 0
        %4324 = vmatprep.subr.bf16.mxu0 0
        %4325 = vmatpush1.bf16.msra.mxu0 0
        %4326 = vmatprep.subr.bf16.mxu0 0
        %4327 = vmatpush1.bf16.msra.mxu0 0
        %4328 = vmatprep.subr.bf16.mxu0 0
        %4329 = vmatpush1.bf16.msra.mxu0 0
        %4330 = vmatprep.subr.bf16.mxu0 0
        %4331 = vmatpush1.bf16.msra.mxu0 0
        %4332 = vmatprep.mubr.bf16.mxu0 0
        %4333 = vmatmul.mubr.bf16.gmra.mrb[0].mxu0 %v3995
        %v4334 = vpop.f32.mrb[0].mxu0
        %v4335 = vadd.f32 %v4158, %v4334
        %v4336 = vpop.f32.mrb[0].mxu0
        %v4337 = vpop.f32.mrb[0].mxu0
        %v4338 = vadd.f32 %v4161, %v4337
        %v4339 = vpop.f32.mrb[0].mxu0
        %4340 = vmatprep.mubr.bf16.mxu0 0
        %4341 = vmatmul.mubr.bf16.gmra.mrb[0].mxu0 %v3996
        %v4342 = vpop.f32.mrb[0].mxu0
        %v4343 = vadd.f32 %v4166, %v4342
        %v4344 = vpop.f32.mrb[0].mxu0
        %v4345 = vpop.f32.mrb[0].mxu0
        %v4346 = vadd.f32 %v4169, %v4345
        %v4347 = vpop.f32.mrb[0].mxu0
        %4348 = vmatprep.mubr.bf16.mxu0 0
        %4349 = vmatmul.mubr.bf16.gmra.mrb[0].mxu0 %v3997
        %v4350 = vpop.f32.mrb[0].mxu0
        %v4351 = vadd.f32 %v4174, %v4350
        %v4352 = vpop.f32.mrb[0].mxu0
        %v4353 = vpop.f32.mrb[0].mxu0
        %v4354 = vadd.f32 %v4177, %v4353
        %v4355 = vpop.f32.mrb[0].mxu0
        %4356 = vmatprep.mubr.bf16.mxu0 0
        %4357 = vmatmul.mubr.bf16.gmra.mrb[0].mxu0 %v3998
        %v4358 = vpop.f32.mrb[0].mxu0
        %v4359 = vadd.f32 %v4182, %v4358
        %v4360 = vpop.f32.mrb[0].mxu0
        %v4361 = vpop.f32.mrb[0].mxu0
        %v4362 = vadd.f32 %v4185, %v4361
        %v4363 = vpop.f32.mrb[0].mxu0
        %4364 = vmatprep.mubr.bf16.mxu0 0
        %4365 = vmatmul.mubr.bf16.gmra.mrb[0].mxu0 %v3999
        %v4366 = vpop.f32.mrb[0].mxu0
        %v4367 = vadd.f32 %v4190, %v4366
        %v4368 = vpop.f32.mrb[0].mxu0
        %v4369 = vpop.f32.mrb[0].mxu0
        %v4370 = vadd.f32 %v4193, %v4369
        %v4371 = vpop.f32.mrb[0].mxu0
        %4372 = vmatprep.mubr.bf16.mxu0 0
        %4373 = vmatmul.mubr.bf16.gmra.mrb[0].mxu0 %v4000
        %v4374 = vpop.f32.mrb[0].mxu0
        %v4375 = vadd.f32 %v4198, %v4374
        %v4376 = vpop.f32.mrb[0].mxu0
        %v4377 = vpop.f32.mrb[0].mxu0
        %v4378 = vadd.f32 %v4201, %v4377
        %v4379 = vpop.f32.mrb[0].mxu0
        %4380 = vmatprep.mubr.bf16.mxu0 0
        %4381 = vmatmul.mubr.bf16.gmra.mrb[0].mxu0 %v4001
        %v4382 = vpop.f32.mrb[0].mxu0
        %v4383 = vadd.f32 %v4206, %v4382
        %v4384 = vpop.f32.mrb[0].mxu0
        %v4385 = vpop.f32.mrb[0].mxu0
        %v4386 = vadd.f32 %v4209, %v4385
        %v4387 = vpop.f32.mrb[0].mxu0
        %4388 = vmatprep.mubr.bf16.mxu0 0
        %4389 = vmatmul.mubr.bf16.gmra.mrb[0].mxu0 %v4002
        %v4390 = vpop.f32.mrb[0].mxu0
        %v4391 = vadd.f32 %v4214, %v4390
        %v4392 = vpop.f32.mrb[0].mxu0
        %v4393 = vpop.f32.mrb[0].mxu0
        %v4394 = vadd.f32 %v4217, %v4393
        %v4395 = vpop.f32.mrb[0].mxu0
        %4396 = vmatprep.mubr.bf16.mxu0 0
        %4397 = vmatmul.mubr.bf16.gmra.mrb[0].mxu0 %v4003
        %v4398 = vpop.f32.mrb[0].mxu0
        %v4399 = vadd.f32 %v4222, %v4398
        %v4400 = vpop.f32.mrb[0].mxu0
        %v4401 = vpop.f32.mrb[0].mxu0
        %v4402 = vadd.f32 %v4225, %v4401
        %v4403 = vpop.f32.mrb[0].mxu0
        %4404 = vmatprep.mubr.bf16.mxu0 0
        %4405 = vmatmul.mubr.bf16.gmra.mrb[0].mxu0 %v4004
        %v4406 = vpop.f32.mrb[0].mxu0
        %v4407 = vadd.f32 %v4230, %v4406
        %v4408 = vpop.f32.mrb[0].mxu0
        %v4409 = vpop.f32.mrb[0].mxu0
        %v4410 = vadd.f32 %v4233, %v4409
        %v4411 = vpop.f32.mrb[0].mxu0
        %4412 = vmatprep.mubr.bf16.mxu0 0
        %4413 = vmatmul.mubr.bf16.gmra.mrb[0].mxu0 %v4005
        %v4414 = vpop.f32.mrb[0].mxu0
        %v4415 = vadd.f32 %v4238, %v4414
        %v4416 = vpop.f32.mrb[0].mxu0
        %v4417 = vpop.f32.mrb[0].mxu0
        %v4418 = vadd.f32 %v4241, %v4417
        %v4419 = vpop.f32.mrb[0].mxu0
        %4420 = vmatprep.mubr.bf16.mxu0 0
        %4421 = vmatmul.mubr.bf16.gmra.mrb[0].mxu0 %v4006
        %v4422 = vpop.f32.mrb[0].mxu0
        %v4423 = vadd.f32 %v4246, %v4422
        %v4424 = vpop.f32.mrb[0].mxu0
        %v4425 = vpop.f32.mrb[0].mxu0
        %v4426 = vadd.f32 %v4249, %v4425
        %v4427 = vpop.f32.mrb[0].mxu0
        %4428 = vdwg.mxu0
        %v4429 = vld [vmem:[#allocation2 + $0xc9] sm:$0xff]
        %v4430 = vld [vmem:[#allocation2 + $0xd1] sm:$0xff]
        %v4431 = vld [vmem:[#allocation2 + $0xd9] sm:$0xff]
        %v4432 = vld [vmem:[#allocation2 + $0xe1] sm:$0xff]
        %v4433 = vld [vmem:[#allocation2 + $0xe9] sm:$0xff]
        %v4434 = vld [vmem:[#allocation2 + $0xf1] sm:$0xff]
        %v4435 = vld [vmem:[#allocation2 + $0xf9] sm:$0xff]
        %v4436 = vld [vmem:[#allocation2 + $0x101] sm:$0xff]
        %v4437 = vld [vmem:[#allocation2 + $0x109] sm:$0xff]
        %v4438 = vld [vmem:[#allocation2 + $0x111] sm:$0xff]
        %v4439 = vld [vmem:[#allocation2 + $0x119] sm:$0xff]
        %v4440 = vld [vmem:[#allocation2 + $0x121] sm:$0xff]
        %v4441 = vld [vmem:[#allocation2 + $0x129] sm:$0xff]
        %v4442 = vld [vmem:[#allocation2 + $0x131] sm:$0xff]
        %v4443 = vld [vmem:[#allocation2 + $0x139] sm:$0xff]
        %v4444 = vld [vmem:[#allocation2 + $0x141] sm:$0xff]
        %v4445 = vld [vmem:[#allocation2 + $0x149] sm:$0xff]
        %v4446 = vld [vmem:[#allocation2 + $0x151] sm:$0xff]
        %v4447 = vld [vmem:[#allocation2 + $0x159] sm:$0xff]
        %v4448 = vld [vmem:[#allocation2 + $0x161] sm:$0xff]
        %v4449 = vld [vmem:[#allocation2 + $0x169] sm:$0xff]
        %v4450 = vld [vmem:[#allocation2 + $0x171] sm:$0xff]
        %v4451 = vld [vmem:[#allocation2 + $0x179] sm:$0xff]
        %v4452 = vld [vmem:[#allocation2 + $0x181] sm:$0xff]
        %v4453 = vpack.c.bf16 %v4430, %v4429
        %v4454 = vpack.c.bf16 %v4432, %v4431
        %v4455 = vpack.c.bf16 %v4434, %v4433
        %v4456 = vpack.c.bf16 %v4436, %v4435
        %v4457 = vpack.c.bf16 %v4438, %v4437
        %v4458 = vpack.c.bf16 %v4440, %v4439
        %v4459 = vpack.c.bf16 %v4442, %v4441
        %v4460 = vpack.c.bf16 %v4444, %v4443
        %v4461 = vpack.c.bf16 %v4446, %v4445
        %v4462 = vpack.c.bf16 %v4448, %v4447
        %v4463 = vpack.c.bf16 %v4450, %v4449
        %v4464 = vpack.c.bf16 %v4452, %v4451
        %v4465 = vld [vmem:[%s1842] sm:$0xf]
        %v4466 = vld [vmem:[%s1842 + $0x4] sm:$0xf]
        %v4467 = vld [vmem:[%s1842 + $0x8] sm:$0xf]
        %v4468 = vld [vmem:[%s1842 + $0xc] sm:$0xf]
        %v4469 = vld [vmem:[%s1842 + $0x10] sm:$0xf]
        %v4470 = vld [vmem:[%s1842 + $0x14] sm:$0xf]
        %v4471 = vld [vmem:[%s1842 + $0x18] sm:$0xf]
        %v4472 = vld [vmem:[%s1842 + $0x1c] sm:$0xf]
        %v4473 = vld [vmem:[%s1842 + $0x20] sm:$0xf]
        %v4474 = vld [vmem:[%s1842 + $0x24] sm:$0xf]
        %v4475 = vld [vmem:[%s1842 + $0x28] sm:$0xf]
        %v4476 = vld [vmem:[%s1842 + $0x2c] sm:$0xf]
        %v4477 = vld [vmem:[%s1842 + $0x30] sm:$0xf]
        %v4478 = vld [vmem:[%s1842 + $0x34] sm:$0xf]
        %v4479 = vld [vmem:[%s1842 + $0x38] sm:$0xf]
        %v4480 = vld [vmem:[%s1842 + $0x3c] sm:$0xf]
        %v4497 = vunpack.c.l.b16 %v4465
        %v4498 = vunpack.c.l.b16 %v4466
        %v4499 = vunpack.c.l.b16 %v4467
        %v4500 = vunpack.c.l.b16 %v4468
        %v4501 = vunpack.c.l.b16 %v4469
        %v4502 = vunpack.c.l.b16 %v4470
        %v4503 = vunpack.c.l.b16 %v4471
        %v4504 = vunpack.c.l.b16 %v4472
        %v4505 = vunpack.c.l.b16 %v4473
        %v4506 = vunpack.c.l.b16 %v4474
        %v4507 = vunpack.c.l.b16 %v4475
        %v4508 = vunpack.c.l.b16 %v4476
        %v4509 = vunpack.c.l.b16 %v4477
        %v4510 = vunpack.c.l.b16 %v4478
        %v4511 = vunpack.c.l.b16 %v4479
        %v4512 = vunpack.c.l.b16 %v4480
        %v4513 = vpack.c.b16 %v4498, %v4497
        %v4514 = vpack.c.b16 %v4500, %v4499
        %v4515 = vpack.c.b16 %v4502, %v4501
        %v4516 = vpack.c.b16 %v4504, %v4503
        %v4517 = vpack.c.b16 %v4506, %v4505
        %v4518 = vpack.c.b16 %v4508, %v4507
        %v4519 = vpack.c.b16 %v4510, %v4509
        %v4520 = vpack.c.b16 %v4512, %v4511
        %4529 = vmatprep.subr.bf16.mxu0 0
        %4530 = vmatpush1.bf16.msra.mxu0 %v4513
        %4531 = vmatprep.subr.bf16.mxu0 0
        %4532 = vmatpush1.bf16.msra.mxu0 %v4514
        %4533 = vmatprep.subr.bf16.mxu0 0
        %4534 = vmatpush1.bf16.msra.mxu0 %v4515
        %4535 = vmatprep.subr.bf16.mxu0 0
        %4536 = vmatpush1.bf16.msra.mxu0 %v4516
        %4537 = vmatprep.subr.bf16.mxu0 0
        %4538 = vmatpush1.bf16.msra.mxu0 %v4517
        %4539 = vmatprep.subr.bf16.mxu0 0
        %4540 = vmatpush1.bf16.msra.mxu0 %v4518
        %4541 = vmatprep.subr.bf16.mxu0 0
        %4542 = vmatpush1.bf16.msra.mxu0 %v4519
        %4543 = vmatprep.subr.bf16.mxu0 0
        %4544 = vmatpush1.bf16.msra.mxu0 %v4520
        %4545 = vmatprep.subr.bf16.mxu0 0
        %4546 = vmatpush1.bf16.msra.mxu0 0
        %4547 = vmatprep.subr.bf16.mxu0 0
        %4548 = vmatpush1.bf16.msra.mxu0 0
        %4549 = vmatprep.subr.bf16.mxu0 0
        %4550 = vmatpush1.bf16.msra.mxu0 0
        %4551 = vmatprep.subr.bf16.mxu0 0
        %4552 = vmatpush1.bf16.msra.mxu0 0
        %4553 = vmatprep.subr.bf16.mxu0 0
        %4554 = vmatpush1.bf16.msra.mxu0 0
        %4555 = vmatprep.subr.bf16.mxu0 0
        %4556 = vmatpush1.bf16.msra.mxu0 0
        %4557 = vmatprep.subr.bf16.mxu0 0
        %4558 = vmatpush1.bf16.msra.mxu0 0
        %4559 = vmatprep.subr.bf16.mxu0 0
        %4560 = vmatpush1.bf16.msra.mxu0 0
        %4561 = vmatprep.mubr.bf16.mxu0 0
        %4562 = vmatmul.mubr.bf16.gmra.mrb[0].mxu0 %v4453
        %v4563 = vpop.f32.mrb[0].mxu0
        %v4564 = vadd.f32 0.0, %v4563
        %v4565 = vpop.f32.mrb[0].mxu0
        %v4566 = vpop.f32.mrb[0].mxu0
        %v4567 = vadd.f32 0.0, %v4566
        %v4568 = vpop.f32.mrb[0].mxu0
        %4569 = vmatprep.mubr.bf16.mxu0 0
        %4570 = vmatmul.mubr.bf16.gmra.mrb[0].mxu0 %v4454
        %v4571 = vpop.f32.mrb[0].mxu0
        %v4572 = vadd.f32 0.0, %v4571
        %v4573 = vpop.f32.mrb[0].mxu0
        %v4574 = vpop.f32.mrb[0].mxu0
        %v4575 = vadd.f32 0.0, %v4574
        %v4576 = vpop.f32.mrb[0].mxu0
        %4577 = vmatprep.mubr.bf16.mxu0 0
        %4578 = vmatmul.mubr.bf16.gmra.mrb[0].mxu0 %v4455
        %v4579 = vpop.f32.mrb[0].mxu0
        %v4580 = vadd.f32 0.0, %v4579
        %v4581 = vpop.f32.mrb[0].mxu0
        %v4582 = vpop.f32.mrb[0].mxu0
        %v4583 = vadd.f32 0.0, %v4582
        %v4584 = vpop.f32.mrb[0].mxu0
        %4585 = vmatprep.mubr.bf16.mxu0 0
        %4586 = vmatmul.mubr.bf16.gmra.mrb[0].mxu0 %v4456
        %v4587 = vpop.f32.mrb[0].mxu0
        %v4588 = vadd.f32 0.0, %v4587
        %v4589 = vpop.f32.mrb[0].mxu0
        %v4590 = vpop.f32.mrb[0].mxu0
        %v4591 = vadd.f32 0.0, %v4590
        %v4592 = vpop.f32.mrb[0].mxu0
        %4593 = vmatprep.mubr.bf16.mxu0 0
        %4594 = vmatmul.mubr.bf16.gmra.mrb[0].mxu0 %v4457
        %v4595 = vpop.f32.mrb[0].mxu0
        %v4596 = vadd.f32 0.0, %v4595
        %v4597 = vpop.f32.mrb[0].mxu0
        %v4598 = vpop.f32.mrb[0].mxu0
        %v4599 = vadd.f32 0.0, %v4598
        %v4600 = vpop.f32.mrb[0].mxu0
        %4601 = vmatprep.mubr.bf16.mxu0 0
        %4602 = vmatmul.mubr.bf16.gmra.mrb[0].mxu0 %v4458
        %v4603 = vpop.f32.mrb[0].mxu0
        %v4604 = vadd.f32 0.0, %v4603
        %v4605 = vpop.f32.mrb[0].mxu0
        %v4606 = vpop.f32.mrb[0].mxu0
        %v4607 = vadd.f32 0.0, %v4606
        %v4608 = vpop.f32.mrb[0].mxu0
        %4609 = vmatprep.mubr.bf16.mxu0 0
        %4610 = vmatmul.mubr.bf16.gmra.mrb[0].mxu0 %v4459
        %v4611 = vpop.f32.mrb[0].mxu0
        %v4612 = vadd.f32 0.0, %v4611
        %v4613 = vpop.f32.mrb[0].mxu0
        %v4614 = vpop.f32.mrb[0].mxu0
        %v4615 = vadd.f32 0.0, %v4614
        %v4616 = vpop.f32.mrb[0].mxu0
        %4617 = vmatprep.mubr.bf16.mxu0 0
        %4618 = vmatmul.mubr.bf16.gmra.mrb[0].mxu0 %v4460
        %v4619 = vpop.f32.mrb[0].mxu0
        %v4620 = vadd.f32 0.0, %v4619
        %v4621 = vpop.f32.mrb[0].mxu0
        %v4622 = vpop.f32.mrb[0].mxu0
        %v4623 = vadd.f32 0.0, %v4622
        %v4624 = vpop.f32.mrb[0].mxu0
        %4625 = vmatprep.mubr.bf16.mxu0 0
        %4626 = vmatmul.mubr.bf16.gmra.mrb[0].mxu0 %v4461
        %v4627 = vpop.f32.mrb[0].mxu0
        %v4628 = vadd.f32 0.0, %v4627
        %v4629 = vpop.f32.mrb[0].mxu0
        %v4630 = vpop.f32.mrb[0].mxu0
        %v4631 = vadd.f32 0.0, %v4630
        %v4632 = vpop.f32.mrb[0].mxu0
        %4633 = vmatprep.mubr.bf16.mxu0 0
        %4634 = vmatmul.mubr.bf16.gmra.mrb[0].mxu0 %v4462
        %v4635 = vpop.f32.mrb[0].mxu0
        %v4636 = vadd.f32 0.0, %v4635
        %v4637 = vpop.f32.mrb[0].mxu0
        %v4638 = vpop.f32.mrb[0].mxu0
        %v4639 = vadd.f32 0.0, %v4638
        %v4640 = vpop.f32.mrb[0].mxu0
        %4641 = vmatprep.mubr.bf16.mxu0 0
        %4642 = vmatmul.mubr.bf16.gmra.mrb[0].mxu0 %v4463
        %v4643 = vpop.f32.mrb[0].mxu0
        %v4644 = vadd.f32 0.0, %v4643
        %v4645 = vpop.f32.mrb[0].mxu0
        %v4646 = vpop.f32.mrb[0].mxu0
        %v4647 = vadd.f32 0.0, %v4646
        %v4648 = vpop.f32.mrb[0].mxu0
        %4649 = vmatprep.mubr.bf16.mxu0 0
        %4650 = vmatmul.mubr.bf16.gmra.mrb[0].mxu0 %v4464
        %v4651 = vpop.f32.mrb[0].mxu0
        %v4652 = vadd.f32 0.0, %v4651
        %v4653 = vpop.f32.mrb[0].mxu0
        %v4654 = vpop.f32.mrb[0].mxu0
        %v4655 = vadd.f32 0.0, %v4654
        %v4656 = vpop.f32.mrb[0].mxu0
        %4657 = vdwg.mxu0
        %v4658 = vadd.f32 %v4335, %v4564
        %v4659 = vadd.f32 %v4338, %v4567
        %v4660 = vadd.f32 %v4343, %v4572
        %v4661 = vadd.f32 %v4346, %v4575
        %v4662 = vadd.f32 %v4351, %v4580
        %v4663 = vadd.f32 %v4354, %v4583
        %v4664 = vadd.f32 %v4359, %v4588
        %v4665 = vadd.f32 %v4362, %v4591
        %v4666 = vadd.f32 %v4367, %v4596
        %v4667 = vadd.f32 %v4370, %v4599
        %v4668 = vadd.f32 %v4375, %v4604
        %v4669 = vadd.f32 %v4378, %v4607
        %v4670 = vadd.f32 %v4383, %v4612
        %v4671 = vadd.f32 %v4386, %v4615
        %v4672 = vadd.f32 %v4391, %v4620
        %v4673 = vadd.f32 %v4394, %v4623
        %v4674 = vadd.f32 %v4399, %v4628
        %v4675 = vadd.f32 %v4402, %v4631
        %v4676 = vadd.f32 %v4407, %v4636
        %v4677 = vadd.f32 %v4410, %v4639
        %v4678 = vadd.f32 %v4415, %v4644
        %v4679 = vadd.f32 %v4418, %v4647
        %v4680 = vadd.f32 %v4423, %v4652
        %v4681 = vadd.f32 %v4426, %v4655
        %v4682 = vld [vmem:[#allocation2 + $0xdf] sm:$0xff]
        %v4683 = vld [vmem:[#allocation2 + $0xe7] sm:$0xff]
        %v4684 = vld [vmem:[#allocation2 + $0xef] sm:$0xff]
        %v4685 = vld [vmem:[#allocation2 + $0xf7] sm:$0xff]
        %v4686 = vld [vmem:[#allocation2 + $0xff] sm:$0xff]
        %v4687 = vld [vmem:[#allocation2 + $0x107] sm:$0xff]
        %v4688 = vld [vmem:[#allocation2 + $0x10f] sm:$0xff]
        %v4689 = vld [vmem:[#allocation2 + $0x117] sm:$0xff]
        %v4690 = vld [vmem:[#allocation2 + $0x11f] sm:$0xff]
        %v4691 = vld [vmem:[#allocation2 + $0x127] sm:$0xff]
        %v4692 = vld [vmem:[#allocation2 + $0x12f] sm:$0xff]
        %v4693 = vld [vmem:[#allocation2 + $0x137] sm:$0xff]
        %v4694 = vld [vmem:[#allocation2 + $0x13f] sm:$0xff]
        %v4695 = vld [vmem:[#allocation2 + $0x147] sm:$0xff]
        %v4696 = vld [vmem:[#allocation2 + $0x14f] sm:$0xff]
        %v4697 = vld [vmem:[#allocation2 + $0x157] sm:$0xff]
        %v4698 = vld [vmem:[#allocation2 + $0x15f] sm:$0xff]
        %v4699 = vld [vmem:[#allocation2 + $0x167] sm:$0xff]
        %v4700 = vld [vmem:[#allocation2 + $0x16f] sm:$0xff]
        %v4701 = vld [vmem:[#allocation2 + $0x177] sm:$0xff]
        %v4702 = vld [vmem:[#allocation2 + $0x17f] sm:$0xff]
        %v4703 = vld [vmem:[#allocation2 + $0x187] sm:$0xff]
        %v4704 = vld [vmem:[#allocation2 + $0x18f] sm:$0xff]
        %v4705 = vld [vmem:[#allocation2 + $0x197] sm:$0xff]
        %v4706 = vpack.c.bf16 %v4683, %v4682
        %v4707 = vpack.c.bf16 %v4685, %v4684
        %v4708 = vpack.c.bf16 %v4687, %v4686
        %v4709 = vpack.c.bf16 %v4689, %v4688
        %v4710 = vpack.c.bf16 %v4691, %v4690
        %v4711 = vpack.c.bf16 %v4693, %v4692
        %v4712 = vpack.c.bf16 %v4695, %v4694
        %v4713 = vpack.c.bf16 %v4697, %v4696
        %v4714 = vpack.c.bf16 %v4699, %v4698
        %v4715 = vpack.c.bf16 %v4701, %v4700
        %v4716 = vpack.c.bf16 %v4703, %v4702
        %v4717 = vpack.c.bf16 %v4705, %v4704
        %v4718 = vld [vmem:[%s2096] sm:$0xf]
        %v4719 = vld [vmem:[%s2096 + $0x4] sm:$0xf]
        %v4720 = vld [vmem:[%s2096 + $0x8] sm:$0xf]
        %v4721 = vld [vmem:[%s2096 + $0xc] sm:$0xf]
        %v4722 = vld [vmem:[%s2096 + $0x10] sm:$0xf]
        %v4723 = vld [vmem:[%s2096 + $0x14] sm:$0xf]
        %v4724 = vld [vmem:[%s2096 + $0x18] sm:$0xf]
        %v4725 = vld [vmem:[%s2096 + $0x1c] sm:$0xf]
        %v4726 = vld [vmem:[%s2096 + $0x20] sm:$0xf]
        %v4727 = vld [vmem:[%s2096 + $0x24] sm:$0xf]
        %v4728 = vld [vmem:[%s2096 + $0x28] sm:$0xf]
        %v4729 = vld [vmem:[%s2096 + $0x2c] sm:$0xf]
        %v4730 = vld [vmem:[%s2096 + $0x30] sm:$0xf]
        %v4731 = vld [vmem:[%s2096 + $0x34] sm:$0xf]
        %v4732 = vld [vmem:[%s2096 + $0x38] sm:$0xf]
        %v4733 = vld [vmem:[%s2096 + $0x3c] sm:$0xf]
        %v4750 = vunpack.c.l.b16 %v4718
        %v4751 = vunpack.c.l.b16 %v4719
        %v4752 = vunpack.c.l.b16 %v4720
        %v4753 = vunpack.c.l.b16 %v4721
        %v4754 = vunpack.c.l.b16 %v4722
        %v4755 = vunpack.c.l.b16 %v4723
        %v4756 = vunpack.c.l.b16 %v4724
        %v4757 = vunpack.c.l.b16 %v4725
        %v4758 = vunpack.c.l.b16 %v4726
        %v4759 = vunpack.c.l.b16 %v4727
        %v4760 = vunpack.c.l.b16 %v4728
        %v4761 = vunpack.c.l.b16 %v4729
        %v4762 = vunpack.c.l.b16 %v4730
        %v4763 = vunpack.c.l.b16 %v4731
        %v4764 = vunpack.c.l.b16 %v4732
        %v4765 = vunpack.c.l.b16 %v4733
        %v4766 = vpack.c.b16 %v4751, %v4750
        %v4767 = vpack.c.b16 %v4753, %v4752
        %v4768 = vpack.c.b16 %v4755, %v4754
        %v4769 = vpack.c.b16 %v4757, %v4756
        %v4770 = vpack.c.b16 %v4759, %v4758
        %v4771 = vpack.c.b16 %v4761, %v4760
        %v4772 = vpack.c.b16 %v4763, %v4762
        %v4773 = vpack.c.b16 %v4765, %v4764
        %4782 = vmatprep.subr.bf16.mxu0 0
        %4783 = vmatpush1.bf16.msra.mxu0 %v4766
        %4784 = vmatprep.subr.bf16.mxu0 0
        %4785 = vmatpush1.bf16.msra.mxu0 %v4767
        %4786 = vmatprep.subr.bf16.mxu0 0
        %4787 = vmatpush1.bf16.msra.mxu0 %v4768
        %4788 = vmatprep.subr.bf16.mxu0 0
        %4789 = vmatpush1.bf16.msra.mxu0 %v4769
        %4790 = vmatprep.subr.bf16.mxu0 0
        %4791 = vmatpush1.bf16.msra.mxu0 %v4770
        %4792 = vmatprep.subr.bf16.mxu0 0
        %4793 = vmatpush1.bf16.msra.mxu0 %v4771
        %4794 = vmatprep.subr.bf16.mxu0 0
        %4795 = vmatpush1.bf16.msra.mxu0 %v4772
        %4796 = vmatprep.subr.bf16.mxu0 0
        %4797 = vmatpush1.bf16.msra.mxu0 %v4773
        %4798 = vmatprep.subr.bf16.mxu0 0
        %4799 = vmatpush1.bf16.msra.mxu0 0
        %4800 = vmatprep.subr.bf16.mxu0 0
        %4801 = vmatpush1.bf16.msra.mxu0 0
        %4802 = vmatprep.subr.bf16.mxu0 0
        %4803 = vmatpush1.bf16.msra.mxu0 0
        %4804 = vmatprep.subr.bf16.mxu0 0
        %4805 = vmatpush1.bf16.msra.mxu0 0
        %4806 = vmatprep.subr.bf16.mxu0 0
        %4807 = vmatpush1.bf16.msra.mxu0 0
        %4808 = vmatprep.subr.bf16.mxu0 0
        %4809 = vmatpush1.bf16.msra.mxu0 0
        %4810 = vmatprep.subr.bf16.mxu0 0
        %4811 = vmatpush1.bf16.msra.mxu0 0
        %4812 = vmatprep.subr.bf16.mxu0 0
        %4813 = vmatpush1.bf16.msra.mxu0 0
        %4814 = vmatprep.mubr.bf16.mxu0 0
        %4815 = vmatmul.mubr.bf16.gmra.mrb[0].mxu0 %v4706
        %v4816 = vpop.f32.mrb[0].mxu0
        %v4817 = vadd.f32 0.0, %v4816
        %v4818 = vpop.f32.mrb[0].mxu0
        %v4819 = vpop.f32.mrb[0].mxu0
        %v4820 = vadd.f32 0.0, %v4819
        %v4821 = vpop.f32.mrb[0].mxu0
        %4822 = vmatprep.mubr.bf16.mxu0 0
        %4823 = vmatmul.mubr.bf16.gmra.mrb[0].mxu0 %v4707
        %v4824 = vpop.f32.mrb[0].mxu0
        %v4825 = vadd.f32 0.0, %v4824
        %v4826 = vpop.f32.mrb[0].mxu0
        %v4827 = vpop.f32.mrb[0].mxu0
        %v4828 = vadd.f32 0.0, %v4827
        %v4829 = vpop.f32.mrb[0].mxu0
        %4830 = vmatprep.mubr.bf16.mxu0 0
        %4831 = vmatmul.mubr.bf16.gmra.mrb[0].mxu0 %v4708
        %v4832 = vpop.f32.mrb[0].mxu0
        %v4833 = vadd.f32 0.0, %v4832
        %v4834 = vpop.f32.mrb[0].mxu0
        %v4835 = vpop.f32.mrb[0].mxu0
        %v4836 = vadd.f32 0.0, %v4835
        %v4837 = vpop.f32.mrb[0].mxu0
        %4838 = vmatprep.mubr.bf16.mxu0 0
        %4839 = vmatmul.mubr.bf16.gmra.mrb[0].mxu0 %v4709
        %v4840 = vpop.f32.mrb[0].mxu0
        %v4841 = vadd.f32 0.0, %v4840
        %v4842 = vpop.f32.mrb[0].mxu0
        %v4843 = vpop.f32.mrb[0].mxu0
        %v4844 = vadd.f32 0.0, %v4843
        %v4845 = vpop.f32.mrb[0].mxu0
        %4846 = vmatprep.mubr.bf16.mxu0 0
        %4847 = vmatmul.mubr.bf16.gmra.mrb[0].mxu0 %v4710
        %v4848 = vpop.f32.mrb[0].mxu0
        %v4849 = vadd.f32 0.0, %v4848
        %v4850 = vpop.f32.mrb[0].mxu0
        %v4851 = vpop.f32.mrb[0].mxu0
        %v4852 = vadd.f32 0.0, %v4851
        %v4853 = vpop.f32.mrb[0].mxu0
        %4854 = vmatprep.mubr.bf16.mxu0 0
        %4855 = vmatmul.mubr.bf16.gmra.mrb[0].mxu0 %v4711
        %v4856 = vpop.f32.mrb[0].mxu0
        %v4857 = vadd.f32 0.0, %v4856
        %v4858 = vpop.f32.mrb[0].mxu0
        %v4859 = vpop.f32.mrb[0].mxu0
        %v4860 = vadd.f32 0.0, %v4859
        %v4861 = vpop.f32.mrb[0].mxu0
        %4862 = vmatprep.mubr.bf16.mxu0 0
        %4863 = vmatmul.mubr.bf16.gmra.mrb[0].mxu0 %v4712
        %v4864 = vpop.f32.mrb[0].mxu0
        %v4865 = vadd.f32 0.0, %v4864
        %v4866 = vpop.f32.mrb[0].mxu0
        %v4867 = vpop.f32.mrb[0].mxu0
        %v4868 = vadd.f32 0.0, %v4867
        %v4869 = vpop.f32.mrb[0].mxu0
        %4870 = vmatprep.mubr.bf16.mxu0 0
        %4871 = vmatmul.mubr.bf16.gmra.mrb[0].mxu0 %v4713
        %v4872 = vpop.f32.mrb[0].mxu0
        %v4873 = vadd.f32 0.0, %v4872
        %v4874 = vpop.f32.mrb[0].mxu0
        %v4875 = vpop.f32.mrb[0].mxu0
        %v4876 = vadd.f32 0.0, %v4875
        %v4877 = vpop.f32.mrb[0].mxu0
        %4878 = vmatprep.mubr.bf16.mxu0 0
        %4879 = vmatmul.mubr.bf16.gmra.mrb[0].mxu0 %v4714
        %v4880 = vpop.f32.mrb[0].mxu0
        %v4881 = vadd.f32 0.0, %v4880
        %v4882 = vpop.f32.mrb[0].mxu0
        %v4883 = vpop.f32.mrb[0].mxu0
        %v4884 = vadd.f32 0.0, %v4883
        %v4885 = vpop.f32.mrb[0].mxu0
        %4886 = vmatprep.mubr.bf16.mxu0 0
        %4887 = vmatmul.mubr.bf16.gmra.mrb[0].mxu0 %v4715
        %v4888 = vpop.f32.mrb[0].mxu0
        %v4889 = vadd.f32 0.0, %v4888
        %v4890 = vpop.f32.mrb[0].mxu0
        %v4891 = vpop.f32.mrb[0].mxu0
        %v4892 = vadd.f32 0.0, %v4891
        %v4893 = vpop.f32.mrb[0].mxu0
        %4894 = vmatprep.mubr.bf16.mxu0 0
        %4895 = vmatmul.mubr.bf16.gmra.mrb[0].mxu0 %v4716
        %v4896 = vpop.f32.mrb[0].mxu0
        %v4897 = vadd.f32 0.0, %v4896
        %v4898 = vpop.f32.mrb[0].mxu0
        %v4899 = vpop.f32.mrb[0].mxu0
        %v4900 = vadd.f32 0.0, %v4899
        %v4901 = vpop.f32.mrb[0].mxu0
        %4902 = vmatprep.mubr.bf16.mxu0 0
        %4903 = vmatmul.mubr.bf16.gmra.mrb[0].mxu0 %v4717
        %v4904 = vpop.f32.mrb[0].mxu0
        %v4905 = vadd.f32 0.0, %v4904
        %v4906 = vpop.f32.mrb[0].mxu0
        %v4907 = vpop.f32.mrb[0].mxu0
        %v4908 = vadd.f32 0.0, %v4907
        %v4909 = vpop.f32.mrb[0].mxu0
        %4910 = vdwg.mxu0
        %v4911 = vadd.f32 %v4658, %v4817
        %v4912 = vadd.f32 %v4659, %v4820
        %v4913 = vadd.f32 %v4660, %v4825
        %v4914 = vadd.f32 %v4661, %v4828
        %v4915 = vadd.f32 %v4662, %v4833
        %v4916 = vadd.f32 %v4663, %v4836
        %v4917 = vadd.f32 %v4664, %v4841
        %v4918 = vadd.f32 %v4665, %v4844
        %v4919 = vadd.f32 %v4666, %v4849
        %v4920 = vadd.f32 %v4667, %v4852
        %v4921 = vadd.f32 %v4668, %v4857
        %v4922 = vadd.f32 %v4669, %v4860
        %v4923 = vadd.f32 %v4670, %v4865
        %v4924 = vadd.f32 %v4671, %v4868
        %v4925 = vadd.f32 %v4672, %v4873
        %v4926 = vadd.f32 %v4673, %v4876
        %v4927 = vadd.f32 %v4674, %v4881
        %v4928 = vadd.f32 %v4675, %v4884
        %v4929 = vadd.f32 %v4676, %v4889
        %v4930 = vadd.f32 %v4677, %v4892
        %v4931 = vadd.f32 %v4678, %v4897
        %v4932 = vadd.f32 %v4679, %v4900
        %v4933 = vadd.f32 %v4680, %v4905
        %v4934 = vadd.f32 %v4681, %v4908
        %v4935 = vld [vmem:[#allocation2 + $0xe0] sm:$0xff]
        %v4936 = vld [vmem:[#allocation2 + $0xe8] sm:$0xff]
        %v4937 = vld [vmem:[#allocation2 + $0xf0] sm:$0xff]
        %v4938 = vld [vmem:[#allocation2 + $0xf8] sm:$0xff]
        %v4939 = vld [vmem:[#allocation2 + $0x100] sm:$0xff]
        %v4940 = vld [vmem:[#allocation2 + $0x108] sm:$0xff]
        %v4941 = vld [vmem:[#allocation2 + $0x110] sm:$0xff]
        %v4942 = vld [vmem:[#allocation2 + $0x118] sm:$0xff]
        %v4943 = vld [vmem:[#allocation2 + $0x120] sm:$0xff]
        %v4944 = vld [vmem:[#allocation2 + $0x128] sm:$0xff]
        %v4945 = vld [vmem:[#allocation2 + $0x130] sm:$0xff]
        %v4946 = vld [vmem:[#allocation2 + $0x138] sm:$0xff]
        %v4947 = vld [vmem:[#allocation2 + $0x140] sm:$0xff]
        %v4948 = vld [vmem:[#allocation2 + $0x148] sm:$0xff]
        %v4949 = vld [vmem:[#allocation2 + $0x150] sm:$0xff]
        %v4950 = vld [vmem:[#allocation2 + $0x158] sm:$0xff]
        %v4951 = vld [vmem:[#allocation2 + $0x160] sm:$0xff]
        %v4952 = vld [vmem:[#allocation2 + $0x168] sm:$0xff]
        %v4953 = vld [vmem:[#allocation2 + $0x170] sm:$0xff]
        %v4954 = vld [vmem:[#allocation2 + $0x178] sm:$0xff]
        %v4955 = vld [vmem:[#allocation2 + $0x180] sm:$0xff]
        %v4956 = vld [vmem:[#allocation2 + $0x188] sm:$0xff]
        %v4957 = vld [vmem:[#allocation2 + $0x190] sm:$0xff]
        %v4958 = vld [vmem:[#allocation2 + $0x198] sm:$0xff]
        %v4959 = vpack.c.bf16 %v4936, %v4935
        %v4960 = vpack.c.bf16 %v4938, %v4937
        %v4961 = vpack.c.bf16 %v4940, %v4939
        %v4962 = vpack.c.bf16 %v4942, %v4941
        %v4963 = vpack.c.bf16 %v4944, %v4943
        %v4964 = vpack.c.bf16 %v4946, %v4945
        %v4965 = vpack.c.bf16 %v4948, %v4947
        %v4966 = vpack.c.bf16 %v4950, %v4949
        %v4967 = vpack.c.bf16 %v4952, %v4951
        %v4968 = vpack.c.bf16 %v4954, %v4953
        %v4969 = vpack.c.bf16 %v4956, %v4955
        %v4970 = vpack.c.bf16 %v4958, %v4957
        %v4971 = vld [vmem:[%s2350] sm:$0xf]
        %v4972 = vld [vmem:[%s2350 + $0x4] sm:$0xf]
        %v4973 = vld [vmem:[%s2350 + $0x8] sm:$0xf]
        %v4974 = vld [vmem:[%s2350 + $0xc] sm:$0xf]
        %v4975 = vld [vmem:[%s2350 + $0x10] sm:$0xf]
        %v4976 = vld [vmem:[%s2350 + $0x14] sm:$0xf]
        %v4977 = vld [vmem:[%s2350 + $0x18] sm:$0xf]
        %v4978 = vld [vmem:[%s2350 + $0x1c] sm:$0xf]
        %v4979 = vld [vmem:[%s2350 + $0x20] sm:$0xf]
        %v4980 = vld [vmem:[%s2350 + $0x24] sm:$0xf]
        %v4981 = vld [vmem:[%s2350 + $0x28] sm:$0xf]
        %v4982 = vld [vmem:[%s2350 + $0x2c] sm:$0xf]
        %v4983 = vld [vmem:[%s2350 + $0x30] sm:$0xf]
        %v4984 = vld [vmem:[%s2350 + $0x34] sm:$0xf]
        %v4985 = vld [vmem:[%s2350 + $0x38] sm:$0xf]
        %v4986 = vld [vmem:[%s2350 + $0x3c] sm:$0xf]
        %v5003 = vunpack.c.l.b16 %v4971
        %v5004 = vunpack.c.l.b16 %v4972
        %v5005 = vunpack.c.l.b16 %v4973
        %v5006 = vunpack.c.l.b16 %v4974
        %v5007 = vunpack.c.l.b16 %v4975
        %v5008 = vunpack.c.l.b16 %v4976
        %v5009 = vunpack.c.l.b16 %v4977
        %v5010 = vunpack.c.l.b16 %v4978
        %v5011 = vunpack.c.l.b16 %v4979
        %v5012 = vunpack.c.l.b16 %v4980
        %v5013 = vunpack.c.l.b16 %v4981
        %v5014 = vunpack.c.l.b16 %v4982
        %v5015 = vunpack.c.l.b16 %v4983
        %v5016 = vunpack.c.l.b16 %v4984
        %v5017 = vunpack.c.l.b16 %v4985
        %v5018 = vunpack.c.l.b16 %v4986
        %v5019 = vpack.c.b16 %v5004, %v5003
        %v5020 = vpack.c.b16 %v5006, %v5005
        %v5021 = vpack.c.b16 %v5008, %v5007
        %v5022 = vpack.c.b16 %v5010, %v5009
        %v5023 = vpack.c.b16 %v5012, %v5011
        %v5024 = vpack.c.b16 %v5014, %v5013
        %v5025 = vpack.c.b16 %v5016, %v5015
        %v5026 = vpack.c.b16 %v5018, %v5017
        %5035 = vmatprep.subr.bf16.mxu0 0
        %5036 = vmatpush1.bf16.msra.mxu0 %v5019
        %5037 = vmatprep.subr.bf16.mxu0 0
        %5038 = vmatpush1.bf16.msra.mxu0 %v5020
        %5039 = vmatprep.subr.bf16.mxu0 0
        %5040 = vmatpush1.bf16.msra.mxu0 %v5021
        %5041 = vmatprep.subr.bf16.mxu0 0
        %5042 = vmatpush1.bf16.msra.mxu0 %v5022
        %5043 = vmatprep.subr.bf16.mxu0 0
        %5044 = vmatpush1.bf16.msra.mxu0 %v5023
        %5045 = vmatprep.subr.bf16.mxu0 0
        %5046 = vmatpush1.bf16.msra.mxu0 %v5024
        %5047 = vmatprep.subr.bf16.mxu0 0
        %5048 = vmatpush1.bf16.msra.mxu0 %v5025
        %5049 = vmatprep.subr.bf16.mxu0 0
        %5050 = vmatpush1.bf16.msra.mxu0 %v5026
        %5051 = vmatprep.subr.bf16.mxu0 0
        %5052 = vmatpush1.bf16.msra.mxu0 0
        %5053 = vmatprep.subr.bf16.mxu0 0
        %5054 = vmatpush1.bf16.msra.mxu0 0
        %5055 = vmatprep.subr.bf16.mxu0 0
        %5056 = vmatpush1.bf16.msra.mxu0 0
        %5057 = vmatprep.subr.bf16.mxu0 0
        %5058 = vmatpush1.bf16.msra.mxu0 0
        %5059 = vmatprep.subr.bf16.mxu0 0
        %5060 = vmatpush1.bf16.msra.mxu0 0
        %5061 = vmatprep.subr.bf16.mxu0 0
        %5062 = vmatpush1.bf16.msra.mxu0 0
        %5063 = vmatprep.subr.bf16.mxu0 0
        %5064 = vmatpush1.bf16.msra.mxu0 0
        %5065 = vmatprep.subr.bf16.mxu0 0
        %5066 = vmatpush1.bf16.msra.mxu0 0
        %5067 = vmatprep.mubr.bf16.mxu0 0
        %5068 = vmatmul.mubr.bf16.gmra.mrb[0].mxu0 %v4959
        %v5069 = vpop.f32.mrb[0].mxu0
        %v5070 = vadd.f32 0.0, %v5069
        %v5071 = vpop.f32.mrb[0].mxu0
        %v5072 = vpop.f32.mrb[0].mxu0
        %v5073 = vadd.f32 0.0, %v5072
        %v5074 = vpop.f32.mrb[0].mxu0
        %5075 = vmatprep.mubr.bf16.mxu0 0
        %5076 = vmatmul.mubr.bf16.gmra.mrb[0].mxu0 %v4960
        %v5077 = vpop.f32.mrb[0].mxu0
        %v5078 = vadd.f32 0.0, %v5077
        %v5079 = vpop.f32.mrb[0].mxu0
        %v5080 = vpop.f32.mrb[0].mxu0
        %v5081 = vadd.f32 0.0, %v5080
        %v5082 = vpop.f32.mrb[0].mxu0
        %5083 = vmatprep.mubr.bf16.mxu0 0
        %5084 = vmatmul.mubr.bf16.gmra.mrb[0].mxu0 %v4961
        %v5085 = vpop.f32.mrb[0].mxu0
        %v5086 = vadd.f32 0.0, %v5085
        %v5087 = vpop.f32.mrb[0].mxu0
        %v5088 = vpop.f32.mrb[0].mxu0
        %v5089 = vadd.f32 0.0, %v5088
        %v5090 = vpop.f32.mrb[0].mxu0
        %5091 = vmatprep.mubr.bf16.mxu0 0
        %5092 = vmatmul.mubr.bf16.gmra.mrb[0].mxu0 %v4962
        %v5093 = vpop.f32.mrb[0].mxu0
        %v5094 = vadd.f32 0.0, %v5093
        %v5095 = vpop.f32.mrb[0].mxu0
        %v5096 = vpop.f32.mrb[0].mxu0
        %v5097 = vadd.f32 0.0, %v5096
        %v5098 = vpop.f32.mrb[0].mxu0
        %5099 = vmatprep.mubr.bf16.mxu0 0
        %5100 = vmatmul.mubr.bf16.gmra.mrb[0].mxu0 %v4963
        %v5101 = vpop.f32.mrb[0].mxu0
        %v5102 = vadd.f32 0.0, %v5101
        %v5103 = vpop.f32.mrb[0].mxu0
        %v5104 = vpop.f32.mrb[0].mxu0
        %v5105 = vadd.f32 0.0, %v5104
        %v5106 = vpop.f32.mrb[0].mxu0
        %5107 = vmatprep.mubr.bf16.mxu0 0
        %5108 = vmatmul.mubr.bf16.gmra.mrb[0].mxu0 %v4964
        %v5109 = vpop.f32.mrb[0].mxu0
        %v5110 = vadd.f32 0.0, %v5109
        %v5111 = vpop.f32.mrb[0].mxu0
        %v5112 = vpop.f32.mrb[0].mxu0
        %v5113 = vadd.f32 0.0, %v5112
        %v5114 = vpop.f32.mrb[0].mxu0
        %5115 = vmatprep.mubr.bf16.mxu0 0
        %5116 = vmatmul.mubr.bf16.gmra.mrb[0].mxu0 %v4965
        %v5117 = vpop.f32.mrb[0].mxu0
        %v5118 = vadd.f32 0.0, %v5117
        %v5119 = vpop.f32.mrb[0].mxu0
        %v5120 = vpop.f32.mrb[0].mxu0
        %v5121 = vadd.f32 0.0, %v5120
        %v5122 = vpop.f32.mrb[0].mxu0
        %5123 = vmatprep.mubr.bf16.mxu0 0
        %5124 = vmatmul.mubr.bf16.gmra.mrb[0].mxu0 %v4966
        %v5125 = vpop.f32.mrb[0].mxu0
        %v5126 = vadd.f32 0.0, %v5125
        %v5127 = vpop.f32.mrb[0].mxu0
        %v5128 = vpop.f32.mrb[0].mxu0
        %v5129 = vadd.f32 0.0, %v5128
        %v5130 = vpop.f32.mrb[0].mxu0
        %5131 = vmatprep.mubr.bf16.mxu0 0
        %5132 = vmatmul.mubr.bf16.gmra.mrb[0].mxu0 %v4967
        %v5133 = vpop.f32.mrb[0].mxu0
        %v5134 = vadd.f32 0.0, %v5133
        %v5135 = vpop.f32.mrb[0].mxu0
        %v5136 = vpop.f32.mrb[0].mxu0
        %v5137 = vadd.f32 0.0, %v5136
        %v5138 = vpop.f32.mrb[0].mxu0
        %5139 = vmatprep.mubr.bf16.mxu0 0
        %5140 = vmatmul.mubr.bf16.gmra.mrb[0].mxu0 %v4968
        %v5141 = vpop.f32.mrb[0].mxu0
        %v5142 = vadd.f32 0.0, %v5141
        %v5143 = vpop.f32.mrb[0].mxu0
        %v5144 = vpop.f32.mrb[0].mxu0
        %v5145 = vadd.f32 0.0, %v5144
        %v5146 = vpop.f32.mrb[0].mxu0
        %5147 = vmatprep.mubr.bf16.mxu0 0
        %5148 = vmatmul.mubr.bf16.gmra.mrb[0].mxu0 %v4969
        %v5149 = vpop.f32.mrb[0].mxu0
        %v5150 = vadd.f32 0.0, %v5149
        %v5151 = vpop.f32.mrb[0].mxu0
        %v5152 = vpop.f32.mrb[0].mxu0
        %v5153 = vadd.f32 0.0, %v5152
        %v5154 = vpop.f32.mrb[0].mxu0
        %5155 = vmatprep.mubr.bf16.mxu0 0
        %5156 = vmatmul.mubr.bf16.gmra.mrb[0].mxu0 %v4970
        %v5157 = vpop.f32.mrb[0].mxu0
        %v5158 = vadd.f32 0.0, %v5157
        %v5159 = vpop.f32.mrb[0].mxu0
        %v5160 = vpop.f32.mrb[0].mxu0
        %v5161 = vadd.f32 0.0, %v5160
        %v5162 = vpop.f32.mrb[0].mxu0
        %5163 = vdwg.mxu0
        %v5164 = vadd.f32 %v4911, %v5070
        %v5165 = vadd.f32 %v4912, %v5073
        %v5166 = vadd.f32 %v4913, %v5078
        %v5167 = vadd.f32 %v4914, %v5081
        %v5168 = vadd.f32 %v4915, %v5086
        %v5169 = vadd.f32 %v4916, %v5089
        %v5170 = vadd.f32 %v4917, %v5094
        %v5171 = vadd.f32 %v4918, %v5097
        %v5172 = vadd.f32 %v4919, %v5102
        %v5173 = vadd.f32 %v4920, %v5105
        %v5174 = vadd.f32 %v4921, %v5110
        %v5175 = vadd.f32 %v4922, %v5113
        %v5176 = vadd.f32 %v4923, %v5118
        %v5177 = vadd.f32 %v4924, %v5121
        %v5178 = vadd.f32 %v4925, %v5126
        %v5179 = vadd.f32 %v4926, %v5129
        %v5180 = vadd.f32 %v4927, %v5134
        %v5181 = vadd.f32 %v4928, %v5137
        %v5182 = vadd.f32 %v4929, %v5142
        %v5183 = vadd.f32 %v4930, %v5145
        %v5184 = vadd.f32 %v4931, %v5150
        %v5185 = vadd.f32 %v4932, %v5153
        %v5186 = vadd.f32 %v4933, %v5158
        %v5187 = vadd.f32 %v4934, %v5161
        %v5188 = vld [vmem:[#allocation2 + $0xe1] sm:$0xff]
        %v5189 = vld [vmem:[#allocation2 + $0xe9] sm:$0xff]
        %v5190 = vld [vmem:[#allocation2 + $0xf1] sm:$0xff]
        %v5191 = vld [vmem:[#allocation2 + $0xf9] sm:$0xff]
        %v5192 = vld [vmem:[#allocation2 + $0x101] sm:$0xff]
        %v5193 = vld [vmem:[#allocation2 + $0x109] sm:$0xff]
        %v5194 = vld [vmem:[#allocation2 + $0x111] sm:$0xff]
        %v5195 = vld [vmem:[#allocation2 + $0x119] sm:$0xff]
        %v5196 = vld [vmem:[#allocation2 + $0x121] sm:$0xff]
        %v5197 = vld [vmem:[#allocation2 + $0x129] sm:$0xff]
        %v5198 = vld [vmem:[#allocation2 + $0x131] sm:$0xff]
        %v5199 = vld [vmem:[#allocation2 + $0x139] sm:$0xff]
        %v5200 = vld [vmem:[#allocation2 + $0x141] sm:$0xff]
        %v5201 = vld [vmem:[#allocation2 + $0x149] sm:$0xff]
        %v5202 = vld [vmem:[#allocation2 + $0x151] sm:$0xff]
        %v5203 = vld [vmem:[#allocation2 + $0x159] sm:$0xff]
        %v5204 = vld [vmem:[#allocation2 + $0x161] sm:$0xff]
        %v5205 = vld [vmem:[#allocation2 + $0x169] sm:$0xff]
        %v5206 = vld [vmem:[#allocation2 + $0x171] sm:$0xff]
        %v5207 = vld [vmem:[#allocation2 + $0x179] sm:$0xff]
        %v5208 = vld [vmem:[#allocation2 + $0x181] sm:$0xff]
        %v5209 = vld [vmem:[#allocation2 + $0x189] sm:$0xff]
        %v5210 = vld [vmem:[#allocation2 + $0x191] sm:$0xff]
        %v5211 = vld [vmem:[#allocation2 + $0x199] sm:$0xff]
        %v5212 = vpack.c.bf16 %v5189, %v5188
        %v5213 = vpack.c.bf16 %v5191, %v5190
        %v5214 = vpack.c.bf16 %v5193, %v5192
        %v5215 = vpack.c.bf16 %v5195, %v5194
        %v5216 = vpack.c.bf16 %v5197, %v5196
        %v5217 = vpack.c.bf16 %v5199, %v5198
        %v5218 = vpack.c.bf16 %v5201, %v5200
        %v5219 = vpack.c.bf16 %v5203, %v5202
        %v5220 = vpack.c.bf16 %v5205, %v5204
        %v5221 = vpack.c.bf16 %v5207, %v5206
        %v5222 = vpack.c.bf16 %v5209, %v5208
        %v5223 = vpack.c.bf16 %v5211, %v5210
        %v5224 = vld [vmem:[%s2604] sm:$0xf]
        %v5225 = vld [vmem:[%s2604 + $0x4] sm:$0xf]
        %v5226 = vld [vmem:[%s2604 + $0x8] sm:$0xf]
        %v5227 = vld [vmem:[%s2604 + $0xc] sm:$0xf]
        %v5228 = vld [vmem:[%s2604 + $0x10] sm:$0xf]
        %v5229 = vld [vmem:[%s2604 + $0x14] sm:$0xf]
        %v5230 = vld [vmem:[%s2604 + $0x18] sm:$0xf]
        %v5231 = vld [vmem:[%s2604 + $0x1c] sm:$0xf]
        %v5232 = vld [vmem:[%s2604 + $0x20] sm:$0xf]
        %v5233 = vld [vmem:[%s2604 + $0x24] sm:$0xf]
        %v5234 = vld [vmem:[%s2604 + $0x28] sm:$0xf]
        %v5235 = vld [vmem:[%s2604 + $0x2c] sm:$0xf]
        %v5236 = vld [vmem:[%s2604 + $0x30] sm:$0xf]
        %v5237 = vld [vmem:[%s2604 + $0x34] sm:$0xf]
        %v5238 = vld [vmem:[%s2604 + $0x38] sm:$0xf]
        %v5239 = vld [vmem:[%s2604 + $0x3c] sm:$0xf]
        %v5256 = vunpack.c.l.b16 %v5224
        %v5257 = vunpack.c.l.b16 %v5225
        %v5258 = vunpack.c.l.b16 %v5226
        %v5259 = vunpack.c.l.b16 %v5227
        %v5260 = vunpack.c.l.b16 %v5228
        %v5261 = vunpack.c.l.b16 %v5229
        %v5262 = vunpack.c.l.b16 %v5230
        %v5263 = vunpack.c.l.b16 %v5231
        %v5264 = vunpack.c.l.b16 %v5232
        %v5265 = vunpack.c.l.b16 %v5233
        %v5266 = vunpack.c.l.b16 %v5234
        %v5267 = vunpack.c.l.b16 %v5235
        %v5268 = vunpack.c.l.b16 %v5236
        %v5269 = vunpack.c.l.b16 %v5237
        %v5270 = vunpack.c.l.b16 %v5238
        %v5271 = vunpack.c.l.b16 %v5239
        %v5272 = vpack.c.b16 %v5257, %v5256
        %v5273 = vpack.c.b16 %v5259, %v5258
        %v5274 = vpack.c.b16 %v5261, %v5260
        %v5275 = vpack.c.b16 %v5263, %v5262
        %v5276 = vpack.c.b16 %v5265, %v5264
        %v5277 = vpack.c.b16 %v5267, %v5266
        %v5278 = vpack.c.b16 %v5269, %v5268
        %v5279 = vpack.c.b16 %v5271, %v5270
        %5288 = vmatprep.subr.bf16.mxu0 0
        %5289 = vmatpush1.bf16.msra.mxu0 %v5272
        %5290 = vmatprep.subr.bf16.mxu0 0
        %5291 = vmatpush1.bf16.msra.mxu0 %v5273
        %5292 = vmatprep.subr.bf16.mxu0 0
        %5293 = vmatpush1.bf16.msra.mxu0 %v5274
        %5294 = vmatprep.subr.bf16.mxu0 0
        %5295 = vmatpush1.bf16.msra.mxu0 %v5275
        %5296 = vmatprep.subr.bf16.mxu0 0
        %5297 = vmatpush1.bf16.msra.mxu0 %v5276
        %5298 = vmatprep.subr.bf16.mxu0 0
        %5299 = vmatpush1.bf16.msra.mxu0 %v5277
        %5300 = vmatprep.subr.bf16.mxu0 0
        %5301 = vmatpush1.bf16.msra.mxu0 %v5278
        %5302 = vmatprep.subr.bf16.mxu0 0
        %5303 = vmatpush1.bf16.msra.mxu0 %v5279
        %5304 = vmatprep.subr.bf16.mxu0 0
        %5305 = vmatpush1.bf16.msra.mxu0 0
        %5306 = vmatprep.subr.bf16.mxu0 0
        %5307 = vmatpush1.bf16.msra.mxu0 0
        %5308 = vmatprep.subr.bf16.mxu0 0
        %5309 = vmatpush1.bf16.msra.mxu0 0
        %5310 = vmatprep.subr.bf16.mxu0 0
        %5311 = vmatpush1.bf16.msra.mxu0 0
        %5312 = vmatprep.subr.bf16.mxu0 0
        %5313 = vmatpush1.bf16.msra.mxu0 0
        %5314 = vmatprep.subr.bf16.mxu0 0
        %5315 = vmatpush1.bf16.msra.mxu0 0
        %5316 = vmatprep.subr.bf16.mxu0 0
        %5317 = vmatpush1.bf16.msra.mxu0 0
        %5318 = vmatprep.subr.bf16.mxu0 0
        %5319 = vmatpush1.bf16.msra.mxu0 0
        %5320 = vmatprep.mubr.bf16.mxu0 0
        %5321 = vmatmul.mubr.bf16.gmra.mrb[0].mxu0 %v5212
        %v5322 = vpop.f32.mrb[0].mxu0
        %v5323 = vadd.f32 0.0, %v5322
        %v5324 = vpop.f32.mrb[0].mxu0
        %v5325 = vpop.f32.mrb[0].mxu0
        %v5326 = vadd.f32 0.0, %v5325
        %v5327 = vpop.f32.mrb[0].mxu0
        %5328 = vmatprep.mubr.bf16.mxu0 0
        %5329 = vmatmul.mubr.bf16.gmra.mrb[0].mxu0 %v5213
        %v5330 = vpop.f32.mrb[0].mxu0
        %v5331 = vadd.f32 0.0, %v5330
        %v5332 = vpop.f32.mrb[0].mxu0
        %v5333 = vpop.f32.mrb[0].mxu0
        %v5334 = vadd.f32 0.0, %v5333
        %v5335 = vpop.f32.mrb[0].mxu0
        %5336 = vmatprep.mubr.bf16.mxu0 0
        %5337 = vmatmul.mubr.bf16.gmra.mrb[0].mxu0 %v5214
        %v5338 = vpop.f32.mrb[0].mxu0
        %v5339 = vadd.f32 0.0, %v5338
        %v5340 = vpop.f32.mrb[0].mxu0
        %v5341 = vpop.f32.mrb[0].mxu0
        %v5342 = vadd.f32 0.0, %v5341
        %v5343 = vpop.f32.mrb[0].mxu0
        %5344 = vmatprep.mubr.bf16.mxu0 0
        %5345 = vmatmul.mubr.bf16.gmra.mrb[0].mxu0 %v5215
        %v5346 = vpop.f32.mrb[0].mxu0
        %v5347 = vadd.f32 0.0, %v5346
        %v5348 = vpop.f32.mrb[0].mxu0
        %v5349 = vpop.f32.mrb[0].mxu0
        %v5350 = vadd.f32 0.0, %v5349
        %v5351 = vpop.f32.mrb[0].mxu0
        %5352 = vmatprep.mubr.bf16.mxu0 0
        %5353 = vmatmul.mubr.bf16.gmra.mrb[0].mxu0 %v5216
        %v5354 = vpop.f32.mrb[0].mxu0
        %v5355 = vadd.f32 0.0, %v5354
        %v5356 = vpop.f32.mrb[0].mxu0
        %v5357 = vpop.f32.mrb[0].mxu0
        %v5358 = vadd.f32 0.0, %v5357
        %v5359 = vpop.f32.mrb[0].mxu0
        %5360 = vmatprep.mubr.bf16.mxu0 0
        %5361 = vmatmul.mubr.bf16.gmra.mrb[0].mxu0 %v5217
        %v5362 = vpop.f32.mrb[0].mxu0
        %v5363 = vadd.f32 0.0, %v5362
        %v5364 = vpop.f32.mrb[0].mxu0
        %v5365 = vpop.f32.mrb[0].mxu0
        %v5366 = vadd.f32 0.0, %v5365
        %v5367 = vpop.f32.mrb[0].mxu0
        %5368 = vmatprep.mubr.bf16.mxu0 0
        %5369 = vmatmul.mubr.bf16.gmra.mrb[0].mxu0 %v5218
        %v5370 = vpop.f32.mrb[0].mxu0
        %v5371 = vadd.f32 0.0, %v5370
        %v5372 = vpop.f32.mrb[0].mxu0
        %v5373 = vpop.f32.mrb[0].mxu0
        %v5374 = vadd.f32 0.0, %v5373
        %v5375 = vpop.f32.mrb[0].mxu0
        %5376 = vmatprep.mubr.bf16.mxu0 0
        %5377 = vmatmul.mubr.bf16.gmra.mrb[0].mxu0 %v5219
        %v5378 = vpop.f32.mrb[0].mxu0
        %v5379 = vadd.f32 0.0, %v5378
        %v5380 = vpop.f32.mrb[0].mxu0
        %v5381 = vpop.f32.mrb[0].mxu0
        %v5382 = vadd.f32 0.0, %v5381
        %v5383 = vpop.f32.mrb[0].mxu0
        %5384 = vmatprep.mubr.bf16.mxu0 0
        %5385 = vmatmul.mubr.bf16.gmra.mrb[0].mxu0 %v5220
        %v5386 = vpop.f32.mrb[0].mxu0
        %v5387 = vadd.f32 0.0, %v5386
        %v5388 = vpop.f32.mrb[0].mxu0
        %v5389 = vpop.f32.mrb[0].mxu0
        %v5390 = vadd.f32 0.0, %v5389
        %v5391 = vpop.f32.mrb[0].mxu0
        %5392 = vmatprep.mubr.bf16.mxu0 0
        %5393 = vmatmul.mubr.bf16.gmra.mrb[0].mxu0 %v5221
        %v5394 = vpop.f32.mrb[0].mxu0
        %v5395 = vadd.f32 0.0, %v5394
        %v5396 = vpop.f32.mrb[0].mxu0
        %v5397 = vpop.f32.mrb[0].mxu0
        %v5398 = vadd.f32 0.0, %v5397
        %v5399 = vpop.f32.mrb[0].mxu0
        %5400 = vmatprep.mubr.bf16.mxu0 0
        %5401 = vmatmul.mubr.bf16.gmra.mrb[0].mxu0 %v5222
        %v5402 = vpop.f32.mrb[0].mxu0
        %v5403 = vadd.f32 0.0, %v5402
        %v5404 = vpop.f32.mrb[0].mxu0
        %v5405 = vpop.f32.mrb[0].mxu0
        %v5406 = vadd.f32 0.0, %v5405
        %v5407 = vpop.f32.mrb[0].mxu0
        %5408 = vmatprep.mubr.bf16.mxu0 0
        %5409 = vmatmul.mubr.bf16.gmra.mrb[0].mxu0 %v5223
        %v5410 = vpop.f32.mrb[0].mxu0
        %v5411 = vadd.f32 0.0, %v5410
        %v5412 = vpop.f32.mrb[0].mxu0
        %v5413 = vpop.f32.mrb[0].mxu0
        %v5414 = vadd.f32 0.0, %v5413
        %v5415 = vpop.f32.mrb[0].mxu0
        %5416 = vdwg.mxu0
        %v5417 = vadd.f32 %v5164, %v5323
        %v5418 = vadd.f32 %v5165, %v5326
        %v5419 = vadd.f32 %v5166, %v5331
        %v5420 = vadd.f32 %v5167, %v5334
        %v5421 = vadd.f32 %v5168, %v5339
        %v5422 = vadd.f32 %v5169, %v5342
        %v5423 = vadd.f32 %v5170, %v5347
        %v5424 = vadd.f32 %v5171, %v5350
        %v5425 = vadd.f32 %v5172, %v5355
        %v5426 = vadd.f32 %v5173, %v5358
        %v5427 = vadd.f32 %v5174, %v5363
        %v5428 = vadd.f32 %v5175, %v5366
        %v5429 = vadd.f32 %v5176, %v5371
        %v5430 = vadd.f32 %v5177, %v5374
        %v5431 = vadd.f32 %v5178, %v5379
        %v5432 = vadd.f32 %v5179, %v5382
        %v5433 = vadd.f32 %v5180, %v5387
        %v5434 = vadd.f32 %v5181, %v5390
        %v5435 = vadd.f32 %v5182, %v5395
        %v5436 = vadd.f32 %v5183, %v5398
        %v5437 = vadd.f32 %v5184, %v5403
        %v5438 = vadd.f32 %v5185, %v5406
        %v5439 = vadd.f32 %v5186, %v5411
        %v5440 = vadd.f32 %v5187, %v5414
        %v5441 = vld [vmem:[#allocation2 + $0xf7] sm:$0xff]
        %v5442 = vld [vmem:[#allocation2 + $0xff] sm:$0xff]
        %v5443 = vld [vmem:[#allocation2 + $0x107] sm:$0xff]
        %v5444 = vld [vmem:[#allocation2 + $0x10f] sm:$0xff]
        %v5445 = vld [vmem:[#allocation2 + $0x117] sm:$0xff]
        %v5446 = vld [vmem:[#allocation2 + $0x11f] sm:$0xff]
        %v5447 = vld [vmem:[#allocation2 + $0x127] sm:$0xff]
        %v5448 = vld [vmem:[#allocation2 + $0x12f] sm:$0xff]
        %v5449 = vld [vmem:[#allocation2 + $0x137] sm:$0xff]
        %v5450 = vld [vmem:[#allocation2 + $0x13f] sm:$0xff]
        %v5451 = vld [vmem:[#allocation2 + $0x147] sm:$0xff]
        %v5452 = vld [vmem:[#allocation2 + $0x14f] sm:$0xff]
        %v5453 = vld [vmem:[#allocation2 + $0x157] sm:$0xff]
        %v5454 = vld [vmem:[#allocation2 + $0x15f] sm:$0xff]
        %v5455 = vld [vmem:[#allocation2 + $0x167] sm:$0xff]
        %v5456 = vld [vmem:[#allocation2 + $0x16f] sm:$0xff]
        %v5457 = vld [vmem:[#allocation2 + $0x177] sm:$0xff]
        %v5458 = vld [vmem:[#allocation2 + $0x17f] sm:$0xff]
        %v5459 = vld [vmem:[#allocation2 + $0x187] sm:$0xff]
        %v5460 = vld [vmem:[#allocation2 + $0x18f] sm:$0xff]
        %v5461 = vld [vmem:[#allocation2 + $0x197] sm:$0xff]
        %v5462 = vld [vmem:[#allocation2 + $0x19f] sm:$0xff]
        %v5463 = vld [vmem:[#allocation2 + $0x1a7] sm:$0xff]
        %v5464 = vld [vmem:[#allocation2 + $0x1af] sm:$0xff]
        %v5465 = vpack.c.bf16 %v5442, %v5441
        %v5466 = vpack.c.bf16 %v5444, %v5443
        %v5467 = vpack.c.bf16 %v5446, %v5445
        %v5468 = vpack.c.bf16 %v5448, %v5447
        %v5469 = vpack.c.bf16 %v5450, %v5449
        %v5470 = vpack.c.bf16 %v5452, %v5451
        %v5471 = vpack.c.bf16 %v5454, %v5453
        %v5472 = vpack.c.bf16 %v5456, %v5455
        %v5473 = vpack.c.bf16 %v5458, %v5457
        %v5474 = vpack.c.bf16 %v5460, %v5459
        %v5475 = vpack.c.bf16 %v5462, %v5461
        %v5476 = vpack.c.bf16 %v5464, %v5463
        %v5477 = vld [vmem:[%s2858] sm:$0xf]
        %v5478 = vld [vmem:[%s2858 + $0x4] sm:$0xf]
        %v5479 = vld [vmem:[%s2858 + $0x8] sm:$0xf]
        %v5480 = vld [vmem:[%s2858 + $0xc] sm:$0xf]
        %v5481 = vld [vmem:[%s2858 + $0x10] sm:$0xf]
        %v5482 = vld [vmem:[%s2858 + $0x14] sm:$0xf]
        %v5483 = vld [vmem:[%s2858 + $0x18] sm:$0xf]
        %v5484 = vld [vmem:[%s2858 + $0x1c] sm:$0xf]
        %v5485 = vld [vmem:[%s2858 + $0x20] sm:$0xf]
        %v5486 = vld [vmem:[%s2858 + $0x24] sm:$0xf]
        %v5487 = vld [vmem:[%s2858 + $0x28] sm:$0xf]
        %v5488 = vld [vmem:[%s2858 + $0x2c] sm:$0xf]
        %v5489 = vld [vmem:[%s2858 + $0x30] sm:$0xf]
        %v5490 = vld [vmem:[%s2858 + $0x34] sm:$0xf]
        %v5491 = vld [vmem:[%s2858 + $0x38] sm:$0xf]
        %v5492 = vld [vmem:[%s2858 + $0x3c] sm:$0xf]
        %v5509 = vunpack.c.l.b16 %v5477
        %v5510 = vunpack.c.l.b16 %v5478
        %v5511 = vunpack.c.l.b16 %v5479
        %v5512 = vunpack.c.l.b16 %v5480
        %v5513 = vunpack.c.l.b16 %v5481
        %v5514 = vunpack.c.l.b16 %v5482
        %v5515 = vunpack.c.l.b16 %v5483
        %v5516 = vunpack.c.l.b16 %v5484
        %v5517 = vunpack.c.l.b16 %v5485
        %v5518 = vunpack.c.l.b16 %v5486
        %v5519 = vunpack.c.l.b16 %v5487
        %v5520 = vunpack.c.l.b16 %v5488
        %v5521 = vunpack.c.l.b16 %v5489
        %v5522 = vunpack.c.l.b16 %v5490
        %v5523 = vunpack.c.l.b16 %v5491
        %v5524 = vunpack.c.l.b16 %v5492
        %v5525 = vpack.c.b16 %v5510, %v5509
        %v5526 = vpack.c.b16 %v5512, %v5511
        %v5527 = vpack.c.b16 %v5514, %v5513
        %v5528 = vpack.c.b16 %v5516, %v5515
        %v5529 = vpack.c.b16 %v5518, %v5517
        %v5530 = vpack.c.b16 %v5520, %v5519
        %v5531 = vpack.c.b16 %v5522, %v5521
        %v5532 = vpack.c.b16 %v5524, %v5523
        %5541 = vmatprep.subr.bf16.mxu0 0
        %5542 = vmatpush1.bf16.msra.mxu0 %v5525
        %5543 = vmatprep.subr.bf16.mxu0 0
        %5544 = vmatpush1.bf16.msra.mxu0 %v5526
        %5545 = vmatprep.subr.bf16.mxu0 0
        %5546 = vmatpush1.bf16.msra.mxu0 %v5527
        %5547 = vmatprep.subr.bf16.mxu0 0
        %5548 = vmatpush1.bf16.msra.mxu0 %v5528
        %5549 = vmatprep.subr.bf16.mxu0 0
        %5550 = vmatpush1.bf16.msra.mxu0 %v5529
        %5551 = vmatprep.subr.bf16.mxu0 0
        %5552 = vmatpush1.bf16.msra.mxu0 %v5530
        %5553 = vmatprep.subr.bf16.mxu0 0
        %5554 = vmatpush1.bf16.msra.mxu0 %v5531
        %5555 = vmatprep.subr.bf16.mxu0 0
        %5556 = vmatpush1.bf16.msra.mxu0 %v5532
        %5557 = vmatprep.subr.bf16.mxu0 0
        %5558 = vmatpush1.bf16.msra.mxu0 0
        %5559 = vmatprep.subr.bf16.mxu0 0
        %5560 = vmatpush1.bf16.msra.mxu0 0
        %5561 = vmatprep.subr.bf16.mxu0 0
        %5562 = vmatpush1.bf16.msra.mxu0 0
        %5563 = vmatprep.subr.bf16.mxu0 0
        %5564 = vmatpush1.bf16.msra.mxu0 0
        %5565 = vmatprep.subr.bf16.mxu0 0
        %5566 = vmatpush1.bf16.msra.mxu0 0
        %5567 = vmatprep.subr.bf16.mxu0 0
        %5568 = vmatpush1.bf16.msra.mxu0 0
        %5569 = vmatprep.subr.bf16.mxu0 0
        %5570 = vmatpush1.bf16.msra.mxu0 0
        %5571 = vmatprep.subr.bf16.mxu0 0
        %5572 = vmatpush1.bf16.msra.mxu0 0
        %5573 = vmatprep.mubr.bf16.mxu0 0
        %5574 = vmatmul.mubr.bf16.gmra.mrb[0].mxu0 %v5465
        %v5575 = vpop.f32.mrb[0].mxu0
        %v5576 = vadd.f32 0.0, %v5575
        %v5577 = vpop.f32.mrb[0].mxu0
        %v5578 = vpop.f32.mrb[0].mxu0
        %v5579 = vadd.f32 0.0, %v5578
        %v5580 = vpop.f32.mrb[0].mxu0
        %5581 = vmatprep.mubr.bf16.mxu0 0
        %5582 = vmatmul.mubr.bf16.gmra.mrb[0].mxu0 %v5466
        %v5583 = vpop.f32.mrb[0].mxu0
        %v5584 = vadd.f32 0.0, %v5583
        %v5585 = vpop.f32.mrb[0].mxu0
        %v5586 = vpop.f32.mrb[0].mxu0
        %v5587 = vadd.f32 0.0, %v5586
        %v5588 = vpop.f32.mrb[0].mxu0
        %5589 = vmatprep.mubr.bf16.mxu0 0
        %5590 = vmatmul.mubr.bf16.gmra.mrb[0].mxu0 %v5467
        %v5591 = vpop.f32.mrb[0].mxu0
        %v5592 = vadd.f32 0.0, %v5591
        %v5593 = vpop.f32.mrb[0].mxu0
        %v5594 = vpop.f32.mrb[0].mxu0
        %v5595 = vadd.f32 0.0, %v5594
        %v5596 = vpop.f32.mrb[0].mxu0
        %5597 = vmatprep.mubr.bf16.mxu0 0
        %5598 = vmatmul.mubr.bf16.gmra.mrb[0].mxu0 %v5468
        %v5599 = vpop.f32.mrb[0].mxu0
        %v5600 = vadd.f32 0.0, %v5599
        %v5601 = vpop.f32.mrb[0].mxu0
        %v5602 = vpop.f32.mrb[0].mxu0
        %v5603 = vadd.f32 0.0, %v5602
        %v5604 = vpop.f32.mrb[0].mxu0
        %5605 = vmatprep.mubr.bf16.mxu0 0
        %5606 = vmatmul.mubr.bf16.gmra.mrb[0].mxu0 %v5469
        %v5607 = vpop.f32.mrb[0].mxu0
        %v5608 = vadd.f32 0.0, %v5607
        %v5609 = vpop.f32.mrb[0].mxu0
        %v5610 = vpop.f32.mrb[0].mxu0
        %v5611 = vadd.f32 0.0, %v5610
        %v5612 = vpop.f32.mrb[0].mxu0
        %5613 = vmatprep.mubr.bf16.mxu0 0
        %5614 = vmatmul.mubr.bf16.gmra.mrb[0].mxu0 %v5470
        %v5615 = vpop.f32.mrb[0].mxu0
        %v5616 = vadd.f32 0.0, %v5615
        %v5617 = vpop.f32.mrb[0].mxu0
        %v5618 = vpop.f32.mrb[0].mxu0
        %v5619 = vadd.f32 0.0, %v5618
        %v5620 = vpop.f32.mrb[0].mxu0
        %5621 = vmatprep.mubr.bf16.mxu0 0
        %5622 = vmatmul.mubr.bf16.gmra.mrb[0].mxu0 %v5471
        %v5623 = vpop.f32.mrb[0].mxu0
        %v5624 = vadd.f32 0.0, %v5623
        %v5625 = vpop.f32.mrb[0].mxu0
        %v5626 = vpop.f32.mrb[0].mxu0
        %v5627 = vadd.f32 0.0, %v5626
        %v5628 = vpop.f32.mrb[0].mxu0
        %5629 = vmatprep.mubr.bf16.mxu0 0
        %5630 = vmatmul.mubr.bf16.gmra.mrb[0].mxu0 %v5472
        %v5631 = vpop.f32.mrb[0].mxu0
        %v5632 = vadd.f32 0.0, %v5631
        %v5633 = vpop.f32.mrb[0].mxu0
        %v5634 = vpop.f32.mrb[0].mxu0
        %v5635 = vadd.f32 0.0, %v5634
        %v5636 = vpop.f32.mrb[0].mxu0
        %5637 = vmatprep.mubr.bf16.mxu0 0
        %5638 = vmatmul.mubr.bf16.gmra.mrb[0].mxu0 %v5473
        %v5639 = vpop.f32.mrb[0].mxu0
        %v5640 = vadd.f32 0.0, %v5639
        %v5641 = vpop.f32.mrb[0].mxu0
        %v5642 = vpop.f32.mrb[0].mxu0
        %v5643 = vadd.f32 0.0, %v5642
        %v5644 = vpop.f32.mrb[0].mxu0
        %5645 = vmatprep.mubr.bf16.mxu0 0
        %5646 = vmatmul.mubr.bf16.gmra.mrb[0].mxu0 %v5474
        %v5647 = vpop.f32.mrb[0].mxu0
        %v5648 = vadd.f32 0.0, %v5647
        %v5649 = vpop.f32.mrb[0].mxu0
        %v5650 = vpop.f32.mrb[0].mxu0
        %v5651 = vadd.f32 0.0, %v5650
        %v5652 = vpop.f32.mrb[0].mxu0
        %5653 = vmatprep.mubr.bf16.mxu0 0
        %5654 = vmatmul.mubr.bf16.gmra.mrb[0].mxu0 %v5475
        %v5655 = vpop.f32.mrb[0].mxu0
        %v5656 = vadd.f32 0.0, %v5655
        %v5657 = vpop.f32.mrb[0].mxu0
        %v5658 = vpop.f32.mrb[0].mxu0
        %v5659 = vadd.f32 0.0, %v5658
        %v5660 = vpop.f32.mrb[0].mxu0
        %5661 = vmatprep.mubr.bf16.mxu0 0
        %5662 = vmatmul.mubr.bf16.gmra.mrb[0].mxu0 %v5476
        %v5663 = vpop.f32.mrb[0].mxu0
        %v5664 = vadd.f32 0.0, %v5663
        %v5665 = vpop.f32.mrb[0].mxu0
        %v5666 = vpop.f32.mrb[0].mxu0
        %v5667 = vadd.f32 0.0, %v5666
        %v5668 = vpop.f32.mrb[0].mxu0
        %5669 = vdwg.mxu0
        %v5670 = vadd.f32 %v5417, %v5576
        %v5671 = vadd.f32 %v5418, %v5579
        %v5672 = vadd.f32 %v5419, %v5584
        %v5673 = vadd.f32 %v5420, %v5587
        %v5674 = vadd.f32 %v5421, %v5592
        %v5675 = vadd.f32 %v5422, %v5595
        %v5676 = vadd.f32 %v5423, %v5600
        %v5677 = vadd.f32 %v5424, %v5603
        %v5678 = vadd.f32 %v5425, %v5608
        %v5679 = vadd.f32 %v5426, %v5611
        %v5680 = vadd.f32 %v5427, %v5616
        %v5681 = vadd.f32 %v5428, %v5619
        %v5682 = vadd.f32 %v5429, %v5624
        %v5683 = vadd.f32 %v5430, %v5627
        %v5684 = vadd.f32 %v5431, %v5632
        %v5685 = vadd.f32 %v5432, %v5635
        %v5686 = vadd.f32 %v5433, %v5640
        %v5687 = vadd.f32 %v5434, %v5643
        %v5688 = vadd.f32 %v5435, %v5648
        %v5689 = vadd.f32 %v5436, %v5651
        %v5690 = vadd.f32 %v5437, %v5656
        %v5691 = vadd.f32 %v5438, %v5659
        %v5692 = vadd.f32 %v5439, %v5664
        %v5693 = vadd.f32 %v5440, %v5667
        %v5694 = vld [vmem:[#allocation2 + $0xf8] sm:$0xff]
        %v5695 = vld [vmem:[#allocation2 + $0x100] sm:$0xff]
        %v5696 = vld [vmem:[#allocation2 + $0x108] sm:$0xff]
        %v5697 = vld [vmem:[#allocation2 + $0x110] sm:$0xff]
        %v5698 = vld [vmem:[#allocation2 + $0x118] sm:$0xff]
        %v5699 = vld [vmem:[#allocation2 + $0x120] sm:$0xff]
        %v5700 = vld [vmem:[#allocation2 + $0x128] sm:$0xff]
        %v5701 = vld [vmem:[#allocation2 + $0x130] sm:$0xff]
        %v5702 = vld [vmem:[#allocation2 + $0x138] sm:$0xff]
        %v5703 = vld [vmem:[#allocation2 + $0x140] sm:$0xff]
        %v5704 = vld [vmem:[#allocation2 + $0x148] sm:$0xff]
        %v5705 = vld [vmem:[#allocation2 + $0x150] sm:$0xff]
        %v5706 = vld [vmem:[#allocation2 + $0x158] sm:$0xff]
        %v5707 = vld [vmem:[#allocation2 + $0x160] sm:$0xff]
        %v5708 = vld [vmem:[#allocation2 + $0x168] sm:$0xff]
        %v5709 = vld [vmem:[#allocation2 + $0x170] sm:$0xff]
        %v5710 = vld [vmem:[#allocation2 + $0x178] sm:$0xff]
        %v5711 = vld [vmem:[#allocation2 + $0x180] sm:$0xff]
        %v5712 = vld [vmem:[#allocation2 + $0x188] sm:$0xff]
        %v5713 = vld [vmem:[#allocation2 + $0x190] sm:$0xff]
        %v5714 = vld [vmem:[#allocation2 + $0x198] sm:$0xff]
        %v5715 = vld [vmem:[#allocation2 + $0x1a0] sm:$0xff]
        %v5716 = vld [vmem:[#allocation2 + $0x1a8] sm:$0xff]
        %v5717 = vld [vmem:[#allocation2 + $0x1b0] sm:$0xff]
        %v5718 = vpack.c.bf16 %v5695, %v5694
        %v5719 = vpack.c.bf16 %v5697, %v5696
        %v5720 = vpack.c.bf16 %v5699, %v5698
        %v5721 = vpack.c.bf16 %v5701, %v5700
        %v5722 = vpack.c.bf16 %v5703, %v5702
        %v5723 = vpack.c.bf16 %v5705, %v5704
        %v5724 = vpack.c.bf16 %v5707, %v5706
        %v5725 = vpack.c.bf16 %v5709, %v5708
        %v5726 = vpack.c.bf16 %v5711, %v5710
        %v5727 = vpack.c.bf16 %v5713, %v5712
        %v5728 = vpack.c.bf16 %v5715, %v5714
        %v5729 = vpack.c.bf16 %v5717, %v5716
        %v5730 = vld [vmem:[%s3112] sm:$0xf]
        %v5731 = vld [vmem:[%s3112 + $0x4] sm:$0xf]
        %v5732 = vld [vmem:[%s3112 + $0x8] sm:$0xf]
        %v5733 = vld [vmem:[%s3112 + $0xc] sm:$0xf]
        %v5734 = vld [vmem:[%s3112 + $0x10] sm:$0xf]
        %v5735 = vld [vmem:[%s3112 + $0x14] sm:$0xf]
        %v5736 = vld [vmem:[%s3112 + $0x18] sm:$0xf]
        %v5737 = vld [vmem:[%s3112 + $0x1c] sm:$0xf]
        %v5738 = vld [vmem:[%s3112 + $0x20] sm:$0xf]
        %v5739 = vld [vmem:[%s3112 + $0x24] sm:$0xf]
        %v5740 = vld [vmem:[%s3112 + $0x28] sm:$0xf]
        %v5741 = vld [vmem:[%s3112 + $0x2c] sm:$0xf]
        %v5742 = vld [vmem:[%s3112 + $0x30] sm:$0xf]
        %v5743 = vld [vmem:[%s3112 + $0x34] sm:$0xf]
        %v5744 = vld [vmem:[%s3112 + $0x38] sm:$0xf]
        %v5745 = vld [vmem:[%s3112 + $0x3c] sm:$0xf]
        %v5762 = vunpack.c.l.b16 %v5730
        %v5763 = vunpack.c.l.b16 %v5731
        %v5764 = vunpack.c.l.b16 %v5732
        %v5765 = vunpack.c.l.b16 %v5733
        %v5766 = vunpack.c.l.b16 %v5734
        %v5767 = vunpack.c.l.b16 %v5735
        %v5768 = vunpack.c.l.b16 %v5736
        %v5769 = vunpack.c.l.b16 %v5737
        %v5770 = vunpack.c.l.b16 %v5738
        %v5771 = vunpack.c.l.b16 %v5739
        %v5772 = vunpack.c.l.b16 %v5740
        %v5773 = vunpack.c.l.b16 %v5741
        %v5774 = vunpack.c.l.b16 %v5742
        %v5775 = vunpack.c.l.b16 %v5743
        %v5776 = vunpack.c.l.b16 %v5744
        %v5777 = vunpack.c.l.b16 %v5745
        %v5778 = vpack.c.b16 %v5763, %v5762
        %v5779 = vpack.c.b16 %v5765, %v5764
        %v5780 = vpack.c.b16 %v5767, %v5766
        %v5781 = vpack.c.b16 %v5769, %v5768
        %v5782 = vpack.c.b16 %v5771, %v5770
        %v5783 = vpack.c.b16 %v5773, %v5772
        %v5784 = vpack.c.b16 %v5775, %v5774
        %v5785 = vpack.c.b16 %v5777, %v5776
        %5794 = vmatprep.subr.bf16.mxu0 0
        %5795 = vmatpush1.bf16.msra.mxu0 %v5778
        %5796 = vmatprep.subr.bf16.mxu0 0
        %5797 = vmatpush1.bf16.msra.mxu0 %v5779
        %5798 = vmatprep.subr.bf16.mxu0 0
        %5799 = vmatpush1.bf16.msra.mxu0 %v5780
        %5800 = vmatprep.subr.bf16.mxu0 0
        %5801 = vmatpush1.bf16.msra.mxu0 %v5781
        %5802 = vmatprep.subr.bf16.mxu0 0
        %5803 = vmatpush1.bf16.msra.mxu0 %v5782
        %5804 = vmatprep.subr.bf16.mxu0 0
        %5805 = vmatpush1.bf16.msra.mxu0 %v5783
        %5806 = vmatprep.subr.bf16.mxu0 0
        %5807 = vmatpush1.bf16.msra.mxu0 %v5784
        %5808 = vmatprep.subr.bf16.mxu0 0
        %5809 = vmatpush1.bf16.msra.mxu0 %v5785
        %5810 = vmatprep.subr.bf16.mxu0 0
        %5811 = vmatpush1.bf16.msra.mxu0 0
        %5812 = vmatprep.subr.bf16.mxu0 0
        %5813 = vmatpush1.bf16.msra.mxu0 0
        %5814 = vmatprep.subr.bf16.mxu0 0
        %5815 = vmatpush1.bf16.msra.mxu0 0
        %5816 = vmatprep.subr.bf16.mxu0 0
        %5817 = vmatpush1.bf16.msra.mxu0 0
        %5818 = vmatprep.subr.bf16.mxu0 0
        %5819 = vmatpush1.bf16.msra.mxu0 0
        %5820 = vmatprep.subr.bf16.mxu0 0
        %5821 = vmatpush1.bf16.msra.mxu0 0
        %5822 = vmatprep.subr.bf16.mxu0 0
        %5823 = vmatpush1.bf16.msra.mxu0 0
        %5824 = vmatprep.subr.bf16.mxu0 0
        %5825 = vmatpush1.bf16.msra.mxu0 0
        %5826 = vmatprep.mubr.bf16.mxu0 0
        %5827 = vmatmul.mubr.bf16.gmra.mrb[0].mxu0 %v5718
        %v5828 = vpop.f32.mrb[0].mxu0
        %v5829 = vadd.f32 0.0, %v5828
        %v5830 = vpop.f32.mrb[0].mxu0
        %v5831 = vpop.f32.mrb[0].mxu0
        %v5832 = vadd.f32 0.0, %v5831
        %v5833 = vpop.f32.mrb[0].mxu0
        %5834 = vmatprep.mubr.bf16.mxu0 0
        %5835 = vmatmul.mubr.bf16.gmra.mrb[0].mxu0 %v5719
        %v5836 = vpop.f32.mrb[0].mxu0
        %v5837 = vadd.f32 0.0, %v5836
        %v5838 = vpop.f32.mrb[0].mxu0
        %v5839 = vpop.f32.mrb[0].mxu0
        %v5840 = vadd.f32 0.0, %v5839
        %v5841 = vpop.f32.mrb[0].mxu0
        %5842 = vmatprep.mubr.bf16.mxu0 0
        %5843 = vmatmul.mubr.bf16.gmra.mrb[0].mxu0 %v5720
        %v5844 = vpop.f32.mrb[0].mxu0
        %v5845 = vadd.f32 0.0, %v5844
        %v5846 = vpop.f32.mrb[0].mxu0
        %v5847 = vpop.f32.mrb[0].mxu0
        %v5848 = vadd.f32 0.0, %v5847
        %v5849 = vpop.f32.mrb[0].mxu0
        %5850 = vmatprep.mubr.bf16.mxu0 0
        %5851 = vmatmul.mubr.bf16.gmra.mrb[0].mxu0 %v5721
        %v5852 = vpop.f32.mrb[0].mxu0
        %v5853 = vadd.f32 0.0, %v5852
        %v5854 = vpop.f32.mrb[0].mxu0
        %v5855 = vpop.f32.mrb[0].mxu0
        %v5856 = vadd.f32 0.0, %v5855
        %v5857 = vpop.f32.mrb[0].mxu0
        %5858 = vmatprep.mubr.bf16.mxu0 0
        %5859 = vmatmul.mubr.bf16.gmra.mrb[0].mxu0 %v5722
        %v5860 = vpop.f32.mrb[0].mxu0
        %v5861 = vadd.f32 0.0, %v5860
        %v5862 = vpop.f32.mrb[0].mxu0
        %v5863 = vpop.f32.mrb[0].mxu0
        %v5864 = vadd.f32 0.0, %v5863
        %v5865 = vpop.f32.mrb[0].mxu0
        %5866 = vmatprep.mubr.bf16.mxu0 0
        %5867 = vmatmul.mubr.bf16.gmra.mrb[0].mxu0 %v5723
        %v5868 = vpop.f32.mrb[0].mxu0
        %v5869 = vadd.f32 0.0, %v5868
        %v5870 = vpop.f32.mrb[0].mxu0
        %v5871 = vpop.f32.mrb[0].mxu0
        %v5872 = vadd.f32 0.0, %v5871
        %v5873 = vpop.f32.mrb[0].mxu0
        %5874 = vmatprep.mubr.bf16.mxu0 0
        %5875 = vmatmul.mubr.bf16.gmra.mrb[0].mxu0 %v5724
        %v5876 = vpop.f32.mrb[0].mxu0
        %v5877 = vadd.f32 0.0, %v5876
        %v5878 = vpop.f32.mrb[0].mxu0
        %v5879 = vpop.f32.mrb[0].mxu0
        %v5880 = vadd.f32 0.0, %v5879
        %v5881 = vpop.f32.mrb[0].mxu0
        %5882 = vmatprep.mubr.bf16.mxu0 0
        %5883 = vmatmul.mubr.bf16.gmra.mrb[0].mxu0 %v5725
        %v5884 = vpop.f32.mrb[0].mxu0
        %v5885 = vadd.f32 0.0, %v5884
        %v5886 = vpop.f32.mrb[0].mxu0
        %v5887 = vpop.f32.mrb[0].mxu0
        %v5888 = vadd.f32 0.0, %v5887
        %v5889 = vpop.f32.mrb[0].mxu0
        %5890 = vmatprep.mubr.bf16.mxu0 0
        %5891 = vmatmul.mubr.bf16.gmra.mrb[0].mxu0 %v5726
        %v5892 = vpop.f32.mrb[0].mxu0
        %v5893 = vadd.f32 0.0, %v5892
        %v5894 = vpop.f32.mrb[0].mxu0
        %v5895 = vpop.f32.mrb[0].mxu0
        %v5896 = vadd.f32 0.0, %v5895
        %v5897 = vpop.f32.mrb[0].mxu0
        %5898 = vmatprep.mubr.bf16.mxu0 0
        %5899 = vmatmul.mubr.bf16.gmra.mrb[0].mxu0 %v5727
        %v5900 = vpop.f32.mrb[0].mxu0
        %v5901 = vadd.f32 0.0, %v5900
        %v5902 = vpop.f32.mrb[0].mxu0
        %v5903 = vpop.f32.mrb[0].mxu0
        %v5904 = vadd.f32 0.0, %v5903
        %v5905 = vpop.f32.mrb[0].mxu0
        %5906 = vmatprep.mubr.bf16.mxu0 0
        %5907 = vmatmul.mubr.bf16.gmra.mrb[0].mxu0 %v5728
        %v5908 = vpop.f32.mrb[0].mxu0
        %v5909 = vadd.f32 0.0, %v5908
        %v5910 = vpop.f32.mrb[0].mxu0
        %v5911 = vpop.f32.mrb[0].mxu0
        %v5912 = vadd.f32 0.0, %v5911
        %v5913 = vpop.f32.mrb[0].mxu0
        %5914 = vmatprep.mubr.bf16.mxu0 0
        %5915 = vmatmul.mubr.bf16.gmra.mrb[0].mxu0 %v5729
        %v5916 = vpop.f32.mrb[0].mxu0
        %v5917 = vadd.f32 0.0, %v5916
        %v5918 = vpop.f32.mrb[0].mxu0
        %v5919 = vpop.f32.mrb[0].mxu0
        %v5920 = vadd.f32 0.0, %v5919
        %v5921 = vpop.f32.mrb[0].mxu0
        %5922 = vdwg.mxu0
        %v5923 = vadd.f32 %v5670, %v5829
        %v5924 = vadd.f32 %v5671, %v5832
        %v5925 = vadd.f32 %v5672, %v5837
        %v5926 = vadd.f32 %v5673, %v5840
        %v5927 = vadd.f32 %v5674, %v5845
        %v5928 = vadd.f32 %v5675, %v5848
        %v5929 = vadd.f32 %v5676, %v5853
        %v5930 = vadd.f32 %v5677, %v5856
        %v5931 = vadd.f32 %v5678, %v5861
        %v5932 = vadd.f32 %v5679, %v5864
        %v5933 = vadd.f32 %v5680, %v5869
        %v5934 = vadd.f32 %v5681, %v5872
        %v5935 = vadd.f32 %v5682, %v5877
        %v5936 = vadd.f32 %v5683, %v5880
        %v5937 = vadd.f32 %v5684, %v5885
        %v5938 = vadd.f32 %v5685, %v5888
        %v5939 = vadd.f32 %v5686, %v5893
        %v5940 = vadd.f32 %v5687, %v5896
        %v5941 = vadd.f32 %v5688, %v5901
        %v5942 = vadd.f32 %v5689, %v5904
        %v5943 = vadd.f32 %v5690, %v5909
        %v5944 = vadd.f32 %v5691, %v5912
        %v5945 = vadd.f32 %v5692, %v5917
        %v5946 = vadd.f32 %v5693, %v5920
        %v5947 = vld [vmem:[#allocation2 + $0xf9] sm:$0xff]
        %v5948 = vld [vmem:[#allocation2 + $0x101] sm:$0xff]
        %v5949 = vld [vmem:[#allocation2 + $0x109] sm:$0xff]
        %v5950 = vld [vmem:[#allocation2 + $0x111] sm:$0xff]
        %v5951 = vld [vmem:[#allocation2 + $0x119] sm:$0xff]
        %v5952 = vld [vmem:[#allocation2 + $0x121] sm:$0xff]
        %v5953 = vld [vmem:[#allocation2 + $0x129] sm:$0xff]
        %v5954 = vld [vmem:[#allocation2 + $0x131] sm:$0xff]
        %v5955 = vld [vmem:[#allocation2 + $0x139] sm:$0xff]
        %v5956 = vld [vmem:[#allocation2 + $0x141] sm:$0xff]
        %v5957 = vld [vmem:[#allocation2 + $0x149] sm:$0xff]
        %v5958 = vld [vmem:[#allocation2 + $0x151] sm:$0xff]
        %v5959 = vld [vmem:[#allocation2 + $0x159] sm:$0xff]
        %v5960 = vld [vmem:[#allocation2 + $0x161] sm:$0xff]
        %v5961 = vld [vmem:[#allocation2 + $0x169] sm:$0xff]
        %v5962 = vld [vmem:[#allocation2 + $0x171] sm:$0xff]
        %v5963 = vld [vmem:[#allocation2 + $0x179] sm:$0xff]
        %v5964 = vld [vmem:[#allocation2 + $0x181] sm:$0xff]
        %v5965 = vld [vmem:[#allocation2 + $0x189] sm:$0xff]
        %v5966 = vld [vmem:[#allocation2 + $0x191] sm:$0xff]
        %v5967 = vld [vmem:[#allocation2 + $0x199] sm:$0xff]
        %v5968 = vld [vmem:[#allocation2 + $0x1a1] sm:$0xff]
        %v5969 = vld [vmem:[#allocation2 + $0x1a9] sm:$0xff]
        %v5970 = vld [vmem:[#allocation2 + $0x1b1] sm:$0xff]
        %v5971 = vpack.c.bf16 %v5948, %v5947
        %v5972 = vpack.c.bf16 %v5950, %v5949
        %v5973 = vpack.c.bf16 %v5952, %v5951
        %v5974 = vpack.c.bf16 %v5954, %v5953
        %v5975 = vpack.c.bf16 %v5956, %v5955
        %v5976 = vpack.c.bf16 %v5958, %v5957
        %v5977 = vpack.c.bf16 %v5960, %v5959
        %v5978 = vpack.c.bf16 %v5962, %v5961
        %v5979 = vpack.c.bf16 %v5964, %v5963
        %v5980 = vpack.c.bf16 %v5966, %v5965
        %v5981 = vpack.c.bf16 %v5968, %v5967
        %v5982 = vpack.c.bf16 %v5970, %v5969
        %v5983 = vld [vmem:[%s3366] sm:$0xf]
        %v5984 = vld [vmem:[%s3366 + $0x4] sm:$0xf]
        %v5985 = vld [vmem:[%s3366 + $0x8] sm:$0xf]
        %v5986 = vld [vmem:[%s3366 + $0xc] sm:$0xf]
        %v5987 = vld [vmem:[%s3366 + $0x10] sm:$0xf]
        %v5988 = vld [vmem:[%s3366 + $0x14] sm:$0xf]
        %v5989 = vld [vmem:[%s3366 + $0x18] sm:$0xf]
        %v5990 = vld [vmem:[%s3366 + $0x1c] sm:$0xf]
        %v5991 = vld [vmem:[%s3366 + $0x20] sm:$0xf]
        %v5992 = vld [vmem:[%s3366 + $0x24] sm:$0xf]
        %v5993 = vld [vmem:[%s3366 + $0x28] sm:$0xf]
        %v5994 = vld [vmem:[%s3366 + $0x2c] sm:$0xf]
        %v5995 = vld [vmem:[%s3366 + $0x30] sm:$0xf]
        %v5996 = vld [vmem:[%s3366 + $0x34] sm:$0xf]
        %v5997 = vld [vmem:[%s3366 + $0x38] sm:$0xf]
        %v5998 = vld [vmem:[%s3366 + $0x3c] sm:$0xf]
        %v6015 = vunpack.c.l.b16 %v5983
        %v6016 = vunpack.c.l.b16 %v5984
        %v6017 = vunpack.c.l.b16 %v5985
        %v6018 = vunpack.c.l.b16 %v5986
        %v6019 = vunpack.c.l.b16 %v5987
        %v6020 = vunpack.c.l.b16 %v5988
        %v6021 = vunpack.c.l.b16 %v5989
        %v6022 = vunpack.c.l.b16 %v5990
        %v6023 = vunpack.c.l.b16 %v5991
        %v6024 = vunpack.c.l.b16 %v5992
        %v6025 = vunpack.c.l.b16 %v5993
        %v6026 = vunpack.c.l.b16 %v5994
        %v6027 = vunpack.c.l.b16 %v5995
        %v6028 = vunpack.c.l.b16 %v5996
        %v6029 = vunpack.c.l.b16 %v5997
        %v6030 = vunpack.c.l.b16 %v5998
        %v6031 = vpack.c.b16 %v6016, %v6015
        %v6032 = vpack.c.b16 %v6018, %v6017
        %v6033 = vpack.c.b16 %v6020, %v6019
        %v6034 = vpack.c.b16 %v6022, %v6021
        %v6035 = vpack.c.b16 %v6024, %v6023
        %v6036 = vpack.c.b16 %v6026, %v6025
        %v6037 = vpack.c.b16 %v6028, %v6027
        %v6038 = vpack.c.b16 %v6030, %v6029
        %6047 = vmatprep.subr.bf16.mxu0 0
        %6048 = vmatpush1.bf16.msra.mxu0 %v6031
        %6049 = vmatprep.subr.bf16.mxu0 0
        %6050 = vmatpush1.bf16.msra.mxu0 %v6032
        %6051 = vmatprep.subr.bf16.mxu0 0
        %6052 = vmatpush1.bf16.msra.mxu0 %v6033
        %6053 = vmatprep.subr.bf16.mxu0 0
        %6054 = vmatpush1.bf16.msra.mxu0 %v6034
        %6055 = vmatprep.subr.bf16.mxu0 0
        %6056 = vmatpush1.bf16.msra.mxu0 %v6035
        %6057 = vmatprep.subr.bf16.mxu0 0
        %6058 = vmatpush1.bf16.msra.mxu0 %v6036
        %6059 = vmatprep.subr.bf16.mxu0 0
        %6060 = vmatpush1.bf16.msra.mxu0 %v6037
        %6061 = vmatprep.subr.bf16.mxu0 0
        %6062 = vmatpush1.bf16.msra.mxu0 %v6038
        %6063 = vmatprep.subr.bf16.mxu0 0
        %6064 = vmatpush1.bf16.msra.mxu0 0
        %6065 = vmatprep.subr.bf16.mxu0 0
        %6066 = vmatpush1.bf16.msra.mxu0 0
        %6067 = vmatprep.subr.bf16.mxu0 0
        %6068 = vmatpush1.bf16.msra.mxu0 0
        %6069 = vmatprep.subr.bf16.mxu0 0
        %6070 = vmatpush1.bf16.msra.mxu0 0
        %6071 = vmatprep.subr.bf16.mxu0 0
        %6072 = vmatpush1.bf16.msra.mxu0 0
        %6073 = vmatprep.subr.bf16.mxu0 0
        %6074 = vmatpush1.bf16.msra.mxu0 0
        %6075 = vmatprep.subr.bf16.mxu0 0
        %6076 = vmatpush1.bf16.msra.mxu0 0
        %6077 = vmatprep.subr.bf16.mxu0 0
        %6078 = vmatpush1.bf16.msra.mxu0 0
        %6079 = vmatprep.mubr.bf16.mxu0 0
        %6080 = vmatmul.mubr.bf16.gmra.mrb[0].mxu0 %v5971
        %v6081 = vpop.f32.mrb[0].mxu0
        %v6082 = vadd.f32 0.0, %v6081
        %v6083 = vpop.f32.mrb[0].mxu0
        %v6084 = vpop.f32.mrb[0].mxu0
        %v6085 = vadd.f32 0.0, %v6084
        %v6086 = vpop.f32.mrb[0].mxu0
        %6087 = vmatprep.mubr.bf16.mxu0 0
        %6088 = vmatmul.mubr.bf16.gmra.mrb[0].mxu0 %v5972
        %v6089 = vpop.f32.mrb[0].mxu0
        %v6090 = vadd.f32 0.0, %v6089
        %v6091 = vpop.f32.mrb[0].mxu0
        %v6092 = vpop.f32.mrb[0].mxu0
        %v6093 = vadd.f32 0.0, %v6092
        %v6094 = vpop.f32.mrb[0].mxu0
        %6095 = vmatprep.mubr.bf16.mxu0 0
        %6096 = vmatmul.mubr.bf16.gmra.mrb[0].mxu0 %v5973
        %v6097 = vpop.f32.mrb[0].mxu0
        %v6098 = vadd.f32 0.0, %v6097
        %v6099 = vpop.f32.mrb[0].mxu0
        %v6100 = vpop.f32.mrb[0].mxu0
        %v6101 = vadd.f32 0.0, %v6100
        %v6102 = vpop.f32.mrb[0].mxu0
        %6103 = vmatprep.mubr.bf16.mxu0 0
        %6104 = vmatmul.mubr.bf16.gmra.mrb[0].mxu0 %v5974
        %v6105 = vpop.f32.mrb[0].mxu0
        %v6106 = vadd.f32 0.0, %v6105
        %v6107 = vpop.f32.mrb[0].mxu0
        %v6108 = vpop.f32.mrb[0].mxu0
        %v6109 = vadd.f32 0.0, %v6108
        %v6110 = vpop.f32.mrb[0].mxu0
        %6111 = vmatprep.mubr.bf16.mxu0 0
        %6112 = vmatmul.mubr.bf16.gmra.mrb[0].mxu0 %v5975
        %v6113 = vpop.f32.mrb[0].mxu0
        %v6114 = vadd.f32 0.0, %v6113
        %v6115 = vpop.f32.mrb[0].mxu0
        %v6116 = vpop.f32.mrb[0].mxu0
        %v6117 = vadd.f32 0.0, %v6116
        %v6118 = vpop.f32.mrb[0].mxu0
        %6119 = vmatprep.mubr.bf16.mxu0 0
        %6120 = vmatmul.mubr.bf16.gmra.mrb[0].mxu0 %v5976
        %v6121 = vpop.f32.mrb[0].mxu0
        %v6122 = vadd.f32 0.0, %v6121
        %v6123 = vpop.f32.mrb[0].mxu0
        %v6124 = vpop.f32.mrb[0].mxu0
        %v6125 = vadd.f32 0.0, %v6124
        %v6126 = vpop.f32.mrb[0].mxu0
        %6127 = vmatprep.mubr.bf16.mxu0 0
        %6128 = vmatmul.mubr.bf16.gmra.mrb[0].mxu0 %v5977
        %v6129 = vpop.f32.mrb[0].mxu0
        %v6130 = vadd.f32 0.0, %v6129
        %v6131 = vpop.f32.mrb[0].mxu0
        %v6132 = vpop.f32.mrb[0].mxu0
        %v6133 = vadd.f32 0.0, %v6132
        %v6134 = vpop.f32.mrb[0].mxu0
        %6135 = vmatprep.mubr.bf16.mxu0 0
        %6136 = vmatmul.mubr.bf16.gmra.mrb[0].mxu0 %v5978
        %v6137 = vpop.f32.mrb[0].mxu0
        %v6138 = vadd.f32 0.0, %v6137
        %v6139 = vpop.f32.mrb[0].mxu0
        %v6140 = vpop.f32.mrb[0].mxu0
        %v6141 = vadd.f32 0.0, %v6140
        %v6142 = vpop.f32.mrb[0].mxu0
        %6143 = vmatprep.mubr.bf16.mxu0 0
        %6144 = vmatmul.mubr.bf16.gmra.mrb[0].mxu0 %v5979
        %v6145 = vpop.f32.mrb[0].mxu0
        %v6146 = vadd.f32 0.0, %v6145
        %v6147 = vpop.f32.mrb[0].mxu0
        %v6148 = vpop.f32.mrb[0].mxu0
        %v6149 = vadd.f32 0.0, %v6148
        %v6150 = vpop.f32.mrb[0].mxu0
        %6151 = vmatprep.mubr.bf16.mxu0 0
        %6152 = vmatmul.mubr.bf16.gmra.mrb[0].mxu0 %v5980
        %v6153 = vpop.f32.mrb[0].mxu0
        %v6154 = vadd.f32 0.0, %v6153
        %v6155 = vpop.f32.mrb[0].mxu0
        %v6156 = vpop.f32.mrb[0].mxu0
        %v6157 = vadd.f32 0.0, %v6156
        %v6158 = vpop.f32.mrb[0].mxu0
        %6159 = vmatprep.mubr.bf16.mxu0 0
        %6160 = vmatmul.mubr.bf16.gmra.mrb[0].mxu0 %v5981
        %v6161 = vpop.f32.mrb[0].mxu0
        %v6162 = vadd.f32 0.0, %v6161
        %v6163 = vpop.f32.mrb[0].mxu0
        %v6164 = vpop.f32.mrb[0].mxu0
        %v6165 = vadd.f32 0.0, %v6164
        %v6166 = vpop.f32.mrb[0].mxu0
        %6167 = vmatprep.mubr.bf16.mxu0 0
        %6168 = vmatmul.mubr.bf16.gmra.mrb[0].mxu0 %v5982
        %v6169 = vpop.f32.mrb[0].mxu0
        %v6170 = vadd.f32 0.0, %v6169
        %v6171 = vpop.f32.mrb[0].mxu0
        %v6172 = vpop.f32.mrb[0].mxu0
        %v6173 = vadd.f32 0.0, %v6172
        %v6174 = vpop.f32.mrb[0].mxu0
        %6175 = vdwg.mxu0
        %v6176 = vadd.f32 %v5923, %v6082
        %v6177 = vadd.f32 %v5924, %v6085
        %v6178 = vadd.f32 %v5925, %v6090
        %v6179 = vadd.f32 %v5926, %v6093
        %v6180 = vadd.f32 %v5927, %v6098
        %v6181 = vadd.f32 %v5928, %v6101
        %v6182 = vadd.f32 %v5929, %v6106
        %v6183 = vadd.f32 %v5930, %v6109
        %v6184 = vadd.f32 %v5931, %v6114
        %v6185 = vadd.f32 %v5932, %v6117
        %v6186 = vadd.f32 %v5933, %v6122
        %v6187 = vadd.f32 %v5934, %v6125
        %v6188 = vadd.f32 %v5935, %v6130
        %v6189 = vadd.f32 %v5936, %v6133
        %v6190 = vadd.f32 %v5937, %v6138
        %v6191 = vadd.f32 %v5938, %v6141
        %v6192 = vadd.f32 %v5939, %v6146
        %v6193 = vadd.f32 %v5940, %v6149
        %v6194 = vadd.f32 %v5941, %v6154
        %v6195 = vadd.f32 %v5942, %v6157
        %v6196 = vadd.f32 %v5943, %v6162
        %v6197 = vadd.f32 %v5944, %v6165
        %v6198 = vadd.f32 %v5945, %v6170
        %v6199 = vadd.f32 %v5946, %v6173
        %v6200 = vld [vmem:[#allocation12] sm:$0x1]
        %v6202 = vlaneseq
        %v6203 = vshrl.u32 %v6202, 7
        %v6204 = vsub.s32 0, %v6203
        %v6205 = vrot.slane %v6200, %v6204
        %v6207 = vadd.f32 %v6176, %v6205
        %v6208 = vadd.f32 %v6177, %v6205
        %v6209 = vadd.f32 %v6178, %v6205
        %v6210 = vadd.f32 %v6179, %v6205
        %v6211 = vadd.f32 %v6180, %v6205
        %v6212 = vadd.f32 %v6181, %v6205
        %v6213 = vadd.f32 %v6182, %v6205
        %v6214 = vadd.f32 %v6183, %v6205
        %v6215 = vadd.f32 %v6184, %v6205
        %v6216 = vadd.f32 %v6185, %v6205
        %v6217 = vadd.f32 %v6186, %v6205
        %v6218 = vadd.f32 %v6187, %v6205
        %v6219 = vadd.f32 %v6188, %v6205
        %v6220 = vadd.f32 %v6189, %v6205
        %v6221 = vadd.f32 %v6190, %v6205
        %v6222 = vadd.f32 %v6191, %v6205
        %v6223 = vadd.f32 %v6192, %v6205
        %v6224 = vadd.f32 %v6193, %v6205
        %v6225 = vadd.f32 %v6194, %v6205
        %v6226 = vadd.f32 %v6195, %v6205
        %v6227 = vadd.f32 %v6196, %v6205
        %v6228 = vadd.f32 %v6197, %v6205
        %v6229 = vadd.f32 %v6198, %v6205
        %v6230 = vadd.f32 %v6199, %v6205
        %v6231 = vmax.f32 %v6207, 0.0
        %v6232 = vmax.f32 %v6208, 0.0
        %v6233 = vmax.f32 %v6209, 0.0
        %v6234 = vmax.f32 %v6210, 0.0
        %v6235 = vmax.f32 %v6211, 0.0
        %v6236 = vmax.f32 %v6212, 0.0
        %v6237 = vmax.f32 %v6213, 0.0
        %v6238 = vmax.f32 %v6214, 0.0
        %v6239 = vmax.f32 %v6215, 0.0
        %v6240 = vmax.f32 %v6216, 0.0
        %v6241 = vmax.f32 %v6217, 0.0
        %v6242 = vmax.f32 %v6218, 0.0
        %v6243 = vmax.f32 %v6219, 0.0
        %v6244 = vmax.f32 %v6220, 0.0
        %v6245 = vmax.f32 %v6221, 0.0
        %v6246 = vmax.f32 %v6222, 0.0
        %v6247 = vmax.f32 %v6223, 0.0
        %v6248 = vmax.f32 %v6224, 0.0
        %v6249 = vmax.f32 %v6225, 0.0
        %v6250 = vmax.f32 %v6226, 0.0
        %v6251 = vmax.f32 %v6227, 0.0
        %v6252 = vmax.f32 %v6228, 0.0
        %v6253 = vmax.f32 %v6229, 0.0
        %v6254 = vmax.f32 %v6230, 0.0
        %v6255 = vpack.c.bf16 %v6232, %v6231
        %v6256 = vpack.c.bf16 %v6234, %v6233
        %v6257 = vpack.c.bf16 %v6236, %v6235
        %v6258 = vpack.c.bf16 %v6238, %v6237
        %v6259 = vpack.c.bf16 %v6240, %v6239
        %v6260 = vpack.c.bf16 %v6242, %v6241
        %v6261 = vpack.c.bf16 %v6244, %v6243
        %v6262 = vpack.c.bf16 %v6246, %v6245
        %v6263 = vpack.c.bf16 %v6248, %v6247
        %v6264 = vpack.c.bf16 %v6250, %v6249
        %v6265 = vpack.c.bf16 %v6252, %v6251
        %v6266 = vpack.c.bf16 %v6254, %v6253
        %v6267 = vld [vmem:[#allocation14] sm:$0xf]
        %v6268 = vld [vmem:[#allocation14 + $0x4] sm:$0xf]
        %v6269 = vld [vmem:[#allocation14 + $0x8] sm:$0xf]
        %v6270 = vld [vmem:[#allocation14 + $0xc] sm:$0xf]
        %v6271 = vld [vmem:[#allocation14 + $0x10] sm:$0xf]
        %v6272 = vld [vmem:[#allocation14 + $0x14] sm:$0xf]
        %v6273 = vld [vmem:[#allocation14 + $0x18] sm:$0xf]
        %v6274 = vld [vmem:[#allocation14 + $0x1c] sm:$0xf]
        %v6275 = vld [vmem:[#allocation14 + $0x20] sm:$0xf]
        %v6276 = vld [vmem:[#allocation14 + $0x24] sm:$0xf]
        %v6277 = vld [vmem:[#allocation14 + $0x28] sm:$0xf]
        %v6278 = vld [vmem:[#allocation14 + $0x2c] sm:$0xf]
        %v6279 = vld [vmem:[#allocation14 + $0x30] sm:$0xf]
        %v6280 = vld [vmem:[#allocation14 + $0x34] sm:$0xf]
        %v6281 = vld [vmem:[#allocation14 + $0x38] sm:$0xf]
        %v6282 = vld [vmem:[#allocation14 + $0x3c] sm:$0xf]
        %v6283 = vld [vmem:[#allocation15] sm:$0x1]
        %v6285 = vlaneseq
        %v6286 = vshrl.u32 %v6285, 7
        %v6287 = vsub.s32 0, %v6286
        %v6288 = vrot.slane %v6283, %v6287
        %v6306 = vunpack.c.l.b16 %v6267
        %v6307 = vunpack.c.l.b16 %v6268
        %v6308 = vunpack.c.l.b16 %v6269
        %v6309 = vunpack.c.l.b16 %v6270
        %v6310 = vunpack.c.l.b16 %v6271
        %v6311 = vunpack.c.l.b16 %v6272
        %v6312 = vunpack.c.l.b16 %v6273
        %v6313 = vunpack.c.l.b16 %v6274
        %v6314 = vunpack.c.l.b16 %v6275
        %v6315 = vunpack.c.l.b16 %v6276
        %v6316 = vunpack.c.l.b16 %v6277
        %v6317 = vunpack.c.l.b16 %v6278
        %v6318 = vunpack.c.l.b16 %v6279
        %v6319 = vunpack.c.l.b16 %v6280
        %v6320 = vunpack.c.l.b16 %v6281
        %v6321 = vunpack.c.l.b16 %v6282
        %v6322 = vpack.c.b16 %v6307, %v6306
        %v6323 = vpack.c.b16 %v6309, %v6308
        %v6324 = vpack.c.b16 %v6311, %v6310
        %v6325 = vpack.c.b16 %v6313, %v6312
        %v6326 = vpack.c.b16 %v6315, %v6314
        %v6327 = vpack.c.b16 %v6317, %v6316
        %v6328 = vpack.c.b16 %v6319, %v6318
        %v6329 = vpack.c.b16 %v6321, %v6320
        %6338 = vmatprep.subr.bf16.mxu0 0
        %6339 = vmatpush1.bf16.msra.mxu0 %v6322
        %6340 = vmatprep.subr.bf16.mxu0 0
        %6341 = vmatpush1.bf16.msra.mxu0 %v6323
        %6342 = vmatprep.subr.bf16.mxu0 0
        %6343 = vmatpush1.bf16.msra.mxu0 %v6324
        %6344 = vmatprep.subr.bf16.mxu0 0
        %6345 = vmatpush1.bf16.msra.mxu0 %v6325
        %6346 = vmatprep.subr.bf16.mxu0 0
        %6347 = vmatpush1.bf16.msra.mxu0 %v6326
        %6348 = vmatprep.subr.bf16.mxu0 0
        %6349 = vmatpush1.bf16.msra.mxu0 %v6327
        %6350 = vmatprep.subr.bf16.mxu0 0
        %6351 = vmatpush1.bf16.msra.mxu0 %v6328
        %6352 = vmatprep.subr.bf16.mxu0 0
        %6353 = vmatpush1.bf16.msra.mxu0 %v6329
        %6354 = vmatprep.subr.bf16.mxu0 0
        %6355 = vmatpush1.bf16.msra.mxu0 0
        %6356 = vmatprep.subr.bf16.mxu0 0
        %6357 = vmatpush1.bf16.msra.mxu0 0
        %6358 = vmatprep.subr.bf16.mxu0 0
        %6359 = vmatpush1.bf16.msra.mxu0 0
        %6360 = vmatprep.subr.bf16.mxu0 0
        %6361 = vmatpush1.bf16.msra.mxu0 0
        %6362 = vmatprep.subr.bf16.mxu0 0
        %6363 = vmatpush1.bf16.msra.mxu0 0
        %6364 = vmatprep.subr.bf16.mxu0 0
        %6365 = vmatpush1.bf16.msra.mxu0 0
        %6366 = vmatprep.subr.bf16.mxu0 0
        %6367 = vmatpush1.bf16.msra.mxu0 0
        %6368 = vmatprep.subr.bf16.mxu0 0
        %6369 = vmatpush1.bf16.msra.mxu0 0
        %6370 = vmatprep.mubr.bf16.mxu0 0
        %6371 = vmatmul.mubr.bf16.gmra.mrb[0].mxu0 %v6255
        %v6372 = vpop.f32.mrb[0].mxu0
        %v6373 = vadd.f32 %v6288, %v6372
        %v6374 = vpop.f32.mrb[0].mxu0
        %v6375 = vpop.f32.mrb[0].mxu0
        %v6376 = vadd.f32 %v6288, %v6375
        %v6377 = vpop.f32.mrb[0].mxu0
        %6378 = vmatprep.mubr.bf16.mxu0 0
        %6379 = vmatmul.mubr.bf16.gmra.mrb[0].mxu0 %v6256
        %v6380 = vpop.f32.mrb[0].mxu0
        %v6381 = vadd.f32 %v6288, %v6380
        %v6382 = vpop.f32.mrb[0].mxu0
        %v6383 = vpop.f32.mrb[0].mxu0
        %v6384 = vadd.f32 %v6288, %v6383
        %v6385 = vpop.f32.mrb[0].mxu0
        %6386 = vmatprep.mubr.bf16.mxu0 0
        %6387 = vmatmul.mubr.bf16.gmra.mrb[0].mxu0 %v6257
        %v6388 = vpop.f32.mrb[0].mxu0
        %v6389 = vadd.f32 %v6288, %v6388
        %v6390 = vpop.f32.mrb[0].mxu0
        %v6391 = vpop.f32.mrb[0].mxu0
        %v6392 = vadd.f32 %v6288, %v6391
        %v6393 = vpop.f32.mrb[0].mxu0
        %6394 = vmatprep.mubr.bf16.mxu0 0
        %6395 = vmatmul.mubr.bf16.gmra.mrb[0].mxu0 %v6258
        %v6396 = vpop.f32.mrb[0].mxu0
        %v6397 = vadd.f32 %v6288, %v6396
        %v6398 = vpop.f32.mrb[0].mxu0
        %v6399 = vpop.f32.mrb[0].mxu0
        %v6400 = vadd.f32 %v6288, %v6399
        %v6401 = vpop.f32.mrb[0].mxu0
        %6402 = vmatprep.mubr.bf16.mxu0 0
        %6403 = vmatmul.mubr.bf16.gmra.mrb[0].mxu0 %v6259
        %v6404 = vpop.f32.mrb[0].mxu0
        %v6405 = vadd.f32 %v6288, %v6404
        %v6406 = vpop.f32.mrb[0].mxu0
        %v6407 = vpop.f32.mrb[0].mxu0
        %v6408 = vadd.f32 %v6288, %v6407
        %v6409 = vpop.f32.mrb[0].mxu0
        %6410 = vmatprep.mubr.bf16.mxu0 0
        %6411 = vmatmul.mubr.bf16.gmra.mrb[0].mxu0 %v6260
        %v6412 = vpop.f32.mrb[0].mxu0
        %v6413 = vadd.f32 %v6288, %v6412
        %v6414 = vpop.f32.mrb[0].mxu0
        %v6415 = vpop.f32.mrb[0].mxu0
        %v6416 = vadd.f32 %v6288, %v6415
        %v6417 = vpop.f32.mrb[0].mxu0
        %6418 = vmatprep.mubr.bf16.mxu0 0
        %6419 = vmatmul.mubr.bf16.gmra.mrb[0].mxu0 %v6261
        %v6420 = vpop.f32.mrb[0].mxu0
        %v6421 = vadd.f32 %v6288, %v6420
        %v6422 = vpop.f32.mrb[0].mxu0
        %v6423 = vpop.f32.mrb[0].mxu0
        %v6424 = vadd.f32 %v6288, %v6423
        %v6425 = vpop.f32.mrb[0].mxu0
        %6426 = vmatprep.mubr.bf16.mxu0 0
        %6427 = vmatmul.mubr.bf16.gmra.mrb[0].mxu0 %v6262
        %v6428 = vpop.f32.mrb[0].mxu0
        %v6429 = vadd.f32 %v6288, %v6428
        %v6430 = vpop.f32.mrb[0].mxu0
        %v6431 = vpop.f32.mrb[0].mxu0
        %v6432 = vadd.f32 %v6288, %v6431
        %v6433 = vpop.f32.mrb[0].mxu0
        %6434 = vmatprep.mubr.bf16.mxu0 0
        %6435 = vmatmul.mubr.bf16.gmra.mrb[0].mxu0 %v6263
        %v6436 = vpop.f32.mrb[0].mxu0
        %v6437 = vadd.f32 %v6288, %v6436
        %v6438 = vpop.f32.mrb[0].mxu0
        %v6439 = vpop.f32.mrb[0].mxu0
        %v6440 = vadd.f32 %v6288, %v6439
        %v6441 = vpop.f32.mrb[0].mxu0
        %6442 = vmatprep.mubr.bf16.mxu0 0
        %6443 = vmatmul.mubr.bf16.gmra.mrb[0].mxu0 %v6264
        %v6444 = vpop.f32.mrb[0].mxu0
        %v6445 = vadd.f32 %v6288, %v6444
        %v6446 = vpop.f32.mrb[0].mxu0
        %v6447 = vpop.f32.mrb[0].mxu0
        %v6448 = vadd.f32 %v6288, %v6447
        %v6449 = vpop.f32.mrb[0].mxu0
        %6450 = vmatprep.mubr.bf16.mxu0 0
        %6451 = vmatmul.mubr.bf16.gmra.mrb[0].mxu0 %v6265
        %v6452 = vpop.f32.mrb[0].mxu0
        %v6453 = vadd.f32 %v6288, %v6452
        %v6454 = vpop.f32.mrb[0].mxu0
        %v6455 = vpop.f32.mrb[0].mxu0
        %v6456 = vadd.f32 %v6288, %v6455
        %v6457 = vpop.f32.mrb[0].mxu0
        %6458 = vmatprep.mubr.bf16.mxu0 0
        %6459 = vmatmul.mubr.bf16.gmra.mrb[0].mxu0 %v6266
        %v6460 = vpop.f32.mrb[0].mxu0
        %v6461 = vadd.f32 %v6288, %v6460
        %v6462 = vpop.f32.mrb[0].mxu0
        %v6463 = vpop.f32.mrb[0].mxu0
        %v6464 = vadd.f32 %v6288, %v6463
        %v6465 = vpop.f32.mrb[0].mxu0
        %6466 = vdwg.mxu0
        %v6467 = vld [vmem:[%s359 + $0x60] sm:$0xf]
        %v6468 = vld [vmem:[%s359 + $0x64] sm:$0xf]
        %v6469 = vld [vmem:[%s359 + $0x68] sm:$0xf]
        %v6470 = vld [vmem:[%s359 + $0x6c] sm:$0xf]
        %v6471 = vld [vmem:[%s359 + $0x70] sm:$0xf]
        %v6472 = vld [vmem:[%s359 + $0x74] sm:$0xf]
        %v6473 = vld [vmem:[%s359 + $0x78] sm:$0xf]
        %v6474 = vld [vmem:[%s359 + $0x7c] sm:$0xf]
        %v6475 = vld [vmem:[%s359 + $0x80] sm:$0xf]
        %v6476 = vld [vmem:[%s359 + $0x84] sm:$0xf]
        %v6477 = vld [vmem:[%s359 + $0x88] sm:$0xf]
        %v6478 = vld [vmem:[%s359 + $0x8c] sm:$0xf]
        %v6479 = vld [vmem:[%s359 + $0x90] sm:$0xf]
        %v6480 = vld [vmem:[%s359 + $0x94] sm:$0xf]
        %v6481 = vld [vmem:[%s359 + $0x98] sm:$0xf]
        %v6482 = vld [vmem:[%s359 + $0x9c] sm:$0xf]
        %v6483 = vld [vmem:[%s359 + $0xa0] sm:$0xf]
        %v6484 = vld [vmem:[%s359 + $0xa4] sm:$0xf]
        %v6485 = vld [vmem:[%s359 + $0xa8] sm:$0xf]
        %v6486 = vld [vmem:[%s359 + $0xac] sm:$0xf]
        %v6487 = vld [vmem:[%s359 + $0xb0] sm:$0xf]
        %v6488 = vld [vmem:[%s359 + $0xb4] sm:$0xf]
        %v6489 = vld [vmem:[%s359 + $0xb8] sm:$0xf]
        %v6490 = vld [vmem:[%s359 + $0xbc] sm:$0xf]
        %v6491 = vunpack.c.l.bf16 %v6467
        %v6492 = vunpack.c.l.bf16 %v6468
        %v6493 = vunpack.c.l.bf16 %v6469
        %v6494 = vunpack.c.l.bf16 %v6470
        %v6495 = vunpack.c.l.bf16 %v6471
        %v6496 = vunpack.c.l.bf16 %v6472
        %v6497 = vunpack.c.l.bf16 %v6473
        %v6498 = vunpack.c.l.bf16 %v6474
        %v6499 = vunpack.c.l.bf16 %v6475
        %v6500 = vunpack.c.l.bf16 %v6476
        %v6501 = vunpack.c.l.bf16 %v6477
        %v6502 = vunpack.c.l.bf16 %v6478
        %v6503 = vunpack.c.l.bf16 %v6479
        %v6504 = vunpack.c.l.bf16 %v6480
        %v6505 = vunpack.c.l.bf16 %v6481
        %v6506 = vunpack.c.l.bf16 %v6482
        %v6507 = vunpack.c.l.bf16 %v6483
        %v6508 = vunpack.c.l.bf16 %v6484
        %v6509 = vunpack.c.l.bf16 %v6485
        %v6510 = vunpack.c.l.bf16 %v6486
        %v6511 = vunpack.c.l.bf16 %v6487
        %v6512 = vunpack.c.l.bf16 %v6488
        %v6513 = vunpack.c.l.bf16 %v6489
        %v6514 = vunpack.c.l.bf16 %v6490
        %v6515 = vadd.f32 %v6373, %v6491
        %v6516 = vadd.f32 %v6376, %v6492
        %v6517 = vadd.f32 %v6381, %v6493
        %v6518 = vadd.f32 %v6384, %v6494
        %v6519 = vadd.f32 %v6389, %v6495
        %v6520 = vadd.f32 %v6392, %v6496
        %v6521 = vadd.f32 %v6397, %v6497
        %v6522 = vadd.f32 %v6400, %v6498
        %v6523 = vadd.f32 %v6405, %v6499
        %v6524 = vadd.f32 %v6408, %v6500
        %v6525 = vadd.f32 %v6413, %v6501
        %v6526 = vadd.f32 %v6416, %v6502
        %v6527 = vadd.f32 %v6421, %v6503
        %v6528 = vadd.f32 %v6424, %v6504
        %v6529 = vadd.f32 %v6429, %v6505
        %v6530 = vadd.f32 %v6432, %v6506
        %v6531 = vadd.f32 %v6437, %v6507
        %v6532 = vadd.f32 %v6440, %v6508
        %v6533 = vadd.f32 %v6445, %v6509
        %v6534 = vadd.f32 %v6448, %v6510
        %v6535 = vadd.f32 %v6453, %v6511
        %v6536 = vadd.f32 %v6456, %v6512
        %v6537 = vadd.f32 %v6461, %v6513
        %v6538 = vadd.f32 %v6464, %v6514
        %v6539 = vmax.f32 %v6515, 0.0
        %v6540 = vmax.f32 %v6516, 0.0
        %v6541 = vmax.f32 %v6517, 0.0
        %v6542 = vmax.f32 %v6518, 0.0
        %v6543 = vmax.f32 %v6519, 0.0
        %v6544 = vmax.f32 %v6520, 0.0
        %v6545 = vmax.f32 %v6521, 0.0
        %v6546 = vmax.f32 %v6522, 0.0
        %v6547 = vmax.f32 %v6523, 0.0
        %v6548 = vmax.f32 %v6524, 0.0
        %v6549 = vmax.f32 %v6525, 0.0
        %v6550 = vmax.f32 %v6526, 0.0
        %v6551 = vmax.f32 %v6527, 0.0
        %v6552 = vmax.f32 %v6528, 0.0
        %v6553 = vmax.f32 %v6529, 0.0
        %v6554 = vmax.f32 %v6530, 0.0
        %v6555 = vmax.f32 %v6531, 0.0
        %v6556 = vmax.f32 %v6532, 0.0
        %v6557 = vmax.f32 %v6533, 0.0
        %v6558 = vmax.f32 %v6534, 0.0
        %v6559 = vmax.f32 %v6535, 0.0
        %v6560 = vmax.f32 %v6536, 0.0
        %v6561 = vmax.f32 %v6537, 0.0
        %v6562 = vmax.f32 %v6538, 0.0
        %6563 = vst [vmem:[%s419 + $0xc0] sm:$0xff] %v6539
        %6564 = vst [vmem:[%s419 + $0xc8] sm:$0xff] %v6540
        %6565 = vst [vmem:[%s419 + $0xd0] sm:$0xff] %v6541
        %6566 = vst [vmem:[%s419 + $0xd8] sm:$0xff] %v6542
        %6567 = vst [vmem:[%s419 + $0xe0] sm:$0xff] %v6543
        %6568 = vst [vmem:[%s419 + $0xe8] sm:$0xff] %v6544
        %6569 = vst [vmem:[%s419 + $0xf0] sm:$0xff] %v6545
        %6570 = vst [vmem:[%s419 + $0xf8] sm:$0xff] %v6546
        %6571 = vst [vmem:[%s419 + $0x100] sm:$0xff] %v6547
        %6572 = vst [vmem:[%s419 + $0x108] sm:$0xff] %v6548
        %6573 = vst [vmem:[%s419 + $0x110] sm:$0xff] %v6549
        %6574 = vst [vmem:[%s419 + $0x118] sm:$0xff] %v6550
        %6575 = vst [vmem:[%s419 + $0x120] sm:$0xff] %v6551
        %6576 = vst [vmem:[%s419 + $0x128] sm:$0xff] %v6552
        %6577 = vst [vmem:[%s419 + $0x130] sm:$0xff] %v6553
        %6578 = vst [vmem:[%s419 + $0x138] sm:$0xff] %v6554
        %6579 = vst [vmem:[%s419 + $0x140] sm:$0xff] %v6555
        %6580 = vst [vmem:[%s419 + $0x148] sm:$0xff] %v6556
        %6581 = vst [vmem:[%s419 + $0x150] sm:$0xff] %v6557
        %6582 = vst [vmem:[%s419 + $0x158] sm:$0xff] %v6558
        %6583 = vst [vmem:[%s419 + $0x160] sm:$0xff] %v6559
        %6584 = vst [vmem:[%s419 + $0x168] sm:$0xff] %v6560
        %6585 = vst [vmem:[%s419 + $0x170] sm:$0xff] %v6561
        %6586 = vst [vmem:[%s419 + $0x178] sm:$0xff] %v6562
        %s6587 = sand.u32 %s210, 1
        %s6588 = scalar_lea.sflag [#allocation5], %s6587
        %s6589 = sand.u32 %s210, 1
        %s6590 = smul.addr %s6589, 384
        %s6591 = scalar_lea.vmem [#allocation17], %s6590
        // Predicated region
        $region85: #{tpu_custom_call.1} parent=51 // pred_check
          %p6592 = pneg %p220
        $region86: #{tpu_custom_call.1} parent=51 // pred_check_branch
          %6594 = sbr.rel (%p6592) target = $region88
        $region87: #{tpu_custom_call.1} parent=51 // pred_region
          %s6596 = ssub.s32 6144, 6144
          %6597 = vsyncadd %s6588, %s6596
          %s6598 = smul.addr %s29, 48
          %s6599 = smul.addr %s6598, 128
          %s6600 = scalar_lea.hbm %s8, %s6599
          %s6601 = sshll.u32 %s6591, 4
          %s6602 = int_to_ptr.vmem [resolvable:$true] %s6601
          %6607 = dma.vmem_to_hbm [thread:$0]  %s6602, 6144, %s6600, %s6588, 128, 128, 8
        $region88: #{tpu_custom_call.1} parent=51 // pred_fallthru
          _
      $region52: #{tpu_custom_call.1} parent=5 // pred_fallthru
        _
      %p6608 = scmp.le.s32.totalorder 2, %s24
      // Predicated region
      $region89: #{tpu_custom_call.1} parent=5 // pred_check
        %p6609 = pneg %p6608
      $region90: #{tpu_custom_call.1} parent=5 // pred_check_branch
        %6611 = sbr.rel (%p6609) target = $region92
      $region91: #{tpu_custom_call.1} parent=5 // pred_region
        %s6612 = ssub.s32 %s24, 2
        // Predicated region
        $region93: #{tpu_custom_call.1} parent=91 // pred_check
          %p6613 = pneg %p226
        $region94: #{tpu_custom_call.1} parent=91 // pred_check_branch
          %6615 = sbr.rel (%p6613) target = $region96
        $region95: #{tpu_custom_call.1} parent=91 // pred_region
          %s6616 = sand.u32 %s211, 1
          %s6617 = scalar_lea.sflag [#allocation5], %s6616
          %s6618 = sand.u32 %s211, 1
          %s6619 = smul.addr %s6618, 384
          %s6620 = scalar_lea.vmem [#allocation17], %s6619
          %6621 = dma.done %s6617, 6144
        $region96: #{tpu_custom_call.1} parent=91 // pred_fallthru
          _
      $region92: #{tpu_custom_call.1} parent=5 // pred_fallthru
        _
    $region6: #{tpu_custom_call.1} parent=1 // loop_footer
      %s28 = sadd.s32 1, %s24
    $region7: #{tpu_custom_call.1} parent=1 // loop_footer_branch
      %23 = sbr.rel target = $region3
    $region8: #{tpu_custom_call.1} parent=1 // loop_exit
      _
    %6622 = vsyncpa [#allocation4], 1
    %s6623 = scalar_lea.sflag [#allocation4], 1
    %6624 = vsyncpa %s6623, 1
    %6625 = vsyncpa [#allocation7], 1
    %6626 = vsyncpa [#allocation10], 1
    %6627 = vsyncpa [#allocation13], 1
    %6628 = vsyncpa [#allocation16], 1
    %6629 = vsyncpa [#allocation5], 1
    %s6630 = scalar_lea.sflag [#allocation5], 1
    %6631 = vsyncpa %s6630, 1

</llo_original>
